<compile_context>
chip_gen: v7x
topology: tpu7x:2x2x1
jax: 0.10.0
libtpu: 0.0.40
codegen_flags: <defaults>
</compile_context>

<pallas_src>
import functools

import jax
import jax.numpy as jnp
from jax.experimental import pallas as pl
from jax.experimental.pallas import tpu as pltpu

EPS = 1e-5  # nn.InstanceNorm2d default eps


# ---------------------------------------------------------------------------
# In-kernel helpers
# ---------------------------------------------------------------------------
def _inorm_1x1_relu(x2d, w_ref, b_ref, mxu_dtype):
    """InstanceNorm (affine=False, biased var) + task 1x1 conv + bias + ReLU.

    x2d: (H*W, C) f32 value for ONE image.  Single-pass mean/var, rsqrt on the EUP,
    matmul operands cast to mxu_dtype with f32 accumulation.
    """
    hw = x2d.shape[0]
    inv_hw = 1.0 / hw
    s1 = jnp.sum(x2d, axis=0, keepdims=True)
    s2 = jnp.sum(x2d * x2d, axis=0, keepdims=True)
    mean = s1 * inv_hw
    var = jnp.maximum(s2 * inv_hw - mean * mean, 0.0)   # biased variance (torch IN)
    xn = (x2d - mean) * jax.lax.rsqrt(var + EPS)
    y = jnp.dot(xn.astype(mxu_dtype), w_ref[...].astype(mxu_dtype),
                preferred_element_type=jnp.float32)
    y = y + b_ref[...].astype(jnp.float32)
    return jnp.maximum(y, 0.0)


def _conv3x3_from_padded(hp_ref, w_ref, b_ref, Ho, Wo, stride, mxu_dtype):
    """3x3 cross-correlation (+bias) reading from an already zero-padded VMEM scratch.

    hp_ref: (H+2, W+2, Cin) f32 scratch.  Only the strided output positions are
    computed: tap (ky, kx) for output (i, j) reads hp_ref[stride*i + ky, stride*j + kx].
    """
    Cin = hp_ref.shape[-1]
    Cout = w_ref.shape[-1]
    acc = jnp.zeros((Ho * Wo, Cout), jnp.float32)
    for ky in range(3):
        for kx in range(3):
            if stride == 1:
                patch = hp_ref[pl.ds(ky, Ho), pl.ds(kx, Wo), :]
            else:
                patch = hp_ref[pl.ds(ky, Ho, stride), pl.ds(kx, Wo, stride), :]
            patch = patch.reshape(Ho * Wo, Cin).astype(mxu_dtype)
            acc = acc + jnp.dot(patch, w_ref[ky, kx].astype(mxu_dtype),
                                preferred_element_type=jnp.float32)
    return acc + b_ref[...].astype(jnp.float32)


# ---------------------------------------------------------------------------
# Fused wide_basic kernel (one image per grid step)
# ---------------------------------------------------------------------------
def _wide_basic_kernel(x_ref, n1w_ref, n1b_ref, c1w_ref, c1b_ref,
                       n2w_ref, n2b_ref, c2w_ref, c2b_ref, *rest,
                       stride, has_proj, mxu_dtype):
    if has_proj:
        scw_ref, scb_ref, o_ref, h1p_ref, h2p_ref = rest
    else:
        o_ref, h1p_ref, h2p_ref = rest

    _, H, W, Cin = x_ref.shape
    _, Ho, Wo, Cout = o_ref.shape
    Cmid = c1w_ref.shape[3]

    x2d = x_ref[0].astype(jnp.float32).reshape(H * W, Cin)

    # --- norm1 -> task 1x1 -> relu, written into the interior of a zero-padded scratch.
    h1 = _inorm_1x1_relu(x2d, n1w_ref, n1b_ref, mxu_dtype)                 # (H*W, Cin)
    h1p_ref[...] = jnp.zeros_like(h1p_ref)
    h1p_ref[pl.ds(1, H), pl.ds(1, W), :] = h1.reshape(H, W, Cin)

    # --- conv1: 3x3, pad=1, stride=1.
    out1 = _conv3x3_from_padded(h1p_ref, c1w_ref, c1b_ref, H, W, 1, mxu_dtype)  # (H*W, Cmid)

    # --- norm2 -> task 1x1 -> relu.
    h2 = _inorm_1x1_relu(out1, n2w_ref, n2b_ref, mxu_dtype)                # (H*W, Cmid)
    h2p_ref[...] = jnp.zeros_like(h2p_ref)
    h2p_ref[pl.ds(1, H), pl.ds(1, W), :] = h2.reshape(H, W, Cmid)

    # --- conv2: 3x3, pad=1, stride=s (only strided outputs computed).
    out2 = _conv3x3_from_padded(h2p_ref, c2w_ref, c2b_ref, Ho, Wo, stride, mxu_dtype)

    # --- fused shortcut.
    if has_proj:
        if stride == 1:
            xs = x2d
        else:
            xs = x_ref[0, pl.ds(0, Ho, stride), pl.ds(0, Wo, stride), :]
            xs = xs.astype(jnp.float32).reshape(Ho * Wo, Cin)
        out2 = out2 + jnp.dot(xs.astype(mxu_dtype), scw_ref[...].astype(mxu_dtype),
                              preferred_element_type=jnp.float32)
        out2 = out2 + scb_ref[...].astype(jnp.float32)
    else:
        out2 = out2 + x2d   # identity shortcut (stride==1 and Cin==Cout)

    o_ref[...] = out2.reshape(1, Ho, Wo, Cout).astype(o_ref.dtype)


# ---------------------------------------------------------------------------
# Wrappers
# ---------------------------------------------------------------------------
def wide_basic_forward_nhwc(x, params, *, stride=1, mxu_dtype=jnp.bfloat16):
    """Fused wide_basic forward on NHWC activations (dropout=False path)."""
    N, H, W, Cin = x.shape
    Cmid = params["conv1_w"].shape[3]
    Cout = params["conv2_w"].shape[3]
    Ho = (H - 1) // stride + 1
    Wo = (W - 1) // stride + 1
    has_proj = (stride != 1) or (Cin != Cout)

    kernel = functools.partial(_wide_basic_kernel, stride=stride,
                               has_proj=has_proj, mxu_dtype=mxu_dtype)

    in_specs = [
        pl.BlockSpec((1, H, W, Cin), lambda n: (n, 0, 0, 0)),        # x
        pl.BlockSpec((Cin, Cin), lambda n: (0, 0)),                  # norm1 task 1x1 weight
        pl.BlockSpec((1, Cin), lambda n: (0, 0)),                    # norm1 task 1x1 bias
        pl.BlockSpec((3, 3, Cin, Cmid), lambda n: (0, 0, 0, 0)),     # conv1 weight (HWIO)
        pl.BlockSpec((1, Cmid), lambda n: (0, 0)),                   # conv1 bias
        pl.BlockSpec((Cmid, Cmid), lambda n: (0, 0)),                # norm2 task 1x1 weight
        pl.BlockSpec((1, Cmid), lambda n: (0, 0)),                   # norm2 task 1x1 bias
        pl.BlockSpec((3, 3, Cmid, Cout), lambda n: (0, 0, 0, 0)),    # conv2 weight (HWIO)
        pl.BlockSpec((1, Cout), lambda n: (0, 0)),                   # conv2 bias
    ]
    args = [x,
            params["norm1_w"], params["norm1_b"],
            params["conv1_w"], params["conv1_b"],
            params["norm2_w"], params["norm2_b"],
            params["conv2_w"], params["conv2_b"]]
    if has_proj:
        in_specs += [pl.BlockSpec((Cin, Cout), lambda n: (0, 0)),    # shortcut 1x1 weight
                     pl.BlockSpec((1, Cout), lambda n: (0, 0))]      # shortcut 1x1 bias
        args += [params["sc_w"], params["sc_b"]]

    return pl.pallas_call(
        kernel,
        out_shape=jax.ShapeDtypeStruct((N, Ho, Wo, Cout), x.dtype),
        grid=(N,),
        in_specs=in_specs,
        out_specs=pl.BlockSpec((1, Ho, Wo, Cout), lambda n: (n, 0, 0, 0)),
        scratch_shapes=[pltpu.VMEM((H + 2, W + 2, Cin), jnp.float32),   # padded h1
                        pltpu.VMEM((H + 2, W + 2, Cmid), jnp.float32)],  # padded h2
        compiler_params=pltpu.CompilerParams(dimension_semantics=("parallel",)),
    )(*args)


def wide_basic_forward(x_nchw, params, *, stride=1, mxu_dtype=jnp.bfloat16):
    """NCHW wrapper for parity with the PyTorch module layout.

    Prefer wide_basic_forward_nhwc and keep the whole network NHWC so the transposes
    only happen once at model input/output.
    """
    x = jnp.transpose(x_nchw, (0, 2, 3, 1))
    y = wide_basic_forward_nhwc(x, params, stride=stride, mxu_dtype=mxu_dtype)
    return jnp.transpose(y, (0, 3, 1, 2))


# ---------------------------------------------------------------------------
# Parameters
# ---------------------------------------------------------------------------
def init_params(key, in_planes, planes):
    ks = jax.random.split(key, 10)
    w = lambda k, shape: (0.1 * jax.random.normal(k, shape)).astype(jnp.float32)
    return {
        "norm1_w": w(ks[0], (in_planes, in_planes)),     # ConditionalNorm.conv1x1[task]
        "norm1_b": w(ks[1], (1, in_planes)),
        "conv1_w": w(ks[2], (3, 3, in_planes, planes)),  # HWIO
        "conv1_b": w(ks[3], (1, planes)),
        "norm2_w": w(ks[4], (planes, planes)),
        "norm2_b": w(ks[5], (1, planes)),
        "conv2_w": w(ks[6], (3, 3, planes, planes)),
        "conv2_b": w(ks[7], (1, planes)),
        "sc_w": w(ks[8], (in_planes, planes)),           # shortcut 1x1 conv
        "sc_b": w(ks[9], (1, planes)),
    }


# ---------------------------------------------------------------------------
# Pure-JAX reference (mirrors the PyTorch graph).  mxu_dtype quantizes the matmul /
# conv operands exactly like the kernel does (accumulation stays f32), so the bf16
# kernel can be checked tightly against a matched-precision reference.
# ---------------------------------------------------------------------------
def _ref_forward(x, p, *, stride, mxu_dtype=jnp.float32):
    hi = jax.lax.Precision.HIGHEST

    def inorm(v):  # NCHW instance norm, affine=False, biased variance
        m = v.mean(axis=(2, 3), keepdims=True)
        va = v.var(axis=(2, 3), keepdims=True)
        return (v - m) / jnp.sqrt(va + EPS)

    def conv(v, w_hwio, b, s=1, pad=0):
        y = jax.lax.conv_general_dilated(
            v.astype(mxu_dtype), w_hwio.astype(mxu_dtype), (s, s),
            [(pad, pad), (pad, pad)],
            dimension_numbers=("NCHW", "HWIO", "NCHW"),
            precision=hi, preferred_element_type=jnp.float32)
        return y + b.reshape(1, -1, 1, 1)

    in_planes = x.shape[1]
    planes = p["conv2_w"].shape[3]
    n1w = p["norm1_w"].reshape(1, 1, *p["norm1_w"].shape)
    n2w = p["norm2_w"].reshape(1, 1, *p["norm2_w"].shape)
    scw = p["sc_w"].reshape(1, 1, *p["sc_w"].shape)

    h1 = jax.nn.relu(conv(inorm(x), n1w, p["norm1_b"]))
    out1 = conv(h1, p["conv1_w"], p["conv1_b"], s=1, pad=1)
    h2 = jax.nn.relu(conv(inorm(out1), n2w, p["norm2_b"]))
    out2 = conv(h2, p["conv2_w"], p["conv2_b"], s=stride, pad=1)
    if stride != 1 or in_planes != planes:
        out2 = out2 + conv(x, scw, p["sc_b"], s=stride, pad=0)
    else:
        out2 = out2 + x
    return out2


if __name__ == "__main__":
    # (name, in_planes, planes, stride, mxu_dtype, tol vs matched-precision reference)
    configs = [
        ("proj_bf16", 4, 8, 1, jnp.bfloat16, 5e-3),   # projection shortcut, bf16 MXU operands
        ("ident_bf16", 8, 8, 1, jnp.bfloat16, 5e-3),  # identity shortcut, bf16 MXU operands
        ("proj_f32", 4, 8, 1, jnp.float32, 2e-2),     # strict-parity f32 operand path
    ]
    N, H, W = 2, 16, 16
    keys = jax.random.split(jax.random.PRNGKey(0), 2 * len(configs))

    for i, (name, cin, cout, stride, mxu_dtype, tol) in enumerate(configs):
        kx, kp = keys[2 * i], keys[2 * i + 1]
        x = jax.random.normal(kx, (N, cin, H, W), dtype=jnp.float32)  # NCHW, like torch
        params = init_params(kp, cin, cout)

        out = jax.block_until_ready(
            wide_basic_forward(x, params, stride=stride, mxu_dtype=mxu_dtype))
        ho = (H - 1) // stride + 1
        wo = (W - 1) // stride + 1
        assert out.shape == (N, cout, ho, wo), (name, out.shape)

        # Tight check against a reference with the SAME operand quantization as the kernel.
        ref = _ref_forward(x, params, stride=stride, mxu_dtype=mxu_dtype)
        err = float(jnp.max(jnp.abs(out - ref)))
        assert err < tol, f"{name}: max abs err {err} vs matched reference (tol {tol})"

        # Sanity check against the full-f32 torch-faithful reference.
        ref32 = _ref_forward(x, params, stride=stride, mxu_dtype=jnp.float32)
        rel = float(jnp.linalg.norm(out - ref32) / jnp.linalg.norm(ref32))
        assert rel < 3e-2, f"{name}: relative L2 err {rel} vs f32 reference"

    print("KERNEL_OK")
</pallas_src>

<mosaic_0001>
module attributes {stable_mosaic.version = 11 : i64} {
  func.func @_wide_basic_kernel(%arg0: i32, %arg1: memref<1x16x16x4xf32, #tpu.memory_space<vmem>>, %arg2: memref<4x4xf32, #tpu.memory_space<vmem>>, %arg3: memref<1x4xf32, #tpu.memory_space<vmem>>, %arg4: memref<3x3x4x8xf32, #tpu.memory_space<vmem>>, %arg5: memref<1x8xf32, #tpu.memory_space<vmem>>, %arg6: memref<8x8xf32, #tpu.memory_space<vmem>>, %arg7: memref<1x8xf32, #tpu.memory_space<vmem>>, %arg8: memref<3x3x8x8xf32, #tpu.memory_space<vmem>>, %arg9: memref<1x8xf32, #tpu.memory_space<vmem>>, %arg10: memref<4x8xf32, #tpu.memory_space<vmem>>, %arg11: memref<1x8xf32, #tpu.memory_space<vmem>>, %arg12: memref<1x16x16x8xf32, #tpu.memory_space<vmem>>, %arg13: memref<18x18x4xf32, #tpu.memory_space<vmem>>, %arg14: memref<18x18x8xf32, #tpu.memory_space<vmem>>) attributes {dimension_semantics = [#tpu.dimension_semantics<parallel>], iteration_bounds = array<i64: 2>, scalar_prefetch = 0 : i64, scratch_operands = 2 : i64, tpu.core_type = #tpu.core_type<tc>, window_params = [{transform_indices = @transform_0, window_bounds = array<i64: 1, 16, 16, 4>}, {pipeline_mode = #tpu.pipeline_mode<synchronous>, transform_indices = @transform_1, window_bounds = array<i64: 4, 4>}, {pipeline_mode = #tpu.pipeline_mode<synchronous>, transform_indices = @transform_2, window_bounds = array<i64: 1, 4>}, {pipeline_mode = #tpu.pipeline_mode<synchronous>, transform_indices = @transform_3, window_bounds = array<i64: 3, 3, 4, 8>}, {pipeline_mode = #tpu.pipeline_mode<synchronous>, transform_indices = @transform_4, window_bounds = array<i64: 1, 8>}, {pipeline_mode = #tpu.pipeline_mode<synchronous>, transform_indices = @transform_5, window_bounds = array<i64: 8, 8>}, {pipeline_mode = #tpu.pipeline_mode<synchronous>, transform_indices = @transform_6, window_bounds = array<i64: 1, 8>}, {pipeline_mode = #tpu.pipeline_mode<synchronous>, transform_indices = @transform_7, window_bounds = array<i64: 3, 3, 8, 8>}, {pipeline_mode = #tpu.pipeline_mode<synchronous>, transform_indices = @transform_8, window_bounds = array<i64: 1, 8>}, {pipeline_mode = #tpu.pipeline_mode<synchronous>, transform_indices = @transform_9, window_bounds = array<i64: 4, 8>}, {pipeline_mode = #tpu.pipeline_mode<synchronous>, transform_indices = @transform_10, window_bounds = array<i64: 1, 8>}, {transform_indices = @transform_11, window_bounds = array<i64: 1, 16, 16, 8>}]} {
    %c0 = arith.constant 0 : index
    %c0_0 = arith.constant 0 : index
    %c0_1 = arith.constant 0 : index
    %c0_2 = arith.constant 0 : index
    %0 = vector.load %arg1[%c0, %c0_0, %c0_1, %c0_2] : memref<1x16x16x4xf32, #tpu.memory_space<vmem>>, vector<1x16x16x4xf32>
    %1 = vector.shape_cast %0 : vector<1x16x16x4xf32> to vector<16x16x4xf32>
    %2 = vector.shape_cast %1 : vector<16x16x4xf32> to vector<256x4xf32>
    %cst = arith.constant dense<0.000000e+00> : vector<4xf32>
    %3 = vector.multi_reduction <add>, %2, %cst [0] : vector<256x4xf32> to vector<4xf32>
    %4 = vector.shape_cast %3 : vector<4xf32> to vector<1x4xf32>
    %5 = arith.mulf %2, %2 : vector<256x4xf32>
    %cst_3 = arith.constant dense<0.000000e+00> : vector<4xf32>
    %6 = vector.multi_reduction <add>, %5, %cst_3 [0] : vector<256x4xf32> to vector<4xf32>
    %7 = vector.shape_cast %6 : vector<4xf32> to vector<1x4xf32>
    %cst_4 = arith.constant 3.906250e-03 : f32
    %8 = vector.broadcast %cst_4 : f32 to vector<1x4xf32>
    %9 = arith.mulf %4, %8 : vector<1x4xf32>
    %cst_5 = arith.constant 3.906250e-03 : f32
    %10 = vector.broadcast %cst_5 : f32 to vector<1x4xf32>
    %11 = arith.mulf %7, %10 : vector<1x4xf32>
    %12 = arith.mulf %9, %9 : vector<1x4xf32>
    %13 = arith.subf %11, %12 : vector<1x4xf32>
    %cst_6 = arith.constant 0.000000e+00 : f32
    %14 = vector.broadcast %cst_6 : f32 to vector<1x4xf32>
    %15 = arith.maximumf %13, %14 : vector<1x4xf32>
    %16 = vector.broadcast %9 : vector<1x4xf32> to vector<256x4xf32>
    %17 = arith.subf %2, %16 : vector<256x4xf32>
    %cst_7 = arith.constant 9.99999974E-6 : f32
    %18 = vector.broadcast %cst_7 : f32 to vector<1x4xf32>
    %19 = arith.addf %15, %18 : vector<1x4xf32>
    %20 = math.rsqrt %19 : vector<1x4xf32>
    %21 = vector.broadcast %20 : vector<1x4xf32> to vector<256x4xf32>
    %22 = arith.mulf %17, %21 : vector<256x4xf32>
    %23 = arith.truncf %22 : vector<256x4xf32> to vector<256x4xbf16>
    %c0_8 = arith.constant 0 : index
    %c0_9 = arith.constant 0 : index
    %24 = vector.load %arg2[%c0_8, %c0_9] : memref<4x4xf32, #tpu.memory_space<vmem>>, vector<4x4xf32>
    %25 = arith.truncf %24 : vector<4x4xf32> to vector<4x4xbf16>
    %cst_10 = arith.constant dense<0.000000e+00> : vector<256x4xf32>
    %26 = tpu.matmul %23, %25, %cst_10 {dimension_numbers = #tpu.dot_dimension_numbers<[1], [0], [0], [1], [0, 0, 1, 1], [], []>} : vector<256x4xbf16>, vector<4x4xbf16>, vector<256x4xf32> -> vector<256x4xf32>
    %c0_11 = arith.constant 0 : index
    %c0_12 = arith.constant 0 : index
    %27 = vector.load %arg3[%c0_11, %c0_12] : memref<1x4xf32, #tpu.memory_space<vmem>>, vector<1x4xf32>
    %28 = vector.broadcast %27 : vector<1x4xf32> to vector<256x4xf32>
    %29 = arith.addf %26, %28 : vector<256x4xf32>
    %cst_13 = arith.constant 0.000000e+00 : f32
    %30 = vector.broadcast %cst_13 : f32 to vector<256x4xf32>
    %31 = arith.maximumf %29, %30 : vector<256x4xf32>
    %cst_14 = arith.constant 0.000000e+00 : f32
    %32 = vector.broadcast %cst_14 : f32 to vector<18x18x4xf32>
    %c0_15 = arith.constant 0 : index
    %c0_16 = arith.constant 0 : index
    %c0_17 = arith.constant 0 : index
    %33 = vector.load %arg13[%c0_15, %c0_16, %c0_17] : memref<18x18x4xf32, #tpu.memory_space<vmem>>, vector<18x18x4xf32>
    tpu.vector_store %arg13[%c0_15, %c0_16, %c0_17], %32 {strides = array<i32>} : memref<18x18x4xf32, #tpu.memory_space<vmem>>, vector<18x18x4xf32>,
    %34 = vector.shape_cast %31 : vector<256x4xf32> to vector<16x16x4xf32>
    %c1 = arith.constant 1 : index
    %c1_18 = arith.constant 1 : index
    %c0_19 = arith.constant 0 : index
    %35 = vector.load %arg13[%c1, %c1_18, %c0_19] : memref<18x18x4xf32, #tpu.memory_space<vmem>>, vector<16x16x4xf32>
    tpu.vector_store %arg13[%c1, %c1_18, %c0_19], %34 {strides = array<i32>} : memref<18x18x4xf32, #tpu.memory_space<vmem>>, vector<16x16x4xf32>,
    %cst_20 = arith.constant 0.000000e+00 : f32
    %36 = vector.broadcast %cst_20 : f32 to vector<256x8xf32>
    %c0_21 = arith.constant 0 : index
    %c0_22 = arith.constant 0 : index
    %c0_23 = arith.constant 0 : index
    %37 = vector.load %arg13[%c0_21, %c0_22, %c0_23] : memref<18x18x4xf32, #tpu.memory_space<vmem>>, vector<16x16x4xf32>
    %38 = vector.shape_cast %37 : vector<16x16x4xf32> to vector<256x4xf32>
    %39 = arith.truncf %38 : vector<256x4xf32> to vector<256x4xbf16>
    %c0_24 = arith.constant 0 : index
    %c0_25 = arith.constant 0 : index
    %c0_26 = arith.constant 0 : index
    %c0_27 = arith.constant 0 : index
    %40 = vector.load %arg4[%c0_24, %c0_25, %c0_26, %c0_27] : memref<3x3x4x8xf32, #tpu.memory_space<vmem>>, vector<1x1x4x8xf32>
    %41 = vector.shape_cast %40 : vector<1x1x4x8xf32> to vector<4x8xf32>
    %42 = arith.truncf %41 : vector<4x8xf32> to vector<4x8xbf16>
    %cst_28 = arith.constant dense<0.000000e+00> : vector<256x8xf32>
    %43 = tpu.matmul %39, %42, %cst_28 {dimension_numbers = #tpu.dot_dimension_numbers<[1], [0], [0], [1], [0, 0, 1, 1], [], []>} : vector<256x4xbf16>, vector<4x8xbf16>, vector<256x8xf32> -> vector<256x8xf32>
    %44 = arith.addf %36, %43 : vector<256x8xf32>
    %c0_29 = arith.constant 0 : index
    %c1_30 = arith.constant 1 : index
    %c0_31 = arith.constant 0 : index
    %45 = vector.load %arg13[%c0_29, %c1_30, %c0_31] : memref<18x18x4xf32, #tpu.memory_space<vmem>>, vector<16x16x4xf32>
    %46 = vector.shape_cast %45 : vector<16x16x4xf32> to vector<256x4xf32>
    %47 = arith.truncf %46 : vector<256x4xf32> to vector<256x4xbf16>
    %c0_32 = arith.constant 0 : index
    %c1_33 = arith.constant 1 : index
    %c0_34 = arith.constant 0 : index
    %c0_35 = arith.constant 0 : index
    %48 = vector.load %arg4[%c0_32, %c1_33, %c0_34, %c0_35] : memref<3x3x4x8xf32, #tpu.memory_space<vmem>>, vector<1x1x4x8xf32>
    %49 = vector.shape_cast %48 : vector<1x1x4x8xf32> to vector<4x8xf32>
    %50 = arith.truncf %49 : vector<4x8xf32> to vector<4x8xbf16>
    %cst_36 = arith.constant dense<0.000000e+00> : vector<256x8xf32>
    %51 = tpu.matmul %47, %50, %cst_36 {dimension_numbers = #tpu.dot_dimension_numbers<[1], [0], [0], [1], [0, 0, 1, 1], [], []>} : vector<256x4xbf16>, vector<4x8xbf16>, vector<256x8xf32> -> vector<256x8xf32>
    %52 = arith.addf %44, %51 : vector<256x8xf32>
    %c0_37 = arith.constant 0 : index
    %c2 = arith.constant 2 : index
    %c0_38 = arith.constant 0 : index
    %53 = vector.load %arg13[%c0_37, %c2, %c0_38] : memref<18x18x4xf32, #tpu.memory_space<vmem>>, vector<16x16x4xf32>
    %54 = vector.shape_cast %53 : vector<16x16x4xf32> to vector<256x4xf32>
    %55 = arith.truncf %54 : vector<256x4xf32> to vector<256x4xbf16>
    %c0_39 = arith.constant 0 : index
    %c2_40 = arith.constant 2 : index
    %c0_41 = arith.constant 0 : index
    %c0_42 = arith.constant 0 : index
    %56 = vector.load %arg4[%c0_39, %c2_40, %c0_41, %c0_42] : memref<3x3x4x8xf32, #tpu.memory_space<vmem>>, vector<1x1x4x8xf32>
    %57 = vector.shape_cast %56 : vector<1x1x4x8xf32> to vector<4x8xf32>
    %58 = arith.truncf %57 : vector<4x8xf32> to vector<4x8xbf16>
    %cst_43 = arith.constant dense<0.000000e+00> : vector<256x8xf32>
    %59 = tpu.matmul %55, %58, %cst_43 {dimension_numbers = #tpu.dot_dimension_numbers<[1], [0], [0], [1], [0, 0, 1, 1], [], []>} : vector<256x4xbf16>, vector<4x8xbf16>, vector<256x8xf32> -> vector<256x8xf32>
    %60 = arith.addf %52, %59 : vector<256x8xf32>
    %c1_44 = arith.constant 1 : index
    %c0_45 = arith.constant 0 : index
    %c0_46 = arith.constant 0 : index
    %61 = vector.load %arg13[%c1_44, %c0_45, %c0_46] : memref<18x18x4xf32, #tpu.memory_space<vmem>>, vector<16x16x4xf32>
    %62 = vector.shape_cast %61 : vector<16x16x4xf32> to vector<256x4xf32>
    %63 = arith.truncf %62 : vector<256x4xf32> to vector<256x4xbf16>
    %c1_47 = arith.constant 1 : index
    %c0_48 = arith.constant 0 : index
    %c0_49 = arith.constant 0 : index
    %c0_50 = arith.constant 0 : index
    %64 = vector.load %arg4[%c1_47, %c0_48, %c0_49, %c0_50] : memref<3x3x4x8xf32, #tpu.memory_space<vmem>>, vector<1x1x4x8xf32>
    %65 = vector.shape_cast %64 : vector<1x1x4x8xf32> to vector<4x8xf32>
    %66 = arith.truncf %65 : vector<4x8xf32> to vector<4x8xbf16>
    %cst_51 = arith.constant dense<0.000000e+00> : vector<256x8xf32>
    %67 = tpu.matmul %63, %66, %cst_51 {dimension_numbers = #tpu.dot_dimension_numbers<[1], [0], [0], [1], [0, 0, 1, 1], [], []>} : vector<256x4xbf16>, vector<4x8xbf16>, vector<256x8xf32> -> vector<256x8xf32>
    %68 = arith.addf %60, %67 : vector<256x8xf32>
    %c1_52 = arith.constant 1 : index
    %c1_53 = arith.constant 1 : index
    %c0_54 = arith.constant 0 : index
    %69 = vector.load %arg13[%c1_52, %c1_53, %c0_54] : memref<18x18x4xf32, #tpu.memory_space<vmem>>, vector<16x16x4xf32>
    %70 = vector.shape_cast %69 : vector<16x16x4xf32> to vector<256x4xf32>
    %71 = arith.truncf %70 : vector<256x4xf32> to vector<256x4xbf16>
    %c1_55 = arith.constant 1 : index
    %c1_56 = arith.constant 1 : index
    %c0_57 = arith.constant 0 : index
    %c0_58 = arith.constant 0 : index
    %72 = vector.load %arg4[%c1_55, %c1_56, %c0_57, %c0_58] : memref<3x3x4x8xf32, #tpu.memory_space<vmem>>, vector<1x1x4x8xf32>
    %73 = vector.shape_cast %72 : vector<1x1x4x8xf32> to vector<4x8xf32>
    %74 = arith.truncf %73 : vector<4x8xf32> to vector<4x8xbf16>
    %cst_59 = arith.constant dense<0.000000e+00> : vector<256x8xf32>
    %75 = tpu.matmul %71, %74, %cst_59 {dimension_numbers = #tpu.dot_dimension_numbers<[1], [0], [0], [1], [0, 0, 1, 1], [], []>} : vector<256x4xbf16>, vector<4x8xbf16>, vector<256x8xf32> -> vector<256x8xf32>
    %76 = arith.addf %68, %75 : vector<256x8xf32>
    %c1_60 = arith.constant 1 : index
    %c2_61 = arith.constant 2 : index
    %c0_62 = arith.constant 0 : index
    %77 = vector.load %arg13[%c1_60, %c2_61, %c0_62] : memref<18x18x4xf32, #tpu.memory_space<vmem>>, vector<16x16x4xf32>
    %78 = vector.shape_cast %77 : vector<16x16x4xf32> to vector<256x4xf32>
    %79 = arith.truncf %78 : vector<256x4xf32> to vector<256x4xbf16>
    %c1_63 = arith.constant 1 : index
    %c2_64 = arith.constant 2 : index
    %c0_65 = arith.constant 0 : index
    %c0_66 = arith.constant 0 : index
    %80 = vector.load %arg4[%c1_63, %c2_64, %c0_65, %c0_66] : memref<3x3x4x8xf32, #tpu.memory_space<vmem>>, vector<1x1x4x8xf32>
    %81 = vector.shape_cast %80 : vector<1x1x4x8xf32> to vector<4x8xf32>
    %82 = arith.truncf %81 : vector<4x8xf32> to vector<4x8xbf16>
    %cst_67 = arith.constant dense<0.000000e+00> : vector<256x8xf32>
    %83 = tpu.matmul %79, %82, %cst_67 {dimension_numbers = #tpu.dot_dimension_numbers<[1], [0], [0], [1], [0, 0, 1, 1], [], []>} : vector<256x4xbf16>, vector<4x8xbf16>, vector<256x8xf32> -> vector<256x8xf32>
    %84 = arith.addf %76, %83 : vector<256x8xf32>
    %c2_68 = arith.constant 2 : index
    %c0_69 = arith.constant 0 : index
    %c0_70 = arith.constant 0 : index
    %85 = vector.load %arg13[%c2_68, %c0_69, %c0_70] : memref<18x18x4xf32, #tpu.memory_space<vmem>>, vector<16x16x4xf32>
    %86 = vector.shape_cast %85 : vector<16x16x4xf32> to vector<256x4xf32>
    %87 = arith.truncf %86 : vector<256x4xf32> to vector<256x4xbf16>
    %c2_71 = arith.constant 2 : index
    %c0_72 = arith.constant 0 : index
    %c0_73 = arith.constant 0 : index
    %c0_74 = arith.constant 0 : index
    %88 = vector.load %arg4[%c2_71, %c0_72, %c0_73, %c0_74] : memref<3x3x4x8xf32, #tpu.memory_space<vmem>>, vector<1x1x4x8xf32>
    %89 = vector.shape_cast %88 : vector<1x1x4x8xf32> to vector<4x8xf32>
    %90 = arith.truncf %89 : vector<4x8xf32> to vector<4x8xbf16>
    %cst_75 = arith.constant dense<0.000000e+00> : vector<256x8xf32>
    %91 = tpu.matmul %87, %90, %cst_75 {dimension_numbers = #tpu.dot_dimension_numbers<[1], [0], [0], [1], [0, 0, 1, 1], [], []>} : vector<256x4xbf16>, vector<4x8xbf16>, vector<256x8xf32> -> vector<256x8xf32>
    %92 = arith.addf %84, %91 : vector<256x8xf32>
    %c2_76 = arith.constant 2 : index
    %c1_77 = arith.constant 1 : index
    %c0_78 = arith.constant 0 : index
    %93 = vector.load %arg13[%c2_76, %c1_77, %c0_78] : memref<18x18x4xf32, #tpu.memory_space<vmem>>, vector<16x16x4xf32>
    %94 = vector.shape_cast %93 : vector<16x16x4xf32> to vector<256x4xf32>
    %95 = arith.truncf %94 : vector<256x4xf32> to vector<256x4xbf16>
    %c2_79 = arith.constant 2 : index
    %c1_80 = arith.constant 1 : index
    %c0_81 = arith.constant 0 : index
    %c0_82 = arith.constant 0 : index
    %96 = vector.load %arg4[%c2_79, %c1_80, %c0_81, %c0_82] : memref<3x3x4x8xf32, #tpu.memory_space<vmem>>, vector<1x1x4x8xf32>
    %97 = vector.shape_cast %96 : vector<1x1x4x8xf32> to vector<4x8xf32>
    %98 = arith.truncf %97 : vector<4x8xf32> to vector<4x8xbf16>
    %cst_83 = arith.constant dense<0.000000e+00> : vector<256x8xf32>
    %99 = tpu.matmul %95, %98, %cst_83 {dimension_numbers = #tpu.dot_dimension_numbers<[1], [0], [0], [1], [0, 0, 1, 1], [], []>} : vector<256x4xbf16>, vector<4x8xbf16>, vector<256x8xf32> -> vector<256x8xf32>
    %100 = arith.addf %92, %99 : vector<256x8xf32>
    %c2_84 = arith.constant 2 : index
    %c2_85 = arith.constant 2 : index
    %c0_86 = arith.constant 0 : index
    %101 = vector.load %arg13[%c2_84, %c2_85, %c0_86] : memref<18x18x4xf32, #tpu.memory_space<vmem>>, vector<16x16x4xf32>
    %102 = vector.shape_cast %101 : vector<16x16x4xf32> to vector<256x4xf32>
    %103 = arith.truncf %102 : vector<256x4xf32> to vector<256x4xbf16>
    %c2_87 = arith.constant 2 : index
    %c2_88 = arith.constant 2 : index
    %c0_89 = arith.constant 0 : index
    %c0_90 = arith.constant 0 : index
    %104 = vector.load %arg4[%c2_87, %c2_88, %c0_89, %c0_90] : memref<3x3x4x8xf32, #tpu.memory_space<vmem>>, vector<1x1x4x8xf32>
    %105 = vector.shape_cast %104 : vector<1x1x4x8xf32> to vector<4x8xf32>
    %106 = arith.truncf %105 : vector<4x8xf32> to vector<4x8xbf16>
    %cst_91 = arith.constant dense<0.000000e+00> : vector<256x8xf32>
    %107 = tpu.matmul %103, %106, %cst_91 {dimension_numbers = #tpu.dot_dimension_numbers<[1], [0], [0], [1], [0, 0, 1, 1], [], []>} : vector<256x4xbf16>, vector<4x8xbf16>, vector<256x8xf32> -> vector<256x8xf32>
    %108 = arith.addf %100, %107 : vector<256x8xf32>
    %c0_92 = arith.constant 0 : index
    %c0_93 = arith.constant 0 : index
    %109 = vector.load %arg5[%c0_92, %c0_93] : memref<1x8xf32, #tpu.memory_space<vmem>>, vector<1x8xf32>
    %110 = vector.broadcast %109 : vector<1x8xf32> to vector<256x8xf32>
    %111 = arith.addf %108, %110 : vector<256x8xf32>
    %cst_94 = arith.constant dense<0.000000e+00> : vector<8xf32>
    %112 = vector.multi_reduction <add>, %111, %cst_94 [0] : vector<256x8xf32> to vector<8xf32>
    %113 = vector.shape_cast %112 : vector<8xf32> to vector<1x8xf32>
    %114 = arith.mulf %111, %111 : vector<256x8xf32>
    %cst_95 = arith.constant dense<0.000000e+00> : vector<8xf32>
    %115 = vector.multi_reduction <add>, %114, %cst_95 [0] : vector<256x8xf32> to vector<8xf32>
    %116 = vector.shape_cast %115 : vector<8xf32> to vector<1x8xf32>
    %cst_96 = arith.constant 3.906250e-03 : f32
    %117 = vector.broadcast %cst_96 : f32 to vector<1x8xf32>
    %118 = arith.mulf %113, %117 : vector<1x8xf32>
    %cst_97 = arith.constant 3.906250e-03 : f32
    %119 = vector.broadcast %cst_97 : f32 to vector<1x8xf32>
    %120 = arith.mulf %116, %119 : vector<1x8xf32>
    %121 = arith.mulf %118, %118 : vector<1x8xf32>
    %122 = arith.subf %120, %121 : vector<1x8xf32>
    %cst_98 = arith.constant 0.000000e+00 : f32
    %123 = vector.broadcast %cst_98 : f32 to vector<1x8xf32>
    %124 = arith.maximumf %122, %123 : vector<1x8xf32>
    %125 = vector.broadcast %118 : vector<1x8xf32> to vector<256x8xf32>
    %126 = arith.subf %111, %125 : vector<256x8xf32>
    %cst_99 = arith.constant 9.99999974E-6 : f32
    %127 = vector.broadcast %cst_99 : f32 to vector<1x8xf32>
    %128 = arith.addf %124, %127 : vector<1x8xf32>
    %129 = math.rsqrt %128 : vector<1x8xf32>
    %130 = vector.broadcast %129 : vector<1x8xf32> to vector<256x8xf32>
    %131 = arith.mulf %126, %130 : vector<256x8xf32>
    %132 = arith.truncf %131 : vector<256x8xf32> to vector<256x8xbf16>
    %c0_100 = arith.constant 0 : index
    %c0_101 = arith.constant 0 : index
    %133 = vector.load %arg6[%c0_100, %c0_101] : memref<8x8xf32, #tpu.memory_space<vmem>>, vector<8x8xf32>
    %134 = arith.truncf %133 : vector<8x8xf32> to vector<8x8xbf16>
    %cst_102 = arith.constant dense<0.000000e+00> : vector<256x8xf32>
    %135 = tpu.matmul %132, %134, %cst_102 {dimension_numbers = #tpu.dot_dimension_numbers<[1], [0], [0], [1], [0, 0, 1, 1], [], []>} : vector<256x8xbf16>, vector<8x8xbf16>, vector<256x8xf32> -> vector<256x8xf32>
    %c0_103 = arith.constant 0 : index
    %c0_104 = arith.constant 0 : index
    %136 = vector.load %arg7[%c0_103, %c0_104] : memref<1x8xf32, #tpu.memory_space<vmem>>, vector<1x8xf32>
    %137 = vector.broadcast %136 : vector<1x8xf32> to vector<256x8xf32>
    %138 = arith.addf %135, %137 : vector<256x8xf32>
    %cst_105 = arith.constant 0.000000e+00 : f32
    %139 = vector.broadcast %cst_105 : f32 to vector<256x8xf32>
    %140 = arith.maximumf %138, %139 : vector<256x8xf32>
    %cst_106 = arith.constant 0.000000e+00 : f32
    %141 = vector.broadcast %cst_106 : f32 to vector<18x18x8xf32>
    %c0_107 = arith.constant 0 : index
    %c0_108 = arith.constant 0 : index
    %c0_109 = arith.constant 0 : index
    %142 = vector.load %arg14[%c0_107, %c0_108, %c0_109] : memref<18x18x8xf32, #tpu.memory_space<vmem>>, vector<18x18x8xf32>
    tpu.vector_store %arg14[%c0_107, %c0_108, %c0_109], %141 {strides = array<i32>} : memref<18x18x8xf32, #tpu.memory_space<vmem>>, vector<18x18x8xf32>,
    %143 = vector.shape_cast %140 : vector<256x8xf32> to vector<16x16x8xf32>
    %c1_110 = arith.constant 1 : index
    %c1_111 = arith.constant 1 : index
    %c0_112 = arith.constant 0 : index
    %144 = vector.load %arg14[%c1_110, %c1_111, %c0_112] : memref<18x18x8xf32, #tpu.memory_space<vmem>>, vector<16x16x8xf32>
    tpu.vector_store %arg14[%c1_110, %c1_111, %c0_112], %143 {strides = array<i32>} : memref<18x18x8xf32, #tpu.memory_space<vmem>>, vector<16x16x8xf32>,
    %cst_113 = arith.constant 0.000000e+00 : f32
    %145 = vector.broadcast %cst_113 : f32 to vector<256x8xf32>
    %c0_114 = arith.constant 0 : index
    %c0_115 = arith.constant 0 : index
    %c0_116 = arith.constant 0 : index
    %146 = vector.load %arg14[%c0_114, %c0_115, %c0_116] : memref<18x18x8xf32, #tpu.memory_space<vmem>>, vector<16x16x8xf32>
    %147 = vector.shape_cast %146 : vector<16x16x8xf32> to vector<256x8xf32>
    %148 = arith.truncf %147 : vector<256x8xf32> to vector<256x8xbf16>
    %c0_117 = arith.constant 0 : index
    %c0_118 = arith.constant 0 : index
    %c0_119 = arith.constant 0 : index
    %c0_120 = arith.constant 0 : index
    %149 = vector.load %arg8[%c0_117, %c0_118, %c0_119, %c0_120] : memref<3x3x8x8xf32, #tpu.memory_space<vmem>>, vector<1x1x8x8xf32>
    %150 = vector.shape_cast %149 : vector<1x1x8x8xf32> to vector<8x8xf32>
    %151 = arith.truncf %150 : vector<8x8xf32> to vector<8x8xbf16>
    %cst_121 = arith.constant dense<0.000000e+00> : vector<256x8xf32>
    %152 = tpu.matmul %148, %151, %cst_121 {dimension_numbers = #tpu.dot_dimension_numbers<[1], [0], [0], [1], [0, 0, 1, 1], [], []>} : vector<256x8xbf16>, vector<8x8xbf16>, vector<256x8xf32> -> vector<256x8xf32>
    %153 = arith.addf %145, %152 : vector<256x8xf32>
    %c0_122 = arith.constant 0 : index
    %c1_123 = arith.constant 1 : index
    %c0_124 = arith.constant 0 : index
    %154 = vector.load %arg14[%c0_122, %c1_123, %c0_124] : memref<18x18x8xf32, #tpu.memory_space<vmem>>, vector<16x16x8xf32>
    %155 = vector.shape_cast %154 : vector<16x16x8xf32> to vector<256x8xf32>
    %156 = arith.truncf %155 : vector<256x8xf32> to vector<256x8xbf16>
    %c0_125 = arith.constant 0 : index
    %c1_126 = arith.constant 1 : index
    %c0_127 = arith.constant 0 : index
    %c0_128 = arith.constant 0 : index
    %157 = vector.load %arg8[%c0_125, %c1_126, %c0_127, %c0_128] : memref<3x3x8x8xf32, #tpu.memory_space<vmem>>, vector<1x1x8x8xf32>
    %158 = vector.shape_cast %157 : vector<1x1x8x8xf32> to vector<8x8xf32>
    %159 = arith.truncf %158 : vector<8x8xf32> to vector<8x8xbf16>
    %cst_129 = arith.constant dense<0.000000e+00> : vector<256x8xf32>
    %160 = tpu.matmul %156, %159, %cst_129 {dimension_numbers = #tpu.dot_dimension_numbers<[1], [0], [0], [1], [0, 0, 1, 1], [], []>} : vector<256x8xbf16>, vector<8x8xbf16>, vector<256x8xf32> -> vector<256x8xf32>
    %161 = arith.addf %153, %160 : vector<256x8xf32>
    %c0_130 = arith.constant 0 : index
    %c2_131 = arith.constant 2 : index
    %c0_132 = arith.constant 0 : index
    %162 = vector.load %arg14[%c0_130, %c2_131, %c0_132] : memref<18x18x8xf32, #tpu.memory_space<vmem>>, vector<16x16x8xf32>
    %163 = vector.shape_cast %162 : vector<16x16x8xf32> to vector<256x8xf32>
    %164 = arith.truncf %163 : vector<256x8xf32> to vector<256x8xbf16>
    %c0_133 = arith.constant 0 : index
    %c2_134 = arith.constant 2 : index
    %c0_135 = arith.constant 0 : index
    %c0_136 = arith.constant 0 : index
    %165 = vector.load %arg8[%c0_133, %c2_134, %c0_135, %c0_136] : memref<3x3x8x8xf32, #tpu.memory_space<vmem>>, vector<1x1x8x8xf32>
    %166 = vector.shape_cast %165 : vector<1x1x8x8xf32> to vector<8x8xf32>
    %167 = arith.truncf %166 : vector<8x8xf32> to vector<8x8xbf16>
    %cst_137 = arith.constant dense<0.000000e+00> : vector<256x8xf32>
    %168 = tpu.matmul %164, %167, %cst_137 {dimension_numbers = #tpu.dot_dimension_numbers<[1], [0], [0], [1], [0, 0, 1, 1], [], []>} : vector<256x8xbf16>, vector<8x8xbf16>, vector<256x8xf32> -> vector<256x8xf32>
    %169 = arith.addf %161, %168 : vector<256x8xf32>
    %c1_138 = arith.constant 1 : index
    %c0_139 = arith.constant 0 : index
    %c0_140 = arith.constant 0 : index
    %170 = vector.load %arg14[%c1_138, %c0_139, %c0_140] : memref<18x18x8xf32, #tpu.memory_space<vmem>>, vector<16x16x8xf32>
    %171 = vector.shape_cast %170 : vector<16x16x8xf32> to vector<256x8xf32>
    %172 = arith.truncf %171 : vector<256x8xf32> to vector<256x8xbf16>
    %c1_141 = arith.constant 1 : index
    %c0_142 = arith.constant 0 : index
    %c0_143 = arith.constant 0 : index
    %c0_144 = arith.constant 0 : index
    %173 = vector.load %arg8[%c1_141, %c0_142, %c0_143, %c0_144] : memref<3x3x8x8xf32, #tpu.memory_space<vmem>>, vector<1x1x8x8xf32>
    %174 = vector.shape_cast %173 : vector<1x1x8x8xf32> to vector<8x8xf32>
    %175 = arith.truncf %174 : vector<8x8xf32> to vector<8x8xbf16>
    %cst_145 = arith.constant dense<0.000000e+00> : vector<256x8xf32>
    %176 = tpu.matmul %172, %175, %cst_145 {dimension_numbers = #tpu.dot_dimension_numbers<[1], [0], [0], [1], [0, 0, 1, 1], [], []>} : vector<256x8xbf16>, vector<8x8xbf16>, vector<256x8xf32> -> vector<256x8xf32>
    %177 = arith.addf %169, %176 : vector<256x8xf32>
    %c1_146 = arith.constant 1 : index
    %c1_147 = arith.constant 1 : index
    %c0_148 = arith.constant 0 : index
    %178 = vector.load %arg14[%c1_146, %c1_147, %c0_148] : memref<18x18x8xf32, #tpu.memory_space<vmem>>, vector<16x16x8xf32>
    %179 = vector.shape_cast %178 : vector<16x16x8xf32> to vector<256x8xf32>
    %180 = arith.truncf %179 : vector<256x8xf32> to vector<256x8xbf16>
    %c1_149 = arith.constant 1 : index
    %c1_150 = arith.constant 1 : index
    %c0_151 = arith.constant 0 : index
    %c0_152 = arith.constant 0 : index
    %181 = vector.load %arg8[%c1_149, %c1_150, %c0_151, %c0_152] : memref<3x3x8x8xf32, #tpu.memory_space<vmem>>, vector<1x1x8x8xf32>
    %182 = vector.shape_cast %181 : vector<1x1x8x8xf32> to vector<8x8xf32>
    %183 = arith.truncf %182 : vector<8x8xf32> to vector<8x8xbf16>
    %cst_153 = arith.constant dense<0.000000e+00> : vector<256x8xf32>
    %184 = tpu.matmul %180, %183, %cst_153 {dimension_numbers = #tpu.dot_dimension_numbers<[1], [0], [0], [1], [0, 0, 1, 1], [], []>} : vector<256x8xbf16>, vector<8x8xbf16>, vector<256x8xf32> -> vector<256x8xf32>
    %185 = arith.addf %177, %184 : vector<256x8xf32>
    %c1_154 = arith.constant 1 : index
    %c2_155 = arith.constant 2 : index
    %c0_156 = arith.constant 0 : index
    %186 = vector.load %arg14[%c1_154, %c2_155, %c0_156] : memref<18x18x8xf32, #tpu.memory_space<vmem>>, vector<16x16x8xf32>
    %187 = vector.shape_cast %186 : vector<16x16x8xf32> to vector<256x8xf32>
    %188 = arith.truncf %187 : vector<256x8xf32> to vector<256x8xbf16>
    %c1_157 = arith.constant 1 : index
    %c2_158 = arith.constant 2 : index
    %c0_159 = arith.constant 0 : index
    %c0_160 = arith.constant 0 : index
    %189 = vector.load %arg8[%c1_157, %c2_158, %c0_159, %c0_160] : memref<3x3x8x8xf32, #tpu.memory_space<vmem>>, vector<1x1x8x8xf32>
    %190 = vector.shape_cast %189 : vector<1x1x8x8xf32> to vector<8x8xf32>
    %191 = arith.truncf %190 : vector<8x8xf32> to vector<8x8xbf16>
    %cst_161 = arith.constant dense<0.000000e+00> : vector<256x8xf32>
    %192 = tpu.matmul %188, %191, %cst_161 {dimension_numbers = #tpu.dot_dimension_numbers<[1], [0], [0], [1], [0, 0, 1, 1], [], []>} : vector<256x8xbf16>, vector<8x8xbf16>, vector<256x8xf32> -> vector<256x8xf32>
    %193 = arith.addf %185, %192 : vector<256x8xf32>
    %c2_162 = arith.constant 2 : index
    %c0_163 = arith.constant 0 : index
    %c0_164 = arith.constant 0 : index
    %194 = vector.load %arg14[%c2_162, %c0_163, %c0_164] : memref<18x18x8xf32, #tpu.memory_space<vmem>>, vector<16x16x8xf32>
    %195 = vector.shape_cast %194 : vector<16x16x8xf32> to vector<256x8xf32>
    %196 = arith.truncf %195 : vector<256x8xf32> to vector<256x8xbf16>
    %c2_165 = arith.constant 2 : index
    %c0_166 = arith.constant 0 : index
    %c0_167 = arith.constant 0 : index
    %c0_168 = arith.constant 0 : index
    %197 = vector.load %arg8[%c2_165, %c0_166, %c0_167, %c0_168] : memref<3x3x8x8xf32, #tpu.memory_space<vmem>>, vector<1x1x8x8xf32>
    %198 = vector.shape_cast %197 : vector<1x1x8x8xf32> to vector<8x8xf32>
    %199 = arith.truncf %198 : vector<8x8xf32> to vector<8x8xbf16>
    %cst_169 = arith.constant dense<0.000000e+00> : vector<256x8xf32>
    %200 = tpu.matmul %196, %199, %cst_169 {dimension_numbers = #tpu.dot_dimension_numbers<[1], [0], [0], [1], [0, 0, 1, 1], [], []>} : vector<256x8xbf16>, vector<8x8xbf16>, vector<256x8xf32> -> vector<256x8xf32>
    %201 = arith.addf %193, %200 : vector<256x8xf32>
    %c2_170 = arith.constant 2 : index
    %c1_171 = arith.constant 1 : index
    %c0_172 = arith.constant 0 : index
    %202 = vector.load %arg14[%c2_170, %c1_171, %c0_172] : memref<18x18x8xf32, #tpu.memory_space<vmem>>, vector<16x16x8xf32>
    %203 = vector.shape_cast %202 : vector<16x16x8xf32> to vector<256x8xf32>
    %204 = arith.truncf %203 : vector<256x8xf32> to vector<256x8xbf16>
    %c2_173 = arith.constant 2 : index
    %c1_174 = arith.constant 1 : index
    %c0_175 = arith.constant 0 : index
    %c0_176 = arith.constant 0 : index
    %205 = vector.load %arg8[%c2_173, %c1_174, %c0_175, %c0_176] : memref<3x3x8x8xf32, #tpu.memory_space<vmem>>, vector<1x1x8x8xf32>
    %206 = vector.shape_cast %205 : vector<1x1x8x8xf32> to vector<8x8xf32>
    %207 = arith.truncf %206 : vector<8x8xf32> to vector<8x8xbf16>
    %cst_177 = arith.constant dense<0.000000e+00> : vector<256x8xf32>
    %208 = tpu.matmul %204, %207, %cst_177 {dimension_numbers = #tpu.dot_dimension_numbers<[1], [0], [0], [1], [0, 0, 1, 1], [], []>} : vector<256x8xbf16>, vector<8x8xbf16>, vector<256x8xf32> -> vector<256x8xf32>
    %209 = arith.addf %201, %208 : vector<256x8xf32>
    %c2_178 = arith.constant 2 : index
    %c2_179 = arith.constant 2 : index
    %c0_180 = arith.constant 0 : index
    %210 = vector.load %arg14[%c2_178, %c2_179, %c0_180] : memref<18x18x8xf32, #tpu.memory_space<vmem>>, vector<16x16x8xf32>
    %211 = vector.shape_cast %210 : vector<16x16x8xf32> to vector<256x8xf32>
    %212 = arith.truncf %211 : vector<256x8xf32> to vector<256x8xbf16>
    %c2_181 = arith.constant 2 : index
    %c2_182 = arith.constant 2 : index
    %c0_183 = arith.constant 0 : index
    %c0_184 = arith.constant 0 : index
    %213 = vector.load %arg8[%c2_181, %c2_182, %c0_183, %c0_184] : memref<3x3x8x8xf32, #tpu.memory_space<vmem>>, vector<1x1x8x8xf32>
    %214 = vector.shape_cast %213 : vector<1x1x8x8xf32> to vector<8x8xf32>
    %215 = arith.truncf %214 : vector<8x8xf32> to vector<8x8xbf16>
    %cst_185 = arith.constant dense<0.000000e+00> : vector<256x8xf32>
    %216 = tpu.matmul %212, %215, %cst_185 {dimension_numbers = #tpu.dot_dimension_numbers<[1], [0], [0], [1], [0, 0, 1, 1], [], []>} : vector<256x8xbf16>, vector<8x8xbf16>, vector<256x8xf32> -> vector<256x8xf32>
    %217 = arith.addf %209, %216 : vector<256x8xf32>
    %c0_186 = arith.constant 0 : index
    %c0_187 = arith.constant 0 : index
    %218 = vector.load %arg9[%c0_186, %c0_187] : memref<1x8xf32, #tpu.memory_space<vmem>>, vector<1x8xf32>
    %219 = vector.broadcast %218 : vector<1x8xf32> to vector<256x8xf32>
    %220 = arith.addf %217, %219 : vector<256x8xf32>
    %221 = arith.truncf %2 : vector<256x4xf32> to vector<256x4xbf16>
    %c0_188 = arith.constant 0 : index
    %c0_189 = arith.constant 0 : index
    %222 = vector.load %arg10[%c0_188, %c0_189] : memref<4x8xf32, #tpu.memory_space<vmem>>, vector<4x8xf32>
    %223 = arith.truncf %222 : vector<4x8xf32> to vector<4x8xbf16>
    %cst_190 = arith.constant dense<0.000000e+00> : vector<256x8xf32>
    %224 = tpu.matmul %221, %223, %cst_190 {dimension_numbers = #tpu.dot_dimension_numbers<[1], [0], [0], [1], [0, 0, 1, 1], [], []>} : vector<256x4xbf16>, vector<4x8xbf16>, vector<256x8xf32> -> vector<256x8xf32>
    %225 = arith.addf %220, %224 : vector<256x8xf32>
    %c0_191 = arith.constant 0 : index
    %c0_192 = arith.constant 0 : index
    %226 = vector.load %arg11[%c0_191, %c0_192] : memref<1x8xf32, #tpu.memory_space<vmem>>, vector<1x8xf32>
    %227 = vector.broadcast %226 : vector<1x8xf32> to vector<256x8xf32>
    %228 = arith.addf %225, %227 : vector<256x8xf32>
    %229 = vector.shape_cast %228 : vector<256x8xf32> to vector<1x16x16x8xf32>
    %c0_193 = arith.constant 0 : index
    %c0_194 = arith.constant 0 : index
    %c0_195 = arith.constant 0 : index
    %c0_196 = arith.constant 0 : index
    %230 = vector.load %arg12[%c0_193, %c0_194, %c0_195, %c0_196] : memref<1x16x16x8xf32, #tpu.memory_space<vmem>>, vector<1x16x16x8xf32>
    tpu.vector_store %arg12[%c0_193, %c0_194, %c0_195, %c0_196], %229 {strides = array<i32>} : memref<1x16x16x8xf32, #tpu.memory_space<vmem>>, vector<1x16x16x8xf32>,
    return
  }
  func.func @transform_0(%arg0: i32) -> (i32, i32, i32, i32) {
    %c0_i32 = arith.constant 0 : i32
    %c0_i32_0 = arith.constant 0 : i32
    %c0_i32_1 = arith.constant 0 : i32
    %c0_i32_2 = arith.constant 0 : i32
    return %arg0, %c0_i32, %c0_i32_0, %c0_i32_1 : i32, i32, i32, i32
  }
  func.func @transform_1(%arg0: i32) -> (i32, i32) {
    %c0_i32 = arith.constant 0 : i32
    %c0_i32_0 = arith.constant 0 : i32
    %c0_i32_1 = arith.constant 0 : i32
    return %c0_i32, %c0_i32_0 : i32, i32
  }
  func.func @transform_2(%arg0: i32) -> (i32, i32) {
    %c0_i32 = arith.constant 0 : i32
    %c0_i32_0 = arith.constant 0 : i32
    %c0_i32_1 = arith.constant 0 : i32
    return %c0_i32, %c0_i32_0 : i32, i32
  }
  func.func @transform_3(%arg0: i32) -> (i32, i32, i32, i32) {
    %c0_i32 = arith.constant 0 : i32
    %c0_i32_0 = arith.constant 0 : i32
    %c0_i32_1 = arith.constant 0 : i32
    %c0_i32_2 = arith.constant 0 : i32
    %c0_i32_3 = arith.constant 0 : i32
    return %c0_i32, %c0_i32_0, %c0_i32_1, %c0_i32_2 : i32, i32, i32, i32
  }
  func.func @transform_4(%arg0: i32) -> (i32, i32) {
    %c0_i32 = arith.constant 0 : i32
    %c0_i32_0 = arith.constant 0 : i32
    %c0_i32_1 = arith.constant 0 : i32
    return %c0_i32, %c0_i32_0 : i32, i32
  }
  func.func @transform_5(%arg0: i32) -> (i32, i32) {
    %c0_i32 = arith.constant 0 : i32
    %c0_i32_0 = arith.constant 0 : i32
    %c0_i32_1 = arith.constant 0 : i32
    return %c0_i32, %c0_i32_0 : i32, i32
  }
  func.func @transform_6(%arg0: i32) -> (i32, i32) {
    %c0_i32 = arith.constant 0 : i32
    %c0_i32_0 = arith.constant 0 : i32
    %c0_i32_1 = arith.constant 0 : i32
    return %c0_i32, %c0_i32_0 : i32, i32
  }
  func.func @transform_7(%arg0: i32) -> (i32, i32, i32, i32) {
    %c0_i32 = arith.constant 0 : i32
    %c0_i32_0 = arith.constant 0 : i32
    %c0_i32_1 = arith.constant 0 : i32
    %c0_i32_2 = arith.constant 0 : i32
    %c0_i32_3 = arith.constant 0 : i32
    return %c0_i32, %c0_i32_0, %c0_i32_1, %c0_i32_2 : i32, i32, i32, i32
  }
  func.func @transform_8(%arg0: i32) -> (i32, i32) {
    %c0_i32 = arith.constant 0 : i32
    %c0_i32_0 = arith.constant 0 : i32
    %c0_i32_1 = arith.constant 0 : i32
    return %c0_i32, %c0_i32_0 : i32, i32
  }
  func.func @transform_9(%arg0: i32) -> (i32, i32) {
    %c0_i32 = arith.constant 0 : i32
    %c0_i32_0 = arith.constant 0 : i32
    %c0_i32_1 = arith.constant 0 : i32
    return %c0_i32, %c0_i32_0 : i32, i32
  }
  func.func @transform_10(%arg0: i32) -> (i32, i32) {
    %c0_i32 = arith.constant 0 : i32
    %c0_i32_0 = arith.constant 0 : i32
    %c0_i32_1 = arith.constant 0 : i32
    return %c0_i32, %c0_i32_0 : i32, i32
  }
  func.func @transform_11(%arg0: i32) -> (i32, i32, i32, i32) {
    %c0_i32 = arith.constant 0 : i32
    %c0_i32_0 = arith.constant 0 : i32
    %c0_i32_1 = arith.constant 0 : i32
    %c0_i32_2 = arith.constant 0 : i32
    return %arg0, %c0_i32, %c0_i32_0, %c0_i32_1 : i32, i32, i32, i32
  }
}

</mosaic_0001>

<llo_original>
// kernel: tpu_custom_call.1
$region0: #{tpu_custom_call.1}
  #allocation0 [shape = 'u32[]', space=smem, size = 0x4, offset = 0x4, fixed_abs, tag = 'smem constant byte address 0x4 - core index']
  #allocation1 [shape = 'u32[144,128]{1,0:T(1,128)}', space=vmem, size = 0x12000, scoped, tag = 'internal scratch']
  #allocation2 [shape = 'f32[18,18,4]{2,1,0:T(8,128)}', space=vmem, size = 0x36000, scoped, tag = 'scratch operand']
  #allocation3 [shape = 'f32[18,18,8]{2,1,0:T(8,128)}', space=vmem, size = 0x36000, scoped, tag = 'scratch operand']
  %s0 = inlined_call_operand.vmem [shape: f32[2,16,16,4], index: 0, kind: input, shape index: {}]
  %s1 = inlined_call_operand.vmem [shape: f32[4,4], index: 1, kind: input, shape index: {}]
  %s2 = inlined_call_operand.vmem [shape: f32[1,4], index: 2, kind: input, shape index: {}]
  %s3 = inlined_call_operand.vmem [shape: f32[3,3,4,8], index: 3, kind: input, shape index: {}]
  %s4 = inlined_call_operand.vmem [shape: f32[1,8], index: 4, kind: input, shape index: {}]
  %s5 = inlined_call_operand.vmem [shape: f32[8,8], index: 5, kind: input, shape index: {}]
  %s6 = inlined_call_operand.vmem [shape: f32[1,8], index: 6, kind: input, shape index: {}]
  %s7 = inlined_call_operand.vmem [shape: f32[3,3,8,8], index: 7, kind: input, shape index: {}]
  %s8 = inlined_call_operand.vmem [shape: f32[1,8], index: 8, kind: input, shape index: {}]
  %s9 = inlined_call_operand.vmem [shape: f32[4,8], index: 9, kind: input, shape index: {}]
  %s10 = inlined_call_operand.vmem [shape: f32[1,8], index: 10, kind: input, shape index: {}]
  %s11 = inlined_call_operand.vmem [shape: f32[2,16,16,8], index: 11, kind: output, shape index: {}]
  %s12 = sld [smem:[#allocation0]]
  $region77: #{tpu_custom_call.1} parent=0
    _
  %s14 = ssub.s32 1, %s12
  %s15 = scalar_select 0, %s14, %s12
  loop: start=0, step=1, limit=4
  $region2: #{tpu_custom_call.1} parent=0 // loop_pre_header
    _
  $region3: #{tpu_custom_call.1} parent=0 // loop_header
    %s17 = sphi 0, %s21
    %p18 = scmp.ge.s32.totalorder %s17, 4
    %s27 = sphi 0, %s29
    %s30 = sphi 0, %s27
    %s31 = sphi 0, %s30
    %s47 = sphi 0, %s31
    %s51 = sphi 0, %s51
    %s53 = sphi 0, %s51
    %s54 = sphi 0, %s53
    %s68 = sphi 0, %s54
    %s72 = sphi 0, %s72
    %s74 = sphi 0, %s72
    %s75 = sphi 0, %s74
    %s89 = sphi 0, %s75
    %s93 = sphi 0, %s93
    %s95 = sphi 0, %s93
    %s96 = sphi 0, %s95
    %s110 = sphi 0, %s96
    %s114 = sphi 0, %s114
    %s116 = sphi 0, %s114
    %s117 = sphi 0, %s116
    %s131 = sphi 0, %s117
    %s135 = sphi 0, %s135
    %s137 = sphi 0, %s135
    %s138 = sphi 0, %s137
    %s152 = sphi 0, %s138
    %s156 = sphi 0, %s156
    %s158 = sphi 0, %s156
    %s159 = sphi 0, %s158
    %s173 = sphi 0, %s159
    %s177 = sphi 0, %s177
    %s179 = sphi 0, %s177
    %s180 = sphi 0, %s179
    %s194 = sphi 0, %s180
    %s198 = sphi 0, %s198
    %s200 = sphi 0, %s198
    %s201 = sphi 0, %s200
    %s215 = sphi 0, %s201
    %s219 = sphi 0, %s219
    %s221 = sphi 0, %s219
    %s222 = sphi 0, %s221
    %s236 = sphi 0, %s222
    %s240 = sphi 0, %s240
    %s242 = sphi 0, %s240
    %s243 = sphi 0, %s242
    %s257 = sphi 0, %s243
    %s263 = sphi 0, %s265
    %s266 = sphi 0, %s263
    %s267 = sphi 0, %s266
    %s283 = sphi 0, %s267
  $region4: #{tpu_custom_call.1} parent=0 // loop_header_branch
    %20 = sbr.rel (%p18) target = $region8
  $region5: #{tpu_custom_call.1} parent=0 // loop_body
    %s22 = ssub.s32 %s17, 1
    %s23 = ssub.s32 %s17, 2
    %s24 = sadd.s32 %s17, 1
    %s25 = ssub.s32 %s17, %s24
    %p26 = scmp.eq.s32.totalorder %s25, 0
    %s28 = sadd.s32 %s27, 1
    %s29 = scalar_select %p26, %s27, %s28
    %p32 = pneg %p26
    %p33 = scmp.eq.s32.totalorder %s17, 1
    %p34 = por %p32, %p33
    %p35 = scmp.ne.s32.totalorder %s27, %s30
    %p36 = scmp.eq.s32.totalorder %s17, 0
    %p37 = por %p35, %p36
    %p38 = scmp.ne.s32.totalorder %s27, %s30
    %p39 = scmp.eq.s32.totalorder %s22, 1
    %p40 = por %p38, %p39
    %p41 = scmp.ne.s32.totalorder %s30, %s31
    %p42 = scmp.eq.s32.totalorder %s22, 0
    %p43 = por %p41, %p42
    %p44 = scmp.ne.s32.totalorder %s30, %s31
    %p45 = scmp.eq.s32.totalorder %s23, 1
    %p46 = por %p44, %p45
    %p48 = scmp.ne.s32.totalorder %s31, %s47
    %p49 = scmp.eq.s32.totalorder %s23, 0
    %p50 = por %p48, %p49
    %s52 = sadd.s32 %s51, 1
    %p55 = scmp.eq.s32.totalorder %s17, 1
    %p56 = scmp.ne.s32.totalorder %s51, %s53
    %p57 = scmp.eq.s32.totalorder %s17, 0
    %p58 = por %p56, %p57
    %p59 = scmp.ne.s32.totalorder %s51, %s53
    %p60 = scmp.eq.s32.totalorder %s22, 1
    %p61 = por %p59, %p60
    %p62 = scmp.ne.s32.totalorder %s53, %s54
    %p63 = scmp.eq.s32.totalorder %s22, 0
    %p64 = por %p62, %p63
    %p65 = scmp.ne.s32.totalorder %s53, %s54
    %p66 = scmp.eq.s32.totalorder %s23, 1
    %p67 = por %p65, %p66
    %p69 = scmp.ne.s32.totalorder %s54, %s68
    %p70 = scmp.eq.s32.totalorder %s23, 0
    %p71 = por %p69, %p70
    %s73 = sadd.s32 %s72, 1
    %p76 = scmp.eq.s32.totalorder %s17, 1
    %p77 = scmp.ne.s32.totalorder %s72, %s74
    %p78 = scmp.eq.s32.totalorder %s17, 0
    %p79 = por %p77, %p78
    %p80 = scmp.ne.s32.totalorder %s72, %s74
    %p81 = scmp.eq.s32.totalorder %s22, 1
    %p82 = por %p80, %p81
    %p83 = scmp.ne.s32.totalorder %s74, %s75
    %p84 = scmp.eq.s32.totalorder %s22, 0
    %p85 = por %p83, %p84
    %p86 = scmp.ne.s32.totalorder %s74, %s75
    %p87 = scmp.eq.s32.totalorder %s23, 1
    %p88 = por %p86, %p87
    %p90 = scmp.ne.s32.totalorder %s75, %s89
    %p91 = scmp.eq.s32.totalorder %s23, 0
    %p92 = por %p90, %p91
    %s94 = sadd.s32 %s93, 1
    %p97 = scmp.eq.s32.totalorder %s17, 1
    %p98 = scmp.ne.s32.totalorder %s93, %s95
    %p99 = scmp.eq.s32.totalorder %s17, 0
    %p100 = por %p98, %p99
    %p101 = scmp.ne.s32.totalorder %s93, %s95
    %p102 = scmp.eq.s32.totalorder %s22, 1
    %p103 = por %p101, %p102
    %p104 = scmp.ne.s32.totalorder %s95, %s96
    %p105 = scmp.eq.s32.totalorder %s22, 0
    %p106 = por %p104, %p105
    %p107 = scmp.ne.s32.totalorder %s95, %s96
    %p108 = scmp.eq.s32.totalorder %s23, 1
    %p109 = por %p107, %p108
    %p111 = scmp.ne.s32.totalorder %s96, %s110
    %p112 = scmp.eq.s32.totalorder %s23, 0
    %p113 = por %p111, %p112
    %s115 = sadd.s32 %s114, 1
    %p118 = scmp.eq.s32.totalorder %s17, 1
    %p119 = scmp.ne.s32.totalorder %s114, %s116
    %p120 = scmp.eq.s32.totalorder %s17, 0
    %p121 = por %p119, %p120
    %p122 = scmp.ne.s32.totalorder %s114, %s116
    %p123 = scmp.eq.s32.totalorder %s22, 1
    %p124 = por %p122, %p123
    %p125 = scmp.ne.s32.totalorder %s116, %s117
    %p126 = scmp.eq.s32.totalorder %s22, 0
    %p127 = por %p125, %p126
    %p128 = scmp.ne.s32.totalorder %s116, %s117
    %p129 = scmp.eq.s32.totalorder %s23, 1
    %p130 = por %p128, %p129
    %p132 = scmp.ne.s32.totalorder %s117, %s131
    %p133 = scmp.eq.s32.totalorder %s23, 0
    %p134 = por %p132, %p133
    %s136 = sadd.s32 %s135, 1
    %p139 = scmp.eq.s32.totalorder %s17, 1
    %p140 = scmp.ne.s32.totalorder %s135, %s137
    %p141 = scmp.eq.s32.totalorder %s17, 0
    %p142 = por %p140, %p141
    %p143 = scmp.ne.s32.totalorder %s135, %s137
    %p144 = scmp.eq.s32.totalorder %s22, 1
    %p145 = por %p143, %p144
    %p146 = scmp.ne.s32.totalorder %s137, %s138
    %p147 = scmp.eq.s32.totalorder %s22, 0
    %p148 = por %p146, %p147
    %p149 = scmp.ne.s32.totalorder %s137, %s138
    %p150 = scmp.eq.s32.totalorder %s23, 1
    %p151 = por %p149, %p150
    %p153 = scmp.ne.s32.totalorder %s138, %s152
    %p154 = scmp.eq.s32.totalorder %s23, 0
    %p155 = por %p153, %p154
    %s157 = sadd.s32 %s156, 1
    %p160 = scmp.eq.s32.totalorder %s17, 1
    %p161 = scmp.ne.s32.totalorder %s156, %s158
    %p162 = scmp.eq.s32.totalorder %s17, 0
    %p163 = por %p161, %p162
    %p164 = scmp.ne.s32.totalorder %s156, %s158
    %p165 = scmp.eq.s32.totalorder %s22, 1
    %p166 = por %p164, %p165
    %p167 = scmp.ne.s32.totalorder %s158, %s159
    %p168 = scmp.eq.s32.totalorder %s22, 0
    %p169 = por %p167, %p168
    %p170 = scmp.ne.s32.totalorder %s158, %s159
    %p171 = scmp.eq.s32.totalorder %s23, 1
    %p172 = por %p170, %p171
    %p174 = scmp.ne.s32.totalorder %s159, %s173
    %p175 = scmp.eq.s32.totalorder %s23, 0
    %p176 = por %p174, %p175
    %s178 = sadd.s32 %s177, 1
    %p181 = scmp.eq.s32.totalorder %s17, 1
    %p182 = scmp.ne.s32.totalorder %s177, %s179
    %p183 = scmp.eq.s32.totalorder %s17, 0
    %p184 = por %p182, %p183
    %p185 = scmp.ne.s32.totalorder %s177, %s179
    %p186 = scmp.eq.s32.totalorder %s22, 1
    %p187 = por %p185, %p186
    %p188 = scmp.ne.s32.totalorder %s179, %s180
    %p189 = scmp.eq.s32.totalorder %s22, 0
    %p190 = por %p188, %p189
    %p191 = scmp.ne.s32.totalorder %s179, %s180
    %p192 = scmp.eq.s32.totalorder %s23, 1
    %p193 = por %p191, %p192
    %p195 = scmp.ne.s32.totalorder %s180, %s194
    %p196 = scmp.eq.s32.totalorder %s23, 0
    %p197 = por %p195, %p196
    %s199 = sadd.s32 %s198, 1
    %p202 = scmp.eq.s32.totalorder %s17, 1
    %p203 = scmp.ne.s32.totalorder %s198, %s200
    %p204 = scmp.eq.s32.totalorder %s17, 0
    %p205 = por %p203, %p204
    %p206 = scmp.ne.s32.totalorder %s198, %s200
    %p207 = scmp.eq.s32.totalorder %s22, 1
    %p208 = por %p206, %p207
    %p209 = scmp.ne.s32.totalorder %s200, %s201
    %p210 = scmp.eq.s32.totalorder %s22, 0
    %p211 = por %p209, %p210
    %p212 = scmp.ne.s32.totalorder %s200, %s201
    %p213 = scmp.eq.s32.totalorder %s23, 1
    %p214 = por %p212, %p213
    %p216 = scmp.ne.s32.totalorder %s201, %s215
    %p217 = scmp.eq.s32.totalorder %s23, 0
    %p218 = por %p216, %p217
    %s220 = sadd.s32 %s219, 1
    %p223 = scmp.eq.s32.totalorder %s17, 1
    %p224 = scmp.ne.s32.totalorder %s219, %s221
    %p225 = scmp.eq.s32.totalorder %s17, 0
    %p226 = por %p224, %p225
    %p227 = scmp.ne.s32.totalorder %s219, %s221
    %p228 = scmp.eq.s32.totalorder %s22, 1
    %p229 = por %p227, %p228
    %p230 = scmp.ne.s32.totalorder %s221, %s222
    %p231 = scmp.eq.s32.totalorder %s22, 0
    %p232 = por %p230, %p231
    %p233 = scmp.ne.s32.totalorder %s221, %s222
    %p234 = scmp.eq.s32.totalorder %s23, 1
    %p235 = por %p233, %p234
    %p237 = scmp.ne.s32.totalorder %s222, %s236
    %p238 = scmp.eq.s32.totalorder %s23, 0
    %p239 = por %p237, %p238
    %s241 = sadd.s32 %s240, 1
    %p244 = scmp.eq.s32.totalorder %s17, 1
    %p245 = scmp.ne.s32.totalorder %s240, %s242
    %p246 = scmp.eq.s32.totalorder %s17, 0
    %p247 = por %p245, %p246
    %p248 = scmp.ne.s32.totalorder %s240, %s242
    %p249 = scmp.eq.s32.totalorder %s22, 1
    %p250 = por %p248, %p249
    %p251 = scmp.ne.s32.totalorder %s242, %s243
    %p252 = scmp.eq.s32.totalorder %s22, 0
    %p253 = por %p251, %p252
    %p254 = scmp.ne.s32.totalorder %s242, %s243
    %p255 = scmp.eq.s32.totalorder %s23, 1
    %p256 = por %p254, %p255
    %p258 = scmp.ne.s32.totalorder %s243, %s257
    %p259 = scmp.eq.s32.totalorder %s23, 0
    %p260 = por %p258, %p259
    %s261 = ssub.s32 %s17, %s24
    %p262 = scmp.eq.s32.totalorder %s261, 0
    %s264 = sadd.s32 %s263, 1
    %s265 = scalar_select %p262, %s263, %s264
    %p268 = pneg %p262
    %p269 = scmp.eq.s32.totalorder %s17, 1
    %p270 = por %p268, %p269
    %p271 = scmp.ne.s32.totalorder %s263, %s266
    %p272 = scmp.eq.s32.totalorder %s17, 0
    %p273 = por %p271, %p272
    %p274 = scmp.ne.s32.totalorder %s263, %s266
    %p275 = scmp.eq.s32.totalorder %s22, 1
    %p276 = por %p274, %p275
    %p277 = scmp.ne.s32.totalorder %s266, %s267
    %p278 = scmp.eq.s32.totalorder %s22, 0
    %p279 = por %p277, %p278
    %p280 = scmp.ne.s32.totalorder %s266, %s267
    %p281 = scmp.eq.s32.totalorder %s23, 1
    %p282 = por %p280, %p281
    %p284 = scmp.ne.s32.totalorder %s267, %s283
    %p285 = scmp.eq.s32.totalorder %s23, 0
    %p286 = por %p284, %p285
    %p287 = scmp.le.s32.totalorder 1, %s17
    %p288 = scmp.lt.s32.totalorder %s17, 3
    %p289 = pnand %p287, %p288
    %p290 = pneg %p289
    // Predicated region
    $region9: #{tpu_custom_call.1} parent=5 // pred_check
      _
    $region10: #{tpu_custom_call.1} parent=5 // pred_check_branch
      %292 = sbr.rel (%p289) target = $region12
    $region11: #{tpu_custom_call.1} parent=5 // pred_region
      %s293 = ssub.s32 %s17, 1
      // Predicated region
      $region13: #{tpu_custom_call.1} parent=11 // pred_check
        %p294 = pneg %p64
      $region14: #{tpu_custom_call.1} parent=11 // pred_check_branch
        %296 = sbr.rel (%p294) target = $region16
      $region15: #{tpu_custom_call.1} parent=11 // pred_region
        _
      $region16: #{tpu_custom_call.1} parent=11 // pred_fallthru
        _
      // Predicated region
      $region17: #{tpu_custom_call.1} parent=11 // pred_check
        %p297 = pneg %p85
      $region18: #{tpu_custom_call.1} parent=11 // pred_check_branch
        %299 = sbr.rel (%p297) target = $region20
      $region19: #{tpu_custom_call.1} parent=11 // pred_region
        _
      $region20: #{tpu_custom_call.1} parent=11 // pred_fallthru
        _
      // Predicated region
      $region21: #{tpu_custom_call.1} parent=11 // pred_check
        %p300 = pneg %p106
      $region22: #{tpu_custom_call.1} parent=11 // pred_check_branch
        %302 = sbr.rel (%p300) target = $region24
      $region23: #{tpu_custom_call.1} parent=11 // pred_region
        _
      $region24: #{tpu_custom_call.1} parent=11 // pred_fallthru
        _
      // Predicated region
      $region25: #{tpu_custom_call.1} parent=11 // pred_check
        %p303 = pneg %p127
      $region26: #{tpu_custom_call.1} parent=11 // pred_check_branch
        %305 = sbr.rel (%p303) target = $region28
      $region27: #{tpu_custom_call.1} parent=11 // pred_region
        _
      $region28: #{tpu_custom_call.1} parent=11 // pred_fallthru
        _
      // Predicated region
      $region29: #{tpu_custom_call.1} parent=11 // pred_check
        %p306 = pneg %p148
      $region30: #{tpu_custom_call.1} parent=11 // pred_check_branch
        %308 = sbr.rel (%p306) target = $region32
      $region31: #{tpu_custom_call.1} parent=11 // pred_region
        _
      $region32: #{tpu_custom_call.1} parent=11 // pred_fallthru
        _
      // Predicated region
      $region33: #{tpu_custom_call.1} parent=11 // pred_check
        %p309 = pneg %p169
      $region34: #{tpu_custom_call.1} parent=11 // pred_check_branch
        %311 = sbr.rel (%p309) target = $region36
      $region35: #{tpu_custom_call.1} parent=11 // pred_region
        _
      $region36: #{tpu_custom_call.1} parent=11 // pred_fallthru
        _
      // Predicated region
      $region37: #{tpu_custom_call.1} parent=11 // pred_check
        %p312 = pneg %p190
      $region38: #{tpu_custom_call.1} parent=11 // pred_check_branch
        %314 = sbr.rel (%p312) target = $region40
      $region39: #{tpu_custom_call.1} parent=11 // pred_region
        _
      $region40: #{tpu_custom_call.1} parent=11 // pred_fallthru
        _
      // Predicated region
      $region41: #{tpu_custom_call.1} parent=11 // pred_check
        %p315 = pneg %p211
      $region42: #{tpu_custom_call.1} parent=11 // pred_check_branch
        %317 = sbr.rel (%p315) target = $region44
      $region43: #{tpu_custom_call.1} parent=11 // pred_region
        _
      $region44: #{tpu_custom_call.1} parent=11 // pred_fallthru
        _
      // Predicated region
      $region45: #{tpu_custom_call.1} parent=11 // pred_check
        %p318 = pneg %p232
      $region46: #{tpu_custom_call.1} parent=11 // pred_check_branch
        %320 = sbr.rel (%p318) target = $region48
      $region47: #{tpu_custom_call.1} parent=11 // pred_region
        _
      $region48: #{tpu_custom_call.1} parent=11 // pred_fallthru
        _
      // Predicated region
      $region49: #{tpu_custom_call.1} parent=11 // pred_check
        %p321 = pneg %p253
      $region50: #{tpu_custom_call.1} parent=11 // pred_check_branch
        %323 = sbr.rel (%p321) target = $region52
      $region51: #{tpu_custom_call.1} parent=11 // pred_region
        _
      $region52: #{tpu_custom_call.1} parent=11 // pred_fallthru
        _
    $region12: #{tpu_custom_call.1} parent=5 // pred_fallthru
      _
    %p324 = scmp.lt.s32.totalorder %s17, 2
    // Predicated region
    $region53: #{tpu_custom_call.1} parent=5 // pred_check
      %p325 = pneg %p324
    $region54: #{tpu_custom_call.1} parent=5 // pred_check_branch
      %327 = sbr.rel (%p325) target = $region56
    $region55: #{tpu_custom_call.1} parent=5 // pred_region
      // Predicated region
      $region57: #{tpu_custom_call.1} parent=55 // pred_check
        %p328 = pneg %p37
      $region58: #{tpu_custom_call.1} parent=55 // pred_check_branch
        %330 = sbr.rel (%p328) target = $region60
      $region59: #{tpu_custom_call.1} parent=55 // pred_region
        %p331 = scmp.lt.s32.totalorder %s17, 1
        %s332 = scalar_select %p331, %s17, 1
        %s333 = smul.addr %s332, 32
        %s334 = smul.addr %s333, 8
        %s335 = scalar_lea.vmem %s0, %s334
      $region60: #{tpu_custom_call.1} parent=55 // pred_fallthru
        _
    $region56: #{tpu_custom_call.1} parent=5 // pred_fallthru
      _
    %p336 = scmp.le.s32.totalorder 1, %s17
    %p337 = scmp.lt.s32.totalorder %s17, 3
    %p338 = pnand %p336, %p337
    %p339 = pneg %p338
    // Predicated region
    $region61: #{tpu_custom_call.1} parent=5 // pred_check
      _
    $region62: #{tpu_custom_call.1} parent=5 // pred_check_branch
      %341 = sbr.rel (%p338) target = $region64
    $region63: #{tpu_custom_call.1} parent=5 // pred_region
      %s342 = ssub.s32 %s17, 1
      %p343 = scmp.lt.s32.totalorder %s22, 1
      %s344 = scalar_select %p343, %s22, 1
      %s345 = smul.addr %s344, 32
      %s346 = smul.addr %s345, 8
      %s347 = scalar_lea.vmem %s0, %s346
      %p348 = pneg %p43
      %p349 = pneg %p40
      %p350 = pneg %p64
      %p351 = pneg %p61
      %p352 = pneg %p85
      %p353 = pneg %p82
      %p354 = pneg %p106
      %p355 = pneg %p103
      %p356 = pneg %p127
      %p357 = pneg %p124
      %p358 = pneg %p148
      %p359 = pneg %p145
      %p360 = pneg %p169
      %p361 = pneg %p166
      %p362 = pneg %p190
      %p363 = pneg %p187
      %p364 = pneg %p211
      %p365 = pneg %p208
      %p366 = pneg %p232
      %p367 = pneg %p229
      %p368 = pneg %p253
      %p369 = pneg %p250
      %p370 = pneg %p279
      %p371 = pneg %p276
      %p372 = scmp.lt.s32.totalorder %s22, 1
      %s373 = scalar_select %p372, %s22, 1
      %s374 = smul.addr %s373, 32
      %s375 = smul.addr %s374, 8
      %s376 = scalar_lea.vmem %s11, %s375
      %p377 = scmp.lt.s32.totalorder %s22, 1
      %s378 = scalar_select %p377, %s22, 1
      %s379 = smul.addr %s378, 32
      %s380 = smul.addr %s379, 8
      %s381 = scalar_lea.vmem %s0, %s380
      %p382 = scmp.lt.s32.totalorder %s22, 1
      %s383 = scalar_select %p382, %s22, 1
      %s384 = smul.addr %s383, 32
      %s385 = smul.addr %s384, 8
      %s386 = scalar_lea.vmem %s11, %s385
      %v388 = vld [vmem:[%s381] sm:$0xff]
      %v389 = vld [vmem:[%s381 + $0x8] sm:$0xff]
      %v390 = vld [vmem:[%s381 + $0x10] sm:$0xff]
      %v391 = vld [vmem:[%s381 + $0x18] sm:$0xff]
      %v392 = vld [vmem:[%s381 + $0x20] sm:$0xff]
      %v393 = vld [vmem:[%s381 + $0x28] sm:$0xff]
      %v394 = vld [vmem:[%s381 + $0x30] sm:$0xff]
      %v395 = vld [vmem:[%s381 + $0x38] sm:$0xff]
      %v396 = vld [vmem:[%s381 + $0x40] sm:$0xff]
      %v397 = vld [vmem:[%s381 + $0x48] sm:$0xff]
      %v398 = vld [vmem:[%s381 + $0x50] sm:$0xff]
      %v399 = vld [vmem:[%s381 + $0x58] sm:$0xff]
      %v400 = vld [vmem:[%s381 + $0x60] sm:$0xff]
      %v401 = vld [vmem:[%s381 + $0x68] sm:$0xff]
      %v402 = vld [vmem:[%s381 + $0x70] sm:$0xff]
      %v403 = vld [vmem:[%s381 + $0x78] sm:$0xff]
      %v404 = vld [vmem:[%s381 + $0x80] sm:$0xff]
      %v405 = vld [vmem:[%s381 + $0x88] sm:$0xff]
      %v406 = vld [vmem:[%s381 + $0x90] sm:$0xff]
      %v407 = vld [vmem:[%s381 + $0x98] sm:$0xff]
      %v408 = vld [vmem:[%s381 + $0xa0] sm:$0xff]
      %v409 = vld [vmem:[%s381 + $0xa8] sm:$0xff]
      %v410 = vld [vmem:[%s381 + $0xb0] sm:$0xff]
      %v411 = vld [vmem:[%s381 + $0xb8] sm:$0xff]
      %v412 = vld [vmem:[%s381 + $0xc0] sm:$0xff]
      %v413 = vld [vmem:[%s381 + $0xc8] sm:$0xff]
      %v414 = vld [vmem:[%s381 + $0xd0] sm:$0xff]
      %v415 = vld [vmem:[%s381 + $0xd8] sm:$0xff]
      %v416 = vld [vmem:[%s381 + $0xe0] sm:$0xff]
      %v417 = vld [vmem:[%s381 + $0xe8] sm:$0xff]
      %v418 = vld [vmem:[%s381 + $0xf0] sm:$0xff]
      %v419 = vld [vmem:[%s381 + $0xf8] sm:$0xff]
      %vm420 = vcmask 31744
      %v421 = vsel %vm420, %v388, 0.0
      %v422 = vsel %vm420, %v389, 0.0
      %v423 = vadd.f32 %v421, %v422
      %v424 = vsel %vm420, %v390, 0.0
      %v425 = vadd.f32 %v423, %v424
      %v426 = vsel %vm420, %v391, 0.0
      %v427 = vadd.f32 %v425, %v426
      %v428 = vsel %vm420, %v392, 0.0
      %v429 = vadd.f32 %v427, %v428
      %v430 = vsel %vm420, %v393, 0.0
      %v431 = vadd.f32 %v429, %v430
      %v432 = vsel %vm420, %v394, 0.0
      %v433 = vadd.f32 %v431, %v432
      %v434 = vsel %vm420, %v395, 0.0
      %v435 = vadd.f32 %v433, %v434
      %v436 = vsel %vm420, %v396, 0.0
      %v437 = vadd.f32 %v435, %v436
      %v438 = vsel %vm420, %v397, 0.0
      %v439 = vadd.f32 %v437, %v438
      %v440 = vsel %vm420, %v398, 0.0
      %v441 = vadd.f32 %v439, %v440
      %v442 = vsel %vm420, %v399, 0.0
      %v443 = vadd.f32 %v441, %v442
      %v444 = vsel %vm420, %v400, 0.0
      %v445 = vadd.f32 %v443, %v444
      %v446 = vsel %vm420, %v401, 0.0
      %v447 = vadd.f32 %v445, %v446
      %v448 = vsel %vm420, %v402, 0.0
      %v449 = vadd.f32 %v447, %v448
      %v450 = vsel %vm420, %v403, 0.0
      %v451 = vadd.f32 %v449, %v450
      %v452 = vsel %vm420, %v404, 0.0
      %v453 = vadd.f32 %v451, %v452
      %v454 = vsel %vm420, %v405, 0.0
      %v455 = vadd.f32 %v453, %v454
      %v456 = vsel %vm420, %v406, 0.0
      %v457 = vadd.f32 %v455, %v456
      %v458 = vsel %vm420, %v407, 0.0
      %v459 = vadd.f32 %v457, %v458
      %v460 = vsel %vm420, %v408, 0.0
      %v461 = vadd.f32 %v459, %v460
      %v462 = vsel %vm420, %v409, 0.0
      %v463 = vadd.f32 %v461, %v462
      %v464 = vsel %vm420, %v410, 0.0
      %v465 = vadd.f32 %v463, %v464
      %v466 = vsel %vm420, %v411, 0.0
      %v467 = vadd.f32 %v465, %v466
      %v468 = vsel %vm420, %v412, 0.0
      %v469 = vadd.f32 %v467, %v468
      %v470 = vsel %vm420, %v413, 0.0
      %v471 = vadd.f32 %v469, %v470
      %v472 = vsel %vm420, %v414, 0.0
      %v473 = vadd.f32 %v471, %v472
      %v474 = vsel %vm420, %v415, 0.0
      %v475 = vadd.f32 %v473, %v474
      %v476 = vsel %vm420, %v416, 0.0
      %v477 = vadd.f32 %v475, %v476
      %v478 = vsel %vm420, %v417, 0.0
      %v479 = vadd.f32 %v477, %v478
      %v480 = vsel %vm420, %v418, 0.0
      %v481 = vadd.f32 %v479, %v480
      %v482 = vsel %vm420, %v419, 0.0
      %v483 = vadd.f32 %v481, %v482
      %v484 = vrot.slane %v483, 4
      %v485 = vadd.f32 %v483, %v484
      %v486 = vrot.slane %v485, 2
      %v487 = vadd.f32 %v485, %v486
      %v488 = vrot.slane %v487, 1
      %v489 = vadd.f32 %v487, %v488
      %v490 = vmul.f32 %v388, %v388
      %v491 = vmul.f32 %v389, %v389
      %v492 = vmul.f32 %v390, %v390
      %v493 = vmul.f32 %v391, %v391
      %v494 = vmul.f32 %v392, %v392
      %v495 = vmul.f32 %v393, %v393
      %v496 = vmul.f32 %v394, %v394
      %v497 = vmul.f32 %v395, %v395
      %v498 = vmul.f32 %v396, %v396
      %v499 = vmul.f32 %v397, %v397
      %v500 = vmul.f32 %v398, %v398
      %v501 = vmul.f32 %v399, %v399
      %v502 = vmul.f32 %v400, %v400
      %v503 = vmul.f32 %v401, %v401
      %v504 = vmul.f32 %v402, %v402
      %v505 = vmul.f32 %v403, %v403
      %v506 = vmul.f32 %v404, %v404
      %v507 = vmul.f32 %v405, %v405
      %v508 = vmul.f32 %v406, %v406
      %v509 = vmul.f32 %v407, %v407
      %v510 = vmul.f32 %v408, %v408
      %v511 = vmul.f32 %v409, %v409
      %v512 = vmul.f32 %v410, %v410
      %v513 = vmul.f32 %v411, %v411
      %v514 = vmul.f32 %v412, %v412
      %v515 = vmul.f32 %v413, %v413
      %v516 = vmul.f32 %v414, %v414
      %v517 = vmul.f32 %v415, %v415
      %v518 = vmul.f32 %v416, %v416
      %v519 = vmul.f32 %v417, %v417
      %v520 = vmul.f32 %v418, %v418
      %v521 = vmul.f32 %v419, %v419
      %v522 = vsel %vm420, %v490, 0.0
      %v523 = vsel %vm420, %v491, 0.0
      %v524 = vadd.f32 %v522, %v523
      %v525 = vsel %vm420, %v492, 0.0
      %v526 = vadd.f32 %v524, %v525
      %v527 = vsel %vm420, %v493, 0.0
      %v528 = vadd.f32 %v526, %v527
      %v529 = vsel %vm420, %v494, 0.0
      %v530 = vadd.f32 %v528, %v529
      %v531 = vsel %vm420, %v495, 0.0
      %v532 = vadd.f32 %v530, %v531
      %v533 = vsel %vm420, %v496, 0.0
      %v534 = vadd.f32 %v532, %v533
      %v535 = vsel %vm420, %v497, 0.0
      %v536 = vadd.f32 %v534, %v535
      %v537 = vsel %vm420, %v498, 0.0
      %v538 = vadd.f32 %v536, %v537
      %v539 = vsel %vm420, %v499, 0.0
      %v540 = vadd.f32 %v538, %v539
      %v541 = vsel %vm420, %v500, 0.0
      %v542 = vadd.f32 %v540, %v541
      %v543 = vsel %vm420, %v501, 0.0
      %v544 = vadd.f32 %v542, %v543
      %v545 = vsel %vm420, %v502, 0.0
      %v546 = vadd.f32 %v544, %v545
      %v547 = vsel %vm420, %v503, 0.0
      %v548 = vadd.f32 %v546, %v547
      %v549 = vsel %vm420, %v504, 0.0
      %v550 = vadd.f32 %v548, %v549
      %v551 = vsel %vm420, %v505, 0.0
      %v552 = vadd.f32 %v550, %v551
      %v553 = vsel %vm420, %v506, 0.0
      %v554 = vadd.f32 %v552, %v553
      %v555 = vsel %vm420, %v507, 0.0
      %v556 = vadd.f32 %v554, %v555
      %v557 = vsel %vm420, %v508, 0.0
      %v558 = vadd.f32 %v556, %v557
      %v559 = vsel %vm420, %v509, 0.0
      %v560 = vadd.f32 %v558, %v559
      %v561 = vsel %vm420, %v510, 0.0
      %v562 = vadd.f32 %v560, %v561
      %v563 = vsel %vm420, %v511, 0.0
      %v564 = vadd.f32 %v562, %v563
      %v565 = vsel %vm420, %v512, 0.0
      %v566 = vadd.f32 %v564, %v565
      %v567 = vsel %vm420, %v513, 0.0
      %v568 = vadd.f32 %v566, %v567
      %v569 = vsel %vm420, %v514, 0.0
      %v570 = vadd.f32 %v568, %v569
      %v571 = vsel %vm420, %v515, 0.0
      %v572 = vadd.f32 %v570, %v571
      %v573 = vsel %vm420, %v516, 0.0
      %v574 = vadd.f32 %v572, %v573
      %v575 = vsel %vm420, %v517, 0.0
      %v576 = vadd.f32 %v574, %v575
      %v577 = vsel %vm420, %v518, 0.0
      %v578 = vadd.f32 %v576, %v577
      %v579 = vsel %vm420, %v519, 0.0
      %v580 = vadd.f32 %v578, %v579
      %v581 = vsel %vm420, %v520, 0.0
      %v582 = vadd.f32 %v580, %v581
      %v583 = vsel %vm420, %v521, 0.0
      %v584 = vadd.f32 %v582, %v583
      %v585 = vrot.slane %v584, 4
      %v586 = vadd.f32 %v584, %v585
      %v587 = vrot.slane %v586, 2
      %v588 = vadd.f32 %v586, %v587
      %v589 = vrot.slane %v588, 1
      %v590 = vadd.f32 %v588, %v589
      %v591 = vmul.f32 %v489, 0.00390625
      %v592 = vmul.f32 %v590, 0.00390625
      %v593 = vmul.f32 %v591, %v591
      %v594 = vsub.f32 %v592, %v593
      %v595 = vmax.f32 %v594, 0.0
      %v596 = vsub.f32 %v388, %v591
      %v597 = vsub.f32 %v389, %v591
      %v598 = vsub.f32 %v390, %v591
      %v599 = vsub.f32 %v391, %v591
      %v600 = vsub.f32 %v392, %v591
      %v601 = vsub.f32 %v393, %v591
      %v602 = vsub.f32 %v394, %v591
      %v603 = vsub.f32 %v395, %v591
      %v604 = vsub.f32 %v396, %v591
      %v605 = vsub.f32 %v397, %v591
      %v606 = vsub.f32 %v398, %v591
      %v607 = vsub.f32 %v399, %v591
      %v608 = vsub.f32 %v400, %v591
      %v609 = vsub.f32 %v401, %v591
      %v610 = vsub.f32 %v402, %v591
      %v611 = vsub.f32 %v403, %v591
      %v612 = vsub.f32 %v404, %v591
      %v613 = vsub.f32 %v405, %v591
      %v614 = vsub.f32 %v406, %v591
      %v615 = vsub.f32 %v407, %v591
      %v616 = vsub.f32 %v408, %v591
      %v617 = vsub.f32 %v409, %v591
      %v618 = vsub.f32 %v410, %v591
      %v619 = vsub.f32 %v411, %v591
      %v620 = vsub.f32 %v412, %v591
      %v621 = vsub.f32 %v413, %v591
      %v622 = vsub.f32 %v414, %v591
      %v623 = vsub.f32 %v415, %v591
      %v624 = vsub.f32 %v416, %v591
      %v625 = vsub.f32 %v417, %v591
      %v626 = vsub.f32 %v418, %v591
      %v627 = vsub.f32 %v419, %v591
      %v628 = vadd.f32 %v595, 1e-05
      %v629 = vrsqrt.pop %v628
      %v630 = vmul.f32 %v596, %v629
      %v631 = vmul.f32 %v597, %v629
      %v632 = vmul.f32 %v598, %v629
      %v633 = vmul.f32 %v599, %v629
      %v634 = vmul.f32 %v600, %v629
      %v635 = vmul.f32 %v601, %v629
      %v636 = vmul.f32 %v602, %v629
      %v637 = vmul.f32 %v603, %v629
      %v638 = vmul.f32 %v604, %v629
      %v639 = vmul.f32 %v605, %v629
      %v640 = vmul.f32 %v606, %v629
      %v641 = vmul.f32 %v607, %v629
      %v642 = vmul.f32 %v608, %v629
      %v643 = vmul.f32 %v609, %v629
      %v644 = vmul.f32 %v610, %v629
      %v645 = vmul.f32 %v611, %v629
      %v646 = vmul.f32 %v612, %v629
      %v647 = vmul.f32 %v613, %v629
      %v648 = vmul.f32 %v614, %v629
      %v649 = vmul.f32 %v615, %v629
      %v650 = vmul.f32 %v616, %v629
      %v651 = vmul.f32 %v617, %v629
      %v652 = vmul.f32 %v618, %v629
      %v653 = vmul.f32 %v619, %v629
      %v654 = vmul.f32 %v620, %v629
      %v655 = vmul.f32 %v621, %v629
      %v656 = vmul.f32 %v622, %v629
      %v657 = vmul.f32 %v623, %v629
      %v658 = vmul.f32 %v624, %v629
      %v659 = vmul.f32 %v625, %v629
      %v660 = vmul.f32 %v626, %v629
      %v661 = vmul.f32 %v627, %v629
      %v662 = vpack.c.bf16 %v631, %v630
      %v663 = vpack.c.bf16 %v633, %v632
      %v664 = vpack.c.bf16 %v635, %v634
      %v665 = vpack.c.bf16 %v637, %v636
      %v666 = vpack.c.bf16 %v639, %v638
      %v667 = vpack.c.bf16 %v641, %v640
      %v668 = vpack.c.bf16 %v643, %v642
      %v669 = vpack.c.bf16 %v645, %v644
      %v670 = vpack.c.bf16 %v647, %v646
      %v671 = vpack.c.bf16 %v649, %v648
      %v672 = vpack.c.bf16 %v651, %v650
      %v673 = vpack.c.bf16 %v653, %v652
      %v674 = vpack.c.bf16 %v655, %v654
      %v675 = vpack.c.bf16 %v657, %v656
      %v676 = vpack.c.bf16 %v659, %v658
      %v677 = vpack.c.bf16 %v661, %v660
      %v678 = vld [vmem:[%s1] sm:$0xf]
      %v679 = vpack.c.bf16 %v678, %v678
      %v680 = vld [vmem:[%s2] sm:$0x1]
      %v682 = vlaneseq
      %v683 = vshrl.u32 %v682, 7
      %v684 = vsub.s32 0, %v683
      %v685 = vrot.slane %v680, %v684
      %v688 = vsel %vm420, %v662, 0
      %v691 = vsel %vm420, %v663, 0
      %v694 = vsel %vm420, %v664, 0
      %v697 = vsel %vm420, %v665, 0
      %v700 = vsel %vm420, %v666, 0
      %v703 = vsel %vm420, %v667, 0
      %v706 = vsel %vm420, %v668, 0
      %v709 = vsel %vm420, %v669, 0
      %v712 = vsel %vm420, %v670, 0
      %v715 = vsel %vm420, %v671, 0
      %v718 = vsel %vm420, %v672, 0
      %v721 = vsel %vm420, %v673, 0
      %v724 = vsel %vm420, %v674, 0
      %v727 = vsel %vm420, %v675, 0
      %v730 = vsel %vm420, %v676, 0
      %v733 = vsel %vm420, %v677, 0
      %vm735 = vcmask 1041408
      %v737 = vsel %vm735, %v679, 0
      %739 = vmatprep.subr.bf16.mxu0 0
      %740 = vmatpush1.bf16.msra.mxu0 %v737
      %741 = vmatprep.subr.bf16.mxu0 0
      %742 = vmatpush1.bf16.msra.mxu0 0
      %743 = vmatprep.subr.bf16.mxu0 0
      %744 = vmatpush1.bf16.msra.mxu0 0
      %745 = vmatprep.subr.bf16.mxu0 0
      %746 = vmatpush1.bf16.msra.mxu0 0
      %747 = vmatprep.subr.bf16.mxu0 0
      %748 = vmatpush1.bf16.msra.mxu0 0
      %749 = vmatprep.subr.bf16.mxu0 0
      %750 = vmatpush1.bf16.msra.mxu0 0
      %751 = vmatprep.subr.bf16.mxu0 0
      %752 = vmatpush1.bf16.msra.mxu0 0
      %753 = vmatprep.subr.bf16.mxu0 0
      %754 = vmatpush1.bf16.msra.mxu0 0
      %755 = vmatprep.subr.bf16.mxu0 0
      %756 = vmatpush1.bf16.msra.mxu0 0
      %757 = vmatprep.subr.bf16.mxu0 0
      %758 = vmatpush1.bf16.msra.mxu0 0
      %759 = vmatprep.subr.bf16.mxu0 0
      %760 = vmatpush1.bf16.msra.mxu0 0
      %761 = vmatprep.subr.bf16.mxu0 0
      %762 = vmatpush1.bf16.msra.mxu0 0
      %763 = vmatprep.subr.bf16.mxu0 0
      %764 = vmatpush1.bf16.msra.mxu0 0
      %765 = vmatprep.subr.bf16.mxu0 0
      %766 = vmatpush1.bf16.msra.mxu0 0
      %767 = vmatprep.subr.bf16.mxu0 0
      %768 = vmatpush1.bf16.msra.mxu0 0
      %769 = vmatprep.subr.bf16.mxu0 0
      %770 = vmatpush1.bf16.msra.mxu0 0
      %771 = vmatprep.mubr.bf16.mxu0 0
      %772 = vmatmul.mubr.bf16.gmra.mrb[0].mxu0 %v688
      %v773 = vpop.f32.mrb[0].mxu0
      %v774 = vadd.f32 %v685, %v773
      %v775 = vpop.f32.mrb[0].mxu0
      %v776 = vpop.f32.mrb[0].mxu0
      %v777 = vadd.f32 %v685, %v776
      %v778 = vpop.f32.mrb[0].mxu0
      %779 = vmatprep.mubr.bf16.mxu0 0
      %780 = vmatmul.mubr.bf16.gmra.mrb[0].mxu0 %v691
      %v781 = vpop.f32.mrb[0].mxu0
      %v782 = vadd.f32 %v685, %v781
      %v783 = vpop.f32.mrb[0].mxu0
      %v784 = vpop.f32.mrb[0].mxu0
      %v785 = vadd.f32 %v685, %v784
      %v786 = vpop.f32.mrb[0].mxu0
      %787 = vmatprep.mubr.bf16.mxu0 0
      %788 = vmatmul.mubr.bf16.gmra.mrb[0].mxu0 %v694
      %v789 = vpop.f32.mrb[0].mxu0
      %v790 = vadd.f32 %v685, %v789
      %v791 = vpop.f32.mrb[0].mxu0
      %v792 = vpop.f32.mrb[0].mxu0
      %v793 = vadd.f32 %v685, %v792
      %v794 = vpop.f32.mrb[0].mxu0
      %795 = vmatprep.mubr.bf16.mxu0 0
      %796 = vmatmul.mubr.bf16.gmra.mrb[0].mxu0 %v697
      %v797 = vpop.f32.mrb[0].mxu0
      %v798 = vadd.f32 %v685, %v797
      %v799 = vpop.f32.mrb[0].mxu0
      %v800 = vpop.f32.mrb[0].mxu0
      %v801 = vadd.f32 %v685, %v800
      %v802 = vpop.f32.mrb[0].mxu0
      %803 = vmatprep.mubr.bf16.mxu0 0
      %804 = vmatmul.mubr.bf16.gmra.mrb[0].mxu0 %v700
      %v805 = vpop.f32.mrb[0].mxu0
      %v806 = vadd.f32 %v685, %v805
      %v807 = vpop.f32.mrb[0].mxu0
      %v808 = vpop.f32.mrb[0].mxu0
      %v809 = vadd.f32 %v685, %v808
      %v810 = vpop.f32.mrb[0].mxu0
      %811 = vmatprep.mubr.bf16.mxu0 0
      %812 = vmatmul.mubr.bf16.gmra.mrb[0].mxu0 %v703
      %v813 = vpop.f32.mrb[0].mxu0
      %v814 = vadd.f32 %v685, %v813
      %v815 = vpop.f32.mrb[0].mxu0
      %v816 = vpop.f32.mrb[0].mxu0
      %v817 = vadd.f32 %v685, %v816
      %v818 = vpop.f32.mrb[0].mxu0
      %819 = vmatprep.mubr.bf16.mxu0 0
      %820 = vmatmul.mubr.bf16.gmra.mrb[0].mxu0 %v706
      %v821 = vpop.f32.mrb[0].mxu0
      %v822 = vadd.f32 %v685, %v821
      %v823 = vpop.f32.mrb[0].mxu0
      %v824 = vpop.f32.mrb[0].mxu0
      %v825 = vadd.f32 %v685, %v824
      %v826 = vpop.f32.mrb[0].mxu0
      %827 = vmatprep.mubr.bf16.mxu0 0
      %828 = vmatmul.mubr.bf16.gmra.mrb[0].mxu0 %v709
      %v829 = vpop.f32.mrb[0].mxu0
      %v830 = vadd.f32 %v685, %v829
      %v831 = vpop.f32.mrb[0].mxu0
      %v832 = vpop.f32.mrb[0].mxu0
      %v833 = vadd.f32 %v685, %v832
      %v834 = vpop.f32.mrb[0].mxu0
      %835 = vmatprep.mubr.bf16.mxu0 0
      %836 = vmatmul.mubr.bf16.gmra.mrb[0].mxu0 %v712
      %v837 = vpop.f32.mrb[0].mxu0
      %v838 = vadd.f32 %v685, %v837
      %v839 = vpop.f32.mrb[0].mxu0
      %v840 = vpop.f32.mrb[0].mxu0
      %v841 = vadd.f32 %v685, %v840
      %v842 = vpop.f32.mrb[0].mxu0
      %843 = vmatprep.mubr.bf16.mxu0 0
      %844 = vmatmul.mubr.bf16.gmra.mrb[0].mxu0 %v715
      %v845 = vpop.f32.mrb[0].mxu0
      %v846 = vadd.f32 %v685, %v845
      %v847 = vpop.f32.mrb[0].mxu0
      %v848 = vpop.f32.mrb[0].mxu0
      %v849 = vadd.f32 %v685, %v848
      %v850 = vpop.f32.mrb[0].mxu0
      %851 = vmatprep.mubr.bf16.mxu0 0
      %852 = vmatmul.mubr.bf16.gmra.mrb[0].mxu0 %v718
      %v853 = vpop.f32.mrb[0].mxu0
      %v854 = vadd.f32 %v685, %v853
      %v855 = vpop.f32.mrb[0].mxu0
      %v856 = vpop.f32.mrb[0].mxu0
      %v857 = vadd.f32 %v685, %v856
      %v858 = vpop.f32.mrb[0].mxu0
      %859 = vmatprep.mubr.bf16.mxu0 0
      %860 = vmatmul.mubr.bf16.gmra.mrb[0].mxu0 %v721
      %v861 = vpop.f32.mrb[0].mxu0
      %v862 = vadd.f32 %v685, %v861
      %v863 = vpop.f32.mrb[0].mxu0
      %v864 = vpop.f32.mrb[0].mxu0
      %v865 = vadd.f32 %v685, %v864
      %v866 = vpop.f32.mrb[0].mxu0
      %867 = vmatprep.mubr.bf16.mxu0 0
      %868 = vmatmul.mubr.bf16.gmra.mrb[0].mxu0 %v724
      %v869 = vpop.f32.mrb[0].mxu0
      %v870 = vadd.f32 %v685, %v869
      %v871 = vpop.f32.mrb[0].mxu0
      %v872 = vpop.f32.mrb[0].mxu0
      %v873 = vadd.f32 %v685, %v872
      %v874 = vpop.f32.mrb[0].mxu0
      %875 = vmatprep.mubr.bf16.mxu0 0
      %876 = vmatmul.mubr.bf16.gmra.mrb[0].mxu0 %v727
      %v877 = vpop.f32.mrb[0].mxu0
      %v878 = vadd.f32 %v685, %v877
      %v879 = vpop.f32.mrb[0].mxu0
      %v880 = vpop.f32.mrb[0].mxu0
      %v881 = vadd.f32 %v685, %v880
      %v882 = vpop.f32.mrb[0].mxu0
      %883 = vmatprep.mubr.bf16.mxu0 0
      %884 = vmatmul.mubr.bf16.gmra.mrb[0].mxu0 %v730
      %v885 = vpop.f32.mrb[0].mxu0
      %v886 = vadd.f32 %v685, %v885
      %v887 = vpop.f32.mrb[0].mxu0
      %v888 = vpop.f32.mrb[0].mxu0
      %v889 = vadd.f32 %v685, %v888
      %v890 = vpop.f32.mrb[0].mxu0
      %891 = vmatprep.mubr.bf16.mxu0 0
      %892 = vmatmul.mubr.bf16.gmra.mrb[0].mxu0 %v733
      %v893 = vpop.f32.mrb[0].mxu0
      %v894 = vadd.f32 %v685, %v893
      %v895 = vpop.f32.mrb[0].mxu0
      %v896 = vpop.f32.mrb[0].mxu0
      %v897 = vadd.f32 %v685, %v896
      %v898 = vpop.f32.mrb[0].mxu0
      %899 = vdwg.mxu0
      %v900 = vmax.f32 %v774, 0.0
      %v901 = vmax.f32 %v777, 0.0
      %v902 = vmax.f32 %v782, 0.0
      %v903 = vmax.f32 %v785, 0.0
      %v904 = vmax.f32 %v790, 0.0
      %v905 = vmax.f32 %v793, 0.0
      %v906 = vmax.f32 %v798, 0.0
      %v907 = vmax.f32 %v801, 0.0
      %v908 = vmax.f32 %v806, 0.0
      %v909 = vmax.f32 %v809, 0.0
      %v910 = vmax.f32 %v814, 0.0
      %v911 = vmax.f32 %v817, 0.0
      %v912 = vmax.f32 %v822, 0.0
      %v913 = vmax.f32 %v825, 0.0
      %v914 = vmax.f32 %v830, 0.0
      %v915 = vmax.f32 %v833, 0.0
      %v916 = vmax.f32 %v838, 0.0
      %v917 = vmax.f32 %v841, 0.0
      %v918 = vmax.f32 %v846, 0.0
      %v919 = vmax.f32 %v849, 0.0
      %v920 = vmax.f32 %v854, 0.0
      %v921 = vmax.f32 %v857, 0.0
      %v922 = vmax.f32 %v862, 0.0
      %v923 = vmax.f32 %v865, 0.0
      %v924 = vmax.f32 %v870, 0.0
      %v925 = vmax.f32 %v873, 0.0
      %v926 = vmax.f32 %v878, 0.0
      %v927 = vmax.f32 %v881, 0.0
      %v928 = vmax.f32 %v886, 0.0
      %v929 = vmax.f32 %v889, 0.0
      %v930 = vmax.f32 %v894, 0.0
      %v931 = vmax.f32 %v897, 0.0
      %932 = vst.msk [vmem:[#allocation2] sm:$0xff] %vm420, 0.0
      %933 = vst.msk [vmem:[#allocation2 + $0x8] sm:$0xff] %vm420, 0.0
      %vm934 = vcmask 25600
      %935 = vst.msk [vmem:[#allocation2 + $0x10] sm:$0x3] %vm934, 0.0
      %936 = vst.msk [vmem:[#allocation2 + $0x18] sm:$0xff] %vm420, 0.0
      %937 = vst.msk [vmem:[#allocation2 + $0x20] sm:$0xff] %vm420, 0.0
      %938 = vst.msk [vmem:[#allocation2 + $0x28] sm:$0x3] %vm934, 0.0
      %939 = vst.msk [vmem:[#allocation2 + $0x30] sm:$0xff] %vm420, 0.0
      %940 = vst.msk [vmem:[#allocation2 + $0x38] sm:$0xff] %vm420, 0.0
      %941 = vst.msk [vmem:[#allocation2 + $0x40] sm:$0x3] %vm934, 0.0
      %942 = vst.msk [vmem:[#allocation2 + $0x48] sm:$0xff] %vm420, 0.0
      %943 = vst.msk [vmem:[#allocation2 + $0x50] sm:$0xff] %vm420, 0.0
      %944 = vst.msk [vmem:[#allocation2 + $0x58] sm:$0x3] %vm934, 0.0
      %945 = vst.msk [vmem:[#allocation2 + $0x60] sm:$0xff] %vm420, 0.0
      %946 = vst.msk [vmem:[#allocation2 + $0x68] sm:$0xff] %vm420, 0.0
      %947 = vst.msk [vmem:[#allocation2 + $0x70] sm:$0x3] %vm934, 0.0
      %948 = vst.msk [vmem:[#allocation2 + $0x78] sm:$0xff] %vm420, 0.0
      %949 = vst.msk [vmem:[#allocation2 + $0x80] sm:$0xff] %vm420, 0.0
      %950 = vst.msk [vmem:[#allocation2 + $0x88] sm:$0x3] %vm934, 0.0
      %951 = vst.msk [vmem:[#allocation2 + $0x90] sm:$0xff] %vm420, 0.0
      %952 = vst.msk [vmem:[#allocation2 + $0x98] sm:$0xff] %vm420, 0.0
      %953 = vst.msk [vmem:[#allocation2 + $0xa0] sm:$0x3] %vm934, 0.0
      %954 = vst.msk [vmem:[#allocation2 + $0xa8] sm:$0xff] %vm420, 0.0
      %955 = vst.msk [vmem:[#allocation2 + $0xb0] sm:$0xff] %vm420, 0.0
      %956 = vst.msk [vmem:[#allocation2 + $0xb8] sm:$0x3] %vm934, 0.0
      %957 = vst.msk [vmem:[#allocation2 + $0xc0] sm:$0xff] %vm420, 0.0
      %958 = vst.msk [vmem:[#allocation2 + $0xc8] sm:$0xff] %vm420, 0.0
      %959 = vst.msk [vmem:[#allocation2 + $0xd0] sm:$0x3] %vm934, 0.0
      %960 = vst.msk [vmem:[#allocation2 + $0xd8] sm:$0xff] %vm420, 0.0
      %961 = vst.msk [vmem:[#allocation2 + $0xe0] sm:$0xff] %vm420, 0.0
      %962 = vst.msk [vmem:[#allocation2 + $0xe8] sm:$0x3] %vm934, 0.0
      %963 = vst.msk [vmem:[#allocation2 + $0xf0] sm:$0xff] %vm420, 0.0
      %964 = vst.msk [vmem:[#allocation2 + $0xf8] sm:$0xff] %vm420, 0.0
      %965 = vst.msk [vmem:[#allocation2 + $0x100] sm:$0x3] %vm934, 0.0
      %966 = vst.msk [vmem:[#allocation2 + $0x108] sm:$0xff] %vm420, 0.0
      %967 = vst.msk [vmem:[#allocation2 + $0x110] sm:$0xff] %vm420, 0.0
      %968 = vst.msk [vmem:[#allocation2 + $0x118] sm:$0x3] %vm934, 0.0
      %969 = vst.msk [vmem:[#allocation2 + $0x120] sm:$0xff] %vm420, 0.0
      %970 = vst.msk [vmem:[#allocation2 + $0x128] sm:$0xff] %vm420, 0.0
      %971 = vst.msk [vmem:[#allocation2 + $0x130] sm:$0x3] %vm934, 0.0
      %972 = vst.msk [vmem:[#allocation2 + $0x138] sm:$0xff] %vm420, 0.0
      %973 = vst.msk [vmem:[#allocation2 + $0x140] sm:$0xff] %vm420, 0.0
      %974 = vst.msk [vmem:[#allocation2 + $0x148] sm:$0x3] %vm934, 0.0
      %975 = vst.msk [vmem:[#allocation2 + $0x150] sm:$0xff] %vm420, 0.0
      %976 = vst.msk [vmem:[#allocation2 + $0x158] sm:$0xff] %vm420, 0.0
      %977 = vst.msk [vmem:[#allocation2 + $0x160] sm:$0x3] %vm934, 0.0
      %978 = vst.msk [vmem:[#allocation2 + $0x168] sm:$0xff] %vm420, 0.0
      %979 = vst.msk [vmem:[#allocation2 + $0x170] sm:$0xff] %vm420, 0.0
      %980 = vst.msk [vmem:[#allocation2 + $0x178] sm:$0x3] %vm934, 0.0
      %981 = vst.msk [vmem:[#allocation2 + $0x180] sm:$0xff] %vm420, 0.0
      %982 = vst.msk [vmem:[#allocation2 + $0x188] sm:$0xff] %vm420, 0.0
      %983 = vst.msk [vmem:[#allocation2 + $0x190] sm:$0x3] %vm934, 0.0
      %984 = vst.msk [vmem:[#allocation2 + $0x198] sm:$0xff] %vm420, 0.0
      %985 = vst.msk [vmem:[#allocation2 + $0x1a0] sm:$0xff] %vm420, 0.0
      %986 = vst.msk [vmem:[#allocation2 + $0x1a8] sm:$0x3] %vm934, 0.0
      %s987 = scalar_lea.vmem [#allocation2], 24
      %988 = vst.msk [vmem:[%s987 + $0x1] sm:$0xff] %vm420, %v900
      %989 = vst.msk [vmem:[%s987 + $0x9] sm:$0xff] %vm420, %v901
      %990 = vst.msk [vmem:[%s987 + $0x19] sm:$0xff] %vm420, %v902
      %991 = vst.msk [vmem:[%s987 + $0x21] sm:$0xff] %vm420, %v903
      %992 = vst.msk [vmem:[%s987 + $0x31] sm:$0xff] %vm420, %v904
      %993 = vst.msk [vmem:[%s987 + $0x39] sm:$0xff] %vm420, %v905
      %994 = vst.msk [vmem:[%s987 + $0x49] sm:$0xff] %vm420, %v906
      %995 = vst.msk [vmem:[%s987 + $0x51] sm:$0xff] %vm420, %v907
      %996 = vst.msk [vmem:[%s987 + $0x61] sm:$0xff] %vm420, %v908
      %997 = vst.msk [vmem:[%s987 + $0x69] sm:$0xff] %vm420, %v909
      %998 = vst.msk [vmem:[%s987 + $0x79] sm:$0xff] %vm420, %v910
      %999 = vst.msk [vmem:[%s987 + $0x81] sm:$0xff] %vm420, %v911
      %1000 = vst.msk [vmem:[%s987 + $0x91] sm:$0xff] %vm420, %v912
      %1001 = vst.msk [vmem:[%s987 + $0x99] sm:$0xff] %vm420, %v913
      %1002 = vst.msk [vmem:[%s987 + $0xa9] sm:$0xff] %vm420, %v914
      %1003 = vst.msk [vmem:[%s987 + $0xb1] sm:$0xff] %vm420, %v915
      %1004 = vst.msk [vmem:[%s987 + $0xc1] sm:$0xff] %vm420, %v916
      %1005 = vst.msk [vmem:[%s987 + $0xc9] sm:$0xff] %vm420, %v917
      %1006 = vst.msk [vmem:[%s987 + $0xd9] sm:$0xff] %vm420, %v918
      %1007 = vst.msk [vmem:[%s987 + $0xe1] sm:$0xff] %vm420, %v919
      %1008 = vst.msk [vmem:[%s987 + $0xf1] sm:$0xff] %vm420, %v920
      %1009 = vst.msk [vmem:[%s987 + $0xf9] sm:$0xff] %vm420, %v921
      %1010 = vst.msk [vmem:[%s987 + $0x109] sm:$0xff] %vm420, %v922
      %1011 = vst.msk [vmem:[%s987 + $0x111] sm:$0xff] %vm420, %v923
      %1012 = vst.msk [vmem:[%s987 + $0x121] sm:$0xff] %vm420, %v924
      %1013 = vst.msk [vmem:[%s987 + $0x129] sm:$0xff] %vm420, %v925
      %1014 = vst.msk [vmem:[%s987 + $0x139] sm:$0xff] %vm420, %v926
      %1015 = vst.msk [vmem:[%s987 + $0x141] sm:$0xff] %vm420, %v927
      %1016 = vst.msk [vmem:[%s987 + $0x151] sm:$0xff] %vm420, %v928
      %1017 = vst.msk [vmem:[%s987 + $0x159] sm:$0xff] %vm420, %v929
      %1018 = vst.msk [vmem:[%s987 + $0x169] sm:$0xff] %vm420, %v930
      %1019 = vst.msk [vmem:[%s987 + $0x171] sm:$0xff] %vm420, %v931
      %v1020 = vld [vmem:[#allocation2] sm:$0xff]
      %v1021 = vld [vmem:[#allocation2 + $0x8] sm:$0xff]
      %v1022 = vld [vmem:[#allocation2 + $0x18] sm:$0xff]
      %v1023 = vld [vmem:[#allocation2 + $0x20] sm:$0xff]
      %v1024 = vld [vmem:[#allocation2 + $0x30] sm:$0xff]
      %v1025 = vld [vmem:[#allocation2 + $0x38] sm:$0xff]
      %v1026 = vld [vmem:[#allocation2 + $0x48] sm:$0xff]
      %v1027 = vld [vmem:[#allocation2 + $0x50] sm:$0xff]
      %v1028 = vld [vmem:[#allocation2 + $0x60] sm:$0xff]
      %v1029 = vld [vmem:[#allocation2 + $0x68] sm:$0xff]
      %v1030 = vld [vmem:[#allocation2 + $0x78] sm:$0xff]
      %v1031 = vld [vmem:[#allocation2 + $0x80] sm:$0xff]
      %v1032 = vld [vmem:[#allocation2 + $0x90] sm:$0xff]
      %v1033 = vld [vmem:[#allocation2 + $0x98] sm:$0xff]
      %v1034 = vld [vmem:[#allocation2 + $0xa8] sm:$0xff]
      %v1035 = vld [vmem:[#allocation2 + $0xb0] sm:$0xff]
      %v1036 = vld [vmem:[#allocation2 + $0xc0] sm:$0xff]
      %v1037 = vld [vmem:[#allocation2 + $0xc8] sm:$0xff]
      %v1038 = vld [vmem:[#allocation2 + $0xd8] sm:$0xff]
      %v1039 = vld [vmem:[#allocation2 + $0xe0] sm:$0xff]
      %v1040 = vld [vmem:[#allocation2 + $0xf0] sm:$0xff]
      %v1041 = vld [vmem:[#allocation2 + $0xf8] sm:$0xff]
      %v1042 = vld [vmem:[#allocation2 + $0x108] sm:$0xff]
      %v1043 = vld [vmem:[#allocation2 + $0x110] sm:$0xff]
      %v1044 = vld [vmem:[#allocation2 + $0x120] sm:$0xff]
      %v1045 = vld [vmem:[#allocation2 + $0x128] sm:$0xff]
      %v1046 = vld [vmem:[#allocation2 + $0x138] sm:$0xff]
      %v1047 = vld [vmem:[#allocation2 + $0x140] sm:$0xff]
      %v1048 = vld [vmem:[#allocation2 + $0x150] sm:$0xff]
      %v1049 = vld [vmem:[#allocation2 + $0x158] sm:$0xff]
      %v1050 = vld [vmem:[#allocation2 + $0x168] sm:$0xff]
      %v1051 = vld [vmem:[#allocation2 + $0x170] sm:$0xff]
      %v1052 = vpack.c.bf16 %v1021, %v1020
      %v1053 = vpack.c.bf16 %v1023, %v1022
      %v1054 = vpack.c.bf16 %v1025, %v1024
      %v1055 = vpack.c.bf16 %v1027, %v1026
      %v1056 = vpack.c.bf16 %v1029, %v1028
      %v1057 = vpack.c.bf16 %v1031, %v1030
      %v1058 = vpack.c.bf16 %v1033, %v1032
      %v1059 = vpack.c.bf16 %v1035, %v1034
      %v1060 = vpack.c.bf16 %v1037, %v1036
      %v1061 = vpack.c.bf16 %v1039, %v1038
      %v1062 = vpack.c.bf16 %v1041, %v1040
      %v1063 = vpack.c.bf16 %v1043, %v1042
      %v1064 = vpack.c.bf16 %v1045, %v1044
      %v1065 = vpack.c.bf16 %v1047, %v1046
      %v1066 = vpack.c.bf16 %v1049, %v1048
      %v1067 = vpack.c.bf16 %v1051, %v1050
      %v1068 = vld [vmem:[%s3] sm:$0xf]
      %v1069 = vpack.c.bf16 %v1068, %v1068
      %v1070 = vld [vmem:[#allocation2 + $0x1] sm:$0xff]
      %v1071 = vld [vmem:[#allocation2 + $0x9] sm:$0xff]
      %v1072 = vld [vmem:[#allocation2 + $0x19] sm:$0xff]
      %v1073 = vld [vmem:[#allocation2 + $0x21] sm:$0xff]
      %v1074 = vld [vmem:[#allocation2 + $0x31] sm:$0xff]
      %v1075 = vld [vmem:[#allocation2 + $0x39] sm:$0xff]
      %v1076 = vld [vmem:[#allocation2 + $0x49] sm:$0xff]
      %v1077 = vld [vmem:[#allocation2 + $0x51] sm:$0xff]
      %v1078 = vld [vmem:[#allocation2 + $0x61] sm:$0xff]
      %v1079 = vld [vmem:[#allocation2 + $0x69] sm:$0xff]
      %v1080 = vld [vmem:[#allocation2 + $0x79] sm:$0xff]
      %v1081 = vld [vmem:[#allocation2 + $0x81] sm:$0xff]
      %v1082 = vld [vmem:[#allocation2 + $0x91] sm:$0xff]
      %v1083 = vld [vmem:[#allocation2 + $0x99] sm:$0xff]
      %v1084 = vld [vmem:[#allocation2 + $0xa9] sm:$0xff]
      %v1085 = vld [vmem:[#allocation2 + $0xb1] sm:$0xff]
      %v1086 = vld [vmem:[#allocation2 + $0xc1] sm:$0xff]
      %v1087 = vld [vmem:[#allocation2 + $0xc9] sm:$0xff]
      %v1088 = vld [vmem:[#allocation2 + $0xd9] sm:$0xff]
      %v1089 = vld [vmem:[#allocation2 + $0xe1] sm:$0xff]
      %v1090 = vld [vmem:[#allocation2 + $0xf1] sm:$0xff]
      %v1091 = vld [vmem:[#allocation2 + $0xf9] sm:$0xff]
      %v1092 = vld [vmem:[#allocation2 + $0x109] sm:$0xff]
      %v1093 = vld [vmem:[#allocation2 + $0x111] sm:$0xff]
      %v1094 = vld [vmem:[#allocation2 + $0x121] sm:$0xff]
      %v1095 = vld [vmem:[#allocation2 + $0x129] sm:$0xff]
      %v1096 = vld [vmem:[#allocation2 + $0x139] sm:$0xff]
      %v1097 = vld [vmem:[#allocation2 + $0x141] sm:$0xff]
      %v1098 = vld [vmem:[#allocation2 + $0x151] sm:$0xff]
      %v1099 = vld [vmem:[#allocation2 + $0x159] sm:$0xff]
      %v1100 = vld [vmem:[#allocation2 + $0x169] sm:$0xff]
      %v1101 = vld [vmem:[#allocation2 + $0x171] sm:$0xff]
      %v1102 = vpack.c.bf16 %v1071, %v1070
      %v1103 = vpack.c.bf16 %v1073, %v1072
      %v1104 = vpack.c.bf16 %v1075, %v1074
      %v1105 = vpack.c.bf16 %v1077, %v1076
      %v1106 = vpack.c.bf16 %v1079, %v1078
      %v1107 = vpack.c.bf16 %v1081, %v1080
      %v1108 = vpack.c.bf16 %v1083, %v1082
      %v1109 = vpack.c.bf16 %v1085, %v1084
      %v1110 = vpack.c.bf16 %v1087, %v1086
      %v1111 = vpack.c.bf16 %v1089, %v1088
      %v1112 = vpack.c.bf16 %v1091, %v1090
      %v1113 = vpack.c.bf16 %v1093, %v1092
      %v1114 = vpack.c.bf16 %v1095, %v1094
      %v1115 = vpack.c.bf16 %v1097, %v1096
      %v1116 = vpack.c.bf16 %v1099, %v1098
      %v1117 = vpack.c.bf16 %v1101, %v1100
      %s1118 = scalar_lea.vmem %s3, 4
      %v1119 = vld [vmem:[%s1118] sm:$0xf]
      %v1120 = vpack.c.bf16 %v1119, %v1119
      %v1122 = vsel %vm420, %v1102, 0
      %v1125 = vsel %vm420, %v1103, 0
      %v1128 = vsel %vm420, %v1104, 0
      %v1131 = vsel %vm420, %v1105, 0
      %v1134 = vsel %vm420, %v1106, 0
      %v1137 = vsel %vm420, %v1107, 0
      %v1140 = vsel %vm420, %v1108, 0
      %v1143 = vsel %vm420, %v1109, 0
      %v1146 = vsel %vm420, %v1110, 0
      %v1149 = vsel %vm420, %v1111, 0
      %v1152 = vsel %vm420, %v1112, 0
      %v1155 = vsel %vm420, %v1113, 0
      %v1158 = vsel %vm420, %v1114, 0
      %v1161 = vsel %vm420, %v1115, 0
      %v1164 = vsel %vm420, %v1116, 0
      %v1167 = vsel %vm420, %v1117, 0
      %v1170 = vsel %vm735, %v1120, 0
      %1172 = vmatprep.subr.bf16.mxu0 0
      %1173 = vmatpush1.bf16.msra.mxu0 %v1170
      %1174 = vmatprep.subr.bf16.mxu0 0
      %1175 = vmatpush1.bf16.msra.mxu0 0
      %1176 = vmatprep.subr.bf16.mxu0 0
      %1177 = vmatpush1.bf16.msra.mxu0 0
      %1178 = vmatprep.subr.bf16.mxu0 0
      %1179 = vmatpush1.bf16.msra.mxu0 0
      %1180 = vmatprep.subr.bf16.mxu0 0
      %1181 = vmatpush1.bf16.msra.mxu0 0
      %1182 = vmatprep.subr.bf16.mxu0 0
      %1183 = vmatpush1.bf16.msra.mxu0 0
      %1184 = vmatprep.subr.bf16.mxu0 0
      %1185 = vmatpush1.bf16.msra.mxu0 0
      %1186 = vmatprep.subr.bf16.mxu0 0
      %1187 = vmatpush1.bf16.msra.mxu0 0
      %1188 = vmatprep.subr.bf16.mxu0 0
      %1189 = vmatpush1.bf16.msra.mxu0 0
      %1190 = vmatprep.subr.bf16.mxu0 0
      %1191 = vmatpush1.bf16.msra.mxu0 0
      %1192 = vmatprep.subr.bf16.mxu0 0
      %1193 = vmatpush1.bf16.msra.mxu0 0
      %1194 = vmatprep.subr.bf16.mxu0 0
      %1195 = vmatpush1.bf16.msra.mxu0 0
      %1196 = vmatprep.subr.bf16.mxu0 0
      %1197 = vmatpush1.bf16.msra.mxu0 0
      %1198 = vmatprep.subr.bf16.mxu0 0
      %1199 = vmatpush1.bf16.msra.mxu0 0
      %1200 = vmatprep.subr.bf16.mxu0 0
      %1201 = vmatpush1.bf16.msra.mxu0 0
      %1202 = vmatprep.subr.bf16.mxu0 0
      %1203 = vmatpush1.bf16.msra.mxu0 0
      %1204 = vmatprep.mubr.bf16.mxu0 0
      %1205 = vmatmul.mubr.bf16.gmra.mrb[0].mxu0 %v1122
      %v1206 = vpop.f32.mrb[0].mxu0
      %v1207 = vadd.f32 0.0, %v1206
      %v1208 = vpop.f32.mrb[0].mxu0
      %v1209 = vpop.f32.mrb[0].mxu0
      %v1210 = vadd.f32 0.0, %v1209
      %v1211 = vpop.f32.mrb[0].mxu0
      %1212 = vmatprep.mubr.bf16.mxu0 0
      %1213 = vmatmul.mubr.bf16.gmra.mrb[0].mxu0 %v1125
      %v1214 = vpop.f32.mrb[0].mxu0
      %v1215 = vadd.f32 0.0, %v1214
      %v1216 = vpop.f32.mrb[0].mxu0
      %v1217 = vpop.f32.mrb[0].mxu0
      %v1218 = vadd.f32 0.0, %v1217
      %v1219 = vpop.f32.mrb[0].mxu0
      %1220 = vmatprep.mubr.bf16.mxu0 0
      %1221 = vmatmul.mubr.bf16.gmra.mrb[0].mxu0 %v1128
      %v1222 = vpop.f32.mrb[0].mxu0
      %v1223 = vadd.f32 0.0, %v1222
      %v1224 = vpop.f32.mrb[0].mxu0
      %v1225 = vpop.f32.mrb[0].mxu0
      %v1226 = vadd.f32 0.0, %v1225
      %v1227 = vpop.f32.mrb[0].mxu0
      %1228 = vmatprep.mubr.bf16.mxu0 0
      %1229 = vmatmul.mubr.bf16.gmra.mrb[0].mxu0 %v1131
      %v1230 = vpop.f32.mrb[0].mxu0
      %v1231 = vadd.f32 0.0, %v1230
      %v1232 = vpop.f32.mrb[0].mxu0
      %v1233 = vpop.f32.mrb[0].mxu0
      %v1234 = vadd.f32 0.0, %v1233
      %v1235 = vpop.f32.mrb[0].mxu0
      %1236 = vmatprep.mubr.bf16.mxu0 0
      %1237 = vmatmul.mubr.bf16.gmra.mrb[0].mxu0 %v1134
      %v1238 = vpop.f32.mrb[0].mxu0
      %v1239 = vadd.f32 0.0, %v1238
      %v1240 = vpop.f32.mrb[0].mxu0
      %v1241 = vpop.f32.mrb[0].mxu0
      %v1242 = vadd.f32 0.0, %v1241
      %v1243 = vpop.f32.mrb[0].mxu0
      %1244 = vmatprep.mubr.bf16.mxu0 0
      %1245 = vmatmul.mubr.bf16.gmra.mrb[0].mxu0 %v1137
      %v1246 = vpop.f32.mrb[0].mxu0
      %v1247 = vadd.f32 0.0, %v1246
      %v1248 = vpop.f32.mrb[0].mxu0
      %v1249 = vpop.f32.mrb[0].mxu0
      %v1250 = vadd.f32 0.0, %v1249
      %v1251 = vpop.f32.mrb[0].mxu0
      %1252 = vmatprep.mubr.bf16.mxu0 0
      %1253 = vmatmul.mubr.bf16.gmra.mrb[0].mxu0 %v1140
      %v1254 = vpop.f32.mrb[0].mxu0
      %v1255 = vadd.f32 0.0, %v1254
      %v1256 = vpop.f32.mrb[0].mxu0
      %v1257 = vpop.f32.mrb[0].mxu0
      %v1258 = vadd.f32 0.0, %v1257
      %v1259 = vpop.f32.mrb[0].mxu0
      %1260 = vmatprep.mubr.bf16.mxu0 0
      %1261 = vmatmul.mubr.bf16.gmra.mrb[0].mxu0 %v1143
      %v1262 = vpop.f32.mrb[0].mxu0
      %v1263 = vadd.f32 0.0, %v1262
      %v1264 = vpop.f32.mrb[0].mxu0
      %v1265 = vpop.f32.mrb[0].mxu0
      %v1266 = vadd.f32 0.0, %v1265
      %v1267 = vpop.f32.mrb[0].mxu0
      %1268 = vmatprep.mubr.bf16.mxu0 0
      %1269 = vmatmul.mubr.bf16.gmra.mrb[0].mxu0 %v1146
      %v1270 = vpop.f32.mrb[0].mxu0
      %v1271 = vadd.f32 0.0, %v1270
      %v1272 = vpop.f32.mrb[0].mxu0
      %v1273 = vpop.f32.mrb[0].mxu0
      %v1274 = vadd.f32 0.0, %v1273
      %v1275 = vpop.f32.mrb[0].mxu0
      %1276 = vmatprep.mubr.bf16.mxu0 0
      %1277 = vmatmul.mubr.bf16.gmra.mrb[0].mxu0 %v1149
      %v1278 = vpop.f32.mrb[0].mxu0
      %v1279 = vadd.f32 0.0, %v1278
      %v1280 = vpop.f32.mrb[0].mxu0
      %v1281 = vpop.f32.mrb[0].mxu0
      %v1282 = vadd.f32 0.0, %v1281
      %v1283 = vpop.f32.mrb[0].mxu0
      %1284 = vmatprep.mubr.bf16.mxu0 0
      %1285 = vmatmul.mubr.bf16.gmra.mrb[0].mxu0 %v1152
      %v1286 = vpop.f32.mrb[0].mxu0
      %v1287 = vadd.f32 0.0, %v1286
      %v1288 = vpop.f32.mrb[0].mxu0
      %v1289 = vpop.f32.mrb[0].mxu0
      %v1290 = vadd.f32 0.0, %v1289
      %v1291 = vpop.f32.mrb[0].mxu0
      %1292 = vmatprep.mubr.bf16.mxu0 0
      %1293 = vmatmul.mubr.bf16.gmra.mrb[0].mxu0 %v1155
      %v1294 = vpop.f32.mrb[0].mxu0
      %v1295 = vadd.f32 0.0, %v1294
      %v1296 = vpop.f32.mrb[0].mxu0
      %v1297 = vpop.f32.mrb[0].mxu0
      %v1298 = vadd.f32 0.0, %v1297
      %v1299 = vpop.f32.mrb[0].mxu0
      %1300 = vmatprep.mubr.bf16.mxu0 0
      %1301 = vmatmul.mubr.bf16.gmra.mrb[0].mxu0 %v1158
      %v1302 = vpop.f32.mrb[0].mxu0
      %v1303 = vadd.f32 0.0, %v1302
      %v1304 = vpop.f32.mrb[0].mxu0
      %v1305 = vpop.f32.mrb[0].mxu0
      %v1306 = vadd.f32 0.0, %v1305
      %v1307 = vpop.f32.mrb[0].mxu0
      %1308 = vmatprep.mubr.bf16.mxu0 0
      %1309 = vmatmul.mubr.bf16.gmra.mrb[0].mxu0 %v1161
      %v1310 = vpop.f32.mrb[0].mxu0
      %v1311 = vadd.f32 0.0, %v1310
      %v1312 = vpop.f32.mrb[0].mxu0
      %v1313 = vpop.f32.mrb[0].mxu0
      %v1314 = vadd.f32 0.0, %v1313
      %v1315 = vpop.f32.mrb[0].mxu0
      %1316 = vmatprep.mubr.bf16.mxu0 0
      %1317 = vmatmul.mubr.bf16.gmra.mrb[0].mxu0 %v1164
      %v1318 = vpop.f32.mrb[0].mxu0
      %v1319 = vadd.f32 0.0, %v1318
      %v1320 = vpop.f32.mrb[0].mxu0
      %v1321 = vpop.f32.mrb[0].mxu0
      %v1322 = vadd.f32 0.0, %v1321
      %v1323 = vpop.f32.mrb[0].mxu0
      %1324 = vmatprep.mubr.bf16.mxu0 0
      %1325 = vmatmul.mubr.bf16.gmra.mrb[0].mxu0 %v1167
      %v1326 = vpop.f32.mrb[0].mxu0
      %v1327 = vadd.f32 0.0, %v1326
      %v1328 = vpop.f32.mrb[0].mxu0
      %v1329 = vpop.f32.mrb[0].mxu0
      %v1330 = vadd.f32 0.0, %v1329
      %v1331 = vpop.f32.mrb[0].mxu0
      %1332 = vdwg.mxu0
      %v1334 = vsel %vm420, %v1052, 0
      %v1337 = vsel %vm420, %v1053, 0
      %v1340 = vsel %vm420, %v1054, 0
      %v1343 = vsel %vm420, %v1055, 0
      %v1346 = vsel %vm420, %v1056, 0
      %v1349 = vsel %vm420, %v1057, 0
      %v1352 = vsel %vm420, %v1058, 0
      %v1355 = vsel %vm420, %v1059, 0
      %v1358 = vsel %vm420, %v1060, 0
      %v1361 = vsel %vm420, %v1061, 0
      %v1364 = vsel %vm420, %v1062, 0
      %v1367 = vsel %vm420, %v1063, 0
      %v1370 = vsel %vm420, %v1064, 0
      %v1373 = vsel %vm420, %v1065, 0
      %v1376 = vsel %vm420, %v1066, 0
      %v1379 = vsel %vm420, %v1067, 0
      %v1382 = vsel %vm735, %v1069, 0
      %1384 = vmatprep.subr.bf16.mxu0 0
      %1385 = vmatpush1.bf16.msra.mxu0 %v1382
      %1386 = vmatprep.subr.bf16.mxu0 0
      %1387 = vmatpush1.bf16.msra.mxu0 0
      %1388 = vmatprep.subr.bf16.mxu0 0
      %1389 = vmatpush1.bf16.msra.mxu0 0
      %1390 = vmatprep.subr.bf16.mxu0 0
      %1391 = vmatpush1.bf16.msra.mxu0 0
      %1392 = vmatprep.subr.bf16.mxu0 0
      %1393 = vmatpush1.bf16.msra.mxu0 0
      %1394 = vmatprep.subr.bf16.mxu0 0
      %1395 = vmatpush1.bf16.msra.mxu0 0
      %1396 = vmatprep.subr.bf16.mxu0 0
      %1397 = vmatpush1.bf16.msra.mxu0 0
      %1398 = vmatprep.subr.bf16.mxu0 0
      %1399 = vmatpush1.bf16.msra.mxu0 0
      %1400 = vmatprep.subr.bf16.mxu0 0
      %1401 = vmatpush1.bf16.msra.mxu0 0
      %1402 = vmatprep.subr.bf16.mxu0 0
      %1403 = vmatpush1.bf16.msra.mxu0 0
      %1404 = vmatprep.subr.bf16.mxu0 0
      %1405 = vmatpush1.bf16.msra.mxu0 0
      %1406 = vmatprep.subr.bf16.mxu0 0
      %1407 = vmatpush1.bf16.msra.mxu0 0
      %1408 = vmatprep.subr.bf16.mxu0 0
      %1409 = vmatpush1.bf16.msra.mxu0 0
      %1410 = vmatprep.subr.bf16.mxu0 0
      %1411 = vmatpush1.bf16.msra.mxu0 0
      %1412 = vmatprep.subr.bf16.mxu0 0
      %1413 = vmatpush1.bf16.msra.mxu0 0
      %1414 = vmatprep.subr.bf16.mxu0 0
      %1415 = vmatpush1.bf16.msra.mxu0 0
      %1416 = vmatprep.mubr.bf16.mxu0 0
      %1417 = vmatmul.mubr.bf16.gmra.mrb[0].mxu0 %v1334
      %v1418 = vpop.f32.mrb[0].mxu0
      %v1419 = vadd.f32 %v1207, %v1418
      %v1420 = vpop.f32.mrb[0].mxu0
      %v1421 = vpop.f32.mrb[0].mxu0
      %v1422 = vadd.f32 %v1210, %v1421
      %v1423 = vpop.f32.mrb[0].mxu0
      %1424 = vmatprep.mubr.bf16.mxu0 0
      %1425 = vmatmul.mubr.bf16.gmra.mrb[0].mxu0 %v1337
      %v1426 = vpop.f32.mrb[0].mxu0
      %v1427 = vadd.f32 %v1215, %v1426
      %v1428 = vpop.f32.mrb[0].mxu0
      %v1429 = vpop.f32.mrb[0].mxu0
      %v1430 = vadd.f32 %v1218, %v1429
      %v1431 = vpop.f32.mrb[0].mxu0
      %1432 = vmatprep.mubr.bf16.mxu0 0
      %1433 = vmatmul.mubr.bf16.gmra.mrb[0].mxu0 %v1340
      %v1434 = vpop.f32.mrb[0].mxu0
      %v1435 = vadd.f32 %v1223, %v1434
      %v1436 = vpop.f32.mrb[0].mxu0
      %v1437 = vpop.f32.mrb[0].mxu0
      %v1438 = vadd.f32 %v1226, %v1437
      %v1439 = vpop.f32.mrb[0].mxu0
      %1440 = vmatprep.mubr.bf16.mxu0 0
      %1441 = vmatmul.mubr.bf16.gmra.mrb[0].mxu0 %v1343
      %v1442 = vpop.f32.mrb[0].mxu0
      %v1443 = vadd.f32 %v1231, %v1442
      %v1444 = vpop.f32.mrb[0].mxu0
      %v1445 = vpop.f32.mrb[0].mxu0
      %v1446 = vadd.f32 %v1234, %v1445
      %v1447 = vpop.f32.mrb[0].mxu0
      %1448 = vmatprep.mubr.bf16.mxu0 0
      %1449 = vmatmul.mubr.bf16.gmra.mrb[0].mxu0 %v1346
      %v1450 = vpop.f32.mrb[0].mxu0
      %v1451 = vadd.f32 %v1239, %v1450
      %v1452 = vpop.f32.mrb[0].mxu0
      %v1453 = vpop.f32.mrb[0].mxu0
      %v1454 = vadd.f32 %v1242, %v1453
      %v1455 = vpop.f32.mrb[0].mxu0
      %1456 = vmatprep.mubr.bf16.mxu0 0
      %1457 = vmatmul.mubr.bf16.gmra.mrb[0].mxu0 %v1349
      %v1458 = vpop.f32.mrb[0].mxu0
      %v1459 = vadd.f32 %v1247, %v1458
      %v1460 = vpop.f32.mrb[0].mxu0
      %v1461 = vpop.f32.mrb[0].mxu0
      %v1462 = vadd.f32 %v1250, %v1461
      %v1463 = vpop.f32.mrb[0].mxu0
      %1464 = vmatprep.mubr.bf16.mxu0 0
      %1465 = vmatmul.mubr.bf16.gmra.mrb[0].mxu0 %v1352
      %v1466 = vpop.f32.mrb[0].mxu0
      %v1467 = vadd.f32 %v1255, %v1466
      %v1468 = vpop.f32.mrb[0].mxu0
      %v1469 = vpop.f32.mrb[0].mxu0
      %v1470 = vadd.f32 %v1258, %v1469
      %v1471 = vpop.f32.mrb[0].mxu0
      %1472 = vmatprep.mubr.bf16.mxu0 0
      %1473 = vmatmul.mubr.bf16.gmra.mrb[0].mxu0 %v1355
      %v1474 = vpop.f32.mrb[0].mxu0
      %v1475 = vadd.f32 %v1263, %v1474
      %v1476 = vpop.f32.mrb[0].mxu0
      %v1477 = vpop.f32.mrb[0].mxu0
      %v1478 = vadd.f32 %v1266, %v1477
      %v1479 = vpop.f32.mrb[0].mxu0
      %1480 = vmatprep.mubr.bf16.mxu0 0
      %1481 = vmatmul.mubr.bf16.gmra.mrb[0].mxu0 %v1358
      %v1482 = vpop.f32.mrb[0].mxu0
      %v1483 = vadd.f32 %v1271, %v1482
      %v1484 = vpop.f32.mrb[0].mxu0
      %v1485 = vpop.f32.mrb[0].mxu0
      %v1486 = vadd.f32 %v1274, %v1485
      %v1487 = vpop.f32.mrb[0].mxu0
      %1488 = vmatprep.mubr.bf16.mxu0 0
      %1489 = vmatmul.mubr.bf16.gmra.mrb[0].mxu0 %v1361
      %v1490 = vpop.f32.mrb[0].mxu0
      %v1491 = vadd.f32 %v1279, %v1490
      %v1492 = vpop.f32.mrb[0].mxu0
      %v1493 = vpop.f32.mrb[0].mxu0
      %v1494 = vadd.f32 %v1282, %v1493
      %v1495 = vpop.f32.mrb[0].mxu0
      %1496 = vmatprep.mubr.bf16.mxu0 0
      %1497 = vmatmul.mubr.bf16.gmra.mrb[0].mxu0 %v1364
      %v1498 = vpop.f32.mrb[0].mxu0
      %v1499 = vadd.f32 %v1287, %v1498
      %v1500 = vpop.f32.mrb[0].mxu0
      %v1501 = vpop.f32.mrb[0].mxu0
      %v1502 = vadd.f32 %v1290, %v1501
      %v1503 = vpop.f32.mrb[0].mxu0
      %1504 = vmatprep.mubr.bf16.mxu0 0
      %1505 = vmatmul.mubr.bf16.gmra.mrb[0].mxu0 %v1367
      %v1506 = vpop.f32.mrb[0].mxu0
      %v1507 = vadd.f32 %v1295, %v1506
      %v1508 = vpop.f32.mrb[0].mxu0
      %v1509 = vpop.f32.mrb[0].mxu0
      %v1510 = vadd.f32 %v1298, %v1509
      %v1511 = vpop.f32.mrb[0].mxu0
      %1512 = vmatprep.mubr.bf16.mxu0 0
      %1513 = vmatmul.mubr.bf16.gmra.mrb[0].mxu0 %v1370
      %v1514 = vpop.f32.mrb[0].mxu0
      %v1515 = vadd.f32 %v1303, %v1514
      %v1516 = vpop.f32.mrb[0].mxu0
      %v1517 = vpop.f32.mrb[0].mxu0
      %v1518 = vadd.f32 %v1306, %v1517
      %v1519 = vpop.f32.mrb[0].mxu0
      %1520 = vmatprep.mubr.bf16.mxu0 0
      %1521 = vmatmul.mubr.bf16.gmra.mrb[0].mxu0 %v1373
      %v1522 = vpop.f32.mrb[0].mxu0
      %v1523 = vadd.f32 %v1311, %v1522
      %v1524 = vpop.f32.mrb[0].mxu0
      %v1525 = vpop.f32.mrb[0].mxu0
      %v1526 = vadd.f32 %v1314, %v1525
      %v1527 = vpop.f32.mrb[0].mxu0
      %1528 = vmatprep.mubr.bf16.mxu0 0
      %1529 = vmatmul.mubr.bf16.gmra.mrb[0].mxu0 %v1376
      %v1530 = vpop.f32.mrb[0].mxu0
      %v1531 = vadd.f32 %v1319, %v1530
      %v1532 = vpop.f32.mrb[0].mxu0
      %v1533 = vpop.f32.mrb[0].mxu0
      %v1534 = vadd.f32 %v1322, %v1533
      %v1535 = vpop.f32.mrb[0].mxu0
      %1536 = vmatprep.mubr.bf16.mxu0 0
      %1537 = vmatmul.mubr.bf16.gmra.mrb[0].mxu0 %v1379
      %v1538 = vpop.f32.mrb[0].mxu0
      %v1539 = vadd.f32 %v1327, %v1538
      %v1540 = vpop.f32.mrb[0].mxu0
      %v1541 = vpop.f32.mrb[0].mxu0
      %v1542 = vadd.f32 %v1330, %v1541
      %v1543 = vpop.f32.mrb[0].mxu0
      %1544 = vdwg.mxu0
      %v1545 = vld [vmem:[#allocation2 + $0x2] sm:$0xff]
      %v1546 = vld [vmem:[#allocation2 + $0xa] sm:$0xff]
      %v1547 = vld [vmem:[#allocation2 + $0x1a] sm:$0xff]
      %v1548 = vld [vmem:[#allocation2 + $0x22] sm:$0xff]
      %v1549 = vld [vmem:[#allocation2 + $0x32] sm:$0xff]
      %v1550 = vld [vmem:[#allocation2 + $0x3a] sm:$0xff]
      %v1551 = vld [vmem:[#allocation2 + $0x4a] sm:$0xff]
      %v1552 = vld [vmem:[#allocation2 + $0x52] sm:$0xff]
      %v1553 = vld [vmem:[#allocation2 + $0x62] sm:$0xff]
      %v1554 = vld [vmem:[#allocation2 + $0x6a] sm:$0xff]
      %v1555 = vld [vmem:[#allocation2 + $0x7a] sm:$0xff]
      %v1556 = vld [vmem:[#allocation2 + $0x82] sm:$0xff]
      %v1557 = vld [vmem:[#allocation2 + $0x92] sm:$0xff]
      %v1558 = vld [vmem:[#allocation2 + $0x9a] sm:$0xff]
      %v1559 = vld [vmem:[#allocation2 + $0xaa] sm:$0xff]
      %v1560 = vld [vmem:[#allocation2 + $0xb2] sm:$0xff]
      %v1561 = vld [vmem:[#allocation2 + $0xc2] sm:$0xff]
      %v1562 = vld [vmem:[#allocation2 + $0xca] sm:$0xff]
      %v1563 = vld [vmem:[#allocation2 + $0xda] sm:$0xff]
      %v1564 = vld [vmem:[#allocation2 + $0xe2] sm:$0xff]
      %v1565 = vld [vmem:[#allocation2 + $0xf2] sm:$0xff]
      %v1566 = vld [vmem:[#allocation2 + $0xfa] sm:$0xff]
      %v1567 = vld [vmem:[#allocation2 + $0x10a] sm:$0xff]
      %v1568 = vld [vmem:[#allocation2 + $0x112] sm:$0xff]
      %v1569 = vld [vmem:[#allocation2 + $0x122] sm:$0xff]
      %v1570 = vld [vmem:[#allocation2 + $0x12a] sm:$0xff]
      %v1571 = vld [vmem:[#allocation2 + $0x13a] sm:$0xff]
      %v1572 = vld [vmem:[#allocation2 + $0x142] sm:$0xff]
      %v1573 = vld [vmem:[#allocation2 + $0x152] sm:$0xff]
      %v1574 = vld [vmem:[#allocation2 + $0x15a] sm:$0xff]
      %v1575 = vld [vmem:[#allocation2 + $0x16a] sm:$0xff]
      %v1576 = vld [vmem:[#allocation2 + $0x172] sm:$0xff]
      %v1577 = vpack.c.bf16 %v1546, %v1545
      %v1578 = vpack.c.bf16 %v1548, %v1547
      %v1579 = vpack.c.bf16 %v1550, %v1549
      %v1580 = vpack.c.bf16 %v1552, %v1551
      %v1581 = vpack.c.bf16 %v1554, %v1553
      %v1582 = vpack.c.bf16 %v1556, %v1555
      %v1583 = vpack.c.bf16 %v1558, %v1557
      %v1584 = vpack.c.bf16 %v1560, %v1559
      %v1585 = vpack.c.bf16 %v1562, %v1561
      %v1586 = vpack.c.bf16 %v1564, %v1563
      %v1587 = vpack.c.bf16 %v1566, %v1565
      %v1588 = vpack.c.bf16 %v1568, %v1567
      %v1589 = vpack.c.bf16 %v1570, %v1569
      %v1590 = vpack.c.bf16 %v1572, %v1571
      %v1591 = vpack.c.bf16 %v1574, %v1573
      %v1592 = vpack.c.bf16 %v1576, %v1575
      %s1593 = scalar_lea.vmem %s3, 8
      %v1594 = vld [vmem:[%s1593] sm:$0xf]
      %v1595 = vpack.c.bf16 %v1594, %v1594
      %v1597 = vsel %vm420, %v1577, 0
      %v1600 = vsel %vm420, %v1578, 0
      %v1603 = vsel %vm420, %v1579, 0
      %v1606 = vsel %vm420, %v1580, 0
      %v1609 = vsel %vm420, %v1581, 0
      %v1612 = vsel %vm420, %v1582, 0
      %v1615 = vsel %vm420, %v1583, 0
      %v1618 = vsel %vm420, %v1584, 0
      %v1621 = vsel %vm420, %v1585, 0
      %v1624 = vsel %vm420, %v1586, 0
      %v1627 = vsel %vm420, %v1587, 0
      %v1630 = vsel %vm420, %v1588, 0
      %v1633 = vsel %vm420, %v1589, 0
      %v1636 = vsel %vm420, %v1590, 0
      %v1639 = vsel %vm420, %v1591, 0
      %v1642 = vsel %vm420, %v1592, 0
      %v1645 = vsel %vm735, %v1595, 0
      %1647 = vmatprep.subr.bf16.mxu0 0
      %1648 = vmatpush1.bf16.msra.mxu0 %v1645
      %1649 = vmatprep.subr.bf16.mxu0 0
      %1650 = vmatpush1.bf16.msra.mxu0 0
      %1651 = vmatprep.subr.bf16.mxu0 0
      %1652 = vmatpush1.bf16.msra.mxu0 0
      %1653 = vmatprep.subr.bf16.mxu0 0
      %1654 = vmatpush1.bf16.msra.mxu0 0
      %1655 = vmatprep.subr.bf16.mxu0 0
      %1656 = vmatpush1.bf16.msra.mxu0 0
      %1657 = vmatprep.subr.bf16.mxu0 0
      %1658 = vmatpush1.bf16.msra.mxu0 0
      %1659 = vmatprep.subr.bf16.mxu0 0
      %1660 = vmatpush1.bf16.msra.mxu0 0
      %1661 = vmatprep.subr.bf16.mxu0 0
      %1662 = vmatpush1.bf16.msra.mxu0 0
      %1663 = vmatprep.subr.bf16.mxu0 0
      %1664 = vmatpush1.bf16.msra.mxu0 0
      %1665 = vmatprep.subr.bf16.mxu0 0
      %1666 = vmatpush1.bf16.msra.mxu0 0
      %1667 = vmatprep.subr.bf16.mxu0 0
      %1668 = vmatpush1.bf16.msra.mxu0 0
      %1669 = vmatprep.subr.bf16.mxu0 0
      %1670 = vmatpush1.bf16.msra.mxu0 0
      %1671 = vmatprep.subr.bf16.mxu0 0
      %1672 = vmatpush1.bf16.msra.mxu0 0
      %1673 = vmatprep.subr.bf16.mxu0 0
      %1674 = vmatpush1.bf16.msra.mxu0 0
      %1675 = vmatprep.subr.bf16.mxu0 0
      %1676 = vmatpush1.bf16.msra.mxu0 0
      %1677 = vmatprep.subr.bf16.mxu0 0
      %1678 = vmatpush1.bf16.msra.mxu0 0
      %1679 = vmatprep.mubr.bf16.mxu0 0
      %1680 = vmatmul.mubr.bf16.gmra.mrb[0].mxu0 %v1597
      %v1681 = vpop.f32.mrb[0].mxu0
      %v1682 = vadd.f32 0.0, %v1681
      %v1683 = vpop.f32.mrb[0].mxu0
      %v1684 = vpop.f32.mrb[0].mxu0
      %v1685 = vadd.f32 0.0, %v1684
      %v1686 = vpop.f32.mrb[0].mxu0
      %1687 = vmatprep.mubr.bf16.mxu0 0
      %1688 = vmatmul.mubr.bf16.gmra.mrb[0].mxu0 %v1600
      %v1689 = vpop.f32.mrb[0].mxu0
      %v1690 = vadd.f32 0.0, %v1689
      %v1691 = vpop.f32.mrb[0].mxu0
      %v1692 = vpop.f32.mrb[0].mxu0
      %v1693 = vadd.f32 0.0, %v1692
      %v1694 = vpop.f32.mrb[0].mxu0
      %1695 = vmatprep.mubr.bf16.mxu0 0
      %1696 = vmatmul.mubr.bf16.gmra.mrb[0].mxu0 %v1603
      %v1697 = vpop.f32.mrb[0].mxu0
      %v1698 = vadd.f32 0.0, %v1697
      %v1699 = vpop.f32.mrb[0].mxu0
      %v1700 = vpop.f32.mrb[0].mxu0
      %v1701 = vadd.f32 0.0, %v1700
      %v1702 = vpop.f32.mrb[0].mxu0
      %1703 = vmatprep.mubr.bf16.mxu0 0
      %1704 = vmatmul.mubr.bf16.gmra.mrb[0].mxu0 %v1606
      %v1705 = vpop.f32.mrb[0].mxu0
      %v1706 = vadd.f32 0.0, %v1705
      %v1707 = vpop.f32.mrb[0].mxu0
      %v1708 = vpop.f32.mrb[0].mxu0
      %v1709 = vadd.f32 0.0, %v1708
      %v1710 = vpop.f32.mrb[0].mxu0
      %1711 = vmatprep.mubr.bf16.mxu0 0
      %1712 = vmatmul.mubr.bf16.gmra.mrb[0].mxu0 %v1609
      %v1713 = vpop.f32.mrb[0].mxu0
      %v1714 = vadd.f32 0.0, %v1713
      %v1715 = vpop.f32.mrb[0].mxu0
      %v1716 = vpop.f32.mrb[0].mxu0
      %v1717 = vadd.f32 0.0, %v1716
      %v1718 = vpop.f32.mrb[0].mxu0
      %1719 = vmatprep.mubr.bf16.mxu0 0
      %1720 = vmatmul.mubr.bf16.gmra.mrb[0].mxu0 %v1612
      %v1721 = vpop.f32.mrb[0].mxu0
      %v1722 = vadd.f32 0.0, %v1721
      %v1723 = vpop.f32.mrb[0].mxu0
      %v1724 = vpop.f32.mrb[0].mxu0
      %v1725 = vadd.f32 0.0, %v1724
      %v1726 = vpop.f32.mrb[0].mxu0
      %1727 = vmatprep.mubr.bf16.mxu0 0
      %1728 = vmatmul.mubr.bf16.gmra.mrb[0].mxu0 %v1615
      %v1729 = vpop.f32.mrb[0].mxu0
      %v1730 = vadd.f32 0.0, %v1729
      %v1731 = vpop.f32.mrb[0].mxu0
      %v1732 = vpop.f32.mrb[0].mxu0
      %v1733 = vadd.f32 0.0, %v1732
      %v1734 = vpop.f32.mrb[0].mxu0
      %1735 = vmatprep.mubr.bf16.mxu0 0
      %1736 = vmatmul.mubr.bf16.gmra.mrb[0].mxu0 %v1618
      %v1737 = vpop.f32.mrb[0].mxu0
      %v1738 = vadd.f32 0.0, %v1737
      %v1739 = vpop.f32.mrb[0].mxu0
      %v1740 = vpop.f32.mrb[0].mxu0
      %v1741 = vadd.f32 0.0, %v1740
      %v1742 = vpop.f32.mrb[0].mxu0
      %1743 = vmatprep.mubr.bf16.mxu0 0
      %1744 = vmatmul.mubr.bf16.gmra.mrb[0].mxu0 %v1621
      %v1745 = vpop.f32.mrb[0].mxu0
      %v1746 = vadd.f32 0.0, %v1745
      %v1747 = vpop.f32.mrb[0].mxu0
      %v1748 = vpop.f32.mrb[0].mxu0
      %v1749 = vadd.f32 0.0, %v1748
      %v1750 = vpop.f32.mrb[0].mxu0
      %1751 = vmatprep.mubr.bf16.mxu0 0
      %1752 = vmatmul.mubr.bf16.gmra.mrb[0].mxu0 %v1624
      %v1753 = vpop.f32.mrb[0].mxu0
      %v1754 = vadd.f32 0.0, %v1753
      %v1755 = vpop.f32.mrb[0].mxu0
      %v1756 = vpop.f32.mrb[0].mxu0
      %v1757 = vadd.f32 0.0, %v1756
      %v1758 = vpop.f32.mrb[0].mxu0
      %1759 = vmatprep.mubr.bf16.mxu0 0
      %1760 = vmatmul.mubr.bf16.gmra.mrb[0].mxu0 %v1627
      %v1761 = vpop.f32.mrb[0].mxu0
      %v1762 = vadd.f32 0.0, %v1761
      %v1763 = vpop.f32.mrb[0].mxu0
      %v1764 = vpop.f32.mrb[0].mxu0
      %v1765 = vadd.f32 0.0, %v1764
      %v1766 = vpop.f32.mrb[0].mxu0
      %1767 = vmatprep.mubr.bf16.mxu0 0
      %1768 = vmatmul.mubr.bf16.gmra.mrb[0].mxu0 %v1630
      %v1769 = vpop.f32.mrb[0].mxu0
      %v1770 = vadd.f32 0.0, %v1769
      %v1771 = vpop.f32.mrb[0].mxu0
      %v1772 = vpop.f32.mrb[0].mxu0
      %v1773 = vadd.f32 0.0, %v1772
      %v1774 = vpop.f32.mrb[0].mxu0
      %1775 = vmatprep.mubr.bf16.mxu0 0
      %1776 = vmatmul.mubr.bf16.gmra.mrb[0].mxu0 %v1633
      %v1777 = vpop.f32.mrb[0].mxu0
      %v1778 = vadd.f32 0.0, %v1777
      %v1779 = vpop.f32.mrb[0].mxu0
      %v1780 = vpop.f32.mrb[0].mxu0
      %v1781 = vadd.f32 0.0, %v1780
      %v1782 = vpop.f32.mrb[0].mxu0
      %1783 = vmatprep.mubr.bf16.mxu0 0
      %1784 = vmatmul.mubr.bf16.gmra.mrb[0].mxu0 %v1636
      %v1785 = vpop.f32.mrb[0].mxu0
      %v1786 = vadd.f32 0.0, %v1785
      %v1787 = vpop.f32.mrb[0].mxu0
      %v1788 = vpop.f32.mrb[0].mxu0
      %v1789 = vadd.f32 0.0, %v1788
      %v1790 = vpop.f32.mrb[0].mxu0
      %1791 = vmatprep.mubr.bf16.mxu0 0
      %1792 = vmatmul.mubr.bf16.gmra.mrb[0].mxu0 %v1639
      %v1793 = vpop.f32.mrb[0].mxu0
      %v1794 = vadd.f32 0.0, %v1793
      %v1795 = vpop.f32.mrb[0].mxu0
      %v1796 = vpop.f32.mrb[0].mxu0
      %v1797 = vadd.f32 0.0, %v1796
      %v1798 = vpop.f32.mrb[0].mxu0
      %1799 = vmatprep.mubr.bf16.mxu0 0
      %1800 = vmatmul.mubr.bf16.gmra.mrb[0].mxu0 %v1642
      %v1801 = vpop.f32.mrb[0].mxu0
      %v1802 = vadd.f32 0.0, %v1801
      %v1803 = vpop.f32.mrb[0].mxu0
      %v1804 = vpop.f32.mrb[0].mxu0
      %v1805 = vadd.f32 0.0, %v1804
      %v1806 = vpop.f32.mrb[0].mxu0
      %1807 = vdwg.mxu0
      %v1808 = vadd.f32 %v1419, %v1682
      %v1809 = vadd.f32 %v1422, %v1685
      %v1810 = vadd.f32 %v1427, %v1690
      %v1811 = vadd.f32 %v1430, %v1693
      %v1812 = vadd.f32 %v1435, %v1698
      %v1813 = vadd.f32 %v1438, %v1701
      %v1814 = vadd.f32 %v1443, %v1706
      %v1815 = vadd.f32 %v1446, %v1709
      %v1816 = vadd.f32 %v1451, %v1714
      %v1817 = vadd.f32 %v1454, %v1717
      %v1818 = vadd.f32 %v1459, %v1722
      %v1819 = vadd.f32 %v1462, %v1725
      %v1820 = vadd.f32 %v1467, %v1730
      %v1821 = vadd.f32 %v1470, %v1733
      %v1822 = vadd.f32 %v1475, %v1738
      %v1823 = vadd.f32 %v1478, %v1741
      %v1824 = vadd.f32 %v1483, %v1746
      %v1825 = vadd.f32 %v1486, %v1749
      %v1826 = vadd.f32 %v1491, %v1754
      %v1827 = vadd.f32 %v1494, %v1757
      %v1828 = vadd.f32 %v1499, %v1762
      %v1829 = vadd.f32 %v1502, %v1765
      %v1830 = vadd.f32 %v1507, %v1770
      %v1831 = vadd.f32 %v1510, %v1773
      %v1832 = vadd.f32 %v1515, %v1778
      %v1833 = vadd.f32 %v1518, %v1781
      %v1834 = vadd.f32 %v1523, %v1786
      %v1835 = vadd.f32 %v1526, %v1789
      %v1836 = vadd.f32 %v1531, %v1794
      %v1837 = vadd.f32 %v1534, %v1797
      %v1838 = vadd.f32 %v1539, %v1802
      %v1839 = vadd.f32 %v1542, %v1805
      %v1840 = vld [vmem:[%s987] sm:$0xff]
      %v1841 = vld [vmem:[%s987 + $0x8] sm:$0xff]
      %v1842 = vld [vmem:[%s987 + $0x18] sm:$0xff]
      %v1843 = vld [vmem:[%s987 + $0x20] sm:$0xff]
      %v1844 = vld [vmem:[%s987 + $0x30] sm:$0xff]
      %v1845 = vld [vmem:[%s987 + $0x38] sm:$0xff]
      %v1846 = vld [vmem:[%s987 + $0x48] sm:$0xff]
      %v1847 = vld [vmem:[%s987 + $0x50] sm:$0xff]
      %v1848 = vld [vmem:[%s987 + $0x60] sm:$0xff]
      %v1849 = vld [vmem:[%s987 + $0x68] sm:$0xff]
      %v1850 = vld [vmem:[%s987 + $0x78] sm:$0xff]
      %v1851 = vld [vmem:[%s987 + $0x80] sm:$0xff]
      %v1852 = vld [vmem:[%s987 + $0x90] sm:$0xff]
      %v1853 = vld [vmem:[%s987 + $0x98] sm:$0xff]
      %v1854 = vld [vmem:[%s987 + $0xa8] sm:$0xff]
      %v1855 = vld [vmem:[%s987 + $0xb0] sm:$0xff]
      %v1856 = vld [vmem:[%s987 + $0xc0] sm:$0xff]
      %v1857 = vld [vmem:[%s987 + $0xc8] sm:$0xff]
      %v1858 = vld [vmem:[%s987 + $0xd8] sm:$0xff]
      %v1859 = vld [vmem:[%s987 + $0xe0] sm:$0xff]
      %v1860 = vld [vmem:[%s987 + $0xf0] sm:$0xff]
      %v1861 = vld [vmem:[%s987 + $0xf8] sm:$0xff]
      %v1862 = vld [vmem:[%s987 + $0x108] sm:$0xff]
      %v1863 = vld [vmem:[%s987 + $0x110] sm:$0xff]
      %v1864 = vld [vmem:[%s987 + $0x120] sm:$0xff]
      %v1865 = vld [vmem:[%s987 + $0x128] sm:$0xff]
      %v1866 = vld [vmem:[%s987 + $0x138] sm:$0xff]
      %v1867 = vld [vmem:[%s987 + $0x140] sm:$0xff]
      %v1868 = vld [vmem:[%s987 + $0x150] sm:$0xff]
      %v1869 = vld [vmem:[%s987 + $0x158] sm:$0xff]
      %v1870 = vld [vmem:[%s987 + $0x168] sm:$0xff]
      %v1871 = vld [vmem:[%s987 + $0x170] sm:$0xff]
      %v1872 = vpack.c.bf16 %v1841, %v1840
      %v1873 = vpack.c.bf16 %v1843, %v1842
      %v1874 = vpack.c.bf16 %v1845, %v1844
      %v1875 = vpack.c.bf16 %v1847, %v1846
      %v1876 = vpack.c.bf16 %v1849, %v1848
      %v1877 = vpack.c.bf16 %v1851, %v1850
      %v1878 = vpack.c.bf16 %v1853, %v1852
      %v1879 = vpack.c.bf16 %v1855, %v1854
      %v1880 = vpack.c.bf16 %v1857, %v1856
      %v1881 = vpack.c.bf16 %v1859, %v1858
      %v1882 = vpack.c.bf16 %v1861, %v1860
      %v1883 = vpack.c.bf16 %v1863, %v1862
      %v1884 = vpack.c.bf16 %v1865, %v1864
      %v1885 = vpack.c.bf16 %v1867, %v1866
      %v1886 = vpack.c.bf16 %v1869, %v1868
      %v1887 = vpack.c.bf16 %v1871, %v1870
      %s1888 = scalar_lea.vmem %s3, 12
      %v1889 = vld [vmem:[%s1888] sm:$0xf]
      %v1890 = vpack.c.bf16 %v1889, %v1889
      %v1892 = vsel %vm420, %v1872, 0
      %v1895 = vsel %vm420, %v1873, 0
      %v1898 = vsel %vm420, %v1874, 0
      %v1901 = vsel %vm420, %v1875, 0
      %v1904 = vsel %vm420, %v1876, 0
      %v1907 = vsel %vm420, %v1877, 0
      %v1910 = vsel %vm420, %v1878, 0
      %v1913 = vsel %vm420, %v1879, 0
      %v1916 = vsel %vm420, %v1880, 0
      %v1919 = vsel %vm420, %v1881, 0
      %v1922 = vsel %vm420, %v1882, 0
      %v1925 = vsel %vm420, %v1883, 0
      %v1928 = vsel %vm420, %v1884, 0
      %v1931 = vsel %vm420, %v1885, 0
      %v1934 = vsel %vm420, %v1886, 0
      %v1937 = vsel %vm420, %v1887, 0
      %v1940 = vsel %vm735, %v1890, 0
      %1942 = vmatprep.subr.bf16.mxu0 0
      %1943 = vmatpush1.bf16.msra.mxu0 %v1940
      %1944 = vmatprep.subr.bf16.mxu0 0
      %1945 = vmatpush1.bf16.msra.mxu0 0
      %1946 = vmatprep.subr.bf16.mxu0 0
      %1947 = vmatpush1.bf16.msra.mxu0 0
      %1948 = vmatprep.subr.bf16.mxu0 0
      %1949 = vmatpush1.bf16.msra.mxu0 0
      %1950 = vmatprep.subr.bf16.mxu0 0
      %1951 = vmatpush1.bf16.msra.mxu0 0
      %1952 = vmatprep.subr.bf16.mxu0 0
      %1953 = vmatpush1.bf16.msra.mxu0 0
      %1954 = vmatprep.subr.bf16.mxu0 0
      %1955 = vmatpush1.bf16.msra.mxu0 0
      %1956 = vmatprep.subr.bf16.mxu0 0
      %1957 = vmatpush1.bf16.msra.mxu0 0
      %1958 = vmatprep.subr.bf16.mxu0 0
      %1959 = vmatpush1.bf16.msra.mxu0 0
      %1960 = vmatprep.subr.bf16.mxu0 0
      %1961 = vmatpush1.bf16.msra.mxu0 0
      %1962 = vmatprep.subr.bf16.mxu0 0
      %1963 = vmatpush1.bf16.msra.mxu0 0
      %1964 = vmatprep.subr.bf16.mxu0 0
      %1965 = vmatpush1.bf16.msra.mxu0 0
      %1966 = vmatprep.subr.bf16.mxu0 0
      %1967 = vmatpush1.bf16.msra.mxu0 0
      %1968 = vmatprep.subr.bf16.mxu0 0
      %1969 = vmatpush1.bf16.msra.mxu0 0
      %1970 = vmatprep.subr.bf16.mxu0 0
      %1971 = vmatpush1.bf16.msra.mxu0 0
      %1972 = vmatprep.subr.bf16.mxu0 0
      %1973 = vmatpush1.bf16.msra.mxu0 0
      %1974 = vmatprep.mubr.bf16.mxu0 0
      %1975 = vmatmul.mubr.bf16.gmra.mrb[0].mxu0 %v1892
      %v1976 = vpop.f32.mrb[0].mxu0
      %v1977 = vadd.f32 0.0, %v1976
      %v1978 = vpop.f32.mrb[0].mxu0
      %v1979 = vpop.f32.mrb[0].mxu0
      %v1980 = vadd.f32 0.0, %v1979
      %v1981 = vpop.f32.mrb[0].mxu0
      %1982 = vmatprep.mubr.bf16.mxu0 0
      %1983 = vmatmul.mubr.bf16.gmra.mrb[0].mxu0 %v1895
      %v1984 = vpop.f32.mrb[0].mxu0
      %v1985 = vadd.f32 0.0, %v1984
      %v1986 = vpop.f32.mrb[0].mxu0
      %v1987 = vpop.f32.mrb[0].mxu0
      %v1988 = vadd.f32 0.0, %v1987
      %v1989 = vpop.f32.mrb[0].mxu0
      %1990 = vmatprep.mubr.bf16.mxu0 0
      %1991 = vmatmul.mubr.bf16.gmra.mrb[0].mxu0 %v1898
      %v1992 = vpop.f32.mrb[0].mxu0
      %v1993 = vadd.f32 0.0, %v1992
      %v1994 = vpop.f32.mrb[0].mxu0
      %v1995 = vpop.f32.mrb[0].mxu0
      %v1996 = vadd.f32 0.0, %v1995
      %v1997 = vpop.f32.mrb[0].mxu0
      %1998 = vmatprep.mubr.bf16.mxu0 0
      %1999 = vmatmul.mubr.bf16.gmra.mrb[0].mxu0 %v1901
      %v2000 = vpop.f32.mrb[0].mxu0
      %v2001 = vadd.f32 0.0, %v2000
      %v2002 = vpop.f32.mrb[0].mxu0
      %v2003 = vpop.f32.mrb[0].mxu0
      %v2004 = vadd.f32 0.0, %v2003
      %v2005 = vpop.f32.mrb[0].mxu0
      %2006 = vmatprep.mubr.bf16.mxu0 0
      %2007 = vmatmul.mubr.bf16.gmra.mrb[0].mxu0 %v1904
      %v2008 = vpop.f32.mrb[0].mxu0
      %v2009 = vadd.f32 0.0, %v2008
      %v2010 = vpop.f32.mrb[0].mxu0
      %v2011 = vpop.f32.mrb[0].mxu0
      %v2012 = vadd.f32 0.0, %v2011
      %v2013 = vpop.f32.mrb[0].mxu0
      %2014 = vmatprep.mubr.bf16.mxu0 0
      %2015 = vmatmul.mubr.bf16.gmra.mrb[0].mxu0 %v1907
      %v2016 = vpop.f32.mrb[0].mxu0
      %v2017 = vadd.f32 0.0, %v2016
      %v2018 = vpop.f32.mrb[0].mxu0
      %v2019 = vpop.f32.mrb[0].mxu0
      %v2020 = vadd.f32 0.0, %v2019
      %v2021 = vpop.f32.mrb[0].mxu0
      %2022 = vmatprep.mubr.bf16.mxu0 0
      %2023 = vmatmul.mubr.bf16.gmra.mrb[0].mxu0 %v1910
      %v2024 = vpop.f32.mrb[0].mxu0
      %v2025 = vadd.f32 0.0, %v2024
      %v2026 = vpop.f32.mrb[0].mxu0
      %v2027 = vpop.f32.mrb[0].mxu0
      %v2028 = vadd.f32 0.0, %v2027
      %v2029 = vpop.f32.mrb[0].mxu0
      %2030 = vmatprep.mubr.bf16.mxu0 0
      %2031 = vmatmul.mubr.bf16.gmra.mrb[0].mxu0 %v1913
      %v2032 = vpop.f32.mrb[0].mxu0
      %v2033 = vadd.f32 0.0, %v2032
      %v2034 = vpop.f32.mrb[0].mxu0
      %v2035 = vpop.f32.mrb[0].mxu0
      %v2036 = vadd.f32 0.0, %v2035
      %v2037 = vpop.f32.mrb[0].mxu0
      %2038 = vmatprep.mubr.bf16.mxu0 0
      %2039 = vmatmul.mubr.bf16.gmra.mrb[0].mxu0 %v1916
      %v2040 = vpop.f32.mrb[0].mxu0
      %v2041 = vadd.f32 0.0, %v2040
      %v2042 = vpop.f32.mrb[0].mxu0
      %v2043 = vpop.f32.mrb[0].mxu0
      %v2044 = vadd.f32 0.0, %v2043
      %v2045 = vpop.f32.mrb[0].mxu0
      %2046 = vmatprep.mubr.bf16.mxu0 0
      %2047 = vmatmul.mubr.bf16.gmra.mrb[0].mxu0 %v1919
      %v2048 = vpop.f32.mrb[0].mxu0
      %v2049 = vadd.f32 0.0, %v2048
      %v2050 = vpop.f32.mrb[0].mxu0
      %v2051 = vpop.f32.mrb[0].mxu0
      %v2052 = vadd.f32 0.0, %v2051
      %v2053 = vpop.f32.mrb[0].mxu0
      %2054 = vmatprep.mubr.bf16.mxu0 0
      %2055 = vmatmul.mubr.bf16.gmra.mrb[0].mxu0 %v1922
      %v2056 = vpop.f32.mrb[0].mxu0
      %v2057 = vadd.f32 0.0, %v2056
      %v2058 = vpop.f32.mrb[0].mxu0
      %v2059 = vpop.f32.mrb[0].mxu0
      %v2060 = vadd.f32 0.0, %v2059
      %v2061 = vpop.f32.mrb[0].mxu0
      %2062 = vmatprep.mubr.bf16.mxu0 0
      %2063 = vmatmul.mubr.bf16.gmra.mrb[0].mxu0 %v1925
      %v2064 = vpop.f32.mrb[0].mxu0
      %v2065 = vadd.f32 0.0, %v2064
      %v2066 = vpop.f32.mrb[0].mxu0
      %v2067 = vpop.f32.mrb[0].mxu0
      %v2068 = vadd.f32 0.0, %v2067
      %v2069 = vpop.f32.mrb[0].mxu0
      %2070 = vmatprep.mubr.bf16.mxu0 0
      %2071 = vmatmul.mubr.bf16.gmra.mrb[0].mxu0 %v1928
      %v2072 = vpop.f32.mrb[0].mxu0
      %v2073 = vadd.f32 0.0, %v2072
      %v2074 = vpop.f32.mrb[0].mxu0
      %v2075 = vpop.f32.mrb[0].mxu0
      %v2076 = vadd.f32 0.0, %v2075
      %v2077 = vpop.f32.mrb[0].mxu0
      %2078 = vmatprep.mubr.bf16.mxu0 0
      %2079 = vmatmul.mubr.bf16.gmra.mrb[0].mxu0 %v1931
      %v2080 = vpop.f32.mrb[0].mxu0
      %v2081 = vadd.f32 0.0, %v2080
      %v2082 = vpop.f32.mrb[0].mxu0
      %v2083 = vpop.f32.mrb[0].mxu0
      %v2084 = vadd.f32 0.0, %v2083
      %v2085 = vpop.f32.mrb[0].mxu0
      %2086 = vmatprep.mubr.bf16.mxu0 0
      %2087 = vmatmul.mubr.bf16.gmra.mrb[0].mxu0 %v1934
      %v2088 = vpop.f32.mrb[0].mxu0
      %v2089 = vadd.f32 0.0, %v2088
      %v2090 = vpop.f32.mrb[0].mxu0
      %v2091 = vpop.f32.mrb[0].mxu0
      %v2092 = vadd.f32 0.0, %v2091
      %v2093 = vpop.f32.mrb[0].mxu0
      %2094 = vmatprep.mubr.bf16.mxu0 0
      %2095 = vmatmul.mubr.bf16.gmra.mrb[0].mxu0 %v1937
      %v2096 = vpop.f32.mrb[0].mxu0
      %v2097 = vadd.f32 0.0, %v2096
      %v2098 = vpop.f32.mrb[0].mxu0
      %v2099 = vpop.f32.mrb[0].mxu0
      %v2100 = vadd.f32 0.0, %v2099
      %v2101 = vpop.f32.mrb[0].mxu0
      %2102 = vdwg.mxu0
      %v2103 = vadd.f32 %v1808, %v1977
      %v2104 = vadd.f32 %v1809, %v1980
      %v2105 = vadd.f32 %v1810, %v1985
      %v2106 = vadd.f32 %v1811, %v1988
      %v2107 = vadd.f32 %v1812, %v1993
      %v2108 = vadd.f32 %v1813, %v1996
      %v2109 = vadd.f32 %v1814, %v2001
      %v2110 = vadd.f32 %v1815, %v2004
      %v2111 = vadd.f32 %v1816, %v2009
      %v2112 = vadd.f32 %v1817, %v2012
      %v2113 = vadd.f32 %v1818, %v2017
      %v2114 = vadd.f32 %v1819, %v2020
      %v2115 = vadd.f32 %v1820, %v2025
      %v2116 = vadd.f32 %v1821, %v2028
      %v2117 = vadd.f32 %v1822, %v2033
      %v2118 = vadd.f32 %v1823, %v2036
      %v2119 = vadd.f32 %v1824, %v2041
      %v2120 = vadd.f32 %v1825, %v2044
      %v2121 = vadd.f32 %v1826, %v2049
      %v2122 = vadd.f32 %v1827, %v2052
      %v2123 = vadd.f32 %v1828, %v2057
      %v2124 = vadd.f32 %v1829, %v2060
      %v2125 = vadd.f32 %v1830, %v2065
      %v2126 = vadd.f32 %v1831, %v2068
      %v2127 = vadd.f32 %v1832, %v2073
      %v2128 = vadd.f32 %v1833, %v2076
      %v2129 = vadd.f32 %v1834, %v2081
      %v2130 = vadd.f32 %v1835, %v2084
      %v2131 = vadd.f32 %v1836, %v2089
      %v2132 = vadd.f32 %v1837, %v2092
      %v2133 = vadd.f32 %v1838, %v2097
      %v2134 = vadd.f32 %v1839, %v2100
      %v2135 = vld [vmem:[%s987 + $0x1] sm:$0xff]
      %v2136 = vld [vmem:[%s987 + $0x9] sm:$0xff]
      %v2137 = vld [vmem:[%s987 + $0x19] sm:$0xff]
      %v2138 = vld [vmem:[%s987 + $0x21] sm:$0xff]
      %v2139 = vld [vmem:[%s987 + $0x31] sm:$0xff]
      %v2140 = vld [vmem:[%s987 + $0x39] sm:$0xff]
      %v2141 = vld [vmem:[%s987 + $0x49] sm:$0xff]
      %v2142 = vld [vmem:[%s987 + $0x51] sm:$0xff]
      %v2143 = vld [vmem:[%s987 + $0x61] sm:$0xff]
      %v2144 = vld [vmem:[%s987 + $0x69] sm:$0xff]
      %v2145 = vld [vmem:[%s987 + $0x79] sm:$0xff]
      %v2146 = vld [vmem:[%s987 + $0x81] sm:$0xff]
      %v2147 = vld [vmem:[%s987 + $0x91] sm:$0xff]
      %v2148 = vld [vmem:[%s987 + $0x99] sm:$0xff]
      %v2149 = vld [vmem:[%s987 + $0xa9] sm:$0xff]
      %v2150 = vld [vmem:[%s987 + $0xb1] sm:$0xff]
      %v2151 = vld [vmem:[%s987 + $0xc1] sm:$0xff]
      %v2152 = vld [vmem:[%s987 + $0xc9] sm:$0xff]
      %v2153 = vld [vmem:[%s987 + $0xd9] sm:$0xff]
      %v2154 = vld [vmem:[%s987 + $0xe1] sm:$0xff]
      %v2155 = vld [vmem:[%s987 + $0xf1] sm:$0xff]
      %v2156 = vld [vmem:[%s987 + $0xf9] sm:$0xff]
      %v2157 = vld [vmem:[%s987 + $0x109] sm:$0xff]
      %v2158 = vld [vmem:[%s987 + $0x111] sm:$0xff]
      %v2159 = vld [vmem:[%s987 + $0x121] sm:$0xff]
      %v2160 = vld [vmem:[%s987 + $0x129] sm:$0xff]
      %v2161 = vld [vmem:[%s987 + $0x139] sm:$0xff]
      %v2162 = vld [vmem:[%s987 + $0x141] sm:$0xff]
      %v2163 = vld [vmem:[%s987 + $0x151] sm:$0xff]
      %v2164 = vld [vmem:[%s987 + $0x159] sm:$0xff]
      %v2165 = vld [vmem:[%s987 + $0x169] sm:$0xff]
      %v2166 = vld [vmem:[%s987 + $0x171] sm:$0xff]
      %v2167 = vpack.c.bf16 %v2136, %v2135
      %v2168 = vpack.c.bf16 %v2138, %v2137
      %v2169 = vpack.c.bf16 %v2140, %v2139
      %v2170 = vpack.c.bf16 %v2142, %v2141
      %v2171 = vpack.c.bf16 %v2144, %v2143
      %v2172 = vpack.c.bf16 %v2146, %v2145
      %v2173 = vpack.c.bf16 %v2148, %v2147
      %v2174 = vpack.c.bf16 %v2150, %v2149
      %v2175 = vpack.c.bf16 %v2152, %v2151
      %v2176 = vpack.c.bf16 %v2154, %v2153
      %v2177 = vpack.c.bf16 %v2156, %v2155
      %v2178 = vpack.c.bf16 %v2158, %v2157
      %v2179 = vpack.c.bf16 %v2160, %v2159
      %v2180 = vpack.c.bf16 %v2162, %v2161
      %v2181 = vpack.c.bf16 %v2164, %v2163
      %v2182 = vpack.c.bf16 %v2166, %v2165
      %s2183 = scalar_lea.vmem %s3, 16
      %v2184 = vld [vmem:[%s2183] sm:$0xf]
      %v2185 = vpack.c.bf16 %v2184, %v2184
      %v2187 = vsel %vm420, %v2167, 0
      %v2190 = vsel %vm420, %v2168, 0
      %v2193 = vsel %vm420, %v2169, 0
      %v2196 = vsel %vm420, %v2170, 0
      %v2199 = vsel %vm420, %v2171, 0
      %v2202 = vsel %vm420, %v2172, 0
      %v2205 = vsel %vm420, %v2173, 0
      %v2208 = vsel %vm420, %v2174, 0
      %v2211 = vsel %vm420, %v2175, 0
      %v2214 = vsel %vm420, %v2176, 0
      %v2217 = vsel %vm420, %v2177, 0
      %v2220 = vsel %vm420, %v2178, 0
      %v2223 = vsel %vm420, %v2179, 0
      %v2226 = vsel %vm420, %v2180, 0
      %v2229 = vsel %vm420, %v2181, 0
      %v2232 = vsel %vm420, %v2182, 0
      %v2235 = vsel %vm735, %v2185, 0
      %2237 = vmatprep.subr.bf16.mxu0 0
      %2238 = vmatpush1.bf16.msra.mxu0 %v2235
      %2239 = vmatprep.subr.bf16.mxu0 0
      %2240 = vmatpush1.bf16.msra.mxu0 0
      %2241 = vmatprep.subr.bf16.mxu0 0
      %2242 = vmatpush1.bf16.msra.mxu0 0
      %2243 = vmatprep.subr.bf16.mxu0 0
      %2244 = vmatpush1.bf16.msra.mxu0 0
      %2245 = vmatprep.subr.bf16.mxu0 0
      %2246 = vmatpush1.bf16.msra.mxu0 0
      %2247 = vmatprep.subr.bf16.mxu0 0
      %2248 = vmatpush1.bf16.msra.mxu0 0
      %2249 = vmatprep.subr.bf16.mxu0 0
      %2250 = vmatpush1.bf16.msra.mxu0 0
      %2251 = vmatprep.subr.bf16.mxu0 0
      %2252 = vmatpush1.bf16.msra.mxu0 0
      %2253 = vmatprep.subr.bf16.mxu0 0
      %2254 = vmatpush1.bf16.msra.mxu0 0
      %2255 = vmatprep.subr.bf16.mxu0 0
      %2256 = vmatpush1.bf16.msra.mxu0 0
      %2257 = vmatprep.subr.bf16.mxu0 0
      %2258 = vmatpush1.bf16.msra.mxu0 0
      %2259 = vmatprep.subr.bf16.mxu0 0
      %2260 = vmatpush1.bf16.msra.mxu0 0
      %2261 = vmatprep.subr.bf16.mxu0 0
      %2262 = vmatpush1.bf16.msra.mxu0 0
      %2263 = vmatprep.subr.bf16.mxu0 0
      %2264 = vmatpush1.bf16.msra.mxu0 0
      %2265 = vmatprep.subr.bf16.mxu0 0
      %2266 = vmatpush1.bf16.msra.mxu0 0
      %2267 = vmatprep.subr.bf16.mxu0 0
      %2268 = vmatpush1.bf16.msra.mxu0 0
      %2269 = vmatprep.mubr.bf16.mxu0 0
      %2270 = vmatmul.mubr.bf16.gmra.mrb[0].mxu0 %v2187
      %v2271 = vpop.f32.mrb[0].mxu0
      %v2272 = vadd.f32 0.0, %v2271
      %v2273 = vpop.f32.mrb[0].mxu0
      %v2274 = vpop.f32.mrb[0].mxu0
      %v2275 = vadd.f32 0.0, %v2274
      %v2276 = vpop.f32.mrb[0].mxu0
      %2277 = vmatprep.mubr.bf16.mxu0 0
      %2278 = vmatmul.mubr.bf16.gmra.mrb[0].mxu0 %v2190
      %v2279 = vpop.f32.mrb[0].mxu0
      %v2280 = vadd.f32 0.0, %v2279
      %v2281 = vpop.f32.mrb[0].mxu0
      %v2282 = vpop.f32.mrb[0].mxu0
      %v2283 = vadd.f32 0.0, %v2282
      %v2284 = vpop.f32.mrb[0].mxu0
      %2285 = vmatprep.mubr.bf16.mxu0 0
      %2286 = vmatmul.mubr.bf16.gmra.mrb[0].mxu0 %v2193
      %v2287 = vpop.f32.mrb[0].mxu0
      %v2288 = vadd.f32 0.0, %v2287
      %v2289 = vpop.f32.mrb[0].mxu0
      %v2290 = vpop.f32.mrb[0].mxu0
      %v2291 = vadd.f32 0.0, %v2290
      %v2292 = vpop.f32.mrb[0].mxu0
      %2293 = vmatprep.mubr.bf16.mxu0 0
      %2294 = vmatmul.mubr.bf16.gmra.mrb[0].mxu0 %v2196
      %v2295 = vpop.f32.mrb[0].mxu0
      %v2296 = vadd.f32 0.0, %v2295
      %v2297 = vpop.f32.mrb[0].mxu0
      %v2298 = vpop.f32.mrb[0].mxu0
      %v2299 = vadd.f32 0.0, %v2298
      %v2300 = vpop.f32.mrb[0].mxu0
      %2301 = vmatprep.mubr.bf16.mxu0 0
      %2302 = vmatmul.mubr.bf16.gmra.mrb[0].mxu0 %v2199
      %v2303 = vpop.f32.mrb[0].mxu0
      %v2304 = vadd.f32 0.0, %v2303
      %v2305 = vpop.f32.mrb[0].mxu0
      %v2306 = vpop.f32.mrb[0].mxu0
      %v2307 = vadd.f32 0.0, %v2306
      %v2308 = vpop.f32.mrb[0].mxu0
      %2309 = vmatprep.mubr.bf16.mxu0 0
      %2310 = vmatmul.mubr.bf16.gmra.mrb[0].mxu0 %v2202
      %v2311 = vpop.f32.mrb[0].mxu0
      %v2312 = vadd.f32 0.0, %v2311
      %v2313 = vpop.f32.mrb[0].mxu0
      %v2314 = vpop.f32.mrb[0].mxu0
      %v2315 = vadd.f32 0.0, %v2314
      %v2316 = vpop.f32.mrb[0].mxu0
      %2317 = vmatprep.mubr.bf16.mxu0 0
      %2318 = vmatmul.mubr.bf16.gmra.mrb[0].mxu0 %v2205
      %v2319 = vpop.f32.mrb[0].mxu0
      %v2320 = vadd.f32 0.0, %v2319
      %v2321 = vpop.f32.mrb[0].mxu0
      %v2322 = vpop.f32.mrb[0].mxu0
      %v2323 = vadd.f32 0.0, %v2322
      %v2324 = vpop.f32.mrb[0].mxu0
      %2325 = vmatprep.mubr.bf16.mxu0 0
      %2326 = vmatmul.mubr.bf16.gmra.mrb[0].mxu0 %v2208
      %v2327 = vpop.f32.mrb[0].mxu0
      %v2328 = vadd.f32 0.0, %v2327
      %v2329 = vpop.f32.mrb[0].mxu0
      %v2330 = vpop.f32.mrb[0].mxu0
      %v2331 = vadd.f32 0.0, %v2330
      %v2332 = vpop.f32.mrb[0].mxu0
      %2333 = vmatprep.mubr.bf16.mxu0 0
      %2334 = vmatmul.mubr.bf16.gmra.mrb[0].mxu0 %v2211
      %v2335 = vpop.f32.mrb[0].mxu0
      %v2336 = vadd.f32 0.0, %v2335
      %v2337 = vpop.f32.mrb[0].mxu0
      %v2338 = vpop.f32.mrb[0].mxu0
      %v2339 = vadd.f32 0.0, %v2338
      %v2340 = vpop.f32.mrb[0].mxu0
      %2341 = vmatprep.mubr.bf16.mxu0 0
      %2342 = vmatmul.mubr.bf16.gmra.mrb[0].mxu0 %v2214
      %v2343 = vpop.f32.mrb[0].mxu0
      %v2344 = vadd.f32 0.0, %v2343
      %v2345 = vpop.f32.mrb[0].mxu0
      %v2346 = vpop.f32.mrb[0].mxu0
      %v2347 = vadd.f32 0.0, %v2346
      %v2348 = vpop.f32.mrb[0].mxu0
      %2349 = vmatprep.mubr.bf16.mxu0 0
      %2350 = vmatmul.mubr.bf16.gmra.mrb[0].mxu0 %v2217
      %v2351 = vpop.f32.mrb[0].mxu0
      %v2352 = vadd.f32 0.0, %v2351
      %v2353 = vpop.f32.mrb[0].mxu0
      %v2354 = vpop.f32.mrb[0].mxu0
      %v2355 = vadd.f32 0.0, %v2354
      %v2356 = vpop.f32.mrb[0].mxu0
      %2357 = vmatprep.mubr.bf16.mxu0 0
      %2358 = vmatmul.mubr.bf16.gmra.mrb[0].mxu0 %v2220
      %v2359 = vpop.f32.mrb[0].mxu0
      %v2360 = vadd.f32 0.0, %v2359
      %v2361 = vpop.f32.mrb[0].mxu0
      %v2362 = vpop.f32.mrb[0].mxu0
      %v2363 = vadd.f32 0.0, %v2362
      %v2364 = vpop.f32.mrb[0].mxu0
      %2365 = vmatprep.mubr.bf16.mxu0 0
      %2366 = vmatmul.mubr.bf16.gmra.mrb[0].mxu0 %v2223
      %v2367 = vpop.f32.mrb[0].mxu0
      %v2368 = vadd.f32 0.0, %v2367
      %v2369 = vpop.f32.mrb[0].mxu0
      %v2370 = vpop.f32.mrb[0].mxu0
      %v2371 = vadd.f32 0.0, %v2370
      %v2372 = vpop.f32.mrb[0].mxu0
      %2373 = vmatprep.mubr.bf16.mxu0 0
      %2374 = vmatmul.mubr.bf16.gmra.mrb[0].mxu0 %v2226
      %v2375 = vpop.f32.mrb[0].mxu0
      %v2376 = vadd.f32 0.0, %v2375
      %v2377 = vpop.f32.mrb[0].mxu0
      %v2378 = vpop.f32.mrb[0].mxu0
      %v2379 = vadd.f32 0.0, %v2378
      %v2380 = vpop.f32.mrb[0].mxu0
      %2381 = vmatprep.mubr.bf16.mxu0 0
      %2382 = vmatmul.mubr.bf16.gmra.mrb[0].mxu0 %v2229
      %v2383 = vpop.f32.mrb[0].mxu0
      %v2384 = vadd.f32 0.0, %v2383
      %v2385 = vpop.f32.mrb[0].mxu0
      %v2386 = vpop.f32.mrb[0].mxu0
      %v2387 = vadd.f32 0.0, %v2386
      %v2388 = vpop.f32.mrb[0].mxu0
      %2389 = vmatprep.mubr.bf16.mxu0 0
      %2390 = vmatmul.mubr.bf16.gmra.mrb[0].mxu0 %v2232
      %v2391 = vpop.f32.mrb[0].mxu0
      %v2392 = vadd.f32 0.0, %v2391
      %v2393 = vpop.f32.mrb[0].mxu0
      %v2394 = vpop.f32.mrb[0].mxu0
      %v2395 = vadd.f32 0.0, %v2394
      %v2396 = vpop.f32.mrb[0].mxu0
      %2397 = vdwg.mxu0
      %v2398 = vadd.f32 %v2103, %v2272
      %v2399 = vadd.f32 %v2104, %v2275
      %v2400 = vadd.f32 %v2105, %v2280
      %v2401 = vadd.f32 %v2106, %v2283
      %v2402 = vadd.f32 %v2107, %v2288
      %v2403 = vadd.f32 %v2108, %v2291
      %v2404 = vadd.f32 %v2109, %v2296
      %v2405 = vadd.f32 %v2110, %v2299
      %v2406 = vadd.f32 %v2111, %v2304
      %v2407 = vadd.f32 %v2112, %v2307
      %v2408 = vadd.f32 %v2113, %v2312
      %v2409 = vadd.f32 %v2114, %v2315
      %v2410 = vadd.f32 %v2115, %v2320
      %v2411 = vadd.f32 %v2116, %v2323
      %v2412 = vadd.f32 %v2117, %v2328
      %v2413 = vadd.f32 %v2118, %v2331
      %v2414 = vadd.f32 %v2119, %v2336
      %v2415 = vadd.f32 %v2120, %v2339
      %v2416 = vadd.f32 %v2121, %v2344
      %v2417 = vadd.f32 %v2122, %v2347
      %v2418 = vadd.f32 %v2123, %v2352
      %v2419 = vadd.f32 %v2124, %v2355
      %v2420 = vadd.f32 %v2125, %v2360
      %v2421 = vadd.f32 %v2126, %v2363
      %v2422 = vadd.f32 %v2127, %v2368
      %v2423 = vadd.f32 %v2128, %v2371
      %v2424 = vadd.f32 %v2129, %v2376
      %v2425 = vadd.f32 %v2130, %v2379
      %v2426 = vadd.f32 %v2131, %v2384
      %v2427 = vadd.f32 %v2132, %v2387
      %v2428 = vadd.f32 %v2133, %v2392
      %v2429 = vadd.f32 %v2134, %v2395
      %v2430 = vld [vmem:[%s987 + $0x2] sm:$0xff]
      %v2431 = vld [vmem:[%s987 + $0xa] sm:$0xff]
      %v2432 = vld [vmem:[%s987 + $0x1a] sm:$0xff]
      %v2433 = vld [vmem:[%s987 + $0x22] sm:$0xff]
      %v2434 = vld [vmem:[%s987 + $0x32] sm:$0xff]
      %v2435 = vld [vmem:[%s987 + $0x3a] sm:$0xff]
      %v2436 = vld [vmem:[%s987 + $0x4a] sm:$0xff]
      %v2437 = vld [vmem:[%s987 + $0x52] sm:$0xff]
      %v2438 = vld [vmem:[%s987 + $0x62] sm:$0xff]
      %v2439 = vld [vmem:[%s987 + $0x6a] sm:$0xff]
      %v2440 = vld [vmem:[%s987 + $0x7a] sm:$0xff]
      %v2441 = vld [vmem:[%s987 + $0x82] sm:$0xff]
      %v2442 = vld [vmem:[%s987 + $0x92] sm:$0xff]
      %v2443 = vld [vmem:[%s987 + $0x9a] sm:$0xff]
      %v2444 = vld [vmem:[%s987 + $0xaa] sm:$0xff]
      %v2445 = vld [vmem:[%s987 + $0xb2] sm:$0xff]
      %v2446 = vld [vmem:[%s987 + $0xc2] sm:$0xff]
      %v2447 = vld [vmem:[%s987 + $0xca] sm:$0xff]
      %v2448 = vld [vmem:[%s987 + $0xda] sm:$0xff]
      %v2449 = vld [vmem:[%s987 + $0xe2] sm:$0xff]
      %v2450 = vld [vmem:[%s987 + $0xf2] sm:$0xff]
      %v2451 = vld [vmem:[%s987 + $0xfa] sm:$0xff]
      %v2452 = vld [vmem:[%s987 + $0x10a] sm:$0xff]
      %v2453 = vld [vmem:[%s987 + $0x112] sm:$0xff]
      %v2454 = vld [vmem:[%s987 + $0x122] sm:$0xff]
      %v2455 = vld [vmem:[%s987 + $0x12a] sm:$0xff]
      %v2456 = vld [vmem:[%s987 + $0x13a] sm:$0xff]
      %v2457 = vld [vmem:[%s987 + $0x142] sm:$0xff]
      %v2458 = vld [vmem:[%s987 + $0x152] sm:$0xff]
      %v2459 = vld [vmem:[%s987 + $0x15a] sm:$0xff]
      %v2460 = vld [vmem:[%s987 + $0x16a] sm:$0xff]
      %v2461 = vld [vmem:[%s987 + $0x172] sm:$0xff]
      %v2462 = vpack.c.bf16 %v2431, %v2430
      %v2463 = vpack.c.bf16 %v2433, %v2432
      %v2464 = vpack.c.bf16 %v2435, %v2434
      %v2465 = vpack.c.bf16 %v2437, %v2436
      %v2466 = vpack.c.bf16 %v2439, %v2438
      %v2467 = vpack.c.bf16 %v2441, %v2440
      %v2468 = vpack.c.bf16 %v2443, %v2442
      %v2469 = vpack.c.bf16 %v2445, %v2444
      %v2470 = vpack.c.bf16 %v2447, %v2446
      %v2471 = vpack.c.bf16 %v2449, %v2448
      %v2472 = vpack.c.bf16 %v2451, %v2450
      %v2473 = vpack.c.bf16 %v2453, %v2452
      %v2474 = vpack.c.bf16 %v2455, %v2454
      %v2475 = vpack.c.bf16 %v2457, %v2456
      %v2476 = vpack.c.bf16 %v2459, %v2458
      %v2477 = vpack.c.bf16 %v2461, %v2460
      %s2478 = scalar_lea.vmem %s3, 20
      %v2479 = vld [vmem:[%s2478] sm:$0xf]
      %v2480 = vpack.c.bf16 %v2479, %v2479
      %v2482 = vsel %vm420, %v2462, 0
      %v2485 = vsel %vm420, %v2463, 0
      %v2488 = vsel %vm420, %v2464, 0
      %v2491 = vsel %vm420, %v2465, 0
      %v2494 = vsel %vm420, %v2466, 0
      %v2497 = vsel %vm420, %v2467, 0
      %v2500 = vsel %vm420, %v2468, 0
      %v2503 = vsel %vm420, %v2469, 0
      %v2506 = vsel %vm420, %v2470, 0
      %v2509 = vsel %vm420, %v2471, 0
      %v2512 = vsel %vm420, %v2472, 0
      %v2515 = vsel %vm420, %v2473, 0
      %v2518 = vsel %vm420, %v2474, 0
      %v2521 = vsel %vm420, %v2475, 0
      %v2524 = vsel %vm420, %v2476, 0
      %v2527 = vsel %vm420, %v2477, 0
      %v2530 = vsel %vm735, %v2480, 0
      %2532 = vmatprep.subr.bf16.mxu0 0
      %2533 = vmatpush1.bf16.msra.mxu0 %v2530
      %2534 = vmatprep.subr.bf16.mxu0 0
      %2535 = vmatpush1.bf16.msra.mxu0 0
      %2536 = vmatprep.subr.bf16.mxu0 0
      %2537 = vmatpush1.bf16.msra.mxu0 0
      %2538 = vmatprep.subr.bf16.mxu0 0
      %2539 = vmatpush1.bf16.msra.mxu0 0
      %2540 = vmatprep.subr.bf16.mxu0 0
      %2541 = vmatpush1.bf16.msra.mxu0 0
      %2542 = vmatprep.subr.bf16.mxu0 0
      %2543 = vmatpush1.bf16.msra.mxu0 0
      %2544 = vmatprep.subr.bf16.mxu0 0
      %2545 = vmatpush1.bf16.msra.mxu0 0
      %2546 = vmatprep.subr.bf16.mxu0 0
      %2547 = vmatpush1.bf16.msra.mxu0 0
      %2548 = vmatprep.subr.bf16.mxu0 0
      %2549 = vmatpush1.bf16.msra.mxu0 0
      %2550 = vmatprep.subr.bf16.mxu0 0
      %2551 = vmatpush1.bf16.msra.mxu0 0
      %2552 = vmatprep.subr.bf16.mxu0 0
      %2553 = vmatpush1.bf16.msra.mxu0 0
      %2554 = vmatprep.subr.bf16.mxu0 0
      %2555 = vmatpush1.bf16.msra.mxu0 0
      %2556 = vmatprep.subr.bf16.mxu0 0
      %2557 = vmatpush1.bf16.msra.mxu0 0
      %2558 = vmatprep.subr.bf16.mxu0 0
      %2559 = vmatpush1.bf16.msra.mxu0 0
      %2560 = vmatprep.subr.bf16.mxu0 0
      %2561 = vmatpush1.bf16.msra.mxu0 0
      %2562 = vmatprep.subr.bf16.mxu0 0
      %2563 = vmatpush1.bf16.msra.mxu0 0
      %2564 = vmatprep.mubr.bf16.mxu0 0
      %2565 = vmatmul.mubr.bf16.gmra.mrb[0].mxu0 %v2482
      %v2566 = vpop.f32.mrb[0].mxu0
      %v2567 = vadd.f32 0.0, %v2566
      %v2568 = vpop.f32.mrb[0].mxu0
      %v2569 = vpop.f32.mrb[0].mxu0
      %v2570 = vadd.f32 0.0, %v2569
      %v2571 = vpop.f32.mrb[0].mxu0
      %2572 = vmatprep.mubr.bf16.mxu0 0
      %2573 = vmatmul.mubr.bf16.gmra.mrb[0].mxu0 %v2485
      %v2574 = vpop.f32.mrb[0].mxu0
      %v2575 = vadd.f32 0.0, %v2574
      %v2576 = vpop.f32.mrb[0].mxu0
      %v2577 = vpop.f32.mrb[0].mxu0
      %v2578 = vadd.f32 0.0, %v2577
      %v2579 = vpop.f32.mrb[0].mxu0
      %2580 = vmatprep.mubr.bf16.mxu0 0
      %2581 = vmatmul.mubr.bf16.gmra.mrb[0].mxu0 %v2488
      %v2582 = vpop.f32.mrb[0].mxu0
      %v2583 = vadd.f32 0.0, %v2582
      %v2584 = vpop.f32.mrb[0].mxu0
      %v2585 = vpop.f32.mrb[0].mxu0
      %v2586 = vadd.f32 0.0, %v2585
      %v2587 = vpop.f32.mrb[0].mxu0
      %2588 = vmatprep.mubr.bf16.mxu0 0
      %2589 = vmatmul.mubr.bf16.gmra.mrb[0].mxu0 %v2491
      %v2590 = vpop.f32.mrb[0].mxu0
      %v2591 = vadd.f32 0.0, %v2590
      %v2592 = vpop.f32.mrb[0].mxu0
      %v2593 = vpop.f32.mrb[0].mxu0
      %v2594 = vadd.f32 0.0, %v2593
      %v2595 = vpop.f32.mrb[0].mxu0
      %2596 = vmatprep.mubr.bf16.mxu0 0
      %2597 = vmatmul.mubr.bf16.gmra.mrb[0].mxu0 %v2494
      %v2598 = vpop.f32.mrb[0].mxu0
      %v2599 = vadd.f32 0.0, %v2598
      %v2600 = vpop.f32.mrb[0].mxu0
      %v2601 = vpop.f32.mrb[0].mxu0
      %v2602 = vadd.f32 0.0, %v2601
      %v2603 = vpop.f32.mrb[0].mxu0
      %2604 = vmatprep.mubr.bf16.mxu0 0
      %2605 = vmatmul.mubr.bf16.gmra.mrb[0].mxu0 %v2497
      %v2606 = vpop.f32.mrb[0].mxu0
      %v2607 = vadd.f32 0.0, %v2606
      %v2608 = vpop.f32.mrb[0].mxu0
      %v2609 = vpop.f32.mrb[0].mxu0
      %v2610 = vadd.f32 0.0, %v2609
      %v2611 = vpop.f32.mrb[0].mxu0
      %2612 = vmatprep.mubr.bf16.mxu0 0
      %2613 = vmatmul.mubr.bf16.gmra.mrb[0].mxu0 %v2500
      %v2614 = vpop.f32.mrb[0].mxu0
      %v2615 = vadd.f32 0.0, %v2614
      %v2616 = vpop.f32.mrb[0].mxu0
      %v2617 = vpop.f32.mrb[0].mxu0
      %v2618 = vadd.f32 0.0, %v2617
      %v2619 = vpop.f32.mrb[0].mxu0
      %2620 = vmatprep.mubr.bf16.mxu0 0
      %2621 = vmatmul.mubr.bf16.gmra.mrb[0].mxu0 %v2503
      %v2622 = vpop.f32.mrb[0].mxu0
      %v2623 = vadd.f32 0.0, %v2622
      %v2624 = vpop.f32.mrb[0].mxu0
      %v2625 = vpop.f32.mrb[0].mxu0
      %v2626 = vadd.f32 0.0, %v2625
      %v2627 = vpop.f32.mrb[0].mxu0
      %2628 = vmatprep.mubr.bf16.mxu0 0
      %2629 = vmatmul.mubr.bf16.gmra.mrb[0].mxu0 %v2506
      %v2630 = vpop.f32.mrb[0].mxu0
      %v2631 = vadd.f32 0.0, %v2630
      %v2632 = vpop.f32.mrb[0].mxu0
      %v2633 = vpop.f32.mrb[0].mxu0
      %v2634 = vadd.f32 0.0, %v2633
      %v2635 = vpop.f32.mrb[0].mxu0
      %2636 = vmatprep.mubr.bf16.mxu0 0
      %2637 = vmatmul.mubr.bf16.gmra.mrb[0].mxu0 %v2509
      %v2638 = vpop.f32.mrb[0].mxu0
      %v2639 = vadd.f32 0.0, %v2638
      %v2640 = vpop.f32.mrb[0].mxu0
      %v2641 = vpop.f32.mrb[0].mxu0
      %v2642 = vadd.f32 0.0, %v2641
      %v2643 = vpop.f32.mrb[0].mxu0
      %2644 = vmatprep.mubr.bf16.mxu0 0
      %2645 = vmatmul.mubr.bf16.gmra.mrb[0].mxu0 %v2512
      %v2646 = vpop.f32.mrb[0].mxu0
      %v2647 = vadd.f32 0.0, %v2646
      %v2648 = vpop.f32.mrb[0].mxu0
      %v2649 = vpop.f32.mrb[0].mxu0
      %v2650 = vadd.f32 0.0, %v2649
      %v2651 = vpop.f32.mrb[0].mxu0
      %2652 = vmatprep.mubr.bf16.mxu0 0
      %2653 = vmatmul.mubr.bf16.gmra.mrb[0].mxu0 %v2515
      %v2654 = vpop.f32.mrb[0].mxu0
      %v2655 = vadd.f32 0.0, %v2654
      %v2656 = vpop.f32.mrb[0].mxu0
      %v2657 = vpop.f32.mrb[0].mxu0
      %v2658 = vadd.f32 0.0, %v2657
      %v2659 = vpop.f32.mrb[0].mxu0
      %2660 = vmatprep.mubr.bf16.mxu0 0
      %2661 = vmatmul.mubr.bf16.gmra.mrb[0].mxu0 %v2518
      %v2662 = vpop.f32.mrb[0].mxu0
      %v2663 = vadd.f32 0.0, %v2662
      %v2664 = vpop.f32.mrb[0].mxu0
      %v2665 = vpop.f32.mrb[0].mxu0
      %v2666 = vadd.f32 0.0, %v2665
      %v2667 = vpop.f32.mrb[0].mxu0
      %2668 = vmatprep.mubr.bf16.mxu0 0
      %2669 = vmatmul.mubr.bf16.gmra.mrb[0].mxu0 %v2521
      %v2670 = vpop.f32.mrb[0].mxu0
      %v2671 = vadd.f32 0.0, %v2670
      %v2672 = vpop.f32.mrb[0].mxu0
      %v2673 = vpop.f32.mrb[0].mxu0
      %v2674 = vadd.f32 0.0, %v2673
      %v2675 = vpop.f32.mrb[0].mxu0
      %2676 = vmatprep.mubr.bf16.mxu0 0
      %2677 = vmatmul.mubr.bf16.gmra.mrb[0].mxu0 %v2524
      %v2678 = vpop.f32.mrb[0].mxu0
      %v2679 = vadd.f32 0.0, %v2678
      %v2680 = vpop.f32.mrb[0].mxu0
      %v2681 = vpop.f32.mrb[0].mxu0
      %v2682 = vadd.f32 0.0, %v2681
      %v2683 = vpop.f32.mrb[0].mxu0
      %2684 = vmatprep.mubr.bf16.mxu0 0
      %2685 = vmatmul.mubr.bf16.gmra.mrb[0].mxu0 %v2527
      %v2686 = vpop.f32.mrb[0].mxu0
      %v2687 = vadd.f32 0.0, %v2686
      %v2688 = vpop.f32.mrb[0].mxu0
      %v2689 = vpop.f32.mrb[0].mxu0
      %v2690 = vadd.f32 0.0, %v2689
      %v2691 = vpop.f32.mrb[0].mxu0
      %2692 = vdwg.mxu0
      %v2693 = vadd.f32 %v2398, %v2567
      %v2694 = vadd.f32 %v2399, %v2570
      %v2695 = vadd.f32 %v2400, %v2575
      %v2696 = vadd.f32 %v2401, %v2578
      %v2697 = vadd.f32 %v2402, %v2583
      %v2698 = vadd.f32 %v2403, %v2586
      %v2699 = vadd.f32 %v2404, %v2591
      %v2700 = vadd.f32 %v2405, %v2594
      %v2701 = vadd.f32 %v2406, %v2599
      %v2702 = vadd.f32 %v2407, %v2602
      %v2703 = vadd.f32 %v2408, %v2607
      %v2704 = vadd.f32 %v2409, %v2610
      %v2705 = vadd.f32 %v2410, %v2615
      %v2706 = vadd.f32 %v2411, %v2618
      %v2707 = vadd.f32 %v2412, %v2623
      %v2708 = vadd.f32 %v2413, %v2626
      %v2709 = vadd.f32 %v2414, %v2631
      %v2710 = vadd.f32 %v2415, %v2634
      %v2711 = vadd.f32 %v2416, %v2639
      %v2712 = vadd.f32 %v2417, %v2642
      %v2713 = vadd.f32 %v2418, %v2647
      %v2714 = vadd.f32 %v2419, %v2650
      %v2715 = vadd.f32 %v2420, %v2655
      %v2716 = vadd.f32 %v2421, %v2658
      %v2717 = vadd.f32 %v2422, %v2663
      %v2718 = vadd.f32 %v2423, %v2666
      %v2719 = vadd.f32 %v2424, %v2671
      %v2720 = vadd.f32 %v2425, %v2674
      %v2721 = vadd.f32 %v2426, %v2679
      %v2722 = vadd.f32 %v2427, %v2682
      %v2723 = vadd.f32 %v2428, %v2687
      %v2724 = vadd.f32 %v2429, %v2690
      %s2725 = scalar_lea.vmem [#allocation2], 48
      %v2726 = vld [vmem:[%s2725] sm:$0xff]
      %v2727 = vld [vmem:[%s2725 + $0x8] sm:$0xff]
      %v2728 = vld [vmem:[%s2725 + $0x18] sm:$0xff]
      %v2729 = vld [vmem:[%s2725 + $0x20] sm:$0xff]
      %v2730 = vld [vmem:[%s2725 + $0x30] sm:$0xff]
      %v2731 = vld [vmem:[%s2725 + $0x38] sm:$0xff]
      %v2732 = vld [vmem:[%s2725 + $0x48] sm:$0xff]
      %v2733 = vld [vmem:[%s2725 + $0x50] sm:$0xff]
      %v2734 = vld [vmem:[%s2725 + $0x60] sm:$0xff]
      %v2735 = vld [vmem:[%s2725 + $0x68] sm:$0xff]
      %v2736 = vld [vmem:[%s2725 + $0x78] sm:$0xff]
      %v2737 = vld [vmem:[%s2725 + $0x80] sm:$0xff]
      %v2738 = vld [vmem:[%s2725 + $0x90] sm:$0xff]
      %v2739 = vld [vmem:[%s2725 + $0x98] sm:$0xff]
      %v2740 = vld [vmem:[%s2725 + $0xa8] sm:$0xff]
      %v2741 = vld [vmem:[%s2725 + $0xb0] sm:$0xff]
      %v2742 = vld [vmem:[%s2725 + $0xc0] sm:$0xff]
      %v2743 = vld [vmem:[%s2725 + $0xc8] sm:$0xff]
      %v2744 = vld [vmem:[%s2725 + $0xd8] sm:$0xff]
      %v2745 = vld [vmem:[%s2725 + $0xe0] sm:$0xff]
      %v2746 = vld [vmem:[%s2725 + $0xf0] sm:$0xff]
      %v2747 = vld [vmem:[%s2725 + $0xf8] sm:$0xff]
      %v2748 = vld [vmem:[%s2725 + $0x108] sm:$0xff]
      %v2749 = vld [vmem:[%s2725 + $0x110] sm:$0xff]
      %v2750 = vld [vmem:[%s2725 + $0x120] sm:$0xff]
      %v2751 = vld [vmem:[%s2725 + $0x128] sm:$0xff]
      %v2752 = vld [vmem:[%s2725 + $0x138] sm:$0xff]
      %v2753 = vld [vmem:[%s2725 + $0x140] sm:$0xff]
      %v2754 = vld [vmem:[%s2725 + $0x150] sm:$0xff]
      %v2755 = vld [vmem:[%s2725 + $0x158] sm:$0xff]
      %v2756 = vld [vmem:[%s2725 + $0x168] sm:$0xff]
      %v2757 = vld [vmem:[%s2725 + $0x170] sm:$0xff]
      %v2758 = vpack.c.bf16 %v2727, %v2726
      %v2759 = vpack.c.bf16 %v2729, %v2728
      %v2760 = vpack.c.bf16 %v2731, %v2730
      %v2761 = vpack.c.bf16 %v2733, %v2732
      %v2762 = vpack.c.bf16 %v2735, %v2734
      %v2763 = vpack.c.bf16 %v2737, %v2736
      %v2764 = vpack.c.bf16 %v2739, %v2738
      %v2765 = vpack.c.bf16 %v2741, %v2740
      %v2766 = vpack.c.bf16 %v2743, %v2742
      %v2767 = vpack.c.bf16 %v2745, %v2744
      %v2768 = vpack.c.bf16 %v2747, %v2746
      %v2769 = vpack.c.bf16 %v2749, %v2748
      %v2770 = vpack.c.bf16 %v2751, %v2750
      %v2771 = vpack.c.bf16 %v2753, %v2752
      %v2772 = vpack.c.bf16 %v2755, %v2754
      %v2773 = vpack.c.bf16 %v2757, %v2756
      %s2774 = scalar_lea.vmem %s3, 24
      %v2775 = vld [vmem:[%s2774] sm:$0xf]
      %v2776 = vpack.c.bf16 %v2775, %v2775
      %v2778 = vsel %vm420, %v2758, 0
      %v2781 = vsel %vm420, %v2759, 0
      %v2784 = vsel %vm420, %v2760, 0
      %v2787 = vsel %vm420, %v2761, 0
      %v2790 = vsel %vm420, %v2762, 0
      %v2793 = vsel %vm420, %v2763, 0
      %v2796 = vsel %vm420, %v2764, 0
      %v2799 = vsel %vm420, %v2765, 0
      %v2802 = vsel %vm420, %v2766, 0
      %v2805 = vsel %vm420, %v2767, 0
      %v2808 = vsel %vm420, %v2768, 0
      %v2811 = vsel %vm420, %v2769, 0
      %v2814 = vsel %vm420, %v2770, 0
      %v2817 = vsel %vm420, %v2771, 0
      %v2820 = vsel %vm420, %v2772, 0
      %v2823 = vsel %vm420, %v2773, 0
      %v2826 = vsel %vm735, %v2776, 0
      %2828 = vmatprep.subr.bf16.mxu0 0
      %2829 = vmatpush1.bf16.msra.mxu0 %v2826
      %2830 = vmatprep.subr.bf16.mxu0 0
      %2831 = vmatpush1.bf16.msra.mxu0 0
      %2832 = vmatprep.subr.bf16.mxu0 0
      %2833 = vmatpush1.bf16.msra.mxu0 0
      %2834 = vmatprep.subr.bf16.mxu0 0
      %2835 = vmatpush1.bf16.msra.mxu0 0
      %2836 = vmatprep.subr.bf16.mxu0 0
      %2837 = vmatpush1.bf16.msra.mxu0 0
      %2838 = vmatprep.subr.bf16.mxu0 0
      %2839 = vmatpush1.bf16.msra.mxu0 0
      %2840 = vmatprep.subr.bf16.mxu0 0
      %2841 = vmatpush1.bf16.msra.mxu0 0
      %2842 = vmatprep.subr.bf16.mxu0 0
      %2843 = vmatpush1.bf16.msra.mxu0 0
      %2844 = vmatprep.subr.bf16.mxu0 0
      %2845 = vmatpush1.bf16.msra.mxu0 0
      %2846 = vmatprep.subr.bf16.mxu0 0
      %2847 = vmatpush1.bf16.msra.mxu0 0
      %2848 = vmatprep.subr.bf16.mxu0 0
      %2849 = vmatpush1.bf16.msra.mxu0 0
      %2850 = vmatprep.subr.bf16.mxu0 0
      %2851 = vmatpush1.bf16.msra.mxu0 0
      %2852 = vmatprep.subr.bf16.mxu0 0
      %2853 = vmatpush1.bf16.msra.mxu0 0
      %2854 = vmatprep.subr.bf16.mxu0 0
      %2855 = vmatpush1.bf16.msra.mxu0 0
      %2856 = vmatprep.subr.bf16.mxu0 0
      %2857 = vmatpush1.bf16.msra.mxu0 0
      %2858 = vmatprep.subr.bf16.mxu0 0
      %2859 = vmatpush1.bf16.msra.mxu0 0
      %2860 = vmatprep.mubr.bf16.mxu0 0
      %2861 = vmatmul.mubr.bf16.gmra.mrb[0].mxu0 %v2778
      %v2862 = vpop.f32.mrb[0].mxu0
      %v2863 = vadd.f32 0.0, %v2862
      %v2864 = vpop.f32.mrb[0].mxu0
      %v2865 = vpop.f32.mrb[0].mxu0
      %v2866 = vadd.f32 0.0, %v2865
      %v2867 = vpop.f32.mrb[0].mxu0
      %2868 = vmatprep.mubr.bf16.mxu0 0
      %2869 = vmatmul.mubr.bf16.gmra.mrb[0].mxu0 %v2781
      %v2870 = vpop.f32.mrb[0].mxu0
      %v2871 = vadd.f32 0.0, %v2870
      %v2872 = vpop.f32.mrb[0].mxu0
      %v2873 = vpop.f32.mrb[0].mxu0
      %v2874 = vadd.f32 0.0, %v2873
      %v2875 = vpop.f32.mrb[0].mxu0
      %2876 = vmatprep.mubr.bf16.mxu0 0
      %2877 = vmatmul.mubr.bf16.gmra.mrb[0].mxu0 %v2784
      %v2878 = vpop.f32.mrb[0].mxu0
      %v2879 = vadd.f32 0.0, %v2878
      %v2880 = vpop.f32.mrb[0].mxu0
      %v2881 = vpop.f32.mrb[0].mxu0
      %v2882 = vadd.f32 0.0, %v2881
      %v2883 = vpop.f32.mrb[0].mxu0
      %2884 = vmatprep.mubr.bf16.mxu0 0
      %2885 = vmatmul.mubr.bf16.gmra.mrb[0].mxu0 %v2787
      %v2886 = vpop.f32.mrb[0].mxu0
      %v2887 = vadd.f32 0.0, %v2886
      %v2888 = vpop.f32.mrb[0].mxu0
      %v2889 = vpop.f32.mrb[0].mxu0
      %v2890 = vadd.f32 0.0, %v2889
      %v2891 = vpop.f32.mrb[0].mxu0
      %2892 = vmatprep.mubr.bf16.mxu0 0
      %2893 = vmatmul.mubr.bf16.gmra.mrb[0].mxu0 %v2790
      %v2894 = vpop.f32.mrb[0].mxu0
      %v2895 = vadd.f32 0.0, %v2894
      %v2896 = vpop.f32.mrb[0].mxu0
      %v2897 = vpop.f32.mrb[0].mxu0
      %v2898 = vadd.f32 0.0, %v2897
      %v2899 = vpop.f32.mrb[0].mxu0
      %2900 = vmatprep.mubr.bf16.mxu0 0
      %2901 = vmatmul.mubr.bf16.gmra.mrb[0].mxu0 %v2793
      %v2902 = vpop.f32.mrb[0].mxu0
      %v2903 = vadd.f32 0.0, %v2902
      %v2904 = vpop.f32.mrb[0].mxu0
      %v2905 = vpop.f32.mrb[0].mxu0
      %v2906 = vadd.f32 0.0, %v2905
      %v2907 = vpop.f32.mrb[0].mxu0
      %2908 = vmatprep.mubr.bf16.mxu0 0
      %2909 = vmatmul.mubr.bf16.gmra.mrb[0].mxu0 %v2796
      %v2910 = vpop.f32.mrb[0].mxu0
      %v2911 = vadd.f32 0.0, %v2910
      %v2912 = vpop.f32.mrb[0].mxu0
      %v2913 = vpop.f32.mrb[0].mxu0
      %v2914 = vadd.f32 0.0, %v2913
      %v2915 = vpop.f32.mrb[0].mxu0
      %2916 = vmatprep.mubr.bf16.mxu0 0
      %2917 = vmatmul.mubr.bf16.gmra.mrb[0].mxu0 %v2799
      %v2918 = vpop.f32.mrb[0].mxu0
      %v2919 = vadd.f32 0.0, %v2918
      %v2920 = vpop.f32.mrb[0].mxu0
      %v2921 = vpop.f32.mrb[0].mxu0
      %v2922 = vadd.f32 0.0, %v2921
      %v2923 = vpop.f32.mrb[0].mxu0
      %2924 = vmatprep.mubr.bf16.mxu0 0
      %2925 = vmatmul.mubr.bf16.gmra.mrb[0].mxu0 %v2802
      %v2926 = vpop.f32.mrb[0].mxu0
      %v2927 = vadd.f32 0.0, %v2926
      %v2928 = vpop.f32.mrb[0].mxu0
      %v2929 = vpop.f32.mrb[0].mxu0
      %v2930 = vadd.f32 0.0, %v2929
      %v2931 = vpop.f32.mrb[0].mxu0
      %2932 = vmatprep.mubr.bf16.mxu0 0
      %2933 = vmatmul.mubr.bf16.gmra.mrb[0].mxu0 %v2805
      %v2934 = vpop.f32.mrb[0].mxu0
      %v2935 = vadd.f32 0.0, %v2934
      %v2936 = vpop.f32.mrb[0].mxu0
      %v2937 = vpop.f32.mrb[0].mxu0
      %v2938 = vadd.f32 0.0, %v2937
      %v2939 = vpop.f32.mrb[0].mxu0
      %2940 = vmatprep.mubr.bf16.mxu0 0
      %2941 = vmatmul.mubr.bf16.gmra.mrb[0].mxu0 %v2808
      %v2942 = vpop.f32.mrb[0].mxu0
      %v2943 = vadd.f32 0.0, %v2942
      %v2944 = vpop.f32.mrb[0].mxu0
      %v2945 = vpop.f32.mrb[0].mxu0
      %v2946 = vadd.f32 0.0, %v2945
      %v2947 = vpop.f32.mrb[0].mxu0
      %2948 = vmatprep.mubr.bf16.mxu0 0
      %2949 = vmatmul.mubr.bf16.gmra.mrb[0].mxu0 %v2811
      %v2950 = vpop.f32.mrb[0].mxu0
      %v2951 = vadd.f32 0.0, %v2950
      %v2952 = vpop.f32.mrb[0].mxu0
      %v2953 = vpop.f32.mrb[0].mxu0
      %v2954 = vadd.f32 0.0, %v2953
      %v2955 = vpop.f32.mrb[0].mxu0
      %2956 = vmatprep.mubr.bf16.mxu0 0
      %2957 = vmatmul.mubr.bf16.gmra.mrb[0].mxu0 %v2814
      %v2958 = vpop.f32.mrb[0].mxu0
      %v2959 = vadd.f32 0.0, %v2958
      %v2960 = vpop.f32.mrb[0].mxu0
      %v2961 = vpop.f32.mrb[0].mxu0
      %v2962 = vadd.f32 0.0, %v2961
      %v2963 = vpop.f32.mrb[0].mxu0
      %2964 = vmatprep.mubr.bf16.mxu0 0
      %2965 = vmatmul.mubr.bf16.gmra.mrb[0].mxu0 %v2817
      %v2966 = vpop.f32.mrb[0].mxu0
      %v2967 = vadd.f32 0.0, %v2966
      %v2968 = vpop.f32.mrb[0].mxu0
      %v2969 = vpop.f32.mrb[0].mxu0
      %v2970 = vadd.f32 0.0, %v2969
      %v2971 = vpop.f32.mrb[0].mxu0
      %2972 = vmatprep.mubr.bf16.mxu0 0
      %2973 = vmatmul.mubr.bf16.gmra.mrb[0].mxu0 %v2820
      %v2974 = vpop.f32.mrb[0].mxu0
      %v2975 = vadd.f32 0.0, %v2974
      %v2976 = vpop.f32.mrb[0].mxu0
      %v2977 = vpop.f32.mrb[0].mxu0
      %v2978 = vadd.f32 0.0, %v2977
      %v2979 = vpop.f32.mrb[0].mxu0
      %2980 = vmatprep.mubr.bf16.mxu0 0
      %2981 = vmatmul.mubr.bf16.gmra.mrb[0].mxu0 %v2823
      %v2982 = vpop.f32.mrb[0].mxu0
      %v2983 = vadd.f32 0.0, %v2982
      %v2984 = vpop.f32.mrb[0].mxu0
      %v2985 = vpop.f32.mrb[0].mxu0
      %v2986 = vadd.f32 0.0, %v2985
      %v2987 = vpop.f32.mrb[0].mxu0
      %2988 = vdwg.mxu0
      %v2989 = vadd.f32 %v2693, %v2863
      %v2990 = vadd.f32 %v2694, %v2866
      %v2991 = vadd.f32 %v2695, %v2871
      %v2992 = vadd.f32 %v2696, %v2874
      %v2993 = vadd.f32 %v2697, %v2879
      %v2994 = vadd.f32 %v2698, %v2882
      %v2995 = vadd.f32 %v2699, %v2887
      %v2996 = vadd.f32 %v2700, %v2890
      %v2997 = vadd.f32 %v2701, %v2895
      %v2998 = vadd.f32 %v2702, %v2898
      %v2999 = vadd.f32 %v2703, %v2903
      %v3000 = vadd.f32 %v2704, %v2906
      %v3001 = vadd.f32 %v2705, %v2911
      %v3002 = vadd.f32 %v2706, %v2914
      %v3003 = vadd.f32 %v2707, %v2919
      %v3004 = vadd.f32 %v2708, %v2922
      %v3005 = vadd.f32 %v2709, %v2927
      %v3006 = vadd.f32 %v2710, %v2930
      %v3007 = vadd.f32 %v2711, %v2935
      %v3008 = vadd.f32 %v2712, %v2938
      %v3009 = vadd.f32 %v2713, %v2943
      %v3010 = vadd.f32 %v2714, %v2946
      %v3011 = vadd.f32 %v2715, %v2951
      %v3012 = vadd.f32 %v2716, %v2954
      %v3013 = vadd.f32 %v2717, %v2959
      %v3014 = vadd.f32 %v2718, %v2962
      %v3015 = vadd.f32 %v2719, %v2967
      %v3016 = vadd.f32 %v2720, %v2970
      %v3017 = vadd.f32 %v2721, %v2975
      %v3018 = vadd.f32 %v2722, %v2978
      %v3019 = vadd.f32 %v2723, %v2983
      %v3020 = vadd.f32 %v2724, %v2986
      %v3021 = vld [vmem:[%s2725 + $0x1] sm:$0xff]
      %v3022 = vld [vmem:[%s2725 + $0x9] sm:$0xff]
      %v3023 = vld [vmem:[%s2725 + $0x19] sm:$0xff]
      %v3024 = vld [vmem:[%s2725 + $0x21] sm:$0xff]
      %v3025 = vld [vmem:[%s2725 + $0x31] sm:$0xff]
      %v3026 = vld [vmem:[%s2725 + $0x39] sm:$0xff]
      %v3027 = vld [vmem:[%s2725 + $0x49] sm:$0xff]
      %v3028 = vld [vmem:[%s2725 + $0x51] sm:$0xff]
      %v3029 = vld [vmem:[%s2725 + $0x61] sm:$0xff]
      %v3030 = vld [vmem:[%s2725 + $0x69] sm:$0xff]
      %v3031 = vld [vmem:[%s2725 + $0x79] sm:$0xff]
      %v3032 = vld [vmem:[%s2725 + $0x81] sm:$0xff]
      %v3033 = vld [vmem:[%s2725 + $0x91] sm:$0xff]
      %v3034 = vld [vmem:[%s2725 + $0x99] sm:$0xff]
      %v3035 = vld [vmem:[%s2725 + $0xa9] sm:$0xff]
      %v3036 = vld [vmem:[%s2725 + $0xb1] sm:$0xff]
      %v3037 = vld [vmem:[%s2725 + $0xc1] sm:$0xff]
      %v3038 = vld [vmem:[%s2725 + $0xc9] sm:$0xff]
      %v3039 = vld [vmem:[%s2725 + $0xd9] sm:$0xff]
      %v3040 = vld [vmem:[%s2725 + $0xe1] sm:$0xff]
      %v3041 = vld [vmem:[%s2725 + $0xf1] sm:$0xff]
      %v3042 = vld [vmem:[%s2725 + $0xf9] sm:$0xff]
      %v3043 = vld [vmem:[%s2725 + $0x109] sm:$0xff]
      %v3044 = vld [vmem:[%s2725 + $0x111] sm:$0xff]
      %v3045 = vld [vmem:[%s2725 + $0x121] sm:$0xff]
      %v3046 = vld [vmem:[%s2725 + $0x129] sm:$0xff]
      %v3047 = vld [vmem:[%s2725 + $0x139] sm:$0xff]
      %v3048 = vld [vmem:[%s2725 + $0x141] sm:$0xff]
      %v3049 = vld [vmem:[%s2725 + $0x151] sm:$0xff]
      %v3050 = vld [vmem:[%s2725 + $0x159] sm:$0xff]
      %v3051 = vld [vmem:[%s2725 + $0x169] sm:$0xff]
      %v3052 = vld [vmem:[%s2725 + $0x171] sm:$0xff]
      %v3053 = vpack.c.bf16 %v3022, %v3021
      %v3054 = vpack.c.bf16 %v3024, %v3023
      %v3055 = vpack.c.bf16 %v3026, %v3025
      %v3056 = vpack.c.bf16 %v3028, %v3027
      %v3057 = vpack.c.bf16 %v3030, %v3029
      %v3058 = vpack.c.bf16 %v3032, %v3031
      %v3059 = vpack.c.bf16 %v3034, %v3033
      %v3060 = vpack.c.bf16 %v3036, %v3035
      %v3061 = vpack.c.bf16 %v3038, %v3037
      %v3062 = vpack.c.bf16 %v3040, %v3039
      %v3063 = vpack.c.bf16 %v3042, %v3041
      %v3064 = vpack.c.bf16 %v3044, %v3043
      %v3065 = vpack.c.bf16 %v3046, %v3045
      %v3066 = vpack.c.bf16 %v3048, %v3047
      %v3067 = vpack.c.bf16 %v3050, %v3049
      %v3068 = vpack.c.bf16 %v3052, %v3051
      %s3069 = scalar_lea.vmem %s3, 28
      %v3070 = vld [vmem:[%s3069] sm:$0xf]
      %v3071 = vpack.c.bf16 %v3070, %v3070
      %v3073 = vsel %vm420, %v3053, 0
      %v3076 = vsel %vm420, %v3054, 0
      %v3079 = vsel %vm420, %v3055, 0
      %v3082 = vsel %vm420, %v3056, 0
      %v3085 = vsel %vm420, %v3057, 0
      %v3088 = vsel %vm420, %v3058, 0
      %v3091 = vsel %vm420, %v3059, 0
      %v3094 = vsel %vm420, %v3060, 0
      %v3097 = vsel %vm420, %v3061, 0
      %v3100 = vsel %vm420, %v3062, 0
      %v3103 = vsel %vm420, %v3063, 0
      %v3106 = vsel %vm420, %v3064, 0
      %v3109 = vsel %vm420, %v3065, 0
      %v3112 = vsel %vm420, %v3066, 0
      %v3115 = vsel %vm420, %v3067, 0
      %v3118 = vsel %vm420, %v3068, 0
      %v3121 = vsel %vm735, %v3071, 0
      %3123 = vmatprep.subr.bf16.mxu0 0
      %3124 = vmatpush1.bf16.msra.mxu0 %v3121
      %3125 = vmatprep.subr.bf16.mxu0 0
      %3126 = vmatpush1.bf16.msra.mxu0 0
      %3127 = vmatprep.subr.bf16.mxu0 0
      %3128 = vmatpush1.bf16.msra.mxu0 0
      %3129 = vmatprep.subr.bf16.mxu0 0
      %3130 = vmatpush1.bf16.msra.mxu0 0
      %3131 = vmatprep.subr.bf16.mxu0 0
      %3132 = vmatpush1.bf16.msra.mxu0 0
      %3133 = vmatprep.subr.bf16.mxu0 0
      %3134 = vmatpush1.bf16.msra.mxu0 0
      %3135 = vmatprep.subr.bf16.mxu0 0
      %3136 = vmatpush1.bf16.msra.mxu0 0
      %3137 = vmatprep.subr.bf16.mxu0 0
      %3138 = vmatpush1.bf16.msra.mxu0 0
      %3139 = vmatprep.subr.bf16.mxu0 0
      %3140 = vmatpush1.bf16.msra.mxu0 0
      %3141 = vmatprep.subr.bf16.mxu0 0
      %3142 = vmatpush1.bf16.msra.mxu0 0
      %3143 = vmatprep.subr.bf16.mxu0 0
      %3144 = vmatpush1.bf16.msra.mxu0 0
      %3145 = vmatprep.subr.bf16.mxu0 0
      %3146 = vmatpush1.bf16.msra.mxu0 0
      %3147 = vmatprep.subr.bf16.mxu0 0
      %3148 = vmatpush1.bf16.msra.mxu0 0
      %3149 = vmatprep.subr.bf16.mxu0 0
      %3150 = vmatpush1.bf16.msra.mxu0 0
      %3151 = vmatprep.subr.bf16.mxu0 0
      %3152 = vmatpush1.bf16.msra.mxu0 0
      %3153 = vmatprep.subr.bf16.mxu0 0
      %3154 = vmatpush1.bf16.msra.mxu0 0
      %3155 = vmatprep.mubr.bf16.mxu0 0
      %3156 = vmatmul.mubr.bf16.gmra.mrb[0].mxu0 %v3073
      %v3157 = vpop.f32.mrb[0].mxu0
      %v3158 = vadd.f32 0.0, %v3157
      %v3159 = vpop.f32.mrb[0].mxu0
      %v3160 = vpop.f32.mrb[0].mxu0
      %v3161 = vadd.f32 0.0, %v3160
      %v3162 = vpop.f32.mrb[0].mxu0
      %3163 = vmatprep.mubr.bf16.mxu0 0
      %3164 = vmatmul.mubr.bf16.gmra.mrb[0].mxu0 %v3076
      %v3165 = vpop.f32.mrb[0].mxu0
      %v3166 = vadd.f32 0.0, %v3165
      %v3167 = vpop.f32.mrb[0].mxu0
      %v3168 = vpop.f32.mrb[0].mxu0
      %v3169 = vadd.f32 0.0, %v3168
      %v3170 = vpop.f32.mrb[0].mxu0
      %3171 = vmatprep.mubr.bf16.mxu0 0
      %3172 = vmatmul.mubr.bf16.gmra.mrb[0].mxu0 %v3079
      %v3173 = vpop.f32.mrb[0].mxu0
      %v3174 = vadd.f32 0.0, %v3173
      %v3175 = vpop.f32.mrb[0].mxu0
      %v3176 = vpop.f32.mrb[0].mxu0
      %v3177 = vadd.f32 0.0, %v3176
      %v3178 = vpop.f32.mrb[0].mxu0
      %3179 = vmatprep.mubr.bf16.mxu0 0
      %3180 = vmatmul.mubr.bf16.gmra.mrb[0].mxu0 %v3082
      %v3181 = vpop.f32.mrb[0].mxu0
      %v3182 = vadd.f32 0.0, %v3181
      %v3183 = vpop.f32.mrb[0].mxu0
      %v3184 = vpop.f32.mrb[0].mxu0
      %v3185 = vadd.f32 0.0, %v3184
      %v3186 = vpop.f32.mrb[0].mxu0
      %3187 = vmatprep.mubr.bf16.mxu0 0
      %3188 = vmatmul.mubr.bf16.gmra.mrb[0].mxu0 %v3085
      %v3189 = vpop.f32.mrb[0].mxu0
      %v3190 = vadd.f32 0.0, %v3189
      %v3191 = vpop.f32.mrb[0].mxu0
      %v3192 = vpop.f32.mrb[0].mxu0
      %v3193 = vadd.f32 0.0, %v3192
      %v3194 = vpop.f32.mrb[0].mxu0
      %3195 = vmatprep.mubr.bf16.mxu0 0
      %3196 = vmatmul.mubr.bf16.gmra.mrb[0].mxu0 %v3088
      %v3197 = vpop.f32.mrb[0].mxu0
      %v3198 = vadd.f32 0.0, %v3197
      %v3199 = vpop.f32.mrb[0].mxu0
      %v3200 = vpop.f32.mrb[0].mxu0
      %v3201 = vadd.f32 0.0, %v3200
      %v3202 = vpop.f32.mrb[0].mxu0
      %3203 = vmatprep.mubr.bf16.mxu0 0
      %3204 = vmatmul.mubr.bf16.gmra.mrb[0].mxu0 %v3091
      %v3205 = vpop.f32.mrb[0].mxu0
      %v3206 = vadd.f32 0.0, %v3205
      %v3207 = vpop.f32.mrb[0].mxu0
      %v3208 = vpop.f32.mrb[0].mxu0
      %v3209 = vadd.f32 0.0, %v3208
      %v3210 = vpop.f32.mrb[0].mxu0
      %3211 = vmatprep.mubr.bf16.mxu0 0
      %3212 = vmatmul.mubr.bf16.gmra.mrb[0].mxu0 %v3094
      %v3213 = vpop.f32.mrb[0].mxu0
      %v3214 = vadd.f32 0.0, %v3213
      %v3215 = vpop.f32.mrb[0].mxu0
      %v3216 = vpop.f32.mrb[0].mxu0
      %v3217 = vadd.f32 0.0, %v3216
      %v3218 = vpop.f32.mrb[0].mxu0
      %3219 = vmatprep.mubr.bf16.mxu0 0
      %3220 = vmatmul.mubr.bf16.gmra.mrb[0].mxu0 %v3097
      %v3221 = vpop.f32.mrb[0].mxu0
      %v3222 = vadd.f32 0.0, %v3221
      %v3223 = vpop.f32.mrb[0].mxu0
      %v3224 = vpop.f32.mrb[0].mxu0
      %v3225 = vadd.f32 0.0, %v3224
      %v3226 = vpop.f32.mrb[0].mxu0
      %3227 = vmatprep.mubr.bf16.mxu0 0
      %3228 = vmatmul.mubr.bf16.gmra.mrb[0].mxu0 %v3100
      %v3229 = vpop.f32.mrb[0].mxu0
      %v3230 = vadd.f32 0.0, %v3229
      %v3231 = vpop.f32.mrb[0].mxu0
      %v3232 = vpop.f32.mrb[0].mxu0
      %v3233 = vadd.f32 0.0, %v3232
      %v3234 = vpop.f32.mrb[0].mxu0
      %3235 = vmatprep.mubr.bf16.mxu0 0
      %3236 = vmatmul.mubr.bf16.gmra.mrb[0].mxu0 %v3103
      %v3237 = vpop.f32.mrb[0].mxu0
      %v3238 = vadd.f32 0.0, %v3237
      %v3239 = vpop.f32.mrb[0].mxu0
      %v3240 = vpop.f32.mrb[0].mxu0
      %v3241 = vadd.f32 0.0, %v3240
      %v3242 = vpop.f32.mrb[0].mxu0
      %3243 = vmatprep.mubr.bf16.mxu0 0
      %3244 = vmatmul.mubr.bf16.gmra.mrb[0].mxu0 %v3106
      %v3245 = vpop.f32.mrb[0].mxu0
      %v3246 = vadd.f32 0.0, %v3245
      %v3247 = vpop.f32.mrb[0].mxu0
      %v3248 = vpop.f32.mrb[0].mxu0
      %v3249 = vadd.f32 0.0, %v3248
      %v3250 = vpop.f32.mrb[0].mxu0
      %3251 = vmatprep.mubr.bf16.mxu0 0
      %3252 = vmatmul.mubr.bf16.gmra.mrb[0].mxu0 %v3109
      %v3253 = vpop.f32.mrb[0].mxu0
      %v3254 = vadd.f32 0.0, %v3253
      %v3255 = vpop.f32.mrb[0].mxu0
      %v3256 = vpop.f32.mrb[0].mxu0
      %v3257 = vadd.f32 0.0, %v3256
      %v3258 = vpop.f32.mrb[0].mxu0
      %3259 = vmatprep.mubr.bf16.mxu0 0
      %3260 = vmatmul.mubr.bf16.gmra.mrb[0].mxu0 %v3112
      %v3261 = vpop.f32.mrb[0].mxu0
      %v3262 = vadd.f32 0.0, %v3261
      %v3263 = vpop.f32.mrb[0].mxu0
      %v3264 = vpop.f32.mrb[0].mxu0
      %v3265 = vadd.f32 0.0, %v3264
      %v3266 = vpop.f32.mrb[0].mxu0
      %3267 = vmatprep.mubr.bf16.mxu0 0
      %3268 = vmatmul.mubr.bf16.gmra.mrb[0].mxu0 %v3115
      %v3269 = vpop.f32.mrb[0].mxu0
      %v3270 = vadd.f32 0.0, %v3269
      %v3271 = vpop.f32.mrb[0].mxu0
      %v3272 = vpop.f32.mrb[0].mxu0
      %v3273 = vadd.f32 0.0, %v3272
      %v3274 = vpop.f32.mrb[0].mxu0
      %3275 = vmatprep.mubr.bf16.mxu0 0
      %3276 = vmatmul.mubr.bf16.gmra.mrb[0].mxu0 %v3118
      %v3277 = vpop.f32.mrb[0].mxu0
      %v3278 = vadd.f32 0.0, %v3277
      %v3279 = vpop.f32.mrb[0].mxu0
      %v3280 = vpop.f32.mrb[0].mxu0
      %v3281 = vadd.f32 0.0, %v3280
      %v3282 = vpop.f32.mrb[0].mxu0
      %3283 = vdwg.mxu0
      %v3284 = vadd.f32 %v2989, %v3158
      %v3285 = vadd.f32 %v2990, %v3161
      %v3286 = vadd.f32 %v2991, %v3166
      %v3287 = vadd.f32 %v2992, %v3169
      %v3288 = vadd.f32 %v2993, %v3174
      %v3289 = vadd.f32 %v2994, %v3177
      %v3290 = vadd.f32 %v2995, %v3182
      %v3291 = vadd.f32 %v2996, %v3185
      %v3292 = vadd.f32 %v2997, %v3190
      %v3293 = vadd.f32 %v2998, %v3193
      %v3294 = vadd.f32 %v2999, %v3198
      %v3295 = vadd.f32 %v3000, %v3201
      %v3296 = vadd.f32 %v3001, %v3206
      %v3297 = vadd.f32 %v3002, %v3209
      %v3298 = vadd.f32 %v3003, %v3214
      %v3299 = vadd.f32 %v3004, %v3217
      %v3300 = vadd.f32 %v3005, %v3222
      %v3301 = vadd.f32 %v3006, %v3225
      %v3302 = vadd.f32 %v3007, %v3230
      %v3303 = vadd.f32 %v3008, %v3233
      %v3304 = vadd.f32 %v3009, %v3238
      %v3305 = vadd.f32 %v3010, %v3241
      %v3306 = vadd.f32 %v3011, %v3246
      %v3307 = vadd.f32 %v3012, %v3249
      %v3308 = vadd.f32 %v3013, %v3254
      %v3309 = vadd.f32 %v3014, %v3257
      %v3310 = vadd.f32 %v3015, %v3262
      %v3311 = vadd.f32 %v3016, %v3265
      %v3312 = vadd.f32 %v3017, %v3270
      %v3313 = vadd.f32 %v3018, %v3273
      %v3314 = vadd.f32 %v3019, %v3278
      %v3315 = vadd.f32 %v3020, %v3281
      %v3316 = vld [vmem:[%s2725 + $0x2] sm:$0xff]
      %v3317 = vld [vmem:[%s2725 + $0xa] sm:$0xff]
      %v3318 = vld [vmem:[%s2725 + $0x1a] sm:$0xff]
      %v3319 = vld [vmem:[%s2725 + $0x22] sm:$0xff]
      %v3320 = vld [vmem:[%s2725 + $0x32] sm:$0xff]
      %v3321 = vld [vmem:[%s2725 + $0x3a] sm:$0xff]
      %v3322 = vld [vmem:[%s2725 + $0x4a] sm:$0xff]
      %v3323 = vld [vmem:[%s2725 + $0x52] sm:$0xff]
      %v3324 = vld [vmem:[%s2725 + $0x62] sm:$0xff]
      %v3325 = vld [vmem:[%s2725 + $0x6a] sm:$0xff]
      %v3326 = vld [vmem:[%s2725 + $0x7a] sm:$0xff]
      %v3327 = vld [vmem:[%s2725 + $0x82] sm:$0xff]
      %v3328 = vld [vmem:[%s2725 + $0x92] sm:$0xff]
      %v3329 = vld [vmem:[%s2725 + $0x9a] sm:$0xff]
      %v3330 = vld [vmem:[%s2725 + $0xaa] sm:$0xff]
      %v3331 = vld [vmem:[%s2725 + $0xb2] sm:$0xff]
      %v3332 = vld [vmem:[%s2725 + $0xc2] sm:$0xff]
      %v3333 = vld [vmem:[%s2725 + $0xca] sm:$0xff]
      %v3334 = vld [vmem:[%s2725 + $0xda] sm:$0xff]
      %v3335 = vld [vmem:[%s2725 + $0xe2] sm:$0xff]
      %v3336 = vld [vmem:[%s2725 + $0xf2] sm:$0xff]
      %v3337 = vld [vmem:[%s2725 + $0xfa] sm:$0xff]
      %v3338 = vld [vmem:[%s2725 + $0x10a] sm:$0xff]
      %v3339 = vld [vmem:[%s2725 + $0x112] sm:$0xff]
      %v3340 = vld [vmem:[%s2725 + $0x122] sm:$0xff]
      %v3341 = vld [vmem:[%s2725 + $0x12a] sm:$0xff]
      %v3342 = vld [vmem:[%s2725 + $0x13a] sm:$0xff]
      %v3343 = vld [vmem:[%s2725 + $0x142] sm:$0xff]
      %v3344 = vld [vmem:[%s2725 + $0x152] sm:$0xff]
      %v3345 = vld [vmem:[%s2725 + $0x15a] sm:$0xff]
      %v3346 = vld [vmem:[%s2725 + $0x16a] sm:$0xff]
      %v3347 = vld [vmem:[%s2725 + $0x172] sm:$0xff]
      %v3348 = vpack.c.bf16 %v3317, %v3316
      %v3349 = vpack.c.bf16 %v3319, %v3318
      %v3350 = vpack.c.bf16 %v3321, %v3320
      %v3351 = vpack.c.bf16 %v3323, %v3322
      %v3352 = vpack.c.bf16 %v3325, %v3324
      %v3353 = vpack.c.bf16 %v3327, %v3326
      %v3354 = vpack.c.bf16 %v3329, %v3328
      %v3355 = vpack.c.bf16 %v3331, %v3330
      %v3356 = vpack.c.bf16 %v3333, %v3332
      %v3357 = vpack.c.bf16 %v3335, %v3334
      %v3358 = vpack.c.bf16 %v3337, %v3336
      %v3359 = vpack.c.bf16 %v3339, %v3338
      %v3360 = vpack.c.bf16 %v3341, %v3340
      %v3361 = vpack.c.bf16 %v3343, %v3342
      %v3362 = vpack.c.bf16 %v3345, %v3344
      %v3363 = vpack.c.bf16 %v3347, %v3346
      %s3364 = scalar_lea.vmem %s3, 32
      %v3365 = vld [vmem:[%s3364] sm:$0xf]
      %v3366 = vpack.c.bf16 %v3365, %v3365
      %v3368 = vsel %vm420, %v3348, 0
      %v3371 = vsel %vm420, %v3349, 0
      %v3374 = vsel %vm420, %v3350, 0
      %v3377 = vsel %vm420, %v3351, 0
      %v3380 = vsel %vm420, %v3352, 0
      %v3383 = vsel %vm420, %v3353, 0
      %v3386 = vsel %vm420, %v3354, 0
      %v3389 = vsel %vm420, %v3355, 0
      %v3392 = vsel %vm420, %v3356, 0
      %v3395 = vsel %vm420, %v3357, 0
      %v3398 = vsel %vm420, %v3358, 0
      %v3401 = vsel %vm420, %v3359, 0
      %v3404 = vsel %vm420, %v3360, 0
      %v3407 = vsel %vm420, %v3361, 0
      %v3410 = vsel %vm420, %v3362, 0
      %v3413 = vsel %vm420, %v3363, 0
      %v3416 = vsel %vm735, %v3366, 0
      %3418 = vmatprep.subr.bf16.mxu0 0
      %3419 = vmatpush1.bf16.msra.mxu0 %v3416
      %3420 = vmatprep.subr.bf16.mxu0 0
      %3421 = vmatpush1.bf16.msra.mxu0 0
      %3422 = vmatprep.subr.bf16.mxu0 0
      %3423 = vmatpush1.bf16.msra.mxu0 0
      %3424 = vmatprep.subr.bf16.mxu0 0
      %3425 = vmatpush1.bf16.msra.mxu0 0
      %3426 = vmatprep.subr.bf16.mxu0 0
      %3427 = vmatpush1.bf16.msra.mxu0 0
      %3428 = vmatprep.subr.bf16.mxu0 0
      %3429 = vmatpush1.bf16.msra.mxu0 0
      %3430 = vmatprep.subr.bf16.mxu0 0
      %3431 = vmatpush1.bf16.msra.mxu0 0
      %3432 = vmatprep.subr.bf16.mxu0 0
      %3433 = vmatpush1.bf16.msra.mxu0 0
      %3434 = vmatprep.subr.bf16.mxu0 0
      %3435 = vmatpush1.bf16.msra.mxu0 0
      %3436 = vmatprep.subr.bf16.mxu0 0
      %3437 = vmatpush1.bf16.msra.mxu0 0
      %3438 = vmatprep.subr.bf16.mxu0 0
      %3439 = vmatpush1.bf16.msra.mxu0 0
      %3440 = vmatprep.subr.bf16.mxu0 0
      %3441 = vmatpush1.bf16.msra.mxu0 0
      %3442 = vmatprep.subr.bf16.mxu0 0
      %3443 = vmatpush1.bf16.msra.mxu0 0
      %3444 = vmatprep.subr.bf16.mxu0 0
      %3445 = vmatpush1.bf16.msra.mxu0 0
      %3446 = vmatprep.subr.bf16.mxu0 0
      %3447 = vmatpush1.bf16.msra.mxu0 0
      %3448 = vmatprep.subr.bf16.mxu0 0
      %3449 = vmatpush1.bf16.msra.mxu0 0
      %3450 = vmatprep.mubr.bf16.mxu0 0
      %3451 = vmatmul.mubr.bf16.gmra.mrb[0].mxu0 %v3368
      %v3452 = vpop.f32.mrb[0].mxu0
      %v3453 = vadd.f32 0.0, %v3452
      %v3454 = vpop.f32.mrb[0].mxu0
      %v3455 = vpop.f32.mrb[0].mxu0
      %v3456 = vadd.f32 0.0, %v3455
      %v3457 = vpop.f32.mrb[0].mxu0
      %3458 = vmatprep.mubr.bf16.mxu0 0
      %3459 = vmatmul.mubr.bf16.gmra.mrb[0].mxu0 %v3371
      %v3460 = vpop.f32.mrb[0].mxu0
      %v3461 = vadd.f32 0.0, %v3460
      %v3462 = vpop.f32.mrb[0].mxu0
      %v3463 = vpop.f32.mrb[0].mxu0
      %v3464 = vadd.f32 0.0, %v3463
      %v3465 = vpop.f32.mrb[0].mxu0
      %3466 = vmatprep.mubr.bf16.mxu0 0
      %3467 = vmatmul.mubr.bf16.gmra.mrb[0].mxu0 %v3374
      %v3468 = vpop.f32.mrb[0].mxu0
      %v3469 = vadd.f32 0.0, %v3468
      %v3470 = vpop.f32.mrb[0].mxu0
      %v3471 = vpop.f32.mrb[0].mxu0
      %v3472 = vadd.f32 0.0, %v3471
      %v3473 = vpop.f32.mrb[0].mxu0
      %3474 = vmatprep.mubr.bf16.mxu0 0
      %3475 = vmatmul.mubr.bf16.gmra.mrb[0].mxu0 %v3377
      %v3476 = vpop.f32.mrb[0].mxu0
      %v3477 = vadd.f32 0.0, %v3476
      %v3478 = vpop.f32.mrb[0].mxu0
      %v3479 = vpop.f32.mrb[0].mxu0
      %v3480 = vadd.f32 0.0, %v3479
      %v3481 = vpop.f32.mrb[0].mxu0
      %3482 = vmatprep.mubr.bf16.mxu0 0
      %3483 = vmatmul.mubr.bf16.gmra.mrb[0].mxu0 %v3380
      %v3484 = vpop.f32.mrb[0].mxu0
      %v3485 = vadd.f32 0.0, %v3484
      %v3486 = vpop.f32.mrb[0].mxu0
      %v3487 = vpop.f32.mrb[0].mxu0
      %v3488 = vadd.f32 0.0, %v3487
      %v3489 = vpop.f32.mrb[0].mxu0
      %3490 = vmatprep.mubr.bf16.mxu0 0
      %3491 = vmatmul.mubr.bf16.gmra.mrb[0].mxu0 %v3383
      %v3492 = vpop.f32.mrb[0].mxu0
      %v3493 = vadd.f32 0.0, %v3492
      %v3494 = vpop.f32.mrb[0].mxu0
      %v3495 = vpop.f32.mrb[0].mxu0
      %v3496 = vadd.f32 0.0, %v3495
      %v3497 = vpop.f32.mrb[0].mxu0
      %3498 = vmatprep.mubr.bf16.mxu0 0
      %3499 = vmatmul.mubr.bf16.gmra.mrb[0].mxu0 %v3386
      %v3500 = vpop.f32.mrb[0].mxu0
      %v3501 = vadd.f32 0.0, %v3500
      %v3502 = vpop.f32.mrb[0].mxu0
      %v3503 = vpop.f32.mrb[0].mxu0
      %v3504 = vadd.f32 0.0, %v3503
      %v3505 = vpop.f32.mrb[0].mxu0
      %3506 = vmatprep.mubr.bf16.mxu0 0
      %3507 = vmatmul.mubr.bf16.gmra.mrb[0].mxu0 %v3389
      %v3508 = vpop.f32.mrb[0].mxu0
      %v3509 = vadd.f32 0.0, %v3508
      %v3510 = vpop.f32.mrb[0].mxu0
      %v3511 = vpop.f32.mrb[0].mxu0
      %v3512 = vadd.f32 0.0, %v3511
      %v3513 = vpop.f32.mrb[0].mxu0
      %3514 = vmatprep.mubr.bf16.mxu0 0
      %3515 = vmatmul.mubr.bf16.gmra.mrb[0].mxu0 %v3392
      %v3516 = vpop.f32.mrb[0].mxu0
      %v3517 = vadd.f32 0.0, %v3516
      %v3518 = vpop.f32.mrb[0].mxu0
      %v3519 = vpop.f32.mrb[0].mxu0
      %v3520 = vadd.f32 0.0, %v3519
      %v3521 = vpop.f32.mrb[0].mxu0
      %3522 = vmatprep.mubr.bf16.mxu0 0
      %3523 = vmatmul.mubr.bf16.gmra.mrb[0].mxu0 %v3395
      %v3524 = vpop.f32.mrb[0].mxu0
      %v3525 = vadd.f32 0.0, %v3524
      %v3526 = vpop.f32.mrb[0].mxu0
      %v3527 = vpop.f32.mrb[0].mxu0
      %v3528 = vadd.f32 0.0, %v3527
      %v3529 = vpop.f32.mrb[0].mxu0
      %3530 = vmatprep.mubr.bf16.mxu0 0
      %3531 = vmatmul.mubr.bf16.gmra.mrb[0].mxu0 %v3398
      %v3532 = vpop.f32.mrb[0].mxu0
      %v3533 = vadd.f32 0.0, %v3532
      %v3534 = vpop.f32.mrb[0].mxu0
      %v3535 = vpop.f32.mrb[0].mxu0
      %v3536 = vadd.f32 0.0, %v3535
      %v3537 = vpop.f32.mrb[0].mxu0
      %3538 = vmatprep.mubr.bf16.mxu0 0
      %3539 = vmatmul.mubr.bf16.gmra.mrb[0].mxu0 %v3401
      %v3540 = vpop.f32.mrb[0].mxu0
      %v3541 = vadd.f32 0.0, %v3540
      %v3542 = vpop.f32.mrb[0].mxu0
      %v3543 = vpop.f32.mrb[0].mxu0
      %v3544 = vadd.f32 0.0, %v3543
      %v3545 = vpop.f32.mrb[0].mxu0
      %3546 = vmatprep.mubr.bf16.mxu0 0
      %3547 = vmatmul.mubr.bf16.gmra.mrb[0].mxu0 %v3404
      %v3548 = vpop.f32.mrb[0].mxu0
      %v3549 = vadd.f32 0.0, %v3548
      %v3550 = vpop.f32.mrb[0].mxu0
      %v3551 = vpop.f32.mrb[0].mxu0
      %v3552 = vadd.f32 0.0, %v3551
      %v3553 = vpop.f32.mrb[0].mxu0
      %3554 = vmatprep.mubr.bf16.mxu0 0
      %3555 = vmatmul.mubr.bf16.gmra.mrb[0].mxu0 %v3407
      %v3556 = vpop.f32.mrb[0].mxu0
      %v3557 = vadd.f32 0.0, %v3556
      %v3558 = vpop.f32.mrb[0].mxu0
      %v3559 = vpop.f32.mrb[0].mxu0
      %v3560 = vadd.f32 0.0, %v3559
      %v3561 = vpop.f32.mrb[0].mxu0
      %3562 = vmatprep.mubr.bf16.mxu0 0
      %3563 = vmatmul.mubr.bf16.gmra.mrb[0].mxu0 %v3410
      %v3564 = vpop.f32.mrb[0].mxu0
      %v3565 = vadd.f32 0.0, %v3564
      %v3566 = vpop.f32.mrb[0].mxu0
      %v3567 = vpop.f32.mrb[0].mxu0
      %v3568 = vadd.f32 0.0, %v3567
      %v3569 = vpop.f32.mrb[0].mxu0
      %3570 = vmatprep.mubr.bf16.mxu0 0
      %3571 = vmatmul.mubr.bf16.gmra.mrb[0].mxu0 %v3413
      %v3572 = vpop.f32.mrb[0].mxu0
      %v3573 = vadd.f32 0.0, %v3572
      %v3574 = vpop.f32.mrb[0].mxu0
      %v3575 = vpop.f32.mrb[0].mxu0
      %v3576 = vadd.f32 0.0, %v3575
      %v3577 = vpop.f32.mrb[0].mxu0
      %3578 = vdwg.mxu0
      %v3579 = vadd.f32 %v3284, %v3453
      %v3580 = vadd.f32 %v3285, %v3456
      %v3581 = vadd.f32 %v3286, %v3461
      %v3582 = vadd.f32 %v3287, %v3464
      %v3583 = vadd.f32 %v3288, %v3469
      %v3584 = vadd.f32 %v3289, %v3472
      %v3585 = vadd.f32 %v3290, %v3477
      %v3586 = vadd.f32 %v3291, %v3480
      %v3587 = vadd.f32 %v3292, %v3485
      %v3588 = vadd.f32 %v3293, %v3488
      %v3589 = vadd.f32 %v3294, %v3493
      %v3590 = vadd.f32 %v3295, %v3496
      %v3591 = vadd.f32 %v3296, %v3501
      %v3592 = vadd.f32 %v3297, %v3504
      %v3593 = vadd.f32 %v3298, %v3509
      %v3594 = vadd.f32 %v3299, %v3512
      %v3595 = vadd.f32 %v3300, %v3517
      %v3596 = vadd.f32 %v3301, %v3520
      %v3597 = vadd.f32 %v3302, %v3525
      %v3598 = vadd.f32 %v3303, %v3528
      %v3599 = vadd.f32 %v3304, %v3533
      %v3600 = vadd.f32 %v3305, %v3536
      %v3601 = vadd.f32 %v3306, %v3541
      %v3602 = vadd.f32 %v3307, %v3544
      %v3603 = vadd.f32 %v3308, %v3549
      %v3604 = vadd.f32 %v3309, %v3552
      %v3605 = vadd.f32 %v3310, %v3557
      %v3606 = vadd.f32 %v3311, %v3560
      %v3607 = vadd.f32 %v3312, %v3565
      %v3608 = vadd.f32 %v3313, %v3568
      %v3609 = vadd.f32 %v3314, %v3573
      %v3610 = vadd.f32 %v3315, %v3576
      %v3611 = vld [vmem:[%s4] sm:$0x1]
      %v3613 = vlaneseq
      %v3614 = vshrl.u32 %v3613, 7
      %v3615 = vsub.s32 0, %v3614
      %v3616 = vrot.slane %v3611, %v3615
      %v3618 = vadd.f32 %v3579, %v3616
      %v3619 = vadd.f32 %v3580, %v3616
      %v3620 = vadd.f32 %v3581, %v3616
      %v3621 = vadd.f32 %v3582, %v3616
      %v3622 = vadd.f32 %v3583, %v3616
      %v3623 = vadd.f32 %v3584, %v3616
      %v3624 = vadd.f32 %v3585, %v3616
      %v3625 = vadd.f32 %v3586, %v3616
      %v3626 = vadd.f32 %v3587, %v3616
      %v3627 = vadd.f32 %v3588, %v3616
      %v3628 = vadd.f32 %v3589, %v3616
      %v3629 = vadd.f32 %v3590, %v3616
      %v3630 = vadd.f32 %v3591, %v3616
      %v3631 = vadd.f32 %v3592, %v3616
      %v3632 = vadd.f32 %v3593, %v3616
      %v3633 = vadd.f32 %v3594, %v3616
      %v3634 = vadd.f32 %v3595, %v3616
      %v3635 = vadd.f32 %v3596, %v3616
      %v3636 = vadd.f32 %v3597, %v3616
      %v3637 = vadd.f32 %v3598, %v3616
      %v3638 = vadd.f32 %v3599, %v3616
      %v3639 = vadd.f32 %v3600, %v3616
      %v3640 = vadd.f32 %v3601, %v3616
      %v3641 = vadd.f32 %v3602, %v3616
      %v3642 = vadd.f32 %v3603, %v3616
      %v3643 = vadd.f32 %v3604, %v3616
      %v3644 = vadd.f32 %v3605, %v3616
      %v3645 = vadd.f32 %v3606, %v3616
      %v3646 = vadd.f32 %v3607, %v3616
      %v3647 = vadd.f32 %v3608, %v3616
      %v3648 = vadd.f32 %v3609, %v3616
      %v3649 = vadd.f32 %v3610, %v3616
      %vm3650 = vcmask 64512
      %v3651 = vsel %vm3650, %v3618, 0.0
      %v3652 = vsel %vm3650, %v3619, 0.0
      %v3653 = vadd.f32 %v3651, %v3652
      %v3654 = vsel %vm3650, %v3620, 0.0
      %v3655 = vadd.f32 %v3653, %v3654
      %v3656 = vsel %vm3650, %v3621, 0.0
      %v3657 = vadd.f32 %v3655, %v3656
      %v3658 = vsel %vm3650, %v3622, 0.0
      %v3659 = vadd.f32 %v3657, %v3658
      %v3660 = vsel %vm3650, %v3623, 0.0
      %v3661 = vadd.f32 %v3659, %v3660
      %v3662 = vsel %vm3650, %v3624, 0.0
      %v3663 = vadd.f32 %v3661, %v3662
      %v3664 = vsel %vm3650, %v3625, 0.0
      %v3665 = vadd.f32 %v3663, %v3664
      %v3666 = vsel %vm3650, %v3626, 0.0
      %v3667 = vadd.f32 %v3665, %v3666
      %v3668 = vsel %vm3650, %v3627, 0.0
      %v3669 = vadd.f32 %v3667, %v3668
      %v3670 = vsel %vm3650, %v3628, 0.0
      %v3671 = vadd.f32 %v3669, %v3670
      %v3672 = vsel %vm3650, %v3629, 0.0
      %v3673 = vadd.f32 %v3671, %v3672
      %v3674 = vsel %vm3650, %v3630, 0.0
      %v3675 = vadd.f32 %v3673, %v3674
      %v3676 = vsel %vm3650, %v3631, 0.0
      %v3677 = vadd.f32 %v3675, %v3676
      %v3678 = vsel %vm3650, %v3632, 0.0
      %v3679 = vadd.f32 %v3677, %v3678
      %v3680 = vsel %vm3650, %v3633, 0.0
      %v3681 = vadd.f32 %v3679, %v3680
      %v3682 = vsel %vm3650, %v3634, 0.0
      %v3683 = vadd.f32 %v3681, %v3682
      %v3684 = vsel %vm3650, %v3635, 0.0
      %v3685 = vadd.f32 %v3683, %v3684
      %v3686 = vsel %vm3650, %v3636, 0.0
      %v3687 = vadd.f32 %v3685, %v3686
      %v3688 = vsel %vm3650, %v3637, 0.0
      %v3689 = vadd.f32 %v3687, %v3688
      %v3690 = vsel %vm3650, %v3638, 0.0
      %v3691 = vadd.f32 %v3689, %v3690
      %v3692 = vsel %vm3650, %v3639, 0.0
      %v3693 = vadd.f32 %v3691, %v3692
      %v3694 = vsel %vm3650, %v3640, 0.0
      %v3695 = vadd.f32 %v3693, %v3694
      %v3696 = vsel %vm3650, %v3641, 0.0
      %v3697 = vadd.f32 %v3695, %v3696
      %v3698 = vsel %vm3650, %v3642, 0.0
      %v3699 = vadd.f32 %v3697, %v3698
      %v3700 = vsel %vm3650, %v3643, 0.0
      %v3701 = vadd.f32 %v3699, %v3700
      %v3702 = vsel %vm3650, %v3644, 0.0
      %v3703 = vadd.f32 %v3701, %v3702
      %v3704 = vsel %vm3650, %v3645, 0.0
      %v3705 = vadd.f32 %v3703, %v3704
      %v3706 = vsel %vm3650, %v3646, 0.0
      %v3707 = vadd.f32 %v3705, %v3706
      %v3708 = vsel %vm3650, %v3647, 0.0
      %v3709 = vadd.f32 %v3707, %v3708
      %v3710 = vsel %vm3650, %v3648, 0.0
      %v3711 = vadd.f32 %v3709, %v3710
      %v3712 = vsel %vm3650, %v3649, 0.0
      %v3713 = vadd.f32 %v3711, %v3712
      %v3714 = vrot.slane %v3713, 4
      %v3715 = vadd.f32 %v3713, %v3714
      %v3716 = vrot.slane %v3715, 2
      %v3717 = vadd.f32 %v3715, %v3716
      %v3718 = vrot.slane %v3717, 1
      %v3719 = vadd.f32 %v3717, %v3718
      %v3720 = vmul.f32 %v3618, %v3618
      %v3721 = vmul.f32 %v3619, %v3619
      %v3722 = vmul.f32 %v3620, %v3620
      %v3723 = vmul.f32 %v3621, %v3621
      %v3724 = vmul.f32 %v3622, %v3622
      %v3725 = vmul.f32 %v3623, %v3623
      %v3726 = vmul.f32 %v3624, %v3624
      %v3727 = vmul.f32 %v3625, %v3625
      %v3728 = vmul.f32 %v3626, %v3626
      %v3729 = vmul.f32 %v3627, %v3627
      %v3730 = vmul.f32 %v3628, %v3628
      %v3731 = vmul.f32 %v3629, %v3629
      %v3732 = vmul.f32 %v3630, %v3630
      %v3733 = vmul.f32 %v3631, %v3631
      %v3734 = vmul.f32 %v3632, %v3632
      %v3735 = vmul.f32 %v3633, %v3633
      %v3736 = vmul.f32 %v3634, %v3634
      %v3737 = vmul.f32 %v3635, %v3635
      %v3738 = vmul.f32 %v3636, %v3636
      %v3739 = vmul.f32 %v3637, %v3637
      %v3740 = vmul.f32 %v3638, %v3638
      %v3741 = vmul.f32 %v3639, %v3639
      %v3742 = vmul.f32 %v3640, %v3640
      %v3743 = vmul.f32 %v3641, %v3641
      %v3744 = vmul.f32 %v3642, %v3642
      %v3745 = vmul.f32 %v3643, %v3643
      %v3746 = vmul.f32 %v3644, %v3644
      %v3747 = vmul.f32 %v3645, %v3645
      %v3748 = vmul.f32 %v3646, %v3646
      %v3749 = vmul.f32 %v3647, %v3647
      %v3750 = vmul.f32 %v3648, %v3648
      %v3751 = vmul.f32 %v3649, %v3649
      %v3752 = vsel %vm3650, %v3720, 0.0
      %v3753 = vsel %vm3650, %v3721, 0.0
      %v3754 = vadd.f32 %v3752, %v3753
      %v3755 = vsel %vm3650, %v3722, 0.0
      %v3756 = vadd.f32 %v3754, %v3755
      %v3757 = vsel %vm3650, %v3723, 0.0
      %v3758 = vadd.f32 %v3756, %v3757
      %v3759 = vsel %vm3650, %v3724, 0.0
      %v3760 = vadd.f32 %v3758, %v3759
      %v3761 = vsel %vm3650, %v3725, 0.0
      %v3762 = vadd.f32 %v3760, %v3761
      %v3763 = vsel %vm3650, %v3726, 0.0
      %v3764 = vadd.f32 %v3762, %v3763
      %v3765 = vsel %vm3650, %v3727, 0.0
      %v3766 = vadd.f32 %v3764, %v3765
      %v3767 = vsel %vm3650, %v3728, 0.0
      %v3768 = vadd.f32 %v3766, %v3767
      %v3769 = vsel %vm3650, %v3729, 0.0
      %v3770 = vadd.f32 %v3768, %v3769
      %v3771 = vsel %vm3650, %v3730, 0.0
      %v3772 = vadd.f32 %v3770, %v3771
      %v3773 = vsel %vm3650, %v3731, 0.0
      %v3774 = vadd.f32 %v3772, %v3773
      %v3775 = vsel %vm3650, %v3732, 0.0
      %v3776 = vadd.f32 %v3774, %v3775
      %v3777 = vsel %vm3650, %v3733, 0.0
      %v3778 = vadd.f32 %v3776, %v3777
      %v3779 = vsel %vm3650, %v3734, 0.0
      %v3780 = vadd.f32 %v3778, %v3779
      %v3781 = vsel %vm3650, %v3735, 0.0
      %v3782 = vadd.f32 %v3780, %v3781
      %v3783 = vsel %vm3650, %v3736, 0.0
      %v3784 = vadd.f32 %v3782, %v3783
      %v3785 = vsel %vm3650, %v3737, 0.0
      %v3786 = vadd.f32 %v3784, %v3785
      %v3787 = vsel %vm3650, %v3738, 0.0
      %v3788 = vadd.f32 %v3786, %v3787
      %v3789 = vsel %vm3650, %v3739, 0.0
      %v3790 = vadd.f32 %v3788, %v3789
      %v3791 = vsel %vm3650, %v3740, 0.0
      %v3792 = vadd.f32 %v3790, %v3791
      %v3793 = vsel %vm3650, %v3741, 0.0
      %v3794 = vadd.f32 %v3792, %v3793
      %v3795 = vsel %vm3650, %v3742, 0.0
      %v3796 = vadd.f32 %v3794, %v3795
      %v3797 = vsel %vm3650, %v3743, 0.0
      %v3798 = vadd.f32 %v3796, %v3797
      %v3799 = vsel %vm3650, %v3744, 0.0
      %v3800 = vadd.f32 %v3798, %v3799
      %v3801 = vsel %vm3650, %v3745, 0.0
      %v3802 = vadd.f32 %v3800, %v3801
      %v3803 = vsel %vm3650, %v3746, 0.0
      %v3804 = vadd.f32 %v3802, %v3803
      %v3805 = vsel %vm3650, %v3747, 0.0
      %v3806 = vadd.f32 %v3804, %v3805
      %v3807 = vsel %vm3650, %v3748, 0.0
      %v3808 = vadd.f32 %v3806, %v3807
      %v3809 = vsel %vm3650, %v3749, 0.0
      %v3810 = vadd.f32 %v3808, %v3809
      %v3811 = vsel %vm3650, %v3750, 0.0
      %v3812 = vadd.f32 %v3810, %v3811
      %v3813 = vsel %vm3650, %v3751, 0.0
      %v3814 = vadd.f32 %v3812, %v3813
      %v3815 = vrot.slane %v3814, 4
      %v3816 = vadd.f32 %v3814, %v3815
      %v3817 = vrot.slane %v3816, 2
      %v3818 = vadd.f32 %v3816, %v3817
      %v3819 = vrot.slane %v3818, 1
      %v3820 = vadd.f32 %v3818, %v3819
      %v3821 = vmul.f32 %v3719, 0.00390625
      %v3822 = vmul.f32 %v3820, 0.00390625
      %v3823 = vmul.f32 %v3821, %v3821
      %v3824 = vsub.f32 %v3822, %v3823
      %v3825 = vmax.f32 %v3824, 0.0
      %v3826 = vsub.f32 %v3618, %v3821
      %v3827 = vsub.f32 %v3619, %v3821
      %v3828 = vsub.f32 %v3620, %v3821
      %v3829 = vsub.f32 %v3621, %v3821
      %v3830 = vsub.f32 %v3622, %v3821
      %v3831 = vsub.f32 %v3623, %v3821
      %v3832 = vsub.f32 %v3624, %v3821
      %v3833 = vsub.f32 %v3625, %v3821
      %v3834 = vsub.f32 %v3626, %v3821
      %v3835 = vsub.f32 %v3627, %v3821
      %v3836 = vsub.f32 %v3628, %v3821
      %v3837 = vsub.f32 %v3629, %v3821
      %v3838 = vsub.f32 %v3630, %v3821
      %v3839 = vsub.f32 %v3631, %v3821
      %v3840 = vsub.f32 %v3632, %v3821
      %v3841 = vsub.f32 %v3633, %v3821
      %v3842 = vsub.f32 %v3634, %v3821
      %v3843 = vsub.f32 %v3635, %v3821
      %v3844 = vsub.f32 %v3636, %v3821
      %v3845 = vsub.f32 %v3637, %v3821
      %v3846 = vsub.f32 %v3638, %v3821
      %v3847 = vsub.f32 %v3639, %v3821
      %v3848 = vsub.f32 %v3640, %v3821
      %v3849 = vsub.f32 %v3641, %v3821
      %v3850 = vsub.f32 %v3642, %v3821
      %v3851 = vsub.f32 %v3643, %v3821
      %v3852 = vsub.f32 %v3644, %v3821
      %v3853 = vsub.f32 %v3645, %v3821
      %v3854 = vsub.f32 %v3646, %v3821
      %v3855 = vsub.f32 %v3647, %v3821
      %v3856 = vsub.f32 %v3648, %v3821
      %v3857 = vsub.f32 %v3649, %v3821
      %v3858 = vadd.f32 %v3825, 1e-05
      %v3859 = vrsqrt.pop %v3858
      %v3860 = vmul.f32 %v3826, %v3859
      %v3861 = vmul.f32 %v3827, %v3859
      %v3862 = vmul.f32 %v3828, %v3859
      %v3863 = vmul.f32 %v3829, %v3859
      %v3864 = vmul.f32 %v3830, %v3859
      %v3865 = vmul.f32 %v3831, %v3859
      %v3866 = vmul.f32 %v3832, %v3859
      %v3867 = vmul.f32 %v3833, %v3859
      %v3868 = vmul.f32 %v3834, %v3859
      %v3869 = vmul.f32 %v3835, %v3859
      %v3870 = vmul.f32 %v3836, %v3859
      %v3871 = vmul.f32 %v3837, %v3859
      %v3872 = vmul.f32 %v3838, %v3859
      %v3873 = vmul.f32 %v3839, %v3859
      %v3874 = vmul.f32 %v3840, %v3859
      %v3875 = vmul.f32 %v3841, %v3859
      %v3876 = vmul.f32 %v3842, %v3859
      %v3877 = vmul.f32 %v3843, %v3859
      %v3878 = vmul.f32 %v3844, %v3859
      %v3879 = vmul.f32 %v3845, %v3859
      %v3880 = vmul.f32 %v3846, %v3859
      %v3881 = vmul.f32 %v3847, %v3859
      %v3882 = vmul.f32 %v3848, %v3859
      %v3883 = vmul.f32 %v3849, %v3859
      %v3884 = vmul.f32 %v3850, %v3859
      %v3885 = vmul.f32 %v3851, %v3859
      %v3886 = vmul.f32 %v3852, %v3859
      %v3887 = vmul.f32 %v3853, %v3859
      %v3888 = vmul.f32 %v3854, %v3859
      %v3889 = vmul.f32 %v3855, %v3859
      %v3890 = vmul.f32 %v3856, %v3859
      %v3891 = vmul.f32 %v3857, %v3859
      %v3892 = vpack.c.bf16 %v3861, %v3860
      %v3893 = vpack.c.bf16 %v3863, %v3862
      %v3894 = vpack.c.bf16 %v3865, %v3864
      %v3895 = vpack.c.bf16 %v3867, %v3866
      %v3896 = vpack.c.bf16 %v3869, %v3868
      %v3897 = vpack.c.bf16 %v3871, %v3870
      %v3898 = vpack.c.bf16 %v3873, %v3872
      %v3899 = vpack.c.bf16 %v3875, %v3874
      %v3900 = vpack.c.bf16 %v3877, %v3876
      %v3901 = vpack.c.bf16 %v3879, %v3878
      %v3902 = vpack.c.bf16 %v3881, %v3880
      %v3903 = vpack.c.bf16 %v3883, %v3882
      %v3904 = vpack.c.bf16 %v3885, %v3884
      %v3905 = vpack.c.bf16 %v3887, %v3886
      %v3906 = vpack.c.bf16 %v3889, %v3888
      %v3907 = vpack.c.bf16 %v3891, %v3890
      %v3908 = vld [vmem:[%s5] sm:$0xff]
      %v3909 = vpack.c.bf16 %v3908, %v3908
      %v3910 = vld [vmem:[%s6] sm:$0x1]
      %v3912 = vlaneseq
      %v3913 = vshrl.u32 %v3912, 7
      %v3914 = vsub.s32 0, %v3913
      %v3915 = vrot.slane %v3910, %v3914
      %v3918 = vsel %vm3650, %v3892, 0
      %v3921 = vsel %vm3650, %v3893, 0
      %v3924 = vsel %vm3650, %v3894, 0
      %v3927 = vsel %vm3650, %v3895, 0
      %v3930 = vsel %vm3650, %v3896, 0
      %v3933 = vsel %vm3650, %v3897, 0
      %v3936 = vsel %vm3650, %v3898, 0
      %v3939 = vsel %vm3650, %v3899, 0
      %v3942 = vsel %vm3650, %v3900, 0
      %v3945 = vsel %vm3650, %v3901, 0
      %v3948 = vsel %vm3650, %v3902, 0
      %v3951 = vsel %vm3650, %v3903, 0
      %v3954 = vsel %vm3650, %v3904, 0
      %v3957 = vsel %vm3650, %v3905, 0
      %v3960 = vsel %vm3650, %v3906, 0
      %v3963 = vsel %vm3650, %v3907, 0
      %vm3965 = vcmask 1043456
      %v3967 = vsel %vm3965, %v3909, 0
      %3969 = vmatprep.subr.bf16.mxu0 0
      %3970 = vmatpush1.bf16.msra.mxu0 %v3967
      %3971 = vmatprep.subr.bf16.mxu0 0
      %3972 = vmatpush1.bf16.msra.mxu0 0
      %3973 = vmatprep.subr.bf16.mxu0 0
      %3974 = vmatpush1.bf16.msra.mxu0 0
      %3975 = vmatprep.subr.bf16.mxu0 0
      %3976 = vmatpush1.bf16.msra.mxu0 0
      %3977 = vmatprep.subr.bf16.mxu0 0
      %3978 = vmatpush1.bf16.msra.mxu0 0
      %3979 = vmatprep.subr.bf16.mxu0 0
      %3980 = vmatpush1.bf16.msra.mxu0 0
      %3981 = vmatprep.subr.bf16.mxu0 0
      %3982 = vmatpush1.bf16.msra.mxu0 0
      %3983 = vmatprep.subr.bf16.mxu0 0
      %3984 = vmatpush1.bf16.msra.mxu0 0
      %3985 = vmatprep.subr.bf16.mxu0 0
      %3986 = vmatpush1.bf16.msra.mxu0 0
      %3987 = vmatprep.subr.bf16.mxu0 0
      %3988 = vmatpush1.bf16.msra.mxu0 0
      %3989 = vmatprep.subr.bf16.mxu0 0
      %3990 = vmatpush1.bf16.msra.mxu0 0
      %3991 = vmatprep.subr.bf16.mxu0 0
      %3992 = vmatpush1.bf16.msra.mxu0 0
      %3993 = vmatprep.subr.bf16.mxu0 0
      %3994 = vmatpush1.bf16.msra.mxu0 0
      %3995 = vmatprep.subr.bf16.mxu0 0
      %3996 = vmatpush1.bf16.msra.mxu0 0
      %3997 = vmatprep.subr.bf16.mxu0 0
      %3998 = vmatpush1.bf16.msra.mxu0 0
      %3999 = vmatprep.subr.bf16.mxu0 0
      %4000 = vmatpush1.bf16.msra.mxu0 0
      %4001 = vmatprep.mubr.bf16.mxu0 0
      %4002 = vmatmul.mubr.bf16.gmra.mrb[0].mxu0 %v3918
      %v4003 = vpop.f32.mrb[0].mxu0
      %v4004 = vadd.f32 %v3915, %v4003
      %v4005 = vpop.f32.mrb[0].mxu0
      %v4006 = vpop.f32.mrb[0].mxu0
      %v4007 = vadd.f32 %v3915, %v4006
      %v4008 = vpop.f32.mrb[0].mxu0
      %4009 = vmatprep.mubr.bf16.mxu0 0
      %4010 = vmatmul.mubr.bf16.gmra.mrb[0].mxu0 %v3921
      %v4011 = vpop.f32.mrb[0].mxu0
      %v4012 = vadd.f32 %v3915, %v4011
      %v4013 = vpop.f32.mrb[0].mxu0
      %v4014 = vpop.f32.mrb[0].mxu0
      %v4015 = vadd.f32 %v3915, %v4014
      %v4016 = vpop.f32.mrb[0].mxu0
      %4017 = vmatprep.mubr.bf16.mxu0 0
      %4018 = vmatmul.mubr.bf16.gmra.mrb[0].mxu0 %v3924
      %v4019 = vpop.f32.mrb[0].mxu0
      %v4020 = vadd.f32 %v3915, %v4019
      %v4021 = vpop.f32.mrb[0].mxu0
      %v4022 = vpop.f32.mrb[0].mxu0
      %v4023 = vadd.f32 %v3915, %v4022
      %v4024 = vpop.f32.mrb[0].mxu0
      %4025 = vmatprep.mubr.bf16.mxu0 0
      %4026 = vmatmul.mubr.bf16.gmra.mrb[0].mxu0 %v3927
      %v4027 = vpop.f32.mrb[0].mxu0
      %v4028 = vadd.f32 %v3915, %v4027
      %v4029 = vpop.f32.mrb[0].mxu0
      %v4030 = vpop.f32.mrb[0].mxu0
      %v4031 = vadd.f32 %v3915, %v4030
      %v4032 = vpop.f32.mrb[0].mxu0
      %4033 = vmatprep.mubr.bf16.mxu0 0
      %4034 = vmatmul.mubr.bf16.gmra.mrb[0].mxu0 %v3930
      %v4035 = vpop.f32.mrb[0].mxu0
      %v4036 = vadd.f32 %v3915, %v4035
      %v4037 = vpop.f32.mrb[0].mxu0
      %v4038 = vpop.f32.mrb[0].mxu0
      %v4039 = vadd.f32 %v3915, %v4038
      %v4040 = vpop.f32.mrb[0].mxu0
      %4041 = vmatprep.mubr.bf16.mxu0 0
      %4042 = vmatmul.mubr.bf16.gmra.mrb[0].mxu0 %v3933
      %v4043 = vpop.f32.mrb[0].mxu0
      %v4044 = vadd.f32 %v3915, %v4043
      %v4045 = vpop.f32.mrb[0].mxu0
      %v4046 = vpop.f32.mrb[0].mxu0
      %v4047 = vadd.f32 %v3915, %v4046
      %v4048 = vpop.f32.mrb[0].mxu0
      %4049 = vmatprep.mubr.bf16.mxu0 0
      %4050 = vmatmul.mubr.bf16.gmra.mrb[0].mxu0 %v3936
      %v4051 = vpop.f32.mrb[0].mxu0
      %v4052 = vadd.f32 %v3915, %v4051
      %v4053 = vpop.f32.mrb[0].mxu0
      %v4054 = vpop.f32.mrb[0].mxu0
      %v4055 = vadd.f32 %v3915, %v4054
      %v4056 = vpop.f32.mrb[0].mxu0
      %4057 = vmatprep.mubr.bf16.mxu0 0
      %4058 = vmatmul.mubr.bf16.gmra.mrb[0].mxu0 %v3939
      %v4059 = vpop.f32.mrb[0].mxu0
      %v4060 = vadd.f32 %v3915, %v4059
      %v4061 = vpop.f32.mrb[0].mxu0
      %v4062 = vpop.f32.mrb[0].mxu0
      %v4063 = vadd.f32 %v3915, %v4062
      %v4064 = vpop.f32.mrb[0].mxu0
      %4065 = vmatprep.mubr.bf16.mxu0 0
      %4066 = vmatmul.mubr.bf16.gmra.mrb[0].mxu0 %v3942
      %v4067 = vpop.f32.mrb[0].mxu0
      %v4068 = vadd.f32 %v3915, %v4067
      %v4069 = vpop.f32.mrb[0].mxu0
      %v4070 = vpop.f32.mrb[0].mxu0
      %v4071 = vadd.f32 %v3915, %v4070
      %v4072 = vpop.f32.mrb[0].mxu0
      %4073 = vmatprep.mubr.bf16.mxu0 0
      %4074 = vmatmul.mubr.bf16.gmra.mrb[0].mxu0 %v3945
      %v4075 = vpop.f32.mrb[0].mxu0
      %v4076 = vadd.f32 %v3915, %v4075
      %v4077 = vpop.f32.mrb[0].mxu0
      %v4078 = vpop.f32.mrb[0].mxu0
      %v4079 = vadd.f32 %v3915, %v4078
      %v4080 = vpop.f32.mrb[0].mxu0
      %4081 = vmatprep.mubr.bf16.mxu0 0
      %4082 = vmatmul.mubr.bf16.gmra.mrb[0].mxu0 %v3948
      %v4083 = vpop.f32.mrb[0].mxu0
      %v4084 = vadd.f32 %v3915, %v4083
      %v4085 = vpop.f32.mrb[0].mxu0
      %v4086 = vpop.f32.mrb[0].mxu0
      %v4087 = vadd.f32 %v3915, %v4086
      %v4088 = vpop.f32.mrb[0].mxu0
      %4089 = vmatprep.mubr.bf16.mxu0 0
      %4090 = vmatmul.mubr.bf16.gmra.mrb[0].mxu0 %v3951
      %v4091 = vpop.f32.mrb[0].mxu0
      %v4092 = vadd.f32 %v3915, %v4091
      %v4093 = vpop.f32.mrb[0].mxu0
      %v4094 = vpop.f32.mrb[0].mxu0
      %v4095 = vadd.f32 %v3915, %v4094
      %v4096 = vpop.f32.mrb[0].mxu0
      %4097 = vmatprep.mubr.bf16.mxu0 0
      %4098 = vmatmul.mubr.bf16.gmra.mrb[0].mxu0 %v3954
      %v4099 = vpop.f32.mrb[0].mxu0
      %v4100 = vadd.f32 %v3915, %v4099
      %v4101 = vpop.f32.mrb[0].mxu0
      %v4102 = vpop.f32.mrb[0].mxu0
      %v4103 = vadd.f32 %v3915, %v4102
      %v4104 = vpop.f32.mrb[0].mxu0
      %4105 = vmatprep.mubr.bf16.mxu0 0
      %4106 = vmatmul.mubr.bf16.gmra.mrb[0].mxu0 %v3957
      %v4107 = vpop.f32.mrb[0].mxu0
      %v4108 = vadd.f32 %v3915, %v4107
      %v4109 = vpop.f32.mrb[0].mxu0
      %v4110 = vpop.f32.mrb[0].mxu0
      %v4111 = vadd.f32 %v3915, %v4110
      %v4112 = vpop.f32.mrb[0].mxu0
      %4113 = vmatprep.mubr.bf16.mxu0 0
      %4114 = vmatmul.mubr.bf16.gmra.mrb[0].mxu0 %v3960
      %v4115 = vpop.f32.mrb[0].mxu0
      %v4116 = vadd.f32 %v3915, %v4115
      %v4117 = vpop.f32.mrb[0].mxu0
      %v4118 = vpop.f32.mrb[0].mxu0
      %v4119 = vadd.f32 %v3915, %v4118
      %v4120 = vpop.f32.mrb[0].mxu0
      %4121 = vmatprep.mubr.bf16.mxu0 0
      %4122 = vmatmul.mubr.bf16.gmra.mrb[0].mxu0 %v3963
      %v4123 = vpop.f32.mrb[0].mxu0
      %v4124 = vadd.f32 %v3915, %v4123
      %v4125 = vpop.f32.mrb[0].mxu0
      %v4126 = vpop.f32.mrb[0].mxu0
      %v4127 = vadd.f32 %v3915, %v4126
      %v4128 = vpop.f32.mrb[0].mxu0
      %4129 = vdwg.mxu0
      %v4130 = vmax.f32 %v4004, 0.0
      %v4131 = vmax.f32 %v4007, 0.0
      %v4132 = vmax.f32 %v4012, 0.0
      %v4133 = vmax.f32 %v4015, 0.0
      %v4134 = vmax.f32 %v4020, 0.0
      %v4135 = vmax.f32 %v4023, 0.0
      %v4136 = vmax.f32 %v4028, 0.0
      %v4137 = vmax.f32 %v4031, 0.0
      %v4138 = vmax.f32 %v4036, 0.0
      %v4139 = vmax.f32 %v4039, 0.0
      %v4140 = vmax.f32 %v4044, 0.0
      %v4141 = vmax.f32 %v4047, 0.0
      %v4142 = vmax.f32 %v4052, 0.0
      %v4143 = vmax.f32 %v4055, 0.0
      %v4144 = vmax.f32 %v4060, 0.0
      %v4145 = vmax.f32 %v4063, 0.0
      %v4146 = vmax.f32 %v4068, 0.0
      %v4147 = vmax.f32 %v4071, 0.0
      %v4148 = vmax.f32 %v4076, 0.0
      %v4149 = vmax.f32 %v4079, 0.0
      %v4150 = vmax.f32 %v4084, 0.0
      %v4151 = vmax.f32 %v4087, 0.0
      %v4152 = vmax.f32 %v4092, 0.0
      %v4153 = vmax.f32 %v4095, 0.0
      %v4154 = vmax.f32 %v4100, 0.0
      %v4155 = vmax.f32 %v4103, 0.0
      %v4156 = vmax.f32 %v4108, 0.0
      %v4157 = vmax.f32 %v4111, 0.0
      %v4158 = vmax.f32 %v4116, 0.0
      %v4159 = vmax.f32 %v4119, 0.0
      %v4160 = vmax.f32 %v4124, 0.0
      %v4161 = vmax.f32 %v4127, 0.0
      %4162 = vst.msk [vmem:[#allocation3] sm:$0xff] %vm3650, 0.0
      %4163 = vst.msk [vmem:[#allocation3 + $0x8] sm:$0xff] %vm3650, 0.0
      %vm4164 = vcmask 58368
      %4165 = vst.msk [vmem:[#allocation3 + $0x10] sm:$0x3] %vm4164, 0.0
      %4166 = vst.msk [vmem:[#allocation3 + $0x18] sm:$0xff] %vm3650, 0.0
      %4167 = vst.msk [vmem:[#allocation3 + $0x20] sm:$0xff] %vm3650, 0.0
      %4168 = vst.msk [vmem:[#allocation3 + $0x28] sm:$0x3] %vm4164, 0.0
      %4169 = vst.msk [vmem:[#allocation3 + $0x30] sm:$0xff] %vm3650, 0.0
      %4170 = vst.msk [vmem:[#allocation3 + $0x38] sm:$0xff] %vm3650, 0.0
      %4171 = vst.msk [vmem:[#allocation3 + $0x40] sm:$0x3] %vm4164, 0.0
      %4172 = vst.msk [vmem:[#allocation3 + $0x48] sm:$0xff] %vm3650, 0.0
      %4173 = vst.msk [vmem:[#allocation3 + $0x50] sm:$0xff] %vm3650, 0.0
      %4174 = vst.msk [vmem:[#allocation3 + $0x58] sm:$0x3] %vm4164, 0.0
      %4175 = vst.msk [vmem:[#allocation3 + $0x60] sm:$0xff] %vm3650, 0.0
      %4176 = vst.msk [vmem:[#allocation3 + $0x68] sm:$0xff] %vm3650, 0.0
      %4177 = vst.msk [vmem:[#allocation3 + $0x70] sm:$0x3] %vm4164, 0.0
      %4178 = vst.msk [vmem:[#allocation3 + $0x78] sm:$0xff] %vm3650, 0.0
      %4179 = vst.msk [vmem:[#allocation3 + $0x80] sm:$0xff] %vm3650, 0.0
      %4180 = vst.msk [vmem:[#allocation3 + $0x88] sm:$0x3] %vm4164, 0.0
      %4181 = vst.msk [vmem:[#allocation3 + $0x90] sm:$0xff] %vm3650, 0.0
      %4182 = vst.msk [vmem:[#allocation3 + $0x98] sm:$0xff] %vm3650, 0.0
      %4183 = vst.msk [vmem:[#allocation3 + $0xa0] sm:$0x3] %vm4164, 0.0
      %4184 = vst.msk [vmem:[#allocation3 + $0xa8] sm:$0xff] %vm3650, 0.0
      %4185 = vst.msk [vmem:[#allocation3 + $0xb0] sm:$0xff] %vm3650, 0.0
      %4186 = vst.msk [vmem:[#allocation3 + $0xb8] sm:$0x3] %vm4164, 0.0
      %4187 = vst.msk [vmem:[#allocation3 + $0xc0] sm:$0xff] %vm3650, 0.0
      %4188 = vst.msk [vmem:[#allocation3 + $0xc8] sm:$0xff] %vm3650, 0.0
      %4189 = vst.msk [vmem:[#allocation3 + $0xd0] sm:$0x3] %vm4164, 0.0
      %4190 = vst.msk [vmem:[#allocation3 + $0xd8] sm:$0xff] %vm3650, 0.0
      %4191 = vst.msk [vmem:[#allocation3 + $0xe0] sm:$0xff] %vm3650, 0.0
      %4192 = vst.msk [vmem:[#allocation3 + $0xe8] sm:$0x3] %vm4164, 0.0
      %4193 = vst.msk [vmem:[#allocation3 + $0xf0] sm:$0xff] %vm3650, 0.0
      %4194 = vst.msk [vmem:[#allocation3 + $0xf8] sm:$0xff] %vm3650, 0.0
      %4195 = vst.msk [vmem:[#allocation3 + $0x100] sm:$0x3] %vm4164, 0.0
      %4196 = vst.msk [vmem:[#allocation3 + $0x108] sm:$0xff] %vm3650, 0.0
      %4197 = vst.msk [vmem:[#allocation3 + $0x110] sm:$0xff] %vm3650, 0.0
      %4198 = vst.msk [vmem:[#allocation3 + $0x118] sm:$0x3] %vm4164, 0.0
      %4199 = vst.msk [vmem:[#allocation3 + $0x120] sm:$0xff] %vm3650, 0.0
      %4200 = vst.msk [vmem:[#allocation3 + $0x128] sm:$0xff] %vm3650, 0.0
      %4201 = vst.msk [vmem:[#allocation3 + $0x130] sm:$0x3] %vm4164, 0.0
      %4202 = vst.msk [vmem:[#allocation3 + $0x138] sm:$0xff] %vm3650, 0.0
      %4203 = vst.msk [vmem:[#allocation3 + $0x140] sm:$0xff] %vm3650, 0.0
      %4204 = vst.msk [vmem:[#allocation3 + $0x148] sm:$0x3] %vm4164, 0.0
      %4205 = vst.msk [vmem:[#allocation3 + $0x150] sm:$0xff] %vm3650, 0.0
      %4206 = vst.msk [vmem:[#allocation3 + $0x158] sm:$0xff] %vm3650, 0.0
      %4207 = vst.msk [vmem:[#allocation3 + $0x160] sm:$0x3] %vm4164, 0.0
      %4208 = vst.msk [vmem:[#allocation3 + $0x168] sm:$0xff] %vm3650, 0.0
      %4209 = vst.msk [vmem:[#allocation3 + $0x170] sm:$0xff] %vm3650, 0.0
      %4210 = vst.msk [vmem:[#allocation3 + $0x178] sm:$0x3] %vm4164, 0.0
      %4211 = vst.msk [vmem:[#allocation3 + $0x180] sm:$0xff] %vm3650, 0.0
      %4212 = vst.msk [vmem:[#allocation3 + $0x188] sm:$0xff] %vm3650, 0.0
      %4213 = vst.msk [vmem:[#allocation3 + $0x190] sm:$0x3] %vm4164, 0.0
      %4214 = vst.msk [vmem:[#allocation3 + $0x198] sm:$0xff] %vm3650, 0.0
      %4215 = vst.msk [vmem:[#allocation3 + $0x1a0] sm:$0xff] %vm3650, 0.0
      %4216 = vst.msk [vmem:[#allocation3 + $0x1a8] sm:$0x3] %vm4164, 0.0
      %s4217 = scalar_lea.vmem [#allocation3], 24
      %4218 = vst.msk [vmem:[%s4217 + $0x1] sm:$0xff] %vm3650, %v4130
      %4219 = vst.msk [vmem:[%s4217 + $0x9] sm:$0xff] %vm3650, %v4131
      %4220 = vst.msk [vmem:[%s4217 + $0x19] sm:$0xff] %vm3650, %v4132
      %4221 = vst.msk [vmem:[%s4217 + $0x21] sm:$0xff] %vm3650, %v4133
      %4222 = vst.msk [vmem:[%s4217 + $0x31] sm:$0xff] %vm3650, %v4134
      %4223 = vst.msk [vmem:[%s4217 + $0x39] sm:$0xff] %vm3650, %v4135
      %4224 = vst.msk [vmem:[%s4217 + $0x49] sm:$0xff] %vm3650, %v4136
      %4225 = vst.msk [vmem:[%s4217 + $0x51] sm:$0xff] %vm3650, %v4137
      %4226 = vst.msk [vmem:[%s4217 + $0x61] sm:$0xff] %vm3650, %v4138
      %4227 = vst.msk [vmem:[%s4217 + $0x69] sm:$0xff] %vm3650, %v4139
      %4228 = vst.msk [vmem:[%s4217 + $0x79] sm:$0xff] %vm3650, %v4140
      %4229 = vst.msk [vmem:[%s4217 + $0x81] sm:$0xff] %vm3650, %v4141
      %4230 = vst.msk [vmem:[%s4217 + $0x91] sm:$0xff] %vm3650, %v4142
      %4231 = vst.msk [vmem:[%s4217 + $0x99] sm:$0xff] %vm3650, %v4143
      %4232 = vst.msk [vmem:[%s4217 + $0xa9] sm:$0xff] %vm3650, %v4144
      %4233 = vst.msk [vmem:[%s4217 + $0xb1] sm:$0xff] %vm3650, %v4145
      %4234 = vst.msk [vmem:[%s4217 + $0xc1] sm:$0xff] %vm3650, %v4146
      %4235 = vst.msk [vmem:[%s4217 + $0xc9] sm:$0xff] %vm3650, %v4147
      %4236 = vst.msk [vmem:[%s4217 + $0xd9] sm:$0xff] %vm3650, %v4148
      %4237 = vst.msk [vmem:[%s4217 + $0xe1] sm:$0xff] %vm3650, %v4149
      %4238 = vst.msk [vmem:[%s4217 + $0xf1] sm:$0xff] %vm3650, %v4150
      %4239 = vst.msk [vmem:[%s4217 + $0xf9] sm:$0xff] %vm3650, %v4151
      %4240 = vst.msk [vmem:[%s4217 + $0x109] sm:$0xff] %vm3650, %v4152
      %4241 = vst.msk [vmem:[%s4217 + $0x111] sm:$0xff] %vm3650, %v4153
      %4242 = vst.msk [vmem:[%s4217 + $0x121] sm:$0xff] %vm3650, %v4154
      %4243 = vst.msk [vmem:[%s4217 + $0x129] sm:$0xff] %vm3650, %v4155
      %4244 = vst.msk [vmem:[%s4217 + $0x139] sm:$0xff] %vm3650, %v4156
      %4245 = vst.msk [vmem:[%s4217 + $0x141] sm:$0xff] %vm3650, %v4157
      %4246 = vst.msk [vmem:[%s4217 + $0x151] sm:$0xff] %vm3650, %v4158
      %4247 = vst.msk [vmem:[%s4217 + $0x159] sm:$0xff] %vm3650, %v4159
      %4248 = vst.msk [vmem:[%s4217 + $0x169] sm:$0xff] %vm3650, %v4160
      %4249 = vst.msk [vmem:[%s4217 + $0x171] sm:$0xff] %vm3650, %v4161
      %v4250 = vld [vmem:[#allocation3] sm:$0xff]
      %v4251 = vld [vmem:[#allocation3 + $0x8] sm:$0xff]
      %v4252 = vld [vmem:[#allocation3 + $0x18] sm:$0xff]
      %v4253 = vld [vmem:[#allocation3 + $0x20] sm:$0xff]
      %v4254 = vld [vmem:[#allocation3 + $0x30] sm:$0xff]
      %v4255 = vld [vmem:[#allocation3 + $0x38] sm:$0xff]
      %v4256 = vld [vmem:[#allocation3 + $0x48] sm:$0xff]
      %v4257 = vld [vmem:[#allocation3 + $0x50] sm:$0xff]
      %v4258 = vld [vmem:[#allocation3 + $0x60] sm:$0xff]
      %v4259 = vld [vmem:[#allocation3 + $0x68] sm:$0xff]
      %v4260 = vld [vmem:[#allocation3 + $0x78] sm:$0xff]
      %v4261 = vld [vmem:[#allocation3 + $0x80] sm:$0xff]
      %v4262 = vld [vmem:[#allocation3 + $0x90] sm:$0xff]
      %v4263 = vld [vmem:[#allocation3 + $0x98] sm:$0xff]
      %v4264 = vld [vmem:[#allocation3 + $0xa8] sm:$0xff]
      %v4265 = vld [vmem:[#allocation3 + $0xb0] sm:$0xff]
      %v4266 = vld [vmem:[#allocation3 + $0xc0] sm:$0xff]
      %v4267 = vld [vmem:[#allocation3 + $0xc8] sm:$0xff]
      %v4268 = vld [vmem:[#allocation3 + $0xd8] sm:$0xff]
      %v4269 = vld [vmem:[#allocation3 + $0xe0] sm:$0xff]
      %v4270 = vld [vmem:[#allocation3 + $0xf0] sm:$0xff]
      %v4271 = vld [vmem:[#allocation3 + $0xf8] sm:$0xff]
      %v4272 = vld [vmem:[#allocation3 + $0x108] sm:$0xff]
      %v4273 = vld [vmem:[#allocation3 + $0x110] sm:$0xff]
      %v4274 = vld [vmem:[#allocation3 + $0x120] sm:$0xff]
      %v4275 = vld [vmem:[#allocation3 + $0x128] sm:$0xff]
      %v4276 = vld [vmem:[#allocation3 + $0x138] sm:$0xff]
      %v4277 = vld [vmem:[#allocation3 + $0x140] sm:$0xff]
      %v4278 = vld [vmem:[#allocation3 + $0x150] sm:$0xff]
      %v4279 = vld [vmem:[#allocation3 + $0x158] sm:$0xff]
      %v4280 = vld [vmem:[#allocation3 + $0x168] sm:$0xff]
      %v4281 = vld [vmem:[#allocation3 + $0x170] sm:$0xff]
      %v4282 = vpack.c.bf16 %v4251, %v4250
      %v4283 = vpack.c.bf16 %v4253, %v4252
      %v4284 = vpack.c.bf16 %v4255, %v4254
      %v4285 = vpack.c.bf16 %v4257, %v4256
      %v4286 = vpack.c.bf16 %v4259, %v4258
      %v4287 = vpack.c.bf16 %v4261, %v4260
      %v4288 = vpack.c.bf16 %v4263, %v4262
      %v4289 = vpack.c.bf16 %v4265, %v4264
      %v4290 = vpack.c.bf16 %v4267, %v4266
      %v4291 = vpack.c.bf16 %v4269, %v4268
      %v4292 = vpack.c.bf16 %v4271, %v4270
      %v4293 = vpack.c.bf16 %v4273, %v4272
      %v4294 = vpack.c.bf16 %v4275, %v4274
      %v4295 = vpack.c.bf16 %v4277, %v4276
      %v4296 = vpack.c.bf16 %v4279, %v4278
      %v4297 = vpack.c.bf16 %v4281, %v4280
      %v4298 = vld [vmem:[%s7] sm:$0xff]
      %v4299 = vpack.c.bf16 %v4298, %v4298
      %v4300 = vld [vmem:[#allocation3 + $0x1] sm:$0xff]
      %v4301 = vld [vmem:[#allocation3 + $0x9] sm:$0xff]
      %v4302 = vld [vmem:[#allocation3 + $0x19] sm:$0xff]
      %v4303 = vld [vmem:[#allocation3 + $0x21] sm:$0xff]
      %v4304 = vld [vmem:[#allocation3 + $0x31] sm:$0xff]
      %v4305 = vld [vmem:[#allocation3 + $0x39] sm:$0xff]
      %v4306 = vld [vmem:[#allocation3 + $0x49] sm:$0xff]
      %v4307 = vld [vmem:[#allocation3 + $0x51] sm:$0xff]
      %v4308 = vld [vmem:[#allocation3 + $0x61] sm:$0xff]
      %v4309 = vld [vmem:[#allocation3 + $0x69] sm:$0xff]
      %v4310 = vld [vmem:[#allocation3 + $0x79] sm:$0xff]
      %v4311 = vld [vmem:[#allocation3 + $0x81] sm:$0xff]
      %v4312 = vld [vmem:[#allocation3 + $0x91] sm:$0xff]
      %v4313 = vld [vmem:[#allocation3 + $0x99] sm:$0xff]
      %v4314 = vld [vmem:[#allocation3 + $0xa9] sm:$0xff]
      %v4315 = vld [vmem:[#allocation3 + $0xb1] sm:$0xff]
      %v4316 = vld [vmem:[#allocation3 + $0xc1] sm:$0xff]
      %v4317 = vld [vmem:[#allocation3 + $0xc9] sm:$0xff]
      %v4318 = vld [vmem:[#allocation3 + $0xd9] sm:$0xff]
      %v4319 = vld [vmem:[#allocation3 + $0xe1] sm:$0xff]
      %v4320 = vld [vmem:[#allocation3 + $0xf1] sm:$0xff]
      %v4321 = vld [vmem:[#allocation3 + $0xf9] sm:$0xff]
      %v4322 = vld [vmem:[#allocation3 + $0x109] sm:$0xff]
      %v4323 = vld [vmem:[#allocation3 + $0x111] sm:$0xff]
      %v4324 = vld [vmem:[#allocation3 + $0x121] sm:$0xff]
      %v4325 = vld [vmem:[#allocation3 + $0x129] sm:$0xff]
      %v4326 = vld [vmem:[#allocation3 + $0x139] sm:$0xff]
      %v4327 = vld [vmem:[#allocation3 + $0x141] sm:$0xff]
      %v4328 = vld [vmem:[#allocation3 + $0x151] sm:$0xff]
      %v4329 = vld [vmem:[#allocation3 + $0x159] sm:$0xff]
      %v4330 = vld [vmem:[#allocation3 + $0x169] sm:$0xff]
      %v4331 = vld [vmem:[#allocation3 + $0x171] sm:$0xff]
      %v4332 = vpack.c.bf16 %v4301, %v4300
      %v4333 = vpack.c.bf16 %v4303, %v4302
      %v4334 = vpack.c.bf16 %v4305, %v4304
      %v4335 = vpack.c.bf16 %v4307, %v4306
      %v4336 = vpack.c.bf16 %v4309, %v4308
      %v4337 = vpack.c.bf16 %v4311, %v4310
      %v4338 = vpack.c.bf16 %v4313, %v4312
      %v4339 = vpack.c.bf16 %v4315, %v4314
      %v4340 = vpack.c.bf16 %v4317, %v4316
      %v4341 = vpack.c.bf16 %v4319, %v4318
      %v4342 = vpack.c.bf16 %v4321, %v4320
      %v4343 = vpack.c.bf16 %v4323, %v4322
      %v4344 = vpack.c.bf16 %v4325, %v4324
      %v4345 = vpack.c.bf16 %v4327, %v4326
      %v4346 = vpack.c.bf16 %v4329, %v4328
      %v4347 = vpack.c.bf16 %v4331, %v4330
      %s4348 = scalar_lea.vmem %s7, 8
      %v4349 = vld [vmem:[%s4348] sm:$0xff]
      %v4350 = vpack.c.bf16 %v4349, %v4349
      %v4352 = vsel %vm3650, %v4332, 0
      %v4355 = vsel %vm3650, %v4333, 0
      %v4358 = vsel %vm3650, %v4334, 0
      %v4361 = vsel %vm3650, %v4335, 0
      %v4364 = vsel %vm3650, %v4336, 0
      %v4367 = vsel %vm3650, %v4337, 0
      %v4370 = vsel %vm3650, %v4338, 0
      %v4373 = vsel %vm3650, %v4339, 0
      %v4376 = vsel %vm3650, %v4340, 0
      %v4379 = vsel %vm3650, %v4341, 0
      %v4382 = vsel %vm3650, %v4342, 0
      %v4385 = vsel %vm3650, %v4343, 0
      %v4388 = vsel %vm3650, %v4344, 0
      %v4391 = vsel %vm3650, %v4345, 0
      %v4394 = vsel %vm3650, %v4346, 0
      %v4397 = vsel %vm3650, %v4347, 0
      %v4400 = vsel %vm3965, %v4350, 0
      %4402 = vmatprep.subr.bf16.mxu0 0
      %4403 = vmatpush1.bf16.msra.mxu0 %v4400
      %4404 = vmatprep.subr.bf16.mxu0 0
      %4405 = vmatpush1.bf16.msra.mxu0 0
      %4406 = vmatprep.subr.bf16.mxu0 0
      %4407 = vmatpush1.bf16.msra.mxu0 0
      %4408 = vmatprep.subr.bf16.mxu0 0
      %4409 = vmatpush1.bf16.msra.mxu0 0
      %4410 = vmatprep.subr.bf16.mxu0 0
      %4411 = vmatpush1.bf16.msra.mxu0 0
      %4412 = vmatprep.subr.bf16.mxu0 0
      %4413 = vmatpush1.bf16.msra.mxu0 0
      %4414 = vmatprep.subr.bf16.mxu0 0
      %4415 = vmatpush1.bf16.msra.mxu0 0
      %4416 = vmatprep.subr.bf16.mxu0 0
      %4417 = vmatpush1.bf16.msra.mxu0 0
      %4418 = vmatprep.subr.bf16.mxu0 0
      %4419 = vmatpush1.bf16.msra.mxu0 0
      %4420 = vmatprep.subr.bf16.mxu0 0
      %4421 = vmatpush1.bf16.msra.mxu0 0
      %4422 = vmatprep.subr.bf16.mxu0 0
      %4423 = vmatpush1.bf16.msra.mxu0 0
      %4424 = vmatprep.subr.bf16.mxu0 0
      %4425 = vmatpush1.bf16.msra.mxu0 0
      %4426 = vmatprep.subr.bf16.mxu0 0
      %4427 = vmatpush1.bf16.msra.mxu0 0
      %4428 = vmatprep.subr.bf16.mxu0 0
      %4429 = vmatpush1.bf16.msra.mxu0 0
      %4430 = vmatprep.subr.bf16.mxu0 0
      %4431 = vmatpush1.bf16.msra.mxu0 0
      %4432 = vmatprep.subr.bf16.mxu0 0
      %4433 = vmatpush1.bf16.msra.mxu0 0
      %4434 = vmatprep.mubr.bf16.mxu0 0
      %4435 = vmatmul.mubr.bf16.gmra.mrb[0].mxu0 %v4352
      %v4436 = vpop.f32.mrb[0].mxu0
      %v4437 = vadd.f32 0.0, %v4436
      %v4438 = vpop.f32.mrb[0].mxu0
      %v4439 = vpop.f32.mrb[0].mxu0
      %v4440 = vadd.f32 0.0, %v4439
      %v4441 = vpop.f32.mrb[0].mxu0
      %4442 = vmatprep.mubr.bf16.mxu0 0
      %4443 = vmatmul.mubr.bf16.gmra.mrb[0].mxu0 %v4355
      %v4444 = vpop.f32.mrb[0].mxu0
      %v4445 = vadd.f32 0.0, %v4444
      %v4446 = vpop.f32.mrb[0].mxu0
      %v4447 = vpop.f32.mrb[0].mxu0
      %v4448 = vadd.f32 0.0, %v4447
      %v4449 = vpop.f32.mrb[0].mxu0
      %4450 = vmatprep.mubr.bf16.mxu0 0
      %4451 = vmatmul.mubr.bf16.gmra.mrb[0].mxu0 %v4358
      %v4452 = vpop.f32.mrb[0].mxu0
      %v4453 = vadd.f32 0.0, %v4452
      %v4454 = vpop.f32.mrb[0].mxu0
      %v4455 = vpop.f32.mrb[0].mxu0
      %v4456 = vadd.f32 0.0, %v4455
      %v4457 = vpop.f32.mrb[0].mxu0
      %4458 = vmatprep.mubr.bf16.mxu0 0
      %4459 = vmatmul.mubr.bf16.gmra.mrb[0].mxu0 %v4361
      %v4460 = vpop.f32.mrb[0].mxu0
      %v4461 = vadd.f32 0.0, %v4460
      %v4462 = vpop.f32.mrb[0].mxu0
      %v4463 = vpop.f32.mrb[0].mxu0
      %v4464 = vadd.f32 0.0, %v4463
      %v4465 = vpop.f32.mrb[0].mxu0
      %4466 = vmatprep.mubr.bf16.mxu0 0
      %4467 = vmatmul.mubr.bf16.gmra.mrb[0].mxu0 %v4364
      %v4468 = vpop.f32.mrb[0].mxu0
      %v4469 = vadd.f32 0.0, %v4468
      %v4470 = vpop.f32.mrb[0].mxu0
      %v4471 = vpop.f32.mrb[0].mxu0
      %v4472 = vadd.f32 0.0, %v4471
      %v4473 = vpop.f32.mrb[0].mxu0
      %4474 = vmatprep.mubr.bf16.mxu0 0
      %4475 = vmatmul.mubr.bf16.gmra.mrb[0].mxu0 %v4367
      %v4476 = vpop.f32.mrb[0].mxu0
      %v4477 = vadd.f32 0.0, %v4476
      %v4478 = vpop.f32.mrb[0].mxu0
      %v4479 = vpop.f32.mrb[0].mxu0
      %v4480 = vadd.f32 0.0, %v4479
      %v4481 = vpop.f32.mrb[0].mxu0
      %4482 = vmatprep.mubr.bf16.mxu0 0
      %4483 = vmatmul.mubr.bf16.gmra.mrb[0].mxu0 %v4370
      %v4484 = vpop.f32.mrb[0].mxu0
      %v4485 = vadd.f32 0.0, %v4484
      %v4486 = vpop.f32.mrb[0].mxu0
      %v4487 = vpop.f32.mrb[0].mxu0
      %v4488 = vadd.f32 0.0, %v4487
      %v4489 = vpop.f32.mrb[0].mxu0
      %4490 = vmatprep.mubr.bf16.mxu0 0
      %4491 = vmatmul.mubr.bf16.gmra.mrb[0].mxu0 %v4373
      %v4492 = vpop.f32.mrb[0].mxu0
      %v4493 = vadd.f32 0.0, %v4492
      %v4494 = vpop.f32.mrb[0].mxu0
      %v4495 = vpop.f32.mrb[0].mxu0
      %v4496 = vadd.f32 0.0, %v4495
      %v4497 = vpop.f32.mrb[0].mxu0
      %4498 = vmatprep.mubr.bf16.mxu0 0
      %4499 = vmatmul.mubr.bf16.gmra.mrb[0].mxu0 %v4376
      %v4500 = vpop.f32.mrb[0].mxu0
      %v4501 = vadd.f32 0.0, %v4500
      %v4502 = vpop.f32.mrb[0].mxu0
      %v4503 = vpop.f32.mrb[0].mxu0
      %v4504 = vadd.f32 0.0, %v4503
      %v4505 = vpop.f32.mrb[0].mxu0
      %4506 = vmatprep.mubr.bf16.mxu0 0
      %4507 = vmatmul.mubr.bf16.gmra.mrb[0].mxu0 %v4379
      %v4508 = vpop.f32.mrb[0].mxu0
      %v4509 = vadd.f32 0.0, %v4508
      %v4510 = vpop.f32.mrb[0].mxu0
      %v4511 = vpop.f32.mrb[0].mxu0
      %v4512 = vadd.f32 0.0, %v4511
      %v4513 = vpop.f32.mrb[0].mxu0
      %4514 = vmatprep.mubr.bf16.mxu0 0
      %4515 = vmatmul.mubr.bf16.gmra.mrb[0].mxu0 %v4382
      %v4516 = vpop.f32.mrb[0].mxu0
      %v4517 = vadd.f32 0.0, %v4516
      %v4518 = vpop.f32.mrb[0].mxu0
      %v4519 = vpop.f32.mrb[0].mxu0
      %v4520 = vadd.f32 0.0, %v4519
      %v4521 = vpop.f32.mrb[0].mxu0
      %4522 = vmatprep.mubr.bf16.mxu0 0
      %4523 = vmatmul.mubr.bf16.gmra.mrb[0].mxu0 %v4385
      %v4524 = vpop.f32.mrb[0].mxu0
      %v4525 = vadd.f32 0.0, %v4524
      %v4526 = vpop.f32.mrb[0].mxu0
      %v4527 = vpop.f32.mrb[0].mxu0
      %v4528 = vadd.f32 0.0, %v4527
      %v4529 = vpop.f32.mrb[0].mxu0
      %4530 = vmatprep.mubr.bf16.mxu0 0
      %4531 = vmatmul.mubr.bf16.gmra.mrb[0].mxu0 %v4388
      %v4532 = vpop.f32.mrb[0].mxu0
      %v4533 = vadd.f32 0.0, %v4532
      %v4534 = vpop.f32.mrb[0].mxu0
      %v4535 = vpop.f32.mrb[0].mxu0
      %v4536 = vadd.f32 0.0, %v4535
      %v4537 = vpop.f32.mrb[0].mxu0
      %4538 = vmatprep.mubr.bf16.mxu0 0
      %4539 = vmatmul.mubr.bf16.gmra.mrb[0].mxu0 %v4391
      %v4540 = vpop.f32.mrb[0].mxu0
      %v4541 = vadd.f32 0.0, %v4540
      %v4542 = vpop.f32.mrb[0].mxu0
      %v4543 = vpop.f32.mrb[0].mxu0
      %v4544 = vadd.f32 0.0, %v4543
      %v4545 = vpop.f32.mrb[0].mxu0
      %4546 = vmatprep.mubr.bf16.mxu0 0
      %4547 = vmatmul.mubr.bf16.gmra.mrb[0].mxu0 %v4394
      %v4548 = vpop.f32.mrb[0].mxu0
      %v4549 = vadd.f32 0.0, %v4548
      %v4550 = vpop.f32.mrb[0].mxu0
      %v4551 = vpop.f32.mrb[0].mxu0
      %v4552 = vadd.f32 0.0, %v4551
      %v4553 = vpop.f32.mrb[0].mxu0
      %4554 = vmatprep.mubr.bf16.mxu0 0
      %4555 = vmatmul.mubr.bf16.gmra.mrb[0].mxu0 %v4397
      %v4556 = vpop.f32.mrb[0].mxu0
      %v4557 = vadd.f32 0.0, %v4556
      %v4558 = vpop.f32.mrb[0].mxu0
      %v4559 = vpop.f32.mrb[0].mxu0
      %v4560 = vadd.f32 0.0, %v4559
      %v4561 = vpop.f32.mrb[0].mxu0
      %4562 = vdwg.mxu0
      %v4564 = vsel %vm3650, %v4282, 0
      %v4567 = vsel %vm3650, %v4283, 0
      %v4570 = vsel %vm3650, %v4284, 0
      %v4573 = vsel %vm3650, %v4285, 0
      %v4576 = vsel %vm3650, %v4286, 0
      %v4579 = vsel %vm3650, %v4287, 0
      %v4582 = vsel %vm3650, %v4288, 0
      %v4585 = vsel %vm3650, %v4289, 0
      %v4588 = vsel %vm3650, %v4290, 0
      %v4591 = vsel %vm3650, %v4291, 0
      %v4594 = vsel %vm3650, %v4292, 0
      %v4597 = vsel %vm3650, %v4293, 0
      %v4600 = vsel %vm3650, %v4294, 0
      %v4603 = vsel %vm3650, %v4295, 0
      %v4606 = vsel %vm3650, %v4296, 0
      %v4609 = vsel %vm3650, %v4297, 0
      %v4612 = vsel %vm3965, %v4299, 0
      %4614 = vmatprep.subr.bf16.mxu0 0
      %4615 = vmatpush1.bf16.msra.mxu0 %v4612
      %4616 = vmatprep.subr.bf16.mxu0 0
      %4617 = vmatpush1.bf16.msra.mxu0 0
      %4618 = vmatprep.subr.bf16.mxu0 0
      %4619 = vmatpush1.bf16.msra.mxu0 0
      %4620 = vmatprep.subr.bf16.mxu0 0
      %4621 = vmatpush1.bf16.msra.mxu0 0
      %4622 = vmatprep.subr.bf16.mxu0 0
      %4623 = vmatpush1.bf16.msra.mxu0 0
      %4624 = vmatprep.subr.bf16.mxu0 0
      %4625 = vmatpush1.bf16.msra.mxu0 0
      %4626 = vmatprep.subr.bf16.mxu0 0
      %4627 = vmatpush1.bf16.msra.mxu0 0
      %4628 = vmatprep.subr.bf16.mxu0 0
      %4629 = vmatpush1.bf16.msra.mxu0 0
      %4630 = vmatprep.subr.bf16.mxu0 0
      %4631 = vmatpush1.bf16.msra.mxu0 0
      %4632 = vmatprep.subr.bf16.mxu0 0
      %4633 = vmatpush1.bf16.msra.mxu0 0
      %4634 = vmatprep.subr.bf16.mxu0 0
      %4635 = vmatpush1.bf16.msra.mxu0 0
      %4636 = vmatprep.subr.bf16.mxu0 0
      %4637 = vmatpush1.bf16.msra.mxu0 0
      %4638 = vmatprep.subr.bf16.mxu0 0
      %4639 = vmatpush1.bf16.msra.mxu0 0
      %4640 = vmatprep.subr.bf16.mxu0 0
      %4641 = vmatpush1.bf16.msra.mxu0 0
      %4642 = vmatprep.subr.bf16.mxu0 0
      %4643 = vmatpush1.bf16.msra.mxu0 0
      %4644 = vmatprep.subr.bf16.mxu0 0
      %4645 = vmatpush1.bf16.msra.mxu0 0
      %4646 = vmatprep.mubr.bf16.mxu0 0
      %4647 = vmatmul.mubr.bf16.gmra.mrb[0].mxu0 %v4564
      %v4648 = vpop.f32.mrb[0].mxu0
      %v4649 = vadd.f32 %v4437, %v4648
      %v4650 = vpop.f32.mrb[0].mxu0
      %v4651 = vpop.f32.mrb[0].mxu0
      %v4652 = vadd.f32 %v4440, %v4651
      %v4653 = vpop.f32.mrb[0].mxu0
      %4654 = vmatprep.mubr.bf16.mxu0 0
      %4655 = vmatmul.mubr.bf16.gmra.mrb[0].mxu0 %v4567
      %v4656 = vpop.f32.mrb[0].mxu0
      %v4657 = vadd.f32 %v4445, %v4656
      %v4658 = vpop.f32.mrb[0].mxu0
      %v4659 = vpop.f32.mrb[0].mxu0
      %v4660 = vadd.f32 %v4448, %v4659
      %v4661 = vpop.f32.mrb[0].mxu0
      %4662 = vmatprep.mubr.bf16.mxu0 0
      %4663 = vmatmul.mubr.bf16.gmra.mrb[0].mxu0 %v4570
      %v4664 = vpop.f32.mrb[0].mxu0
      %v4665 = vadd.f32 %v4453, %v4664
      %v4666 = vpop.f32.mrb[0].mxu0
      %v4667 = vpop.f32.mrb[0].mxu0
      %v4668 = vadd.f32 %v4456, %v4667
      %v4669 = vpop.f32.mrb[0].mxu0
      %4670 = vmatprep.mubr.bf16.mxu0 0
      %4671 = vmatmul.mubr.bf16.gmra.mrb[0].mxu0 %v4573
      %v4672 = vpop.f32.mrb[0].mxu0
      %v4673 = vadd.f32 %v4461, %v4672
      %v4674 = vpop.f32.mrb[0].mxu0
      %v4675 = vpop.f32.mrb[0].mxu0
      %v4676 = vadd.f32 %v4464, %v4675
      %v4677 = vpop.f32.mrb[0].mxu0
      %4678 = vmatprep.mubr.bf16.mxu0 0
      %4679 = vmatmul.mubr.bf16.gmra.mrb[0].mxu0 %v4576
      %v4680 = vpop.f32.mrb[0].mxu0
      %v4681 = vadd.f32 %v4469, %v4680
      %v4682 = vpop.f32.mrb[0].mxu0
      %v4683 = vpop.f32.mrb[0].mxu0
      %v4684 = vadd.f32 %v4472, %v4683
      %v4685 = vpop.f32.mrb[0].mxu0
      %4686 = vmatprep.mubr.bf16.mxu0 0
      %4687 = vmatmul.mubr.bf16.gmra.mrb[0].mxu0 %v4579
      %v4688 = vpop.f32.mrb[0].mxu0
      %v4689 = vadd.f32 %v4477, %v4688
      %v4690 = vpop.f32.mrb[0].mxu0
      %v4691 = vpop.f32.mrb[0].mxu0
      %v4692 = vadd.f32 %v4480, %v4691
      %v4693 = vpop.f32.mrb[0].mxu0
      %4694 = vmatprep.mubr.bf16.mxu0 0
      %4695 = vmatmul.mubr.bf16.gmra.mrb[0].mxu0 %v4582
      %v4696 = vpop.f32.mrb[0].mxu0
      %v4697 = vadd.f32 %v4485, %v4696
      %v4698 = vpop.f32.mrb[0].mxu0
      %v4699 = vpop.f32.mrb[0].mxu0
      %v4700 = vadd.f32 %v4488, %v4699
      %v4701 = vpop.f32.mrb[0].mxu0
      %4702 = vmatprep.mubr.bf16.mxu0 0
      %4703 = vmatmul.mubr.bf16.gmra.mrb[0].mxu0 %v4585
      %v4704 = vpop.f32.mrb[0].mxu0
      %v4705 = vadd.f32 %v4493, %v4704
      %v4706 = vpop.f32.mrb[0].mxu0
      %v4707 = vpop.f32.mrb[0].mxu0
      %v4708 = vadd.f32 %v4496, %v4707
      %v4709 = vpop.f32.mrb[0].mxu0
      %4710 = vmatprep.mubr.bf16.mxu0 0
      %4711 = vmatmul.mubr.bf16.gmra.mrb[0].mxu0 %v4588
      %v4712 = vpop.f32.mrb[0].mxu0
      %v4713 = vadd.f32 %v4501, %v4712
      %v4714 = vpop.f32.mrb[0].mxu0
      %v4715 = vpop.f32.mrb[0].mxu0
      %v4716 = vadd.f32 %v4504, %v4715
      %v4717 = vpop.f32.mrb[0].mxu0
      %4718 = vmatprep.mubr.bf16.mxu0 0
      %4719 = vmatmul.mubr.bf16.gmra.mrb[0].mxu0 %v4591
      %v4720 = vpop.f32.mrb[0].mxu0
      %v4721 = vadd.f32 %v4509, %v4720
      %v4722 = vpop.f32.mrb[0].mxu0
      %v4723 = vpop.f32.mrb[0].mxu0
      %v4724 = vadd.f32 %v4512, %v4723
      %v4725 = vpop.f32.mrb[0].mxu0
      %4726 = vmatprep.mubr.bf16.mxu0 0
      %4727 = vmatmul.mubr.bf16.gmra.mrb[0].mxu0 %v4594
      %v4728 = vpop.f32.mrb[0].mxu0
      %v4729 = vadd.f32 %v4517, %v4728
      %v4730 = vpop.f32.mrb[0].mxu0
      %v4731 = vpop.f32.mrb[0].mxu0
      %v4732 = vadd.f32 %v4520, %v4731
      %v4733 = vpop.f32.mrb[0].mxu0
      %4734 = vmatprep.mubr.bf16.mxu0 0
      %4735 = vmatmul.mubr.bf16.gmra.mrb[0].mxu0 %v4597
      %v4736 = vpop.f32.mrb[0].mxu0
      %v4737 = vadd.f32 %v4525, %v4736
      %v4738 = vpop.f32.mrb[0].mxu0
      %v4739 = vpop.f32.mrb[0].mxu0
      %v4740 = vadd.f32 %v4528, %v4739
      %v4741 = vpop.f32.mrb[0].mxu0
      %4742 = vmatprep.mubr.bf16.mxu0 0
      %4743 = vmatmul.mubr.bf16.gmra.mrb[0].mxu0 %v4600
      %v4744 = vpop.f32.mrb[0].mxu0
      %v4745 = vadd.f32 %v4533, %v4744
      %v4746 = vpop.f32.mrb[0].mxu0
      %v4747 = vpop.f32.mrb[0].mxu0
      %v4748 = vadd.f32 %v4536, %v4747
      %v4749 = vpop.f32.mrb[0].mxu0
      %4750 = vmatprep.mubr.bf16.mxu0 0
      %4751 = vmatmul.mubr.bf16.gmra.mrb[0].mxu0 %v4603
      %v4752 = vpop.f32.mrb[0].mxu0
      %v4753 = vadd.f32 %v4541, %v4752
      %v4754 = vpop.f32.mrb[0].mxu0
      %v4755 = vpop.f32.mrb[0].mxu0
      %v4756 = vadd.f32 %v4544, %v4755
      %v4757 = vpop.f32.mrb[0].mxu0
      %4758 = vmatprep.mubr.bf16.mxu0 0
      %4759 = vmatmul.mubr.bf16.gmra.mrb[0].mxu0 %v4606
      %v4760 = vpop.f32.mrb[0].mxu0
      %v4761 = vadd.f32 %v4549, %v4760
      %v4762 = vpop.f32.mrb[0].mxu0
      %v4763 = vpop.f32.mrb[0].mxu0
      %v4764 = vadd.f32 %v4552, %v4763
      %v4765 = vpop.f32.mrb[0].mxu0
      %4766 = vmatprep.mubr.bf16.mxu0 0
      %4767 = vmatmul.mubr.bf16.gmra.mrb[0].mxu0 %v4609
      %v4768 = vpop.f32.mrb[0].mxu0
      %v4769 = vadd.f32 %v4557, %v4768
      %v4770 = vpop.f32.mrb[0].mxu0
      %v4771 = vpop.f32.mrb[0].mxu0
      %v4772 = vadd.f32 %v4560, %v4771
      %v4773 = vpop.f32.mrb[0].mxu0
      %4774 = vdwg.mxu0
      %v4775 = vld [vmem:[#allocation3 + $0x2] sm:$0xff]
      %v4776 = vld [vmem:[#allocation3 + $0xa] sm:$0xff]
      %v4777 = vld [vmem:[#allocation3 + $0x1a] sm:$0xff]
      %v4778 = vld [vmem:[#allocation3 + $0x22] sm:$0xff]
      %v4779 = vld [vmem:[#allocation3 + $0x32] sm:$0xff]
      %v4780 = vld [vmem:[#allocation3 + $0x3a] sm:$0xff]
      %v4781 = vld [vmem:[#allocation3 + $0x4a] sm:$0xff]
      %v4782 = vld [vmem:[#allocation3 + $0x52] sm:$0xff]
      %v4783 = vld [vmem:[#allocation3 + $0x62] sm:$0xff]
      %v4784 = vld [vmem:[#allocation3 + $0x6a] sm:$0xff]
      %v4785 = vld [vmem:[#allocation3 + $0x7a] sm:$0xff]
      %v4786 = vld [vmem:[#allocation3 + $0x82] sm:$0xff]
      %v4787 = vld [vmem:[#allocation3 + $0x92] sm:$0xff]
      %v4788 = vld [vmem:[#allocation3 + $0x9a] sm:$0xff]
      %v4789 = vld [vmem:[#allocation3 + $0xaa] sm:$0xff]
      %v4790 = vld [vmem:[#allocation3 + $0xb2] sm:$0xff]
      %v4791 = vld [vmem:[#allocation3 + $0xc2] sm:$0xff]
      %v4792 = vld [vmem:[#allocation3 + $0xca] sm:$0xff]
      %v4793 = vld [vmem:[#allocation3 + $0xda] sm:$0xff]
      %v4794 = vld [vmem:[#allocation3 + $0xe2] sm:$0xff]
      %v4795 = vld [vmem:[#allocation3 + $0xf2] sm:$0xff]
      %v4796 = vld [vmem:[#allocation3 + $0xfa] sm:$0xff]
      %v4797 = vld [vmem:[#allocation3 + $0x10a] sm:$0xff]
      %v4798 = vld [vmem:[#allocation3 + $0x112] sm:$0xff]
      %v4799 = vld [vmem:[#allocation3 + $0x122] sm:$0xff]
      %v4800 = vld [vmem:[#allocation3 + $0x12a] sm:$0xff]
      %v4801 = vld [vmem:[#allocation3 + $0x13a] sm:$0xff]
      %v4802 = vld [vmem:[#allocation3 + $0x142] sm:$0xff]
      %v4803 = vld [vmem:[#allocation3 + $0x152] sm:$0xff]
      %v4804 = vld [vmem:[#allocation3 + $0x15a] sm:$0xff]
      %v4805 = vld [vmem:[#allocation3 + $0x16a] sm:$0xff]
      %v4806 = vld [vmem:[#allocation3 + $0x172] sm:$0xff]
      %v4807 = vpack.c.bf16 %v4776, %v4775
      %v4808 = vpack.c.bf16 %v4778, %v4777
      %v4809 = vpack.c.bf16 %v4780, %v4779
      %v4810 = vpack.c.bf16 %v4782, %v4781
      %v4811 = vpack.c.bf16 %v4784, %v4783
      %v4812 = vpack.c.bf16 %v4786, %v4785
      %v4813 = vpack.c.bf16 %v4788, %v4787
      %v4814 = vpack.c.bf16 %v4790, %v4789
      %v4815 = vpack.c.bf16 %v4792, %v4791
      %v4816 = vpack.c.bf16 %v4794, %v4793
      %v4817 = vpack.c.bf16 %v4796, %v4795
      %v4818 = vpack.c.bf16 %v4798, %v4797
      %v4819 = vpack.c.bf16 %v4800, %v4799
      %v4820 = vpack.c.bf16 %v4802, %v4801
      %v4821 = vpack.c.bf16 %v4804, %v4803
      %v4822 = vpack.c.bf16 %v4806, %v4805
      %s4823 = scalar_lea.vmem %s7, 16
      %v4824 = vld [vmem:[%s4823] sm:$0xff]
      %v4825 = vpack.c.bf16 %v4824, %v4824
      %v4827 = vsel %vm3650, %v4807, 0
      %v4830 = vsel %vm3650, %v4808, 0
      %v4833 = vsel %vm3650, %v4809, 0
      %v4836 = vsel %vm3650, %v4810, 0
      %v4839 = vsel %vm3650, %v4811, 0
      %v4842 = vsel %vm3650, %v4812, 0
      %v4845 = vsel %vm3650, %v4813, 0
      %v4848 = vsel %vm3650, %v4814, 0
      %v4851 = vsel %vm3650, %v4815, 0
      %v4854 = vsel %vm3650, %v4816, 0
      %v4857 = vsel %vm3650, %v4817, 0
      %v4860 = vsel %vm3650, %v4818, 0
      %v4863 = vsel %vm3650, %v4819, 0
      %v4866 = vsel %vm3650, %v4820, 0
      %v4869 = vsel %vm3650, %v4821, 0
      %v4872 = vsel %vm3650, %v4822, 0
      %v4875 = vsel %vm3965, %v4825, 0
      %4877 = vmatprep.subr.bf16.mxu0 0
      %4878 = vmatpush1.bf16.msra.mxu0 %v4875
      %4879 = vmatprep.subr.bf16.mxu0 0
      %4880 = vmatpush1.bf16.msra.mxu0 0
      %4881 = vmatprep.subr.bf16.mxu0 0
      %4882 = vmatpush1.bf16.msra.mxu0 0
      %4883 = vmatprep.subr.bf16.mxu0 0
      %4884 = vmatpush1.bf16.msra.mxu0 0
      %4885 = vmatprep.subr.bf16.mxu0 0
      %4886 = vmatpush1.bf16.msra.mxu0 0
      %4887 = vmatprep.subr.bf16.mxu0 0
      %4888 = vmatpush1.bf16.msra.mxu0 0
      %4889 = vmatprep.subr.bf16.mxu0 0
      %4890 = vmatpush1.bf16.msra.mxu0 0
      %4891 = vmatprep.subr.bf16.mxu0 0
      %4892 = vmatpush1.bf16.msra.mxu0 0
      %4893 = vmatprep.subr.bf16.mxu0 0
      %4894 = vmatpush1.bf16.msra.mxu0 0
      %4895 = vmatprep.subr.bf16.mxu0 0
      %4896 = vmatpush1.bf16.msra.mxu0 0
      %4897 = vmatprep.subr.bf16.mxu0 0
      %4898 = vmatpush1.bf16.msra.mxu0 0
      %4899 = vmatprep.subr.bf16.mxu0 0
      %4900 = vmatpush1.bf16.msra.mxu0 0
      %4901 = vmatprep.subr.bf16.mxu0 0
      %4902 = vmatpush1.bf16.msra.mxu0 0
      %4903 = vmatprep.subr.bf16.mxu0 0
      %4904 = vmatpush1.bf16.msra.mxu0 0
      %4905 = vmatprep.subr.bf16.mxu0 0
      %4906 = vmatpush1.bf16.msra.mxu0 0
      %4907 = vmatprep.subr.bf16.mxu0 0
      %4908 = vmatpush1.bf16.msra.mxu0 0
      %4909 = vmatprep.mubr.bf16.mxu0 0
      %4910 = vmatmul.mubr.bf16.gmra.mrb[0].mxu0 %v4827
      %v4911 = vpop.f32.mrb[0].mxu0
      %v4912 = vadd.f32 0.0, %v4911
      %v4913 = vpop.f32.mrb[0].mxu0
      %v4914 = vpop.f32.mrb[0].mxu0
      %v4915 = vadd.f32 0.0, %v4914
      %v4916 = vpop.f32.mrb[0].mxu0
      %4917 = vmatprep.mubr.bf16.mxu0 0
      %4918 = vmatmul.mubr.bf16.gmra.mrb[0].mxu0 %v4830
      %v4919 = vpop.f32.mrb[0].mxu0
      %v4920 = vadd.f32 0.0, %v4919
      %v4921 = vpop.f32.mrb[0].mxu0
      %v4922 = vpop.f32.mrb[0].mxu0
      %v4923 = vadd.f32 0.0, %v4922
      %v4924 = vpop.f32.mrb[0].mxu0
      %4925 = vmatprep.mubr.bf16.mxu0 0
      %4926 = vmatmul.mubr.bf16.gmra.mrb[0].mxu0 %v4833
      %v4927 = vpop.f32.mrb[0].mxu0
      %v4928 = vadd.f32 0.0, %v4927
      %v4929 = vpop.f32.mrb[0].mxu0
      %v4930 = vpop.f32.mrb[0].mxu0
      %v4931 = vadd.f32 0.0, %v4930
      %v4932 = vpop.f32.mrb[0].mxu0
      %4933 = vmatprep.mubr.bf16.mxu0 0
      %4934 = vmatmul.mubr.bf16.gmra.mrb[0].mxu0 %v4836
      %v4935 = vpop.f32.mrb[0].mxu0
      %v4936 = vadd.f32 0.0, %v4935
      %v4937 = vpop.f32.mrb[0].mxu0
      %v4938 = vpop.f32.mrb[0].mxu0
      %v4939 = vadd.f32 0.0, %v4938
      %v4940 = vpop.f32.mrb[0].mxu0
      %4941 = vmatprep.mubr.bf16.mxu0 0
      %4942 = vmatmul.mubr.bf16.gmra.mrb[0].mxu0 %v4839
      %v4943 = vpop.f32.mrb[0].mxu0
      %v4944 = vadd.f32 0.0, %v4943
      %v4945 = vpop.f32.mrb[0].mxu0
      %v4946 = vpop.f32.mrb[0].mxu0
      %v4947 = vadd.f32 0.0, %v4946
      %v4948 = vpop.f32.mrb[0].mxu0
      %4949 = vmatprep.mubr.bf16.mxu0 0
      %4950 = vmatmul.mubr.bf16.gmra.mrb[0].mxu0 %v4842
      %v4951 = vpop.f32.mrb[0].mxu0
      %v4952 = vadd.f32 0.0, %v4951
      %v4953 = vpop.f32.mrb[0].mxu0
      %v4954 = vpop.f32.mrb[0].mxu0
      %v4955 = vadd.f32 0.0, %v4954
      %v4956 = vpop.f32.mrb[0].mxu0
      %4957 = vmatprep.mubr.bf16.mxu0 0
      %4958 = vmatmul.mubr.bf16.gmra.mrb[0].mxu0 %v4845
      %v4959 = vpop.f32.mrb[0].mxu0
      %v4960 = vadd.f32 0.0, %v4959
      %v4961 = vpop.f32.mrb[0].mxu0
      %v4962 = vpop.f32.mrb[0].mxu0
      %v4963 = vadd.f32 0.0, %v4962
      %v4964 = vpop.f32.mrb[0].mxu0
      %4965 = vmatprep.mubr.bf16.mxu0 0
      %4966 = vmatmul.mubr.bf16.gmra.mrb[0].mxu0 %v4848
      %v4967 = vpop.f32.mrb[0].mxu0
      %v4968 = vadd.f32 0.0, %v4967
      %v4969 = vpop.f32.mrb[0].mxu0
      %v4970 = vpop.f32.mrb[0].mxu0
      %v4971 = vadd.f32 0.0, %v4970
      %v4972 = vpop.f32.mrb[0].mxu0
      %4973 = vmatprep.mubr.bf16.mxu0 0
      %4974 = vmatmul.mubr.bf16.gmra.mrb[0].mxu0 %v4851
      %v4975 = vpop.f32.mrb[0].mxu0
      %v4976 = vadd.f32 0.0, %v4975
      %v4977 = vpop.f32.mrb[0].mxu0
      %v4978 = vpop.f32.mrb[0].mxu0
      %v4979 = vadd.f32 0.0, %v4978
      %v4980 = vpop.f32.mrb[0].mxu0
      %4981 = vmatprep.mubr.bf16.mxu0 0
      %4982 = vmatmul.mubr.bf16.gmra.mrb[0].mxu0 %v4854
      %v4983 = vpop.f32.mrb[0].mxu0
      %v4984 = vadd.f32 0.0, %v4983
      %v4985 = vpop.f32.mrb[0].mxu0
      %v4986 = vpop.f32.mrb[0].mxu0
      %v4987 = vadd.f32 0.0, %v4986
      %v4988 = vpop.f32.mrb[0].mxu0
      %4989 = vmatprep.mubr.bf16.mxu0 0
      %4990 = vmatmul.mubr.bf16.gmra.mrb[0].mxu0 %v4857
      %v4991 = vpop.f32.mrb[0].mxu0
      %v4992 = vadd.f32 0.0, %v4991
      %v4993 = vpop.f32.mrb[0].mxu0
      %v4994 = vpop.f32.mrb[0].mxu0
      %v4995 = vadd.f32 0.0, %v4994
      %v4996 = vpop.f32.mrb[0].mxu0
      %4997 = vmatprep.mubr.bf16.mxu0 0
      %4998 = vmatmul.mubr.bf16.gmra.mrb[0].mxu0 %v4860
      %v4999 = vpop.f32.mrb[0].mxu0
      %v5000 = vadd.f32 0.0, %v4999
      %v5001 = vpop.f32.mrb[0].mxu0
      %v5002 = vpop.f32.mrb[0].mxu0
      %v5003 = vadd.f32 0.0, %v5002
      %v5004 = vpop.f32.mrb[0].mxu0
      %5005 = vmatprep.mubr.bf16.mxu0 0
      %5006 = vmatmul.mubr.bf16.gmra.mrb[0].mxu0 %v4863
      %v5007 = vpop.f32.mrb[0].mxu0
      %v5008 = vadd.f32 0.0, %v5007
      %v5009 = vpop.f32.mrb[0].mxu0
      %v5010 = vpop.f32.mrb[0].mxu0
      %v5011 = vadd.f32 0.0, %v5010
      %v5012 = vpop.f32.mrb[0].mxu0
      %5013 = vmatprep.mubr.bf16.mxu0 0
      %5014 = vmatmul.mubr.bf16.gmra.mrb[0].mxu0 %v4866
      %v5015 = vpop.f32.mrb[0].mxu0
      %v5016 = vadd.f32 0.0, %v5015
      %v5017 = vpop.f32.mrb[0].mxu0
      %v5018 = vpop.f32.mrb[0].mxu0
      %v5019 = vadd.f32 0.0, %v5018
      %v5020 = vpop.f32.mrb[0].mxu0
      %5021 = vmatprep.mubr.bf16.mxu0 0
      %5022 = vmatmul.mubr.bf16.gmra.mrb[0].mxu0 %v4869
      %v5023 = vpop.f32.mrb[0].mxu0
      %v5024 = vadd.f32 0.0, %v5023
      %v5025 = vpop.f32.mrb[0].mxu0
      %v5026 = vpop.f32.mrb[0].mxu0
      %v5027 = vadd.f32 0.0, %v5026
      %v5028 = vpop.f32.mrb[0].mxu0
      %5029 = vmatprep.mubr.bf16.mxu0 0
      %5030 = vmatmul.mubr.bf16.gmra.mrb[0].mxu0 %v4872
      %v5031 = vpop.f32.mrb[0].mxu0
      %v5032 = vadd.f32 0.0, %v5031
      %v5033 = vpop.f32.mrb[0].mxu0
      %v5034 = vpop.f32.mrb[0].mxu0
      %v5035 = vadd.f32 0.0, %v5034
      %v5036 = vpop.f32.mrb[0].mxu0
      %5037 = vdwg.mxu0
      %v5038 = vadd.f32 %v4649, %v4912
      %v5039 = vadd.f32 %v4652, %v4915
      %v5040 = vadd.f32 %v4657, %v4920
      %v5041 = vadd.f32 %v4660, %v4923
      %v5042 = vadd.f32 %v4665, %v4928
      %v5043 = vadd.f32 %v4668, %v4931
      %v5044 = vadd.f32 %v4673, %v4936
      %v5045 = vadd.f32 %v4676, %v4939
      %v5046 = vadd.f32 %v4681, %v4944
      %v5047 = vadd.f32 %v4684, %v4947
      %v5048 = vadd.f32 %v4689, %v4952
      %v5049 = vadd.f32 %v4692, %v4955
      %v5050 = vadd.f32 %v4697, %v4960
      %v5051 = vadd.f32 %v4700, %v4963
      %v5052 = vadd.f32 %v4705, %v4968
      %v5053 = vadd.f32 %v4708, %v4971
      %v5054 = vadd.f32 %v4713, %v4976
      %v5055 = vadd.f32 %v4716, %v4979
      %v5056 = vadd.f32 %v4721, %v4984
      %v5057 = vadd.f32 %v4724, %v4987
      %v5058 = vadd.f32 %v4729, %v4992
      %v5059 = vadd.f32 %v4732, %v4995
      %v5060 = vadd.f32 %v4737, %v5000
      %v5061 = vadd.f32 %v4740, %v5003
      %v5062 = vadd.f32 %v4745, %v5008
      %v5063 = vadd.f32 %v4748, %v5011
      %v5064 = vadd.f32 %v4753, %v5016
      %v5065 = vadd.f32 %v4756, %v5019
      %v5066 = vadd.f32 %v4761, %v5024
      %v5067 = vadd.f32 %v4764, %v5027
      %v5068 = vadd.f32 %v4769, %v5032
      %v5069 = vadd.f32 %v4772, %v5035
      %v5070 = vld [vmem:[%s4217] sm:$0xff]
      %v5071 = vld [vmem:[%s4217 + $0x8] sm:$0xff]
      %v5072 = vld [vmem:[%s4217 + $0x18] sm:$0xff]
      %v5073 = vld [vmem:[%s4217 + $0x20] sm:$0xff]
      %v5074 = vld [vmem:[%s4217 + $0x30] sm:$0xff]
      %v5075 = vld [vmem:[%s4217 + $0x38] sm:$0xff]
      %v5076 = vld [vmem:[%s4217 + $0x48] sm:$0xff]
      %v5077 = vld [vmem:[%s4217 + $0x50] sm:$0xff]
      %v5078 = vld [vmem:[%s4217 + $0x60] sm:$0xff]
      %v5079 = vld [vmem:[%s4217 + $0x68] sm:$0xff]
      %v5080 = vld [vmem:[%s4217 + $0x78] sm:$0xff]
      %v5081 = vld [vmem:[%s4217 + $0x80] sm:$0xff]
      %v5082 = vld [vmem:[%s4217 + $0x90] sm:$0xff]
      %v5083 = vld [vmem:[%s4217 + $0x98] sm:$0xff]
      %v5084 = vld [vmem:[%s4217 + $0xa8] sm:$0xff]
      %v5085 = vld [vmem:[%s4217 + $0xb0] sm:$0xff]
      %v5086 = vld [vmem:[%s4217 + $0xc0] sm:$0xff]
      %v5087 = vld [vmem:[%s4217 + $0xc8] sm:$0xff]
      %v5088 = vld [vmem:[%s4217 + $0xd8] sm:$0xff]
      %v5089 = vld [vmem:[%s4217 + $0xe0] sm:$0xff]
      %v5090 = vld [vmem:[%s4217 + $0xf0] sm:$0xff]
      %v5091 = vld [vmem:[%s4217 + $0xf8] sm:$0xff]
      %v5092 = vld [vmem:[%s4217 + $0x108] sm:$0xff]
      %v5093 = vld [vmem:[%s4217 + $0x110] sm:$0xff]
      %v5094 = vld [vmem:[%s4217 + $0x120] sm:$0xff]
      %v5095 = vld [vmem:[%s4217 + $0x128] sm:$0xff]
      %v5096 = vld [vmem:[%s4217 + $0x138] sm:$0xff]
      %v5097 = vld [vmem:[%s4217 + $0x140] sm:$0xff]
      %v5098 = vld [vmem:[%s4217 + $0x150] sm:$0xff]
      %v5099 = vld [vmem:[%s4217 + $0x158] sm:$0xff]
      %v5100 = vld [vmem:[%s4217 + $0x168] sm:$0xff]
      %v5101 = vld [vmem:[%s4217 + $0x170] sm:$0xff]
      %v5102 = vpack.c.bf16 %v5071, %v5070
      %v5103 = vpack.c.bf16 %v5073, %v5072
      %v5104 = vpack.c.bf16 %v5075, %v5074
      %v5105 = vpack.c.bf16 %v5077, %v5076
      %v5106 = vpack.c.bf16 %v5079, %v5078
      %v5107 = vpack.c.bf16 %v5081, %v5080
      %v5108 = vpack.c.bf16 %v5083, %v5082
      %v5109 = vpack.c.bf16 %v5085, %v5084
      %v5110 = vpack.c.bf16 %v5087, %v5086
      %v5111 = vpack.c.bf16 %v5089, %v5088
      %v5112 = vpack.c.bf16 %v5091, %v5090
      %v5113 = vpack.c.bf16 %v5093, %v5092
      %v5114 = vpack.c.bf16 %v5095, %v5094
      %v5115 = vpack.c.bf16 %v5097, %v5096
      %v5116 = vpack.c.bf16 %v5099, %v5098
      %v5117 = vpack.c.bf16 %v5101, %v5100
      %s5118 = scalar_lea.vmem %s7, 24
      %v5119 = vld [vmem:[%s5118] sm:$0xff]
      %v5120 = vpack.c.bf16 %v5119, %v5119
      %v5122 = vsel %vm3650, %v5102, 0
      %v5125 = vsel %vm3650, %v5103, 0
      %v5128 = vsel %vm3650, %v5104, 0
      %v5131 = vsel %vm3650, %v5105, 0
      %v5134 = vsel %vm3650, %v5106, 0
      %v5137 = vsel %vm3650, %v5107, 0
      %v5140 = vsel %vm3650, %v5108, 0
      %v5143 = vsel %vm3650, %v5109, 0
      %v5146 = vsel %vm3650, %v5110, 0
      %v5149 = vsel %vm3650, %v5111, 0
      %v5152 = vsel %vm3650, %v5112, 0
      %v5155 = vsel %vm3650, %v5113, 0
      %v5158 = vsel %vm3650, %v5114, 0
      %v5161 = vsel %vm3650, %v5115, 0
      %v5164 = vsel %vm3650, %v5116, 0
      %v5167 = vsel %vm3650, %v5117, 0
      %v5170 = vsel %vm3965, %v5120, 0
      %5172 = vmatprep.subr.bf16.mxu0 0
      %5173 = vmatpush1.bf16.msra.mxu0 %v5170
      %5174 = vmatprep.subr.bf16.mxu0 0
      %5175 = vmatpush1.bf16.msra.mxu0 0
      %5176 = vmatprep.subr.bf16.mxu0 0
      %5177 = vmatpush1.bf16.msra.mxu0 0
      %5178 = vmatprep.subr.bf16.mxu0 0
      %5179 = vmatpush1.bf16.msra.mxu0 0
      %5180 = vmatprep.subr.bf16.mxu0 0
      %5181 = vmatpush1.bf16.msra.mxu0 0
      %5182 = vmatprep.subr.bf16.mxu0 0
      %5183 = vmatpush1.bf16.msra.mxu0 0
      %5184 = vmatprep.subr.bf16.mxu0 0
      %5185 = vmatpush1.bf16.msra.mxu0 0
      %5186 = vmatprep.subr.bf16.mxu0 0
      %5187 = vmatpush1.bf16.msra.mxu0 0
      %5188 = vmatprep.subr.bf16.mxu0 0
      %5189 = vmatpush1.bf16.msra.mxu0 0
      %5190 = vmatprep.subr.bf16.mxu0 0
      %5191 = vmatpush1.bf16.msra.mxu0 0
      %5192 = vmatprep.subr.bf16.mxu0 0
      %5193 = vmatpush1.bf16.msra.mxu0 0
      %5194 = vmatprep.subr.bf16.mxu0 0
      %5195 = vmatpush1.bf16.msra.mxu0 0
      %5196 = vmatprep.subr.bf16.mxu0 0
      %5197 = vmatpush1.bf16.msra.mxu0 0
      %5198 = vmatprep.subr.bf16.mxu0 0
      %5199 = vmatpush1.bf16.msra.mxu0 0
      %5200 = vmatprep.subr.bf16.mxu0 0
      %5201 = vmatpush1.bf16.msra.mxu0 0
      %5202 = vmatprep.subr.bf16.mxu0 0
      %5203 = vmatpush1.bf16.msra.mxu0 0
      %5204 = vmatprep.mubr.bf16.mxu0 0
      %5205 = vmatmul.mubr.bf16.gmra.mrb[0].mxu0 %v5122
      %v5206 = vpop.f32.mrb[0].mxu0
      %v5207 = vadd.f32 0.0, %v5206
      %v5208 = vpop.f32.mrb[0].mxu0
      %v5209 = vpop.f32.mrb[0].mxu0
      %v5210 = vadd.f32 0.0, %v5209
      %v5211 = vpop.f32.mrb[0].mxu0
      %5212 = vmatprep.mubr.bf16.mxu0 0
      %5213 = vmatmul.mubr.bf16.gmra.mrb[0].mxu0 %v5125
      %v5214 = vpop.f32.mrb[0].mxu0
      %v5215 = vadd.f32 0.0, %v5214
      %v5216 = vpop.f32.mrb[0].mxu0
      %v5217 = vpop.f32.mrb[0].mxu0
      %v5218 = vadd.f32 0.0, %v5217
      %v5219 = vpop.f32.mrb[0].mxu0
      %5220 = vmatprep.mubr.bf16.mxu0 0
      %5221 = vmatmul.mubr.bf16.gmra.mrb[0].mxu0 %v5128
      %v5222 = vpop.f32.mrb[0].mxu0
      %v5223 = vadd.f32 0.0, %v5222
      %v5224 = vpop.f32.mrb[0].mxu0
      %v5225 = vpop.f32.mrb[0].mxu0
      %v5226 = vadd.f32 0.0, %v5225
      %v5227 = vpop.f32.mrb[0].mxu0
      %5228 = vmatprep.mubr.bf16.mxu0 0
      %5229 = vmatmul.mubr.bf16.gmra.mrb[0].mxu0 %v5131
      %v5230 = vpop.f32.mrb[0].mxu0
      %v5231 = vadd.f32 0.0, %v5230
      %v5232 = vpop.f32.mrb[0].mxu0
      %v5233 = vpop.f32.mrb[0].mxu0
      %v5234 = vadd.f32 0.0, %v5233
      %v5235 = vpop.f32.mrb[0].mxu0
      %5236 = vmatprep.mubr.bf16.mxu0 0
      %5237 = vmatmul.mubr.bf16.gmra.mrb[0].mxu0 %v5134
      %v5238 = vpop.f32.mrb[0].mxu0
      %v5239 = vadd.f32 0.0, %v5238
      %v5240 = vpop.f32.mrb[0].mxu0
      %v5241 = vpop.f32.mrb[0].mxu0
      %v5242 = vadd.f32 0.0, %v5241
      %v5243 = vpop.f32.mrb[0].mxu0
      %5244 = vmatprep.mubr.bf16.mxu0 0
      %5245 = vmatmul.mubr.bf16.gmra.mrb[0].mxu0 %v5137
      %v5246 = vpop.f32.mrb[0].mxu0
      %v5247 = vadd.f32 0.0, %v5246
      %v5248 = vpop.f32.mrb[0].mxu0
      %v5249 = vpop.f32.mrb[0].mxu0
      %v5250 = vadd.f32 0.0, %v5249
      %v5251 = vpop.f32.mrb[0].mxu0
      %5252 = vmatprep.mubr.bf16.mxu0 0
      %5253 = vmatmul.mubr.bf16.gmra.mrb[0].mxu0 %v5140
      %v5254 = vpop.f32.mrb[0].mxu0
      %v5255 = vadd.f32 0.0, %v5254
      %v5256 = vpop.f32.mrb[0].mxu0
      %v5257 = vpop.f32.mrb[0].mxu0
      %v5258 = vadd.f32 0.0, %v5257
      %v5259 = vpop.f32.mrb[0].mxu0
      %5260 = vmatprep.mubr.bf16.mxu0 0
      %5261 = vmatmul.mubr.bf16.gmra.mrb[0].mxu0 %v5143
      %v5262 = vpop.f32.mrb[0].mxu0
      %v5263 = vadd.f32 0.0, %v5262
      %v5264 = vpop.f32.mrb[0].mxu0
      %v5265 = vpop.f32.mrb[0].mxu0
      %v5266 = vadd.f32 0.0, %v5265
      %v5267 = vpop.f32.mrb[0].mxu0
      %5268 = vmatprep.mubr.bf16.mxu0 0
      %5269 = vmatmul.mubr.bf16.gmra.mrb[0].mxu0 %v5146
      %v5270 = vpop.f32.mrb[0].mxu0
      %v5271 = vadd.f32 0.0, %v5270
      %v5272 = vpop.f32.mrb[0].mxu0
      %v5273 = vpop.f32.mrb[0].mxu0
      %v5274 = vadd.f32 0.0, %v5273
      %v5275 = vpop.f32.mrb[0].mxu0
      %5276 = vmatprep.mubr.bf16.mxu0 0
      %5277 = vmatmul.mubr.bf16.gmra.mrb[0].mxu0 %v5149
      %v5278 = vpop.f32.mrb[0].mxu0
      %v5279 = vadd.f32 0.0, %v5278
      %v5280 = vpop.f32.mrb[0].mxu0
      %v5281 = vpop.f32.mrb[0].mxu0
      %v5282 = vadd.f32 0.0, %v5281
      %v5283 = vpop.f32.mrb[0].mxu0
      %5284 = vmatprep.mubr.bf16.mxu0 0
      %5285 = vmatmul.mubr.bf16.gmra.mrb[0].mxu0 %v5152
      %v5286 = vpop.f32.mrb[0].mxu0
      %v5287 = vadd.f32 0.0, %v5286
      %v5288 = vpop.f32.mrb[0].mxu0
      %v5289 = vpop.f32.mrb[0].mxu0
      %v5290 = vadd.f32 0.0, %v5289
      %v5291 = vpop.f32.mrb[0].mxu0
      %5292 = vmatprep.mubr.bf16.mxu0 0
      %5293 = vmatmul.mubr.bf16.gmra.mrb[0].mxu0 %v5155
      %v5294 = vpop.f32.mrb[0].mxu0
      %v5295 = vadd.f32 0.0, %v5294
      %v5296 = vpop.f32.mrb[0].mxu0
      %v5297 = vpop.f32.mrb[0].mxu0
      %v5298 = vadd.f32 0.0, %v5297
      %v5299 = vpop.f32.mrb[0].mxu0
      %5300 = vmatprep.mubr.bf16.mxu0 0
      %5301 = vmatmul.mubr.bf16.gmra.mrb[0].mxu0 %v5158
      %v5302 = vpop.f32.mrb[0].mxu0
      %v5303 = vadd.f32 0.0, %v5302
      %v5304 = vpop.f32.mrb[0].mxu0
      %v5305 = vpop.f32.mrb[0].mxu0
      %v5306 = vadd.f32 0.0, %v5305
      %v5307 = vpop.f32.mrb[0].mxu0
      %5308 = vmatprep.mubr.bf16.mxu0 0
      %5309 = vmatmul.mubr.bf16.gmra.mrb[0].mxu0 %v5161
      %v5310 = vpop.f32.mrb[0].mxu0
      %v5311 = vadd.f32 0.0, %v5310
      %v5312 = vpop.f32.mrb[0].mxu0
      %v5313 = vpop.f32.mrb[0].mxu0
      %v5314 = vadd.f32 0.0, %v5313
      %v5315 = vpop.f32.mrb[0].mxu0
      %5316 = vmatprep.mubr.bf16.mxu0 0
      %5317 = vmatmul.mubr.bf16.gmra.mrb[0].mxu0 %v5164
      %v5318 = vpop.f32.mrb[0].mxu0
      %v5319 = vadd.f32 0.0, %v5318
      %v5320 = vpop.f32.mrb[0].mxu0
      %v5321 = vpop.f32.mrb[0].mxu0
      %v5322 = vadd.f32 0.0, %v5321
      %v5323 = vpop.f32.mrb[0].mxu0
      %5324 = vmatprep.mubr.bf16.mxu0 0
      %5325 = vmatmul.mubr.bf16.gmra.mrb[0].mxu0 %v5167
      %v5326 = vpop.f32.mrb[0].mxu0
      %v5327 = vadd.f32 0.0, %v5326
      %v5328 = vpop.f32.mrb[0].mxu0
      %v5329 = vpop.f32.mrb[0].mxu0
      %v5330 = vadd.f32 0.0, %v5329
      %v5331 = vpop.f32.mrb[0].mxu0
      %5332 = vdwg.mxu0
      %v5333 = vadd.f32 %v5038, %v5207
      %v5334 = vadd.f32 %v5039, %v5210
      %v5335 = vadd.f32 %v5040, %v5215
      %v5336 = vadd.f32 %v5041, %v5218
      %v5337 = vadd.f32 %v5042, %v5223
      %v5338 = vadd.f32 %v5043, %v5226
      %v5339 = vadd.f32 %v5044, %v5231
      %v5340 = vadd.f32 %v5045, %v5234
      %v5341 = vadd.f32 %v5046, %v5239
      %v5342 = vadd.f32 %v5047, %v5242
      %v5343 = vadd.f32 %v5048, %v5247
      %v5344 = vadd.f32 %v5049, %v5250
      %v5345 = vadd.f32 %v5050, %v5255
      %v5346 = vadd.f32 %v5051, %v5258
      %v5347 = vadd.f32 %v5052, %v5263
      %v5348 = vadd.f32 %v5053, %v5266
      %v5349 = vadd.f32 %v5054, %v5271
      %v5350 = vadd.f32 %v5055, %v5274
      %v5351 = vadd.f32 %v5056, %v5279
      %v5352 = vadd.f32 %v5057, %v5282
      %v5353 = vadd.f32 %v5058, %v5287
      %v5354 = vadd.f32 %v5059, %v5290
      %v5355 = vadd.f32 %v5060, %v5295
      %v5356 = vadd.f32 %v5061, %v5298
      %v5357 = vadd.f32 %v5062, %v5303
      %v5358 = vadd.f32 %v5063, %v5306
      %v5359 = vadd.f32 %v5064, %v5311
      %v5360 = vadd.f32 %v5065, %v5314
      %v5361 = vadd.f32 %v5066, %v5319
      %v5362 = vadd.f32 %v5067, %v5322
      %v5363 = vadd.f32 %v5068, %v5327
      %v5364 = vadd.f32 %v5069, %v5330
      %v5365 = vld [vmem:[%s4217 + $0x1] sm:$0xff]
      %v5366 = vld [vmem:[%s4217 + $0x9] sm:$0xff]
      %v5367 = vld [vmem:[%s4217 + $0x19] sm:$0xff]
      %v5368 = vld [vmem:[%s4217 + $0x21] sm:$0xff]
      %v5369 = vld [vmem:[%s4217 + $0x31] sm:$0xff]
      %v5370 = vld [vmem:[%s4217 + $0x39] sm:$0xff]
      %v5371 = vld [vmem:[%s4217 + $0x49] sm:$0xff]
      %v5372 = vld [vmem:[%s4217 + $0x51] sm:$0xff]
      %v5373 = vld [vmem:[%s4217 + $0x61] sm:$0xff]
      %v5374 = vld [vmem:[%s4217 + $0x69] sm:$0xff]
      %v5375 = vld [vmem:[%s4217 + $0x79] sm:$0xff]
      %v5376 = vld [vmem:[%s4217 + $0x81] sm:$0xff]
      %v5377 = vld [vmem:[%s4217 + $0x91] sm:$0xff]
      %v5378 = vld [vmem:[%s4217 + $0x99] sm:$0xff]
      %v5379 = vld [vmem:[%s4217 + $0xa9] sm:$0xff]
      %v5380 = vld [vmem:[%s4217 + $0xb1] sm:$0xff]
      %v5381 = vld [vmem:[%s4217 + $0xc1] sm:$0xff]
      %v5382 = vld [vmem:[%s4217 + $0xc9] sm:$0xff]
      %v5383 = vld [vmem:[%s4217 + $0xd9] sm:$0xff]
      %v5384 = vld [vmem:[%s4217 + $0xe1] sm:$0xff]
      %v5385 = vld [vmem:[%s4217 + $0xf1] sm:$0xff]
      %v5386 = vld [vmem:[%s4217 + $0xf9] sm:$0xff]
      %v5387 = vld [vmem:[%s4217 + $0x109] sm:$0xff]
      %v5388 = vld [vmem:[%s4217 + $0x111] sm:$0xff]
      %v5389 = vld [vmem:[%s4217 + $0x121] sm:$0xff]
      %v5390 = vld [vmem:[%s4217 + $0x129] sm:$0xff]
      %v5391 = vld [vmem:[%s4217 + $0x139] sm:$0xff]
      %v5392 = vld [vmem:[%s4217 + $0x141] sm:$0xff]
      %v5393 = vld [vmem:[%s4217 + $0x151] sm:$0xff]
      %v5394 = vld [vmem:[%s4217 + $0x159] sm:$0xff]
      %v5395 = vld [vmem:[%s4217 + $0x169] sm:$0xff]
      %v5396 = vld [vmem:[%s4217 + $0x171] sm:$0xff]
      %v5397 = vpack.c.bf16 %v5366, %v5365
      %v5398 = vpack.c.bf16 %v5368, %v5367
      %v5399 = vpack.c.bf16 %v5370, %v5369
      %v5400 = vpack.c.bf16 %v5372, %v5371
      %v5401 = vpack.c.bf16 %v5374, %v5373
      %v5402 = vpack.c.bf16 %v5376, %v5375
      %v5403 = vpack.c.bf16 %v5378, %v5377
      %v5404 = vpack.c.bf16 %v5380, %v5379
      %v5405 = vpack.c.bf16 %v5382, %v5381
      %v5406 = vpack.c.bf16 %v5384, %v5383
      %v5407 = vpack.c.bf16 %v5386, %v5385
      %v5408 = vpack.c.bf16 %v5388, %v5387
      %v5409 = vpack.c.bf16 %v5390, %v5389
      %v5410 = vpack.c.bf16 %v5392, %v5391
      %v5411 = vpack.c.bf16 %v5394, %v5393
      %v5412 = vpack.c.bf16 %v5396, %v5395
      %s5413 = scalar_lea.vmem %s7, 32
      %v5414 = vld [vmem:[%s5413] sm:$0xff]
      %v5415 = vpack.c.bf16 %v5414, %v5414
      %v5417 = vsel %vm3650, %v5397, 0
      %v5420 = vsel %vm3650, %v5398, 0
      %v5423 = vsel %vm3650, %v5399, 0
      %v5426 = vsel %vm3650, %v5400, 0
      %v5429 = vsel %vm3650, %v5401, 0
      %v5432 = vsel %vm3650, %v5402, 0
      %v5435 = vsel %vm3650, %v5403, 0
      %v5438 = vsel %vm3650, %v5404, 0
      %v5441 = vsel %vm3650, %v5405, 0
      %v5444 = vsel %vm3650, %v5406, 0
      %v5447 = vsel %vm3650, %v5407, 0
      %v5450 = vsel %vm3650, %v5408, 0
      %v5453 = vsel %vm3650, %v5409, 0
      %v5456 = vsel %vm3650, %v5410, 0
      %v5459 = vsel %vm3650, %v5411, 0
      %v5462 = vsel %vm3650, %v5412, 0
      %v5465 = vsel %vm3965, %v5415, 0
      %5467 = vmatprep.subr.bf16.mxu0 0
      %5468 = vmatpush1.bf16.msra.mxu0 %v5465
      %5469 = vmatprep.subr.bf16.mxu0 0
      %5470 = vmatpush1.bf16.msra.mxu0 0
      %5471 = vmatprep.subr.bf16.mxu0 0
      %5472 = vmatpush1.bf16.msra.mxu0 0
      %5473 = vmatprep.subr.bf16.mxu0 0
      %5474 = vmatpush1.bf16.msra.mxu0 0
      %5475 = vmatprep.subr.bf16.mxu0 0
      %5476 = vmatpush1.bf16.msra.mxu0 0
      %5477 = vmatprep.subr.bf16.mxu0 0
      %5478 = vmatpush1.bf16.msra.mxu0 0
      %5479 = vmatprep.subr.bf16.mxu0 0
      %5480 = vmatpush1.bf16.msra.mxu0 0
      %5481 = vmatprep.subr.bf16.mxu0 0
      %5482 = vmatpush1.bf16.msra.mxu0 0
      %5483 = vmatprep.subr.bf16.mxu0 0
      %5484 = vmatpush1.bf16.msra.mxu0 0
      %5485 = vmatprep.subr.bf16.mxu0 0
      %5486 = vmatpush1.bf16.msra.mxu0 0
      %5487 = vmatprep.subr.bf16.mxu0 0
      %5488 = vmatpush1.bf16.msra.mxu0 0
      %5489 = vmatprep.subr.bf16.mxu0 0
      %5490 = vmatpush1.bf16.msra.mxu0 0
      %5491 = vmatprep.subr.bf16.mxu0 0
      %5492 = vmatpush1.bf16.msra.mxu0 0
      %5493 = vmatprep.subr.bf16.mxu0 0
      %5494 = vmatpush1.bf16.msra.mxu0 0
      %5495 = vmatprep.subr.bf16.mxu0 0
      %5496 = vmatpush1.bf16.msra.mxu0 0
      %5497 = vmatprep.subr.bf16.mxu0 0
      %5498 = vmatpush1.bf16.msra.mxu0 0
      %5499 = vmatprep.mubr.bf16.mxu0 0
      %5500 = vmatmul.mubr.bf16.gmra.mrb[0].mxu0 %v5417
      %v5501 = vpop.f32.mrb[0].mxu0
      %v5502 = vadd.f32 0.0, %v5501
      %v5503 = vpop.f32.mrb[0].mxu0
      %v5504 = vpop.f32.mrb[0].mxu0
      %v5505 = vadd.f32 0.0, %v5504
      %v5506 = vpop.f32.mrb[0].mxu0
      %5507 = vmatprep.mubr.bf16.mxu0 0
      %5508 = vmatmul.mubr.bf16.gmra.mrb[0].mxu0 %v5420
      %v5509 = vpop.f32.mrb[0].mxu0
      %v5510 = vadd.f32 0.0, %v5509
      %v5511 = vpop.f32.mrb[0].mxu0
      %v5512 = vpop.f32.mrb[0].mxu0
      %v5513 = vadd.f32 0.0, %v5512
      %v5514 = vpop.f32.mrb[0].mxu0
      %5515 = vmatprep.mubr.bf16.mxu0 0
      %5516 = vmatmul.mubr.bf16.gmra.mrb[0].mxu0 %v5423
      %v5517 = vpop.f32.mrb[0].mxu0
      %v5518 = vadd.f32 0.0, %v5517
      %v5519 = vpop.f32.mrb[0].mxu0
      %v5520 = vpop.f32.mrb[0].mxu0
      %v5521 = vadd.f32 0.0, %v5520
      %v5522 = vpop.f32.mrb[0].mxu0
      %5523 = vmatprep.mubr.bf16.mxu0 0
      %5524 = vmatmul.mubr.bf16.gmra.mrb[0].mxu0 %v5426
      %v5525 = vpop.f32.mrb[0].mxu0
      %v5526 = vadd.f32 0.0, %v5525
      %v5527 = vpop.f32.mrb[0].mxu0
      %v5528 = vpop.f32.mrb[0].mxu0
      %v5529 = vadd.f32 0.0, %v5528
      %v5530 = vpop.f32.mrb[0].mxu0
      %5531 = vmatprep.mubr.bf16.mxu0 0
      %5532 = vmatmul.mubr.bf16.gmra.mrb[0].mxu0 %v5429
      %v5533 = vpop.f32.mrb[0].mxu0
      %v5534 = vadd.f32 0.0, %v5533
      %v5535 = vpop.f32.mrb[0].mxu0
      %v5536 = vpop.f32.mrb[0].mxu0
      %v5537 = vadd.f32 0.0, %v5536
      %v5538 = vpop.f32.mrb[0].mxu0
      %5539 = vmatprep.mubr.bf16.mxu0 0
      %5540 = vmatmul.mubr.bf16.gmra.mrb[0].mxu0 %v5432
      %v5541 = vpop.f32.mrb[0].mxu0
      %v5542 = vadd.f32 0.0, %v5541
      %v5543 = vpop.f32.mrb[0].mxu0
      %v5544 = vpop.f32.mrb[0].mxu0
      %v5545 = vadd.f32 0.0, %v5544
      %v5546 = vpop.f32.mrb[0].mxu0
      %5547 = vmatprep.mubr.bf16.mxu0 0
      %5548 = vmatmul.mubr.bf16.gmra.mrb[0].mxu0 %v5435
      %v5549 = vpop.f32.mrb[0].mxu0
      %v5550 = vadd.f32 0.0, %v5549
      %v5551 = vpop.f32.mrb[0].mxu0
      %v5552 = vpop.f32.mrb[0].mxu0
      %v5553 = vadd.f32 0.0, %v5552
      %v5554 = vpop.f32.mrb[0].mxu0
      %5555 = vmatprep.mubr.bf16.mxu0 0
      %5556 = vmatmul.mubr.bf16.gmra.mrb[0].mxu0 %v5438
      %v5557 = vpop.f32.mrb[0].mxu0
      %v5558 = vadd.f32 0.0, %v5557
      %v5559 = vpop.f32.mrb[0].mxu0
      %v5560 = vpop.f32.mrb[0].mxu0
      %v5561 = vadd.f32 0.0, %v5560
      %v5562 = vpop.f32.mrb[0].mxu0
      %5563 = vmatprep.mubr.bf16.mxu0 0
      %5564 = vmatmul.mubr.bf16.gmra.mrb[0].mxu0 %v5441
      %v5565 = vpop.f32.mrb[0].mxu0
      %v5566 = vadd.f32 0.0, %v5565
      %v5567 = vpop.f32.mrb[0].mxu0
      %v5568 = vpop.f32.mrb[0].mxu0
      %v5569 = vadd.f32 0.0, %v5568
      %v5570 = vpop.f32.mrb[0].mxu0
      %5571 = vmatprep.mubr.bf16.mxu0 0
      %5572 = vmatmul.mubr.bf16.gmra.mrb[0].mxu0 %v5444
      %v5573 = vpop.f32.mrb[0].mxu0
      %v5574 = vadd.f32 0.0, %v5573
      %v5575 = vpop.f32.mrb[0].mxu0
      %v5576 = vpop.f32.mrb[0].mxu0
      %v5577 = vadd.f32 0.0, %v5576
      %v5578 = vpop.f32.mrb[0].mxu0
      %5579 = vmatprep.mubr.bf16.mxu0 0
      %5580 = vmatmul.mubr.bf16.gmra.mrb[0].mxu0 %v5447
      %v5581 = vpop.f32.mrb[0].mxu0
      %v5582 = vadd.f32 0.0, %v5581
      %v5583 = vpop.f32.mrb[0].mxu0
      %v5584 = vpop.f32.mrb[0].mxu0
      %v5585 = vadd.f32 0.0, %v5584
      %v5586 = vpop.f32.mrb[0].mxu0
      %5587 = vmatprep.mubr.bf16.mxu0 0
      %5588 = vmatmul.mubr.bf16.gmra.mrb[0].mxu0 %v5450
      %v5589 = vpop.f32.mrb[0].mxu0
      %v5590 = vadd.f32 0.0, %v5589
      %v5591 = vpop.f32.mrb[0].mxu0
      %v5592 = vpop.f32.mrb[0].mxu0
      %v5593 = vadd.f32 0.0, %v5592
      %v5594 = vpop.f32.mrb[0].mxu0
      %5595 = vmatprep.mubr.bf16.mxu0 0
      %5596 = vmatmul.mubr.bf16.gmra.mrb[0].mxu0 %v5453
      %v5597 = vpop.f32.mrb[0].mxu0
      %v5598 = vadd.f32 0.0, %v5597
      %v5599 = vpop.f32.mrb[0].mxu0
      %v5600 = vpop.f32.mrb[0].mxu0
      %v5601 = vadd.f32 0.0, %v5600
      %v5602 = vpop.f32.mrb[0].mxu0
      %5603 = vmatprep.mubr.bf16.mxu0 0
      %5604 = vmatmul.mubr.bf16.gmra.mrb[0].mxu0 %v5456
      %v5605 = vpop.f32.mrb[0].mxu0
      %v5606 = vadd.f32 0.0, %v5605
      %v5607 = vpop.f32.mrb[0].mxu0
      %v5608 = vpop.f32.mrb[0].mxu0
      %v5609 = vadd.f32 0.0, %v5608
      %v5610 = vpop.f32.mrb[0].mxu0
      %5611 = vmatprep.mubr.bf16.mxu0 0
      %5612 = vmatmul.mubr.bf16.gmra.mrb[0].mxu0 %v5459
      %v5613 = vpop.f32.mrb[0].mxu0
      %v5614 = vadd.f32 0.0, %v5613
      %v5615 = vpop.f32.mrb[0].mxu0
      %v5616 = vpop.f32.mrb[0].mxu0
      %v5617 = vadd.f32 0.0, %v5616
      %v5618 = vpop.f32.mrb[0].mxu0
      %5619 = vmatprep.mubr.bf16.mxu0 0
      %5620 = vmatmul.mubr.bf16.gmra.mrb[0].mxu0 %v5462
      %v5621 = vpop.f32.mrb[0].mxu0
      %v5622 = vadd.f32 0.0, %v5621
      %v5623 = vpop.f32.mrb[0].mxu0
      %v5624 = vpop.f32.mrb[0].mxu0
      %v5625 = vadd.f32 0.0, %v5624
      %v5626 = vpop.f32.mrb[0].mxu0
      %5627 = vdwg.mxu0
      %v5628 = vadd.f32 %v5333, %v5502
      %v5629 = vadd.f32 %v5334, %v5505
      %v5630 = vadd.f32 %v5335, %v5510
      %v5631 = vadd.f32 %v5336, %v5513
      %v5632 = vadd.f32 %v5337, %v5518
      %v5633 = vadd.f32 %v5338, %v5521
      %v5634 = vadd.f32 %v5339, %v5526
      %v5635 = vadd.f32 %v5340, %v5529
      %v5636 = vadd.f32 %v5341, %v5534
      %v5637 = vadd.f32 %v5342, %v5537
      %v5638 = vadd.f32 %v5343, %v5542
      %v5639 = vadd.f32 %v5344, %v5545
      %v5640 = vadd.f32 %v5345, %v5550
      %v5641 = vadd.f32 %v5346, %v5553
      %v5642 = vadd.f32 %v5347, %v5558
      %v5643 = vadd.f32 %v5348, %v5561
      %v5644 = vadd.f32 %v5349, %v5566
      %v5645 = vadd.f32 %v5350, %v5569
      %v5646 = vadd.f32 %v5351, %v5574
      %v5647 = vadd.f32 %v5352, %v5577
      %v5648 = vadd.f32 %v5353, %v5582
      %v5649 = vadd.f32 %v5354, %v5585
      %v5650 = vadd.f32 %v5355, %v5590
      %v5651 = vadd.f32 %v5356, %v5593
      %v5652 = vadd.f32 %v5357, %v5598
      %v5653 = vadd.f32 %v5358, %v5601
      %v5654 = vadd.f32 %v5359, %v5606
      %v5655 = vadd.f32 %v5360, %v5609
      %v5656 = vadd.f32 %v5361, %v5614
      %v5657 = vadd.f32 %v5362, %v5617
      %v5658 = vadd.f32 %v5363, %v5622
      %v5659 = vadd.f32 %v5364, %v5625
      %v5660 = vld [vmem:[%s4217 + $0x2] sm:$0xff]
      %v5661 = vld [vmem:[%s4217 + $0xa] sm:$0xff]
      %v5662 = vld [vmem:[%s4217 + $0x1a] sm:$0xff]
      %v5663 = vld [vmem:[%s4217 + $0x22] sm:$0xff]
      %v5664 = vld [vmem:[%s4217 + $0x32] sm:$0xff]
      %v5665 = vld [vmem:[%s4217 + $0x3a] sm:$0xff]
      %v5666 = vld [vmem:[%s4217 + $0x4a] sm:$0xff]
      %v5667 = vld [vmem:[%s4217 + $0x52] sm:$0xff]
      %v5668 = vld [vmem:[%s4217 + $0x62] sm:$0xff]
      %v5669 = vld [vmem:[%s4217 + $0x6a] sm:$0xff]
      %v5670 = vld [vmem:[%s4217 + $0x7a] sm:$0xff]
      %v5671 = vld [vmem:[%s4217 + $0x82] sm:$0xff]
      %v5672 = vld [vmem:[%s4217 + $0x92] sm:$0xff]
      %v5673 = vld [vmem:[%s4217 + $0x9a] sm:$0xff]
      %v5674 = vld [vmem:[%s4217 + $0xaa] sm:$0xff]
      %v5675 = vld [vmem:[%s4217 + $0xb2] sm:$0xff]
      %v5676 = vld [vmem:[%s4217 + $0xc2] sm:$0xff]
      %v5677 = vld [vmem:[%s4217 + $0xca] sm:$0xff]
      %v5678 = vld [vmem:[%s4217 + $0xda] sm:$0xff]
      %v5679 = vld [vmem:[%s4217 + $0xe2] sm:$0xff]
      %v5680 = vld [vmem:[%s4217 + $0xf2] sm:$0xff]
      %v5681 = vld [vmem:[%s4217 + $0xfa] sm:$0xff]
      %v5682 = vld [vmem:[%s4217 + $0x10a] sm:$0xff]
      %v5683 = vld [vmem:[%s4217 + $0x112] sm:$0xff]
      %v5684 = vld [vmem:[%s4217 + $0x122] sm:$0xff]
      %v5685 = vld [vmem:[%s4217 + $0x12a] sm:$0xff]
      %v5686 = vld [vmem:[%s4217 + $0x13a] sm:$0xff]
      %v5687 = vld [vmem:[%s4217 + $0x142] sm:$0xff]
      %v5688 = vld [vmem:[%s4217 + $0x152] sm:$0xff]
      %v5689 = vld [vmem:[%s4217 + $0x15a] sm:$0xff]
      %v5690 = vld [vmem:[%s4217 + $0x16a] sm:$0xff]
      %v5691 = vld [vmem:[%s4217 + $0x172] sm:$0xff]
      %v5692 = vpack.c.bf16 %v5661, %v5660
      %v5693 = vpack.c.bf16 %v5663, %v5662
      %v5694 = vpack.c.bf16 %v5665, %v5664
      %v5695 = vpack.c.bf16 %v5667, %v5666
      %v5696 = vpack.c.bf16 %v5669, %v5668
      %v5697 = vpack.c.bf16 %v5671, %v5670
      %v5698 = vpack.c.bf16 %v5673, %v5672
      %v5699 = vpack.c.bf16 %v5675, %v5674
      %v5700 = vpack.c.bf16 %v5677, %v5676
      %v5701 = vpack.c.bf16 %v5679, %v5678
      %v5702 = vpack.c.bf16 %v5681, %v5680
      %v5703 = vpack.c.bf16 %v5683, %v5682
      %v5704 = vpack.c.bf16 %v5685, %v5684
      %v5705 = vpack.c.bf16 %v5687, %v5686
      %v5706 = vpack.c.bf16 %v5689, %v5688
      %v5707 = vpack.c.bf16 %v5691, %v5690
      %s5708 = scalar_lea.vmem %s7, 40
      %v5709 = vld [vmem:[%s5708] sm:$0xff]
      %v5710 = vpack.c.bf16 %v5709, %v5709
      %v5712 = vsel %vm3650, %v5692, 0
      %v5715 = vsel %vm3650, %v5693, 0
      %v5718 = vsel %vm3650, %v5694, 0
      %v5721 = vsel %vm3650, %v5695, 0
      %v5724 = vsel %vm3650, %v5696, 0
      %v5727 = vsel %vm3650, %v5697, 0
      %v5730 = vsel %vm3650, %v5698, 0
      %v5733 = vsel %vm3650, %v5699, 0
      %v5736 = vsel %vm3650, %v5700, 0
      %v5739 = vsel %vm3650, %v5701, 0
      %v5742 = vsel %vm3650, %v5702, 0
      %v5745 = vsel %vm3650, %v5703, 0
      %v5748 = vsel %vm3650, %v5704, 0
      %v5751 = vsel %vm3650, %v5705, 0
      %v5754 = vsel %vm3650, %v5706, 0
      %v5757 = vsel %vm3650, %v5707, 0
      %v5760 = vsel %vm3965, %v5710, 0
      %5762 = vmatprep.subr.bf16.mxu0 0
      %5763 = vmatpush1.bf16.msra.mxu0 %v5760
      %5764 = vmatprep.subr.bf16.mxu0 0
      %5765 = vmatpush1.bf16.msra.mxu0 0
      %5766 = vmatprep.subr.bf16.mxu0 0
      %5767 = vmatpush1.bf16.msra.mxu0 0
      %5768 = vmatprep.subr.bf16.mxu0 0
      %5769 = vmatpush1.bf16.msra.mxu0 0
      %5770 = vmatprep.subr.bf16.mxu0 0
      %5771 = vmatpush1.bf16.msra.mxu0 0
      %5772 = vmatprep.subr.bf16.mxu0 0
      %5773 = vmatpush1.bf16.msra.mxu0 0
      %5774 = vmatprep.subr.bf16.mxu0 0
      %5775 = vmatpush1.bf16.msra.mxu0 0
      %5776 = vmatprep.subr.bf16.mxu0 0
      %5777 = vmatpush1.bf16.msra.mxu0 0
      %5778 = vmatprep.subr.bf16.mxu0 0
      %5779 = vmatpush1.bf16.msra.mxu0 0
      %5780 = vmatprep.subr.bf16.mxu0 0
      %5781 = vmatpush1.bf16.msra.mxu0 0
      %5782 = vmatprep.subr.bf16.mxu0 0
      %5783 = vmatpush1.bf16.msra.mxu0 0
      %5784 = vmatprep.subr.bf16.mxu0 0
      %5785 = vmatpush1.bf16.msra.mxu0 0
      %5786 = vmatprep.subr.bf16.mxu0 0
      %5787 = vmatpush1.bf16.msra.mxu0 0
      %5788 = vmatprep.subr.bf16.mxu0 0
      %5789 = vmatpush1.bf16.msra.mxu0 0
      %5790 = vmatprep.subr.bf16.mxu0 0
      %5791 = vmatpush1.bf16.msra.mxu0 0
      %5792 = vmatprep.subr.bf16.mxu0 0
      %5793 = vmatpush1.bf16.msra.mxu0 0
      %5794 = vmatprep.mubr.bf16.mxu0 0
      %5795 = vmatmul.mubr.bf16.gmra.mrb[0].mxu0 %v5712
      %v5796 = vpop.f32.mrb[0].mxu0
      %v5797 = vadd.f32 0.0, %v5796
      %v5798 = vpop.f32.mrb[0].mxu0
      %v5799 = vpop.f32.mrb[0].mxu0
      %v5800 = vadd.f32 0.0, %v5799
      %v5801 = vpop.f32.mrb[0].mxu0
      %5802 = vmatprep.mubr.bf16.mxu0 0
      %5803 = vmatmul.mubr.bf16.gmra.mrb[0].mxu0 %v5715
      %v5804 = vpop.f32.mrb[0].mxu0
      %v5805 = vadd.f32 0.0, %v5804
      %v5806 = vpop.f32.mrb[0].mxu0
      %v5807 = vpop.f32.mrb[0].mxu0
      %v5808 = vadd.f32 0.0, %v5807
      %v5809 = vpop.f32.mrb[0].mxu0
      %5810 = vmatprep.mubr.bf16.mxu0 0
      %5811 = vmatmul.mubr.bf16.gmra.mrb[0].mxu0 %v5718
      %v5812 = vpop.f32.mrb[0].mxu0
      %v5813 = vadd.f32 0.0, %v5812
      %v5814 = vpop.f32.mrb[0].mxu0
      %v5815 = vpop.f32.mrb[0].mxu0
      %v5816 = vadd.f32 0.0, %v5815
      %v5817 = vpop.f32.mrb[0].mxu0
      %5818 = vmatprep.mubr.bf16.mxu0 0
      %5819 = vmatmul.mubr.bf16.gmra.mrb[0].mxu0 %v5721
      %v5820 = vpop.f32.mrb[0].mxu0
      %v5821 = vadd.f32 0.0, %v5820
      %v5822 = vpop.f32.mrb[0].mxu0
      %v5823 = vpop.f32.mrb[0].mxu0
      %v5824 = vadd.f32 0.0, %v5823
      %v5825 = vpop.f32.mrb[0].mxu0
      %5826 = vmatprep.mubr.bf16.mxu0 0
      %5827 = vmatmul.mubr.bf16.gmra.mrb[0].mxu0 %v5724
      %v5828 = vpop.f32.mrb[0].mxu0
      %v5829 = vadd.f32 0.0, %v5828
      %v5830 = vpop.f32.mrb[0].mxu0
      %v5831 = vpop.f32.mrb[0].mxu0
      %v5832 = vadd.f32 0.0, %v5831
      %v5833 = vpop.f32.mrb[0].mxu0
      %5834 = vmatprep.mubr.bf16.mxu0 0
      %5835 = vmatmul.mubr.bf16.gmra.mrb[0].mxu0 %v5727
      %v5836 = vpop.f32.mrb[0].mxu0
      %v5837 = vadd.f32 0.0, %v5836
      %v5838 = vpop.f32.mrb[0].mxu0
      %v5839 = vpop.f32.mrb[0].mxu0
      %v5840 = vadd.f32 0.0, %v5839
      %v5841 = vpop.f32.mrb[0].mxu0
      %5842 = vmatprep.mubr.bf16.mxu0 0
      %5843 = vmatmul.mubr.bf16.gmra.mrb[0].mxu0 %v5730
      %v5844 = vpop.f32.mrb[0].mxu0
      %v5845 = vadd.f32 0.0, %v5844
      %v5846 = vpop.f32.mrb[0].mxu0
      %v5847 = vpop.f32.mrb[0].mxu0
      %v5848 = vadd.f32 0.0, %v5847
      %v5849 = vpop.f32.mrb[0].mxu0
      %5850 = vmatprep.mubr.bf16.mxu0 0
      %5851 = vmatmul.mubr.bf16.gmra.mrb[0].mxu0 %v5733
      %v5852 = vpop.f32.mrb[0].mxu0
      %v5853 = vadd.f32 0.0, %v5852
      %v5854 = vpop.f32.mrb[0].mxu0
      %v5855 = vpop.f32.mrb[0].mxu0
      %v5856 = vadd.f32 0.0, %v5855
      %v5857 = vpop.f32.mrb[0].mxu0
      %5858 = vmatprep.mubr.bf16.mxu0 0
      %5859 = vmatmul.mubr.bf16.gmra.mrb[0].mxu0 %v5736
      %v5860 = vpop.f32.mrb[0].mxu0
      %v5861 = vadd.f32 0.0, %v5860
      %v5862 = vpop.f32.mrb[0].mxu0
      %v5863 = vpop.f32.mrb[0].mxu0
      %v5864 = vadd.f32 0.0, %v5863
      %v5865 = vpop.f32.mrb[0].mxu0
      %5866 = vmatprep.mubr.bf16.mxu0 0
      %5867 = vmatmul.mubr.bf16.gmra.mrb[0].mxu0 %v5739
      %v5868 = vpop.f32.mrb[0].mxu0
      %v5869 = vadd.f32 0.0, %v5868
      %v5870 = vpop.f32.mrb[0].mxu0
      %v5871 = vpop.f32.mrb[0].mxu0
      %v5872 = vadd.f32 0.0, %v5871
      %v5873 = vpop.f32.mrb[0].mxu0
      %5874 = vmatprep.mubr.bf16.mxu0 0
      %5875 = vmatmul.mubr.bf16.gmra.mrb[0].mxu0 %v5742
      %v5876 = vpop.f32.mrb[0].mxu0
      %v5877 = vadd.f32 0.0, %v5876
      %v5878 = vpop.f32.mrb[0].mxu0
      %v5879 = vpop.f32.mrb[0].mxu0
      %v5880 = vadd.f32 0.0, %v5879
      %v5881 = vpop.f32.mrb[0].mxu0
      %5882 = vmatprep.mubr.bf16.mxu0 0
      %5883 = vmatmul.mubr.bf16.gmra.mrb[0].mxu0 %v5745
      %v5884 = vpop.f32.mrb[0].mxu0
      %v5885 = vadd.f32 0.0, %v5884
      %v5886 = vpop.f32.mrb[0].mxu0
      %v5887 = vpop.f32.mrb[0].mxu0
      %v5888 = vadd.f32 0.0, %v5887
      %v5889 = vpop.f32.mrb[0].mxu0
      %5890 = vmatprep.mubr.bf16.mxu0 0
      %5891 = vmatmul.mubr.bf16.gmra.mrb[0].mxu0 %v5748
      %v5892 = vpop.f32.mrb[0].mxu0
      %v5893 = vadd.f32 0.0, %v5892
      %v5894 = vpop.f32.mrb[0].mxu0
      %v5895 = vpop.f32.mrb[0].mxu0
      %v5896 = vadd.f32 0.0, %v5895
      %v5897 = vpop.f32.mrb[0].mxu0
      %5898 = vmatprep.mubr.bf16.mxu0 0
      %5899 = vmatmul.mubr.bf16.gmra.mrb[0].mxu0 %v5751
      %v5900 = vpop.f32.mrb[0].mxu0
      %v5901 = vadd.f32 0.0, %v5900
      %v5902 = vpop.f32.mrb[0].mxu0
      %v5903 = vpop.f32.mrb[0].mxu0
      %v5904 = vadd.f32 0.0, %v5903
      %v5905 = vpop.f32.mrb[0].mxu0
      %5906 = vmatprep.mubr.bf16.mxu0 0
      %5907 = vmatmul.mubr.bf16.gmra.mrb[0].mxu0 %v5754
      %v5908 = vpop.f32.mrb[0].mxu0
      %v5909 = vadd.f32 0.0, %v5908
      %v5910 = vpop.f32.mrb[0].mxu0
      %v5911 = vpop.f32.mrb[0].mxu0
      %v5912 = vadd.f32 0.0, %v5911
      %v5913 = vpop.f32.mrb[0].mxu0
      %5914 = vmatprep.mubr.bf16.mxu0 0
      %5915 = vmatmul.mubr.bf16.gmra.mrb[0].mxu0 %v5757
      %v5916 = vpop.f32.mrb[0].mxu0
      %v5917 = vadd.f32 0.0, %v5916
      %v5918 = vpop.f32.mrb[0].mxu0
      %v5919 = vpop.f32.mrb[0].mxu0
      %v5920 = vadd.f32 0.0, %v5919
      %v5921 = vpop.f32.mrb[0].mxu0
      %5922 = vdwg.mxu0
      %v5923 = vadd.f32 %v5628, %v5797
      %v5924 = vadd.f32 %v5629, %v5800
      %v5925 = vadd.f32 %v5630, %v5805
      %v5926 = vadd.f32 %v5631, %v5808
      %v5927 = vadd.f32 %v5632, %v5813
      %v5928 = vadd.f32 %v5633, %v5816
      %v5929 = vadd.f32 %v5634, %v5821
      %v5930 = vadd.f32 %v5635, %v5824
      %v5931 = vadd.f32 %v5636, %v5829
      %v5932 = vadd.f32 %v5637, %v5832
      %v5933 = vadd.f32 %v5638, %v5837
      %v5934 = vadd.f32 %v5639, %v5840
      %v5935 = vadd.f32 %v5640, %v5845
      %v5936 = vadd.f32 %v5641, %v5848
      %v5937 = vadd.f32 %v5642, %v5853
      %v5938 = vadd.f32 %v5643, %v5856
      %v5939 = vadd.f32 %v5644, %v5861
      %v5940 = vadd.f32 %v5645, %v5864
      %v5941 = vadd.f32 %v5646, %v5869
      %v5942 = vadd.f32 %v5647, %v5872
      %v5943 = vadd.f32 %v5648, %v5877
      %v5944 = vadd.f32 %v5649, %v5880
      %v5945 = vadd.f32 %v5650, %v5885
      %v5946 = vadd.f32 %v5651, %v5888
      %v5947 = vadd.f32 %v5652, %v5893
      %v5948 = vadd.f32 %v5653, %v5896
      %v5949 = vadd.f32 %v5654, %v5901
      %v5950 = vadd.f32 %v5655, %v5904
      %v5951 = vadd.f32 %v5656, %v5909
      %v5952 = vadd.f32 %v5657, %v5912
      %v5953 = vadd.f32 %v5658, %v5917
      %v5954 = vadd.f32 %v5659, %v5920
      %s5955 = scalar_lea.vmem [#allocation3], 48
      %v5956 = vld [vmem:[%s5955] sm:$0xff]
      %v5957 = vld [vmem:[%s5955 + $0x8] sm:$0xff]
      %v5958 = vld [vmem:[%s5955 + $0x18] sm:$0xff]
      %v5959 = vld [vmem:[%s5955 + $0x20] sm:$0xff]
      %v5960 = vld [vmem:[%s5955 + $0x30] sm:$0xff]
      %v5961 = vld [vmem:[%s5955 + $0x38] sm:$0xff]
      %v5962 = vld [vmem:[%s5955 + $0x48] sm:$0xff]
      %v5963 = vld [vmem:[%s5955 + $0x50] sm:$0xff]
      %v5964 = vld [vmem:[%s5955 + $0x60] sm:$0xff]
      %v5965 = vld [vmem:[%s5955 + $0x68] sm:$0xff]
      %v5966 = vld [vmem:[%s5955 + $0x78] sm:$0xff]
      %v5967 = vld [vmem:[%s5955 + $0x80] sm:$0xff]
      %v5968 = vld [vmem:[%s5955 + $0x90] sm:$0xff]
      %v5969 = vld [vmem:[%s5955 + $0x98] sm:$0xff]
      %v5970 = vld [vmem:[%s5955 + $0xa8] sm:$0xff]
      %v5971 = vld [vmem:[%s5955 + $0xb0] sm:$0xff]
      %v5972 = vld [vmem:[%s5955 + $0xc0] sm:$0xff]
      %v5973 = vld [vmem:[%s5955 + $0xc8] sm:$0xff]
      %v5974 = vld [vmem:[%s5955 + $0xd8] sm:$0xff]
      %v5975 = vld [vmem:[%s5955 + $0xe0] sm:$0xff]
      %v5976 = vld [vmem:[%s5955 + $0xf0] sm:$0xff]
      %v5977 = vld [vmem:[%s5955 + $0xf8] sm:$0xff]
      %v5978 = vld [vmem:[%s5955 + $0x108] sm:$0xff]
      %v5979 = vld [vmem:[%s5955 + $0x110] sm:$0xff]
      %v5980 = vld [vmem:[%s5955 + $0x120] sm:$0xff]
      %v5981 = vld [vmem:[%s5955 + $0x128] sm:$0xff]
      %v5982 = vld [vmem:[%s5955 + $0x138] sm:$0xff]
      %v5983 = vld [vmem:[%s5955 + $0x140] sm:$0xff]
      %v5984 = vld [vmem:[%s5955 + $0x150] sm:$0xff]
      %v5985 = vld [vmem:[%s5955 + $0x158] sm:$0xff]
      %v5986 = vld [vmem:[%s5955 + $0x168] sm:$0xff]
      %v5987 = vld [vmem:[%s5955 + $0x170] sm:$0xff]
      %v5988 = vpack.c.bf16 %v5957, %v5956
      %v5989 = vpack.c.bf16 %v5959, %v5958
      %v5990 = vpack.c.bf16 %v5961, %v5960
      %v5991 = vpack.c.bf16 %v5963, %v5962
      %v5992 = vpack.c.bf16 %v5965, %v5964
      %v5993 = vpack.c.bf16 %v5967, %v5966
      %v5994 = vpack.c.bf16 %v5969, %v5968
      %v5995 = vpack.c.bf16 %v5971, %v5970
      %v5996 = vpack.c.bf16 %v5973, %v5972
      %v5997 = vpack.c.bf16 %v5975, %v5974
      %v5998 = vpack.c.bf16 %v5977, %v5976
      %v5999 = vpack.c.bf16 %v5979, %v5978
      %v6000 = vpack.c.bf16 %v5981, %v5980
      %v6001 = vpack.c.bf16 %v5983, %v5982
      %v6002 = vpack.c.bf16 %v5985, %v5984
      %v6003 = vpack.c.bf16 %v5987, %v5986
      %s6004 = scalar_lea.vmem %s7, 48
      %v6005 = vld [vmem:[%s6004] sm:$0xff]
      %v6006 = vpack.c.bf16 %v6005, %v6005
      %v6008 = vsel %vm3650, %v5988, 0
      %v6011 = vsel %vm3650, %v5989, 0
      %v6014 = vsel %vm3650, %v5990, 0
      %v6017 = vsel %vm3650, %v5991, 0
      %v6020 = vsel %vm3650, %v5992, 0
      %v6023 = vsel %vm3650, %v5993, 0
      %v6026 = vsel %vm3650, %v5994, 0
      %v6029 = vsel %vm3650, %v5995, 0
      %v6032 = vsel %vm3650, %v5996, 0
      %v6035 = vsel %vm3650, %v5997, 0
      %v6038 = vsel %vm3650, %v5998, 0
      %v6041 = vsel %vm3650, %v5999, 0
      %v6044 = vsel %vm3650, %v6000, 0
      %v6047 = vsel %vm3650, %v6001, 0
      %v6050 = vsel %vm3650, %v6002, 0
      %v6053 = vsel %vm3650, %v6003, 0
      %v6056 = vsel %vm3965, %v6006, 0
      %6058 = vmatprep.subr.bf16.mxu0 0
      %6059 = vmatpush1.bf16.msra.mxu0 %v6056
      %6060 = vmatprep.subr.bf16.mxu0 0
      %6061 = vmatpush1.bf16.msra.mxu0 0
      %6062 = vmatprep.subr.bf16.mxu0 0
      %6063 = vmatpush1.bf16.msra.mxu0 0
      %6064 = vmatprep.subr.bf16.mxu0 0
      %6065 = vmatpush1.bf16.msra.mxu0 0
      %6066 = vmatprep.subr.bf16.mxu0 0
      %6067 = vmatpush1.bf16.msra.mxu0 0
      %6068 = vmatprep.subr.bf16.mxu0 0
      %6069 = vmatpush1.bf16.msra.mxu0 0
      %6070 = vmatprep.subr.bf16.mxu0 0
      %6071 = vmatpush1.bf16.msra.mxu0 0
      %6072 = vmatprep.subr.bf16.mxu0 0
      %6073 = vmatpush1.bf16.msra.mxu0 0
      %6074 = vmatprep.subr.bf16.mxu0 0
      %6075 = vmatpush1.bf16.msra.mxu0 0
      %6076 = vmatprep.subr.bf16.mxu0 0
      %6077 = vmatpush1.bf16.msra.mxu0 0
      %6078 = vmatprep.subr.bf16.mxu0 0
      %6079 = vmatpush1.bf16.msra.mxu0 0
      %6080 = vmatprep.subr.bf16.mxu0 0
      %6081 = vmatpush1.bf16.msra.mxu0 0
      %6082 = vmatprep.subr.bf16.mxu0 0
      %6083 = vmatpush1.bf16.msra.mxu0 0
      %6084 = vmatprep.subr.bf16.mxu0 0
      %6085 = vmatpush1.bf16.msra.mxu0 0
      %6086 = vmatprep.subr.bf16.mxu0 0
      %6087 = vmatpush1.bf16.msra.mxu0 0
      %6088 = vmatprep.subr.bf16.mxu0 0
      %6089 = vmatpush1.bf16.msra.mxu0 0
      %6090 = vmatprep.mubr.bf16.mxu0 0
      %6091 = vmatmul.mubr.bf16.gmra.mrb[0].mxu0 %v6008
      %v6092 = vpop.f32.mrb[0].mxu0
      %v6093 = vadd.f32 0.0, %v6092
      %v6094 = vpop.f32.mrb[0].mxu0
      %v6095 = vpop.f32.mrb[0].mxu0
      %v6096 = vadd.f32 0.0, %v6095
      %v6097 = vpop.f32.mrb[0].mxu0
      %6098 = vmatprep.mubr.bf16.mxu0 0
      %6099 = vmatmul.mubr.bf16.gmra.mrb[0].mxu0 %v6011
      %v6100 = vpop.f32.mrb[0].mxu0
      %v6101 = vadd.f32 0.0, %v6100
      %v6102 = vpop.f32.mrb[0].mxu0
      %v6103 = vpop.f32.mrb[0].mxu0
      %v6104 = vadd.f32 0.0, %v6103
      %v6105 = vpop.f32.mrb[0].mxu0
      %6106 = vmatprep.mubr.bf16.mxu0 0
      %6107 = vmatmul.mubr.bf16.gmra.mrb[0].mxu0 %v6014
      %v6108 = vpop.f32.mrb[0].mxu0
      %v6109 = vadd.f32 0.0, %v6108
      %v6110 = vpop.f32.mrb[0].mxu0
      %v6111 = vpop.f32.mrb[0].mxu0
      %v6112 = vadd.f32 0.0, %v6111
      %v6113 = vpop.f32.mrb[0].mxu0
      %6114 = vmatprep.mubr.bf16.mxu0 0
      %6115 = vmatmul.mubr.bf16.gmra.mrb[0].mxu0 %v6017
      %v6116 = vpop.f32.mrb[0].mxu0
      %v6117 = vadd.f32 0.0, %v6116
      %v6118 = vpop.f32.mrb[0].mxu0
      %v6119 = vpop.f32.mrb[0].mxu0
      %v6120 = vadd.f32 0.0, %v6119
      %v6121 = vpop.f32.mrb[0].mxu0
      %6122 = vmatprep.mubr.bf16.mxu0 0
      %6123 = vmatmul.mubr.bf16.gmra.mrb[0].mxu0 %v6020
      %v6124 = vpop.f32.mrb[0].mxu0
      %v6125 = vadd.f32 0.0, %v6124
      %v6126 = vpop.f32.mrb[0].mxu0
      %v6127 = vpop.f32.mrb[0].mxu0
      %v6128 = vadd.f32 0.0, %v6127
      %v6129 = vpop.f32.mrb[0].mxu0
      %6130 = vmatprep.mubr.bf16.mxu0 0
      %6131 = vmatmul.mubr.bf16.gmra.mrb[0].mxu0 %v6023
      %v6132 = vpop.f32.mrb[0].mxu0
      %v6133 = vadd.f32 0.0, %v6132
      %v6134 = vpop.f32.mrb[0].mxu0
      %v6135 = vpop.f32.mrb[0].mxu0
      %v6136 = vadd.f32 0.0, %v6135
      %v6137 = vpop.f32.mrb[0].mxu0
      %6138 = vmatprep.mubr.bf16.mxu0 0
      %6139 = vmatmul.mubr.bf16.gmra.mrb[0].mxu0 %v6026
      %v6140 = vpop.f32.mrb[0].mxu0
      %v6141 = vadd.f32 0.0, %v6140
      %v6142 = vpop.f32.mrb[0].mxu0
      %v6143 = vpop.f32.mrb[0].mxu0
      %v6144 = vadd.f32 0.0, %v6143
      %v6145 = vpop.f32.mrb[0].mxu0
      %6146 = vmatprep.mubr.bf16.mxu0 0
      %6147 = vmatmul.mubr.bf16.gmra.mrb[0].mxu0 %v6029
      %v6148 = vpop.f32.mrb[0].mxu0
      %v6149 = vadd.f32 0.0, %v6148
      %v6150 = vpop.f32.mrb[0].mxu0
      %v6151 = vpop.f32.mrb[0].mxu0
      %v6152 = vadd.f32 0.0, %v6151
      %v6153 = vpop.f32.mrb[0].mxu0
      %6154 = vmatprep.mubr.bf16.mxu0 0
      %6155 = vmatmul.mubr.bf16.gmra.mrb[0].mxu0 %v6032
      %v6156 = vpop.f32.mrb[0].mxu0
      %v6157 = vadd.f32 0.0, %v6156
      %v6158 = vpop.f32.mrb[0].mxu0
      %v6159 = vpop.f32.mrb[0].mxu0
      %v6160 = vadd.f32 0.0, %v6159
      %v6161 = vpop.f32.mrb[0].mxu0
      %6162 = vmatprep.mubr.bf16.mxu0 0
      %6163 = vmatmul.mubr.bf16.gmra.mrb[0].mxu0 %v6035
      %v6164 = vpop.f32.mrb[0].mxu0
      %v6165 = vadd.f32 0.0, %v6164
      %v6166 = vpop.f32.mrb[0].mxu0
      %v6167 = vpop.f32.mrb[0].mxu0
      %v6168 = vadd.f32 0.0, %v6167
      %v6169 = vpop.f32.mrb[0].mxu0
      %6170 = vmatprep.mubr.bf16.mxu0 0
      %6171 = vmatmul.mubr.bf16.gmra.mrb[0].mxu0 %v6038
      %v6172 = vpop.f32.mrb[0].mxu0
      %v6173 = vadd.f32 0.0, %v6172
      %v6174 = vpop.f32.mrb[0].mxu0
      %v6175 = vpop.f32.mrb[0].mxu0
      %v6176 = vadd.f32 0.0, %v6175
      %v6177 = vpop.f32.mrb[0].mxu0
      %6178 = vmatprep.mubr.bf16.mxu0 0
      %6179 = vmatmul.mubr.bf16.gmra.mrb[0].mxu0 %v6041
      %v6180 = vpop.f32.mrb[0].mxu0
      %v6181 = vadd.f32 0.0, %v6180
      %v6182 = vpop.f32.mrb[0].mxu0
      %v6183 = vpop.f32.mrb[0].mxu0
      %v6184 = vadd.f32 0.0, %v6183
      %v6185 = vpop.f32.mrb[0].mxu0
      %6186 = vmatprep.mubr.bf16.mxu0 0
      %6187 = vmatmul.mubr.bf16.gmra.mrb[0].mxu0 %v6044
      %v6188 = vpop.f32.mrb[0].mxu0
      %v6189 = vadd.f32 0.0, %v6188
      %v6190 = vpop.f32.mrb[0].mxu0
      %v6191 = vpop.f32.mrb[0].mxu0
      %v6192 = vadd.f32 0.0, %v6191
      %v6193 = vpop.f32.mrb[0].mxu0
      %6194 = vmatprep.mubr.bf16.mxu0 0
      %6195 = vmatmul.mubr.bf16.gmra.mrb[0].mxu0 %v6047
      %v6196 = vpop.f32.mrb[0].mxu0
      %v6197 = vadd.f32 0.0, %v6196
      %v6198 = vpop.f32.mrb[0].mxu0
      %v6199 = vpop.f32.mrb[0].mxu0
      %v6200 = vadd.f32 0.0, %v6199
      %v6201 = vpop.f32.mrb[0].mxu0
      %6202 = vmatprep.mubr.bf16.mxu0 0
      %6203 = vmatmul.mubr.bf16.gmra.mrb[0].mxu0 %v6050
      %v6204 = vpop.f32.mrb[0].mxu0
      %v6205 = vadd.f32 0.0, %v6204
      %v6206 = vpop.f32.mrb[0].mxu0
      %v6207 = vpop.f32.mrb[0].mxu0
      %v6208 = vadd.f32 0.0, %v6207
      %v6209 = vpop.f32.mrb[0].mxu0
      %6210 = vmatprep.mubr.bf16.mxu0 0
      %6211 = vmatmul.mubr.bf16.gmra.mrb[0].mxu0 %v6053
      %v6212 = vpop.f32.mrb[0].mxu0
      %v6213 = vadd.f32 0.0, %v6212
      %v6214 = vpop.f32.mrb[0].mxu0
      %v6215 = vpop.f32.mrb[0].mxu0
      %v6216 = vadd.f32 0.0, %v6215
      %v6217 = vpop.f32.mrb[0].mxu0
      %6218 = vdwg.mxu0
      %v6219 = vadd.f32 %v5923, %v6093
      %v6220 = vadd.f32 %v5924, %v6096
      %v6221 = vadd.f32 %v5925, %v6101
      %v6222 = vadd.f32 %v5926, %v6104
      %v6223 = vadd.f32 %v5927, %v6109
      %v6224 = vadd.f32 %v5928, %v6112
      %v6225 = vadd.f32 %v5929, %v6117
      %v6226 = vadd.f32 %v5930, %v6120
      %v6227 = vadd.f32 %v5931, %v6125
      %v6228 = vadd.f32 %v5932, %v6128
      %v6229 = vadd.f32 %v5933, %v6133
      %v6230 = vadd.f32 %v5934, %v6136
      %v6231 = vadd.f32 %v5935, %v6141
      %v6232 = vadd.f32 %v5936, %v6144
      %v6233 = vadd.f32 %v5937, %v6149
      %v6234 = vadd.f32 %v5938, %v6152
      %v6235 = vadd.f32 %v5939, %v6157
      %v6236 = vadd.f32 %v5940, %v6160
      %v6237 = vadd.f32 %v5941, %v6165
      %v6238 = vadd.f32 %v5942, %v6168
      %v6239 = vadd.f32 %v5943, %v6173
      %v6240 = vadd.f32 %v5944, %v6176
      %v6241 = vadd.f32 %v5945, %v6181
      %v6242 = vadd.f32 %v5946, %v6184
      %v6243 = vadd.f32 %v5947, %v6189
      %v6244 = vadd.f32 %v5948, %v6192
      %v6245 = vadd.f32 %v5949, %v6197
      %v6246 = vadd.f32 %v5950, %v6200
      %v6247 = vadd.f32 %v5951, %v6205
      %v6248 = vadd.f32 %v5952, %v6208
      %v6249 = vadd.f32 %v5953, %v6213
      %v6250 = vadd.f32 %v5954, %v6216
      %v6251 = vld [vmem:[%s5955 + $0x1] sm:$0xff]
      %v6252 = vld [vmem:[%s5955 + $0x9] sm:$0xff]
      %v6253 = vld [vmem:[%s5955 + $0x19] sm:$0xff]
      %v6254 = vld [vmem:[%s5955 + $0x21] sm:$0xff]
      %v6255 = vld [vmem:[%s5955 + $0x31] sm:$0xff]
      %v6256 = vld [vmem:[%s5955 + $0x39] sm:$0xff]
      %v6257 = vld [vmem:[%s5955 + $0x49] sm:$0xff]
      %v6258 = vld [vmem:[%s5955 + $0x51] sm:$0xff]
      %v6259 = vld [vmem:[%s5955 + $0x61] sm:$0xff]
      %v6260 = vld [vmem:[%s5955 + $0x69] sm:$0xff]
      %v6261 = vld [vmem:[%s5955 + $0x79] sm:$0xff]
      %v6262 = vld [vmem:[%s5955 + $0x81] sm:$0xff]
      %v6263 = vld [vmem:[%s5955 + $0x91] sm:$0xff]
      %v6264 = vld [vmem:[%s5955 + $0x99] sm:$0xff]
      %v6265 = vld [vmem:[%s5955 + $0xa9] sm:$0xff]
      %v6266 = vld [vmem:[%s5955 + $0xb1] sm:$0xff]
      %v6267 = vld [vmem:[%s5955 + $0xc1] sm:$0xff]
      %v6268 = vld [vmem:[%s5955 + $0xc9] sm:$0xff]
      %v6269 = vld [vmem:[%s5955 + $0xd9] sm:$0xff]
      %v6270 = vld [vmem:[%s5955 + $0xe1] sm:$0xff]
      %v6271 = vld [vmem:[%s5955 + $0xf1] sm:$0xff]
      %v6272 = vld [vmem:[%s5955 + $0xf9] sm:$0xff]
      %v6273 = vld [vmem:[%s5955 + $0x109] sm:$0xff]
      %v6274 = vld [vmem:[%s5955 + $0x111] sm:$0xff]
      %v6275 = vld [vmem:[%s5955 + $0x121] sm:$0xff]
      %v6276 = vld [vmem:[%s5955 + $0x129] sm:$0xff]
      %v6277 = vld [vmem:[%s5955 + $0x139] sm:$0xff]
      %v6278 = vld [vmem:[%s5955 + $0x141] sm:$0xff]
      %v6279 = vld [vmem:[%s5955 + $0x151] sm:$0xff]
      %v6280 = vld [vmem:[%s5955 + $0x159] sm:$0xff]
      %v6281 = vld [vmem:[%s5955 + $0x169] sm:$0xff]
      %v6282 = vld [vmem:[%s5955 + $0x171] sm:$0xff]
      %v6283 = vpack.c.bf16 %v6252, %v6251
      %v6284 = vpack.c.bf16 %v6254, %v6253
      %v6285 = vpack.c.bf16 %v6256, %v6255
      %v6286 = vpack.c.bf16 %v6258, %v6257
      %v6287 = vpack.c.bf16 %v6260, %v6259
      %v6288 = vpack.c.bf16 %v6262, %v6261
      %v6289 = vpack.c.bf16 %v6264, %v6263
      %v6290 = vpack.c.bf16 %v6266, %v6265
      %v6291 = vpack.c.bf16 %v6268, %v6267
      %v6292 = vpack.c.bf16 %v6270, %v6269
      %v6293 = vpack.c.bf16 %v6272, %v6271
      %v6294 = vpack.c.bf16 %v6274, %v6273
      %v6295 = vpack.c.bf16 %v6276, %v6275
      %v6296 = vpack.c.bf16 %v6278, %v6277
      %v6297 = vpack.c.bf16 %v6280, %v6279
      %v6298 = vpack.c.bf16 %v6282, %v6281
      %s6299 = scalar_lea.vmem %s7, 56
      %v6300 = vld [vmem:[%s6299] sm:$0xff]
      %v6301 = vpack.c.bf16 %v6300, %v6300
      %v6303 = vsel %vm3650, %v6283, 0
      %v6306 = vsel %vm3650, %v6284, 0
      %v6309 = vsel %vm3650, %v6285, 0
      %v6312 = vsel %vm3650, %v6286, 0
      %v6315 = vsel %vm3650, %v6287, 0
      %v6318 = vsel %vm3650, %v6288, 0
      %v6321 = vsel %vm3650, %v6289, 0
      %v6324 = vsel %vm3650, %v6290, 0
      %v6327 = vsel %vm3650, %v6291, 0
      %v6330 = vsel %vm3650, %v6292, 0
      %v6333 = vsel %vm3650, %v6293, 0
      %v6336 = vsel %vm3650, %v6294, 0
      %v6339 = vsel %vm3650, %v6295, 0
      %v6342 = vsel %vm3650, %v6296, 0
      %v6345 = vsel %vm3650, %v6297, 0
      %v6348 = vsel %vm3650, %v6298, 0
      %v6351 = vsel %vm3965, %v6301, 0
      %6353 = vmatprep.subr.bf16.mxu0 0
      %6354 = vmatpush1.bf16.msra.mxu0 %v6351
      %6355 = vmatprep.subr.bf16.mxu0 0
      %6356 = vmatpush1.bf16.msra.mxu0 0
      %6357 = vmatprep.subr.bf16.mxu0 0
      %6358 = vmatpush1.bf16.msra.mxu0 0
      %6359 = vmatprep.subr.bf16.mxu0 0
      %6360 = vmatpush1.bf16.msra.mxu0 0
      %6361 = vmatprep.subr.bf16.mxu0 0
      %6362 = vmatpush1.bf16.msra.mxu0 0
      %6363 = vmatprep.subr.bf16.mxu0 0
      %6364 = vmatpush1.bf16.msra.mxu0 0
      %6365 = vmatprep.subr.bf16.mxu0 0
      %6366 = vmatpush1.bf16.msra.mxu0 0
      %6367 = vmatprep.subr.bf16.mxu0 0
      %6368 = vmatpush1.bf16.msra.mxu0 0
      %6369 = vmatprep.subr.bf16.mxu0 0
      %6370 = vmatpush1.bf16.msra.mxu0 0
      %6371 = vmatprep.subr.bf16.mxu0 0
      %6372 = vmatpush1.bf16.msra.mxu0 0
      %6373 = vmatprep.subr.bf16.mxu0 0
      %6374 = vmatpush1.bf16.msra.mxu0 0
      %6375 = vmatprep.subr.bf16.mxu0 0
      %6376 = vmatpush1.bf16.msra.mxu0 0
      %6377 = vmatprep.subr.bf16.mxu0 0
      %6378 = vmatpush1.bf16.msra.mxu0 0
      %6379 = vmatprep.subr.bf16.mxu0 0
      %6380 = vmatpush1.bf16.msra.mxu0 0
      %6381 = vmatprep.subr.bf16.mxu0 0
      %6382 = vmatpush1.bf16.msra.mxu0 0
      %6383 = vmatprep.subr.bf16.mxu0 0
      %6384 = vmatpush1.bf16.msra.mxu0 0
      %6385 = vmatprep.mubr.bf16.mxu0 0
      %6386 = vmatmul.mubr.bf16.gmra.mrb[0].mxu0 %v6303
      %v6387 = vpop.f32.mrb[0].mxu0
      %v6388 = vadd.f32 0.0, %v6387
      %v6389 = vpop.f32.mrb[0].mxu0
      %v6390 = vpop.f32.mrb[0].mxu0
      %v6391 = vadd.f32 0.0, %v6390
      %v6392 = vpop.f32.mrb[0].mxu0
      %6393 = vmatprep.mubr.bf16.mxu0 0
      %6394 = vmatmul.mubr.bf16.gmra.mrb[0].mxu0 %v6306
      %v6395 = vpop.f32.mrb[0].mxu0
      %v6396 = vadd.f32 0.0, %v6395
      %v6397 = vpop.f32.mrb[0].mxu0
      %v6398 = vpop.f32.mrb[0].mxu0
      %v6399 = vadd.f32 0.0, %v6398
      %v6400 = vpop.f32.mrb[0].mxu0
      %6401 = vmatprep.mubr.bf16.mxu0 0
      %6402 = vmatmul.mubr.bf16.gmra.mrb[0].mxu0 %v6309
      %v6403 = vpop.f32.mrb[0].mxu0
      %v6404 = vadd.f32 0.0, %v6403
      %v6405 = vpop.f32.mrb[0].mxu0
      %v6406 = vpop.f32.mrb[0].mxu0
      %v6407 = vadd.f32 0.0, %v6406
      %v6408 = vpop.f32.mrb[0].mxu0
      %6409 = vmatprep.mubr.bf16.mxu0 0
      %6410 = vmatmul.mubr.bf16.gmra.mrb[0].mxu0 %v6312
      %v6411 = vpop.f32.mrb[0].mxu0
      %v6412 = vadd.f32 0.0, %v6411
      %v6413 = vpop.f32.mrb[0].mxu0
      %v6414 = vpop.f32.mrb[0].mxu0
      %v6415 = vadd.f32 0.0, %v6414
      %v6416 = vpop.f32.mrb[0].mxu0
      %6417 = vmatprep.mubr.bf16.mxu0 0
      %6418 = vmatmul.mubr.bf16.gmra.mrb[0].mxu0 %v6315
      %v6419 = vpop.f32.mrb[0].mxu0
      %v6420 = vadd.f32 0.0, %v6419
      %v6421 = vpop.f32.mrb[0].mxu0
      %v6422 = vpop.f32.mrb[0].mxu0
      %v6423 = vadd.f32 0.0, %v6422
      %v6424 = vpop.f32.mrb[0].mxu0
      %6425 = vmatprep.mubr.bf16.mxu0 0
      %6426 = vmatmul.mubr.bf16.gmra.mrb[0].mxu0 %v6318
      %v6427 = vpop.f32.mrb[0].mxu0
      %v6428 = vadd.f32 0.0, %v6427
      %v6429 = vpop.f32.mrb[0].mxu0
      %v6430 = vpop.f32.mrb[0].mxu0
      %v6431 = vadd.f32 0.0, %v6430
      %v6432 = vpop.f32.mrb[0].mxu0
      %6433 = vmatprep.mubr.bf16.mxu0 0
      %6434 = vmatmul.mubr.bf16.gmra.mrb[0].mxu0 %v6321
      %v6435 = vpop.f32.mrb[0].mxu0
      %v6436 = vadd.f32 0.0, %v6435
      %v6437 = vpop.f32.mrb[0].mxu0
      %v6438 = vpop.f32.mrb[0].mxu0
      %v6439 = vadd.f32 0.0, %v6438
      %v6440 = vpop.f32.mrb[0].mxu0
      %6441 = vmatprep.mubr.bf16.mxu0 0
      %6442 = vmatmul.mubr.bf16.gmra.mrb[0].mxu0 %v6324
      %v6443 = vpop.f32.mrb[0].mxu0
      %v6444 = vadd.f32 0.0, %v6443
      %v6445 = vpop.f32.mrb[0].mxu0
      %v6446 = vpop.f32.mrb[0].mxu0
      %v6447 = vadd.f32 0.0, %v6446
      %v6448 = vpop.f32.mrb[0].mxu0
      %6449 = vmatprep.mubr.bf16.mxu0 0
      %6450 = vmatmul.mubr.bf16.gmra.mrb[0].mxu0 %v6327
      %v6451 = vpop.f32.mrb[0].mxu0
      %v6452 = vadd.f32 0.0, %v6451
      %v6453 = vpop.f32.mrb[0].mxu0
      %v6454 = vpop.f32.mrb[0].mxu0
      %v6455 = vadd.f32 0.0, %v6454
      %v6456 = vpop.f32.mrb[0].mxu0
      %6457 = vmatprep.mubr.bf16.mxu0 0
      %6458 = vmatmul.mubr.bf16.gmra.mrb[0].mxu0 %v6330
      %v6459 = vpop.f32.mrb[0].mxu0
      %v6460 = vadd.f32 0.0, %v6459
      %v6461 = vpop.f32.mrb[0].mxu0
      %v6462 = vpop.f32.mrb[0].mxu0
      %v6463 = vadd.f32 0.0, %v6462
      %v6464 = vpop.f32.mrb[0].mxu0
      %6465 = vmatprep.mubr.bf16.mxu0 0
      %6466 = vmatmul.mubr.bf16.gmra.mrb[0].mxu0 %v6333
      %v6467 = vpop.f32.mrb[0].mxu0
      %v6468 = vadd.f32 0.0, %v6467
      %v6469 = vpop.f32.mrb[0].mxu0
      %v6470 = vpop.f32.mrb[0].mxu0
      %v6471 = vadd.f32 0.0, %v6470
      %v6472 = vpop.f32.mrb[0].mxu0
      %6473 = vmatprep.mubr.bf16.mxu0 0
      %6474 = vmatmul.mubr.bf16.gmra.mrb[0].mxu0 %v6336
      %v6475 = vpop.f32.mrb[0].mxu0
      %v6476 = vadd.f32 0.0, %v6475
      %v6477 = vpop.f32.mrb[0].mxu0
      %v6478 = vpop.f32.mrb[0].mxu0
      %v6479 = vadd.f32 0.0, %v6478
      %v6480 = vpop.f32.mrb[0].mxu0
      %6481 = vmatprep.mubr.bf16.mxu0 0
      %6482 = vmatmul.mubr.bf16.gmra.mrb[0].mxu0 %v6339
      %v6483 = vpop.f32.mrb[0].mxu0
      %v6484 = vadd.f32 0.0, %v6483
      %v6485 = vpop.f32.mrb[0].mxu0
      %v6486 = vpop.f32.mrb[0].mxu0
      %v6487 = vadd.f32 0.0, %v6486
      %v6488 = vpop.f32.mrb[0].mxu0
      %6489 = vmatprep.mubr.bf16.mxu0 0
      %6490 = vmatmul.mubr.bf16.gmra.mrb[0].mxu0 %v6342
      %v6491 = vpop.f32.mrb[0].mxu0
      %v6492 = vadd.f32 0.0, %v6491
      %v6493 = vpop.f32.mrb[0].mxu0
      %v6494 = vpop.f32.mrb[0].mxu0
      %v6495 = vadd.f32 0.0, %v6494
      %v6496 = vpop.f32.mrb[0].mxu0
      %6497 = vmatprep.mubr.bf16.mxu0 0
      %6498 = vmatmul.mubr.bf16.gmra.mrb[0].mxu0 %v6345
      %v6499 = vpop.f32.mrb[0].mxu0
      %v6500 = vadd.f32 0.0, %v6499
      %v6501 = vpop.f32.mrb[0].mxu0
      %v6502 = vpop.f32.mrb[0].mxu0
      %v6503 = vadd.f32 0.0, %v6502
      %v6504 = vpop.f32.mrb[0].mxu0
      %6505 = vmatprep.mubr.bf16.mxu0 0
      %6506 = vmatmul.mubr.bf16.gmra.mrb[0].mxu0 %v6348
      %v6507 = vpop.f32.mrb[0].mxu0
      %v6508 = vadd.f32 0.0, %v6507
      %v6509 = vpop.f32.mrb[0].mxu0
      %v6510 = vpop.f32.mrb[0].mxu0
      %v6511 = vadd.f32 0.0, %v6510
      %v6512 = vpop.f32.mrb[0].mxu0
      %6513 = vdwg.mxu0
      %v6514 = vadd.f32 %v6219, %v6388
      %v6515 = vadd.f32 %v6220, %v6391
      %v6516 = vadd.f32 %v6221, %v6396
      %v6517 = vadd.f32 %v6222, %v6399
      %v6518 = vadd.f32 %v6223, %v6404
      %v6519 = vadd.f32 %v6224, %v6407
      %v6520 = vadd.f32 %v6225, %v6412
      %v6521 = vadd.f32 %v6226, %v6415
      %v6522 = vadd.f32 %v6227, %v6420
      %v6523 = vadd.f32 %v6228, %v6423
      %v6524 = vadd.f32 %v6229, %v6428
      %v6525 = vadd.f32 %v6230, %v6431
      %v6526 = vadd.f32 %v6231, %v6436
      %v6527 = vadd.f32 %v6232, %v6439
      %v6528 = vadd.f32 %v6233, %v6444
      %v6529 = vadd.f32 %v6234, %v6447
      %v6530 = vadd.f32 %v6235, %v6452
      %v6531 = vadd.f32 %v6236, %v6455
      %v6532 = vadd.f32 %v6237, %v6460
      %v6533 = vadd.f32 %v6238, %v6463
      %v6534 = vadd.f32 %v6239, %v6468
      %v6535 = vadd.f32 %v6240, %v6471
      %v6536 = vadd.f32 %v6241, %v6476
      %v6537 = vadd.f32 %v6242, %v6479
      %v6538 = vadd.f32 %v6243, %v6484
      %v6539 = vadd.f32 %v6244, %v6487
      %v6540 = vadd.f32 %v6245, %v6492
      %v6541 = vadd.f32 %v6246, %v6495
      %v6542 = vadd.f32 %v6247, %v6500
      %v6543 = vadd.f32 %v6248, %v6503
      %v6544 = vadd.f32 %v6249, %v6508
      %v6545 = vadd.f32 %v6250, %v6511
      %v6546 = vld [vmem:[%s5955 + $0x2] sm:$0xff]
      %v6547 = vld [vmem:[%s5955 + $0xa] sm:$0xff]
      %v6548 = vld [vmem:[%s5955 + $0x1a] sm:$0xff]
      %v6549 = vld [vmem:[%s5955 + $0x22] sm:$0xff]
      %v6550 = vld [vmem:[%s5955 + $0x32] sm:$0xff]
      %v6551 = vld [vmem:[%s5955 + $0x3a] sm:$0xff]
      %v6552 = vld [vmem:[%s5955 + $0x4a] sm:$0xff]
      %v6553 = vld [vmem:[%s5955 + $0x52] sm:$0xff]
      %v6554 = vld [vmem:[%s5955 + $0x62] sm:$0xff]
      %v6555 = vld [vmem:[%s5955 + $0x6a] sm:$0xff]
      %v6556 = vld [vmem:[%s5955 + $0x7a] sm:$0xff]
      %v6557 = vld [vmem:[%s5955 + $0x82] sm:$0xff]
      %v6558 = vld [vmem:[%s5955 + $0x92] sm:$0xff]
      %v6559 = vld [vmem:[%s5955 + $0x9a] sm:$0xff]
      %v6560 = vld [vmem:[%s5955 + $0xaa] sm:$0xff]
      %v6561 = vld [vmem:[%s5955 + $0xb2] sm:$0xff]
      %v6562 = vld [vmem:[%s5955 + $0xc2] sm:$0xff]
      %v6563 = vld [vmem:[%s5955 + $0xca] sm:$0xff]
      %v6564 = vld [vmem:[%s5955 + $0xda] sm:$0xff]
      %v6565 = vld [vmem:[%s5955 + $0xe2] sm:$0xff]
      %v6566 = vld [vmem:[%s5955 + $0xf2] sm:$0xff]
      %v6567 = vld [vmem:[%s5955 + $0xfa] sm:$0xff]
      %v6568 = vld [vmem:[%s5955 + $0x10a] sm:$0xff]
      %v6569 = vld [vmem:[%s5955 + $0x112] sm:$0xff]
      %v6570 = vld [vmem:[%s5955 + $0x122] sm:$0xff]
      %v6571 = vld [vmem:[%s5955 + $0x12a] sm:$0xff]
      %v6572 = vld [vmem:[%s5955 + $0x13a] sm:$0xff]
      %v6573 = vld [vmem:[%s5955 + $0x142] sm:$0xff]
      %v6574 = vld [vmem:[%s5955 + $0x152] sm:$0xff]
      %v6575 = vld [vmem:[%s5955 + $0x15a] sm:$0xff]
      %v6576 = vld [vmem:[%s5955 + $0x16a] sm:$0xff]
      %v6577 = vld [vmem:[%s5955 + $0x172] sm:$0xff]
      %v6578 = vpack.c.bf16 %v6547, %v6546
      %v6579 = vpack.c.bf16 %v6549, %v6548
      %v6580 = vpack.c.bf16 %v6551, %v6550
      %v6581 = vpack.c.bf16 %v6553, %v6552
      %v6582 = vpack.c.bf16 %v6555, %v6554
      %v6583 = vpack.c.bf16 %v6557, %v6556
      %v6584 = vpack.c.bf16 %v6559, %v6558
      %v6585 = vpack.c.bf16 %v6561, %v6560
      %v6586 = vpack.c.bf16 %v6563, %v6562
      %v6587 = vpack.c.bf16 %v6565, %v6564
      %v6588 = vpack.c.bf16 %v6567, %v6566
      %v6589 = vpack.c.bf16 %v6569, %v6568
      %v6590 = vpack.c.bf16 %v6571, %v6570
      %v6591 = vpack.c.bf16 %v6573, %v6572
      %v6592 = vpack.c.bf16 %v6575, %v6574
      %v6593 = vpack.c.bf16 %v6577, %v6576
      %s6594 = scalar_lea.vmem %s7, 64
      %v6595 = vld [vmem:[%s6594] sm:$0xff]
      %v6596 = vpack.c.bf16 %v6595, %v6595
      %v6598 = vsel %vm3650, %v6578, 0
      %v6601 = vsel %vm3650, %v6579, 0
      %v6604 = vsel %vm3650, %v6580, 0
      %v6607 = vsel %vm3650, %v6581, 0
      %v6610 = vsel %vm3650, %v6582, 0
      %v6613 = vsel %vm3650, %v6583, 0
      %v6616 = vsel %vm3650, %v6584, 0
      %v6619 = vsel %vm3650, %v6585, 0
      %v6622 = vsel %vm3650, %v6586, 0
      %v6625 = vsel %vm3650, %v6587, 0
      %v6628 = vsel %vm3650, %v6588, 0
      %v6631 = vsel %vm3650, %v6589, 0
      %v6634 = vsel %vm3650, %v6590, 0
      %v6637 = vsel %vm3650, %v6591, 0
      %v6640 = vsel %vm3650, %v6592, 0
      %v6643 = vsel %vm3650, %v6593, 0
      %v6646 = vsel %vm3965, %v6596, 0
      %6648 = vmatprep.subr.bf16.mxu0 0
      %6649 = vmatpush1.bf16.msra.mxu0 %v6646
      %6650 = vmatprep.subr.bf16.mxu0 0
      %6651 = vmatpush1.bf16.msra.mxu0 0
      %6652 = vmatprep.subr.bf16.mxu0 0
      %6653 = vmatpush1.bf16.msra.mxu0 0
      %6654 = vmatprep.subr.bf16.mxu0 0
      %6655 = vmatpush1.bf16.msra.mxu0 0
      %6656 = vmatprep.subr.bf16.mxu0 0
      %6657 = vmatpush1.bf16.msra.mxu0 0
      %6658 = vmatprep.subr.bf16.mxu0 0
      %6659 = vmatpush1.bf16.msra.mxu0 0
      %6660 = vmatprep.subr.bf16.mxu0 0
      %6661 = vmatpush1.bf16.msra.mxu0 0
      %6662 = vmatprep.subr.bf16.mxu0 0
      %6663 = vmatpush1.bf16.msra.mxu0 0
      %6664 = vmatprep.subr.bf16.mxu0 0
      %6665 = vmatpush1.bf16.msra.mxu0 0
      %6666 = vmatprep.subr.bf16.mxu0 0
      %6667 = vmatpush1.bf16.msra.mxu0 0
      %6668 = vmatprep.subr.bf16.mxu0 0
      %6669 = vmatpush1.bf16.msra.mxu0 0
      %6670 = vmatprep.subr.bf16.mxu0 0
      %6671 = vmatpush1.bf16.msra.mxu0 0
      %6672 = vmatprep.subr.bf16.mxu0 0
      %6673 = vmatpush1.bf16.msra.mxu0 0
      %6674 = vmatprep.subr.bf16.mxu0 0
      %6675 = vmatpush1.bf16.msra.mxu0 0
      %6676 = vmatprep.subr.bf16.mxu0 0
      %6677 = vmatpush1.bf16.msra.mxu0 0
      %6678 = vmatprep.subr.bf16.mxu0 0
      %6679 = vmatpush1.bf16.msra.mxu0 0
      %6680 = vmatprep.mubr.bf16.mxu0 0
      %6681 = vmatmul.mubr.bf16.gmra.mrb[0].mxu0 %v6598
      %v6682 = vpop.f32.mrb[0].mxu0
      %v6683 = vadd.f32 0.0, %v6682
      %v6684 = vpop.f32.mrb[0].mxu0
      %v6685 = vpop.f32.mrb[0].mxu0
      %v6686 = vadd.f32 0.0, %v6685
      %v6687 = vpop.f32.mrb[0].mxu0
      %6688 = vmatprep.mubr.bf16.mxu0 0
      %6689 = vmatmul.mubr.bf16.gmra.mrb[0].mxu0 %v6601
      %v6690 = vpop.f32.mrb[0].mxu0
      %v6691 = vadd.f32 0.0, %v6690
      %v6692 = vpop.f32.mrb[0].mxu0
      %v6693 = vpop.f32.mrb[0].mxu0
      %v6694 = vadd.f32 0.0, %v6693
      %v6695 = vpop.f32.mrb[0].mxu0
      %6696 = vmatprep.mubr.bf16.mxu0 0
      %6697 = vmatmul.mubr.bf16.gmra.mrb[0].mxu0 %v6604
      %v6698 = vpop.f32.mrb[0].mxu0
      %v6699 = vadd.f32 0.0, %v6698
      %v6700 = vpop.f32.mrb[0].mxu0
      %v6701 = vpop.f32.mrb[0].mxu0
      %v6702 = vadd.f32 0.0, %v6701
      %v6703 = vpop.f32.mrb[0].mxu0
      %6704 = vmatprep.mubr.bf16.mxu0 0
      %6705 = vmatmul.mubr.bf16.gmra.mrb[0].mxu0 %v6607
      %v6706 = vpop.f32.mrb[0].mxu0
      %v6707 = vadd.f32 0.0, %v6706
      %v6708 = vpop.f32.mrb[0].mxu0
      %v6709 = vpop.f32.mrb[0].mxu0
      %v6710 = vadd.f32 0.0, %v6709
      %v6711 = vpop.f32.mrb[0].mxu0
      %6712 = vmatprep.mubr.bf16.mxu0 0
      %6713 = vmatmul.mubr.bf16.gmra.mrb[0].mxu0 %v6610
      %v6714 = vpop.f32.mrb[0].mxu0
      %v6715 = vadd.f32 0.0, %v6714
      %v6716 = vpop.f32.mrb[0].mxu0
      %v6717 = vpop.f32.mrb[0].mxu0
      %v6718 = vadd.f32 0.0, %v6717
      %v6719 = vpop.f32.mrb[0].mxu0
      %6720 = vmatprep.mubr.bf16.mxu0 0
      %6721 = vmatmul.mubr.bf16.gmra.mrb[0].mxu0 %v6613
      %v6722 = vpop.f32.mrb[0].mxu0
      %v6723 = vadd.f32 0.0, %v6722
      %v6724 = vpop.f32.mrb[0].mxu0
      %v6725 = vpop.f32.mrb[0].mxu0
      %v6726 = vadd.f32 0.0, %v6725
      %v6727 = vpop.f32.mrb[0].mxu0
      %6728 = vmatprep.mubr.bf16.mxu0 0
      %6729 = vmatmul.mubr.bf16.gmra.mrb[0].mxu0 %v6616
      %v6730 = vpop.f32.mrb[0].mxu0
      %v6731 = vadd.f32 0.0, %v6730
      %v6732 = vpop.f32.mrb[0].mxu0
      %v6733 = vpop.f32.mrb[0].mxu0
      %v6734 = vadd.f32 0.0, %v6733
      %v6735 = vpop.f32.mrb[0].mxu0
      %6736 = vmatprep.mubr.bf16.mxu0 0
      %6737 = vmatmul.mubr.bf16.gmra.mrb[0].mxu0 %v6619
      %v6738 = vpop.f32.mrb[0].mxu0
      %v6739 = vadd.f32 0.0, %v6738
      %v6740 = vpop.f32.mrb[0].mxu0
      %v6741 = vpop.f32.mrb[0].mxu0
      %v6742 = vadd.f32 0.0, %v6741
      %v6743 = vpop.f32.mrb[0].mxu0
      %6744 = vmatprep.mubr.bf16.mxu0 0
      %6745 = vmatmul.mubr.bf16.gmra.mrb[0].mxu0 %v6622
      %v6746 = vpop.f32.mrb[0].mxu0
      %v6747 = vadd.f32 0.0, %v6746
      %v6748 = vpop.f32.mrb[0].mxu0
      %v6749 = vpop.f32.mrb[0].mxu0
      %v6750 = vadd.f32 0.0, %v6749
      %v6751 = vpop.f32.mrb[0].mxu0
      %6752 = vmatprep.mubr.bf16.mxu0 0
      %6753 = vmatmul.mubr.bf16.gmra.mrb[0].mxu0 %v6625
      %v6754 = vpop.f32.mrb[0].mxu0
      %v6755 = vadd.f32 0.0, %v6754
      %v6756 = vpop.f32.mrb[0].mxu0
      %v6757 = vpop.f32.mrb[0].mxu0
      %v6758 = vadd.f32 0.0, %v6757
      %v6759 = vpop.f32.mrb[0].mxu0
      %6760 = vmatprep.mubr.bf16.mxu0 0
      %6761 = vmatmul.mubr.bf16.gmra.mrb[0].mxu0 %v6628
      %v6762 = vpop.f32.mrb[0].mxu0
      %v6763 = vadd.f32 0.0, %v6762
      %v6764 = vpop.f32.mrb[0].mxu0
      %v6765 = vpop.f32.mrb[0].mxu0
      %v6766 = vadd.f32 0.0, %v6765
      %v6767 = vpop.f32.mrb[0].mxu0
      %6768 = vmatprep.mubr.bf16.mxu0 0
      %6769 = vmatmul.mubr.bf16.gmra.mrb[0].mxu0 %v6631
      %v6770 = vpop.f32.mrb[0].mxu0
      %v6771 = vadd.f32 0.0, %v6770
      %v6772 = vpop.f32.mrb[0].mxu0
      %v6773 = vpop.f32.mrb[0].mxu0
      %v6774 = vadd.f32 0.0, %v6773
      %v6775 = vpop.f32.mrb[0].mxu0
      %6776 = vmatprep.mubr.bf16.mxu0 0
      %6777 = vmatmul.mubr.bf16.gmra.mrb[0].mxu0 %v6634
      %v6778 = vpop.f32.mrb[0].mxu0
      %v6779 = vadd.f32 0.0, %v6778
      %v6780 = vpop.f32.mrb[0].mxu0
      %v6781 = vpop.f32.mrb[0].mxu0
      %v6782 = vadd.f32 0.0, %v6781
      %v6783 = vpop.f32.mrb[0].mxu0
      %6784 = vmatprep.mubr.bf16.mxu0 0
      %6785 = vmatmul.mubr.bf16.gmra.mrb[0].mxu0 %v6637
      %v6786 = vpop.f32.mrb[0].mxu0
      %v6787 = vadd.f32 0.0, %v6786
      %v6788 = vpop.f32.mrb[0].mxu0
      %v6789 = vpop.f32.mrb[0].mxu0
      %v6790 = vadd.f32 0.0, %v6789
      %v6791 = vpop.f32.mrb[0].mxu0
      %6792 = vmatprep.mubr.bf16.mxu0 0
      %6793 = vmatmul.mubr.bf16.gmra.mrb[0].mxu0 %v6640
      %v6794 = vpop.f32.mrb[0].mxu0
      %v6795 = vadd.f32 0.0, %v6794
      %v6796 = vpop.f32.mrb[0].mxu0
      %v6797 = vpop.f32.mrb[0].mxu0
      %v6798 = vadd.f32 0.0, %v6797
      %v6799 = vpop.f32.mrb[0].mxu0
      %6800 = vmatprep.mubr.bf16.mxu0 0
      %6801 = vmatmul.mubr.bf16.gmra.mrb[0].mxu0 %v6643
      %v6802 = vpop.f32.mrb[0].mxu0
      %v6803 = vadd.f32 0.0, %v6802
      %v6804 = vpop.f32.mrb[0].mxu0
      %v6805 = vpop.f32.mrb[0].mxu0
      %v6806 = vadd.f32 0.0, %v6805
      %v6807 = vpop.f32.mrb[0].mxu0
      %6808 = vdwg.mxu0
      %v6809 = vadd.f32 %v6514, %v6683
      %v6810 = vadd.f32 %v6515, %v6686
      %v6811 = vadd.f32 %v6516, %v6691
      %v6812 = vadd.f32 %v6517, %v6694
      %v6813 = vadd.f32 %v6518, %v6699
      %v6814 = vadd.f32 %v6519, %v6702
      %v6815 = vadd.f32 %v6520, %v6707
      %v6816 = vadd.f32 %v6521, %v6710
      %v6817 = vadd.f32 %v6522, %v6715
      %v6818 = vadd.f32 %v6523, %v6718
      %v6819 = vadd.f32 %v6524, %v6723
      %v6820 = vadd.f32 %v6525, %v6726
      %v6821 = vadd.f32 %v6526, %v6731
      %v6822 = vadd.f32 %v6527, %v6734
      %v6823 = vadd.f32 %v6528, %v6739
      %v6824 = vadd.f32 %v6529, %v6742
      %v6825 = vadd.f32 %v6530, %v6747
      %v6826 = vadd.f32 %v6531, %v6750
      %v6827 = vadd.f32 %v6532, %v6755
      %v6828 = vadd.f32 %v6533, %v6758
      %v6829 = vadd.f32 %v6534, %v6763
      %v6830 = vadd.f32 %v6535, %v6766
      %v6831 = vadd.f32 %v6536, %v6771
      %v6832 = vadd.f32 %v6537, %v6774
      %v6833 = vadd.f32 %v6538, %v6779
      %v6834 = vadd.f32 %v6539, %v6782
      %v6835 = vadd.f32 %v6540, %v6787
      %v6836 = vadd.f32 %v6541, %v6790
      %v6837 = vadd.f32 %v6542, %v6795
      %v6838 = vadd.f32 %v6543, %v6798
      %v6839 = vadd.f32 %v6544, %v6803
      %v6840 = vadd.f32 %v6545, %v6806
      %v6841 = vld [vmem:[%s8] sm:$0x1]
      %v6843 = vlaneseq
      %v6844 = vshrl.u32 %v6843, 7
      %v6845 = vsub.s32 0, %v6844
      %v6846 = vrot.slane %v6841, %v6845
      %v6848 = vadd.f32 %v6809, %v6846
      %v6849 = vadd.f32 %v6810, %v6846
      %v6850 = vadd.f32 %v6811, %v6846
      %v6851 = vadd.f32 %v6812, %v6846
      %v6852 = vadd.f32 %v6813, %v6846
      %v6853 = vadd.f32 %v6814, %v6846
      %v6854 = vadd.f32 %v6815, %v6846
      %v6855 = vadd.f32 %v6816, %v6846
      %v6856 = vadd.f32 %v6817, %v6846
      %v6857 = vadd.f32 %v6818, %v6846
      %v6858 = vadd.f32 %v6819, %v6846
      %v6859 = vadd.f32 %v6820, %v6846
      %v6860 = vadd.f32 %v6821, %v6846
      %v6861 = vadd.f32 %v6822, %v6846
      %v6862 = vadd.f32 %v6823, %v6846
      %v6863 = vadd.f32 %v6824, %v6846
      %v6864 = vadd.f32 %v6825, %v6846
      %v6865 = vadd.f32 %v6826, %v6846
      %v6866 = vadd.f32 %v6827, %v6846
      %v6867 = vadd.f32 %v6828, %v6846
      %v6868 = vadd.f32 %v6829, %v6846
      %v6869 = vadd.f32 %v6830, %v6846
      %v6870 = vadd.f32 %v6831, %v6846
      %v6871 = vadd.f32 %v6832, %v6846
      %v6872 = vadd.f32 %v6833, %v6846
      %v6873 = vadd.f32 %v6834, %v6846
      %v6874 = vadd.f32 %v6835, %v6846
      %v6875 = vadd.f32 %v6836, %v6846
      %v6876 = vadd.f32 %v6837, %v6846
      %v6877 = vadd.f32 %v6838, %v6846
      %v6878 = vadd.f32 %v6839, %v6846
      %v6879 = vadd.f32 %v6840, %v6846
      %v6880 = vpack.c.bf16 %v389, %v388
      %v6881 = vpack.c.bf16 %v391, %v390
      %v6882 = vpack.c.bf16 %v393, %v392
      %v6883 = vpack.c.bf16 %v395, %v394
      %v6884 = vpack.c.bf16 %v397, %v396
      %v6885 = vpack.c.bf16 %v399, %v398
      %v6886 = vpack.c.bf16 %v401, %v400
      %v6887 = vpack.c.bf16 %v403, %v402
      %v6888 = vpack.c.bf16 %v405, %v404
      %v6889 = vpack.c.bf16 %v407, %v406
      %v6890 = vpack.c.bf16 %v409, %v408
      %v6891 = vpack.c.bf16 %v411, %v410
      %v6892 = vpack.c.bf16 %v413, %v412
      %v6893 = vpack.c.bf16 %v415, %v414
      %v6894 = vpack.c.bf16 %v417, %v416
      %v6895 = vpack.c.bf16 %v419, %v418
      %v6896 = vld [vmem:[%s9] sm:$0xf]
      %v6897 = vpack.c.bf16 %v6896, %v6896
      %v6899 = vsel %vm420, %v6880, 0
      %v6902 = vsel %vm420, %v6881, 0
      %v6905 = vsel %vm420, %v6882, 0
      %v6908 = vsel %vm420, %v6883, 0
      %v6911 = vsel %vm420, %v6884, 0
      %v6914 = vsel %vm420, %v6885, 0
      %v6917 = vsel %vm420, %v6886, 0
      %v6920 = vsel %vm420, %v6887, 0
      %v6923 = vsel %vm420, %v6888, 0
      %v6926 = vsel %vm420, %v6889, 0
      %v6929 = vsel %vm420, %v6890, 0
      %v6932 = vsel %vm420, %v6891, 0
      %v6935 = vsel %vm420, %v6892, 0
      %v6938 = vsel %vm420, %v6893, 0
      %v6941 = vsel %vm420, %v6894, 0
      %v6944 = vsel %vm420, %v6895, 0
      %v6947 = vsel %vm735, %v6897, 0
      %6949 = vmatprep.subr.bf16.mxu0 0
      %6950 = vmatpush1.bf16.msra.mxu0 %v6947
      %6951 = vmatprep.subr.bf16.mxu0 0
      %6952 = vmatpush1.bf16.msra.mxu0 0
      %6953 = vmatprep.subr.bf16.mxu0 0
      %6954 = vmatpush1.bf16.msra.mxu0 0
      %6955 = vmatprep.subr.bf16.mxu0 0
      %6956 = vmatpush1.bf16.msra.mxu0 0
      %6957 = vmatprep.subr.bf16.mxu0 0
      %6958 = vmatpush1.bf16.msra.mxu0 0
      %6959 = vmatprep.subr.bf16.mxu0 0
      %6960 = vmatpush1.bf16.msra.mxu0 0
      %6961 = vmatprep.subr.bf16.mxu0 0
      %6962 = vmatpush1.bf16.msra.mxu0 0
      %6963 = vmatprep.subr.bf16.mxu0 0
      %6964 = vmatpush1.bf16.msra.mxu0 0
      %6965 = vmatprep.subr.bf16.mxu0 0
      %6966 = vmatpush1.bf16.msra.mxu0 0
      %6967 = vmatprep.subr.bf16.mxu0 0
      %6968 = vmatpush1.bf16.msra.mxu0 0
      %6969 = vmatprep.subr.bf16.mxu0 0
      %6970 = vmatpush1.bf16.msra.mxu0 0
      %6971 = vmatprep.subr.bf16.mxu0 0
      %6972 = vmatpush1.bf16.msra.mxu0 0
      %6973 = vmatprep.subr.bf16.mxu0 0
      %6974 = vmatpush1.bf16.msra.mxu0 0
      %6975 = vmatprep.subr.bf16.mxu0 0
      %6976 = vmatpush1.bf16.msra.mxu0 0
      %6977 = vmatprep.subr.bf16.mxu0 0
      %6978 = vmatpush1.bf16.msra.mxu0 0
      %6979 = vmatprep.subr.bf16.mxu0 0
      %6980 = vmatpush1.bf16.msra.mxu0 0
      %6981 = vmatprep.mubr.bf16.mxu0 0
      %6982 = vmatmul.mubr.bf16.gmra.mrb[0].mxu0 %v6899
      %v6983 = vpop.f32.mrb[0].mxu0
      %v6984 = vadd.f32 0.0, %v6983
      %v6985 = vpop.f32.mrb[0].mxu0
      %v6986 = vpop.f32.mrb[0].mxu0
      %v6987 = vadd.f32 0.0, %v6986
      %v6988 = vpop.f32.mrb[0].mxu0
      %6989 = vmatprep.mubr.bf16.mxu0 0
      %6990 = vmatmul.mubr.bf16.gmra.mrb[0].mxu0 %v6902
      %v6991 = vpop.f32.mrb[0].mxu0
      %v6992 = vadd.f32 0.0, %v6991
      %v6993 = vpop.f32.mrb[0].mxu0
      %v6994 = vpop.f32.mrb[0].mxu0
      %v6995 = vadd.f32 0.0, %v6994
      %v6996 = vpop.f32.mrb[0].mxu0
      %6997 = vmatprep.mubr.bf16.mxu0 0
      %6998 = vmatmul.mubr.bf16.gmra.mrb[0].mxu0 %v6905
      %v6999 = vpop.f32.mrb[0].mxu0
      %v7000 = vadd.f32 0.0, %v6999
      %v7001 = vpop.f32.mrb[0].mxu0
      %v7002 = vpop.f32.mrb[0].mxu0
      %v7003 = vadd.f32 0.0, %v7002
      %v7004 = vpop.f32.mrb[0].mxu0
      %7005 = vmatprep.mubr.bf16.mxu0 0
      %7006 = vmatmul.mubr.bf16.gmra.mrb[0].mxu0 %v6908
      %v7007 = vpop.f32.mrb[0].mxu0
      %v7008 = vadd.f32 0.0, %v7007
      %v7009 = vpop.f32.mrb[0].mxu0
      %v7010 = vpop.f32.mrb[0].mxu0
      %v7011 = vadd.f32 0.0, %v7010
      %v7012 = vpop.f32.mrb[0].mxu0
      %7013 = vmatprep.mubr.bf16.mxu0 0
      %7014 = vmatmul.mubr.bf16.gmra.mrb[0].mxu0 %v6911
      %v7015 = vpop.f32.mrb[0].mxu0
      %v7016 = vadd.f32 0.0, %v7015
      %v7017 = vpop.f32.mrb[0].mxu0
      %v7018 = vpop.f32.mrb[0].mxu0
      %v7019 = vadd.f32 0.0, %v7018
      %v7020 = vpop.f32.mrb[0].mxu0
      %7021 = vmatprep.mubr.bf16.mxu0 0
      %7022 = vmatmul.mubr.bf16.gmra.mrb[0].mxu0 %v6914
      %v7023 = vpop.f32.mrb[0].mxu0
      %v7024 = vadd.f32 0.0, %v7023
      %v7025 = vpop.f32.mrb[0].mxu0
      %v7026 = vpop.f32.mrb[0].mxu0
      %v7027 = vadd.f32 0.0, %v7026
      %v7028 = vpop.f32.mrb[0].mxu0
      %7029 = vmatprep.mubr.bf16.mxu0 0
      %7030 = vmatmul.mubr.bf16.gmra.mrb[0].mxu0 %v6917
      %v7031 = vpop.f32.mrb[0].mxu0
      %v7032 = vadd.f32 0.0, %v7031
      %v7033 = vpop.f32.mrb[0].mxu0
      %v7034 = vpop.f32.mrb[0].mxu0
      %v7035 = vadd.f32 0.0, %v7034
      %v7036 = vpop.f32.mrb[0].mxu0
      %7037 = vmatprep.mubr.bf16.mxu0 0
      %7038 = vmatmul.mubr.bf16.gmra.mrb[0].mxu0 %v6920
      %v7039 = vpop.f32.mrb[0].mxu0
      %v7040 = vadd.f32 0.0, %v7039
      %v7041 = vpop.f32.mrb[0].mxu0
      %v7042 = vpop.f32.mrb[0].mxu0
      %v7043 = vadd.f32 0.0, %v7042
      %v7044 = vpop.f32.mrb[0].mxu0
      %7045 = vmatprep.mubr.bf16.mxu0 0
      %7046 = vmatmul.mubr.bf16.gmra.mrb[0].mxu0 %v6923
      %v7047 = vpop.f32.mrb[0].mxu0
      %v7048 = vadd.f32 0.0, %v7047
      %v7049 = vpop.f32.mrb[0].mxu0
      %v7050 = vpop.f32.mrb[0].mxu0
      %v7051 = vadd.f32 0.0, %v7050
      %v7052 = vpop.f32.mrb[0].mxu0
      %7053 = vmatprep.mubr.bf16.mxu0 0
      %7054 = vmatmul.mubr.bf16.gmra.mrb[0].mxu0 %v6926
      %v7055 = vpop.f32.mrb[0].mxu0
      %v7056 = vadd.f32 0.0, %v7055
      %v7057 = vpop.f32.mrb[0].mxu0
      %v7058 = vpop.f32.mrb[0].mxu0
      %v7059 = vadd.f32 0.0, %v7058
      %v7060 = vpop.f32.mrb[0].mxu0
      %7061 = vmatprep.mubr.bf16.mxu0 0
      %7062 = vmatmul.mubr.bf16.gmra.mrb[0].mxu0 %v6929
      %v7063 = vpop.f32.mrb[0].mxu0
      %v7064 = vadd.f32 0.0, %v7063
      %v7065 = vpop.f32.mrb[0].mxu0
      %v7066 = vpop.f32.mrb[0].mxu0
      %v7067 = vadd.f32 0.0, %v7066
      %v7068 = vpop.f32.mrb[0].mxu0
      %7069 = vmatprep.mubr.bf16.mxu0 0
      %7070 = vmatmul.mubr.bf16.gmra.mrb[0].mxu0 %v6932
      %v7071 = vpop.f32.mrb[0].mxu0
      %v7072 = vadd.f32 0.0, %v7071
      %v7073 = vpop.f32.mrb[0].mxu0
      %v7074 = vpop.f32.mrb[0].mxu0
      %v7075 = vadd.f32 0.0, %v7074
      %v7076 = vpop.f32.mrb[0].mxu0
      %7077 = vmatprep.mubr.bf16.mxu0 0
      %7078 = vmatmul.mubr.bf16.gmra.mrb[0].mxu0 %v6935
      %v7079 = vpop.f32.mrb[0].mxu0
      %v7080 = vadd.f32 0.0, %v7079
      %v7081 = vpop.f32.mrb[0].mxu0
      %v7082 = vpop.f32.mrb[0].mxu0
      %v7083 = vadd.f32 0.0, %v7082
      %v7084 = vpop.f32.mrb[0].mxu0
      %7085 = vmatprep.mubr.bf16.mxu0 0
      %7086 = vmatmul.mubr.bf16.gmra.mrb[0].mxu0 %v6938
      %v7087 = vpop.f32.mrb[0].mxu0
      %v7088 = vadd.f32 0.0, %v7087
      %v7089 = vpop.f32.mrb[0].mxu0
      %v7090 = vpop.f32.mrb[0].mxu0
      %v7091 = vadd.f32 0.0, %v7090
      %v7092 = vpop.f32.mrb[0].mxu0
      %7093 = vmatprep.mubr.bf16.mxu0 0
      %7094 = vmatmul.mubr.bf16.gmra.mrb[0].mxu0 %v6941
      %v7095 = vpop.f32.mrb[0].mxu0
      %v7096 = vadd.f32 0.0, %v7095
      %v7097 = vpop.f32.mrb[0].mxu0
      %v7098 = vpop.f32.mrb[0].mxu0
      %v7099 = vadd.f32 0.0, %v7098
      %v7100 = vpop.f32.mrb[0].mxu0
      %7101 = vmatprep.mubr.bf16.mxu0 0
      %7102 = vmatmul.mubr.bf16.gmra.mrb[0].mxu0 %v6944
      %v7103 = vpop.f32.mrb[0].mxu0
      %v7104 = vadd.f32 0.0, %v7103
      %v7105 = vpop.f32.mrb[0].mxu0
      %v7106 = vpop.f32.mrb[0].mxu0
      %v7107 = vadd.f32 0.0, %v7106
      %v7108 = vpop.f32.mrb[0].mxu0
      %7109 = vdwg.mxu0
      %v7110 = vadd.f32 %v6848, %v6984
      %v7111 = vadd.f32 %v6849, %v6987
      %v7112 = vadd.f32 %v6850, %v6992
      %v7113 = vadd.f32 %v6851, %v6995
      %v7114 = vadd.f32 %v6852, %v7000
      %v7115 = vadd.f32 %v6853, %v7003
      %v7116 = vadd.f32 %v6854, %v7008
      %v7117 = vadd.f32 %v6855, %v7011
      %v7118 = vadd.f32 %v6856, %v7016
      %v7119 = vadd.f32 %v6857, %v7019
      %v7120 = vadd.f32 %v6858, %v7024
      %v7121 = vadd.f32 %v6859, %v7027
      %v7122 = vadd.f32 %v6860, %v7032
      %v7123 = vadd.f32 %v6861, %v7035
      %v7124 = vadd.f32 %v6862, %v7040
      %v7125 = vadd.f32 %v6863, %v7043
      %v7126 = vadd.f32 %v6864, %v7048
      %v7127 = vadd.f32 %v6865, %v7051
      %v7128 = vadd.f32 %v6866, %v7056
      %v7129 = vadd.f32 %v6867, %v7059
      %v7130 = vadd.f32 %v6868, %v7064
      %v7131 = vadd.f32 %v6869, %v7067
      %v7132 = vadd.f32 %v6870, %v7072
      %v7133 = vadd.f32 %v6871, %v7075
      %v7134 = vadd.f32 %v6872, %v7080
      %v7135 = vadd.f32 %v6873, %v7083
      %v7136 = vadd.f32 %v6874, %v7088
      %v7137 = vadd.f32 %v6875, %v7091
      %v7138 = vadd.f32 %v6876, %v7096
      %v7139 = vadd.f32 %v6877, %v7099
      %v7140 = vadd.f32 %v6878, %v7104
      %v7141 = vadd.f32 %v6879, %v7107
      %v7142 = vld [vmem:[%s10] sm:$0x1]
      %v7144 = vlaneseq
      %v7145 = vshrl.u32 %v7144, 7
      %v7146 = vsub.s32 0, %v7145
      %v7147 = vrot.slane %v7142, %v7146
      %v7149 = vadd.f32 %v7110, %v7147
      %v7150 = vadd.f32 %v7111, %v7147
      %v7151 = vadd.f32 %v7112, %v7147
      %v7152 = vadd.f32 %v7113, %v7147
      %v7153 = vadd.f32 %v7114, %v7147
      %v7154 = vadd.f32 %v7115, %v7147
      %v7155 = vadd.f32 %v7116, %v7147
      %v7156 = vadd.f32 %v7117, %v7147
      %v7157 = vadd.f32 %v7118, %v7147
      %v7158 = vadd.f32 %v7119, %v7147
      %v7159 = vadd.f32 %v7120, %v7147
      %v7160 = vadd.f32 %v7121, %v7147
      %v7161 = vadd.f32 %v7122, %v7147
      %v7162 = vadd.f32 %v7123, %v7147
      %v7163 = vadd.f32 %v7124, %v7147
      %v7164 = vadd.f32 %v7125, %v7147
      %v7165 = vadd.f32 %v7126, %v7147
      %v7166 = vadd.f32 %v7127, %v7147
      %v7167 = vadd.f32 %v7128, %v7147
      %v7168 = vadd.f32 %v7129, %v7147
      %v7169 = vadd.f32 %v7130, %v7147
      %v7170 = vadd.f32 %v7131, %v7147
      %v7171 = vadd.f32 %v7132, %v7147
      %v7172 = vadd.f32 %v7133, %v7147
      %v7173 = vadd.f32 %v7134, %v7147
      %v7174 = vadd.f32 %v7135, %v7147
      %v7175 = vadd.f32 %v7136, %v7147
      %v7176 = vadd.f32 %v7137, %v7147
      %v7177 = vadd.f32 %v7138, %v7147
      %v7178 = vadd.f32 %v7139, %v7147
      %v7179 = vadd.f32 %v7140, %v7147
      %v7180 = vadd.f32 %v7141, %v7147
      %7181 = vst.msk [vmem:[%s386] sm:$0xff] %vm3650, %v7149
      %7182 = vst.msk [vmem:[%s386 + $0x8] sm:$0xff] %vm3650, %v7150
      %7183 = vst.msk [vmem:[%s386 + $0x10] sm:$0xff] %vm3650, %v7151
      %7184 = vst.msk [vmem:[%s386 + $0x18] sm:$0xff] %vm3650, %v7152
      %7185 = vst.msk [vmem:[%s386 + $0x20] sm:$0xff] %vm3650, %v7153
      %7186 = vst.msk [vmem:[%s386 + $0x28] sm:$0xff] %vm3650, %v7154
      %7187 = vst.msk [vmem:[%s386 + $0x30] sm:$0xff] %vm3650, %v7155
      %7188 = vst.msk [vmem:[%s386 + $0x38] sm:$0xff] %vm3650, %v7156
      %7189 = vst.msk [vmem:[%s386 + $0x40] sm:$0xff] %vm3650, %v7157
      %7190 = vst.msk [vmem:[%s386 + $0x48] sm:$0xff] %vm3650, %v7158
      %7191 = vst.msk [vmem:[%s386 + $0x50] sm:$0xff] %vm3650, %v7159
      %7192 = vst.msk [vmem:[%s386 + $0x58] sm:$0xff] %vm3650, %v7160
      %7193 = vst.msk [vmem:[%s386 + $0x60] sm:$0xff] %vm3650, %v7161
      %7194 = vst.msk [vmem:[%s386 + $0x68] sm:$0xff] %vm3650, %v7162
      %7195 = vst.msk [vmem:[%s386 + $0x70] sm:$0xff] %vm3650, %v7163
      %7196 = vst.msk [vmem:[%s386 + $0x78] sm:$0xff] %vm3650, %v7164
      %7197 = vst.msk [vmem:[%s386 + $0x80] sm:$0xff] %vm3650, %v7165
      %7198 = vst.msk [vmem:[%s386 + $0x88] sm:$0xff] %vm3650, %v7166
      %7199 = vst.msk [vmem:[%s386 + $0x90] sm:$0xff] %vm3650, %v7167
      %7200 = vst.msk [vmem:[%s386 + $0x98] sm:$0xff] %vm3650, %v7168
      %7201 = vst.msk [vmem:[%s386 + $0xa0] sm:$0xff] %vm3650, %v7169
      %7202 = vst.msk [vmem:[%s386 + $0xa8] sm:$0xff] %vm3650, %v7170
      %7203 = vst.msk [vmem:[%s386 + $0xb0] sm:$0xff] %vm3650, %v7171
      %7204 = vst.msk [vmem:[%s386 + $0xb8] sm:$0xff] %vm3650, %v7172
      %7205 = vst.msk [vmem:[%s386 + $0xc0] sm:$0xff] %vm3650, %v7173
      %7206 = vst.msk [vmem:[%s386 + $0xc8] sm:$0xff] %vm3650, %v7174
      %7207 = vst.msk [vmem:[%s386 + $0xd0] sm:$0xff] %vm3650, %v7175
      %7208 = vst.msk [vmem:[%s386 + $0xd8] sm:$0xff] %vm3650, %v7176
      %7209 = vst.msk [vmem:[%s386 + $0xe0] sm:$0xff] %vm3650, %v7177
      %7210 = vst.msk [vmem:[%s386 + $0xe8] sm:$0xff] %vm3650, %v7178
      %7211 = vst.msk [vmem:[%s386 + $0xf0] sm:$0xff] %vm3650, %v7179
      %7212 = vst.msk [vmem:[%s386 + $0xf8] sm:$0xff] %vm3650, %v7180
      %p7213 = scmp.lt.s32.totalorder %s22, 1
      %s7214 = scalar_select %p7213, %s22, 1
      %s7215 = smul.addr %s7214, 32
      %s7216 = smul.addr %s7215, 8
      %s7217 = scalar_lea.vmem %s11, %s7216
      // Predicated region
      $region65: #{tpu_custom_call.1} parent=63 // pred_check
        %p7218 = pneg %p276
      $region66: #{tpu_custom_call.1} parent=63 // pred_check_branch
        %7220 = sbr.rel (%p7218) target = $region68
      $region67: #{tpu_custom_call.1} parent=63 // pred_region
        _
      $region68: #{tpu_custom_call.1} parent=63 // pred_fallthru
        _
    $region64: #{tpu_custom_call.1} parent=5 // pred_fallthru
      _
    %p7221 = scmp.le.s32.totalorder 2, %s17
    // Predicated region
    $region69: #{tpu_custom_call.1} parent=5 // pred_check
      %p7222 = pneg %p7221
    $region70: #{tpu_custom_call.1} parent=5 // pred_check_branch
      %7224 = sbr.rel (%p7222) target = $region72
    $region71: #{tpu_custom_call.1} parent=5 // pred_region
      %s7225 = ssub.s32 %s17, 2
      // Predicated region
      $region73: #{tpu_custom_call.1} parent=71 // pred_check
        %p7226 = pneg %p282
      $region74: #{tpu_custom_call.1} parent=71 // pred_check_branch
        %7228 = sbr.rel (%p7226) target = $region76
      $region75: #{tpu_custom_call.1} parent=71 // pred_region
        %p7229 = scmp.lt.s32.totalorder %s23, 1
        %s7230 = scalar_select %p7229, %s23, 1
        %s7231 = smul.addr %s7230, 32
        %s7232 = smul.addr %s7231, 8
        %s7233 = scalar_lea.vmem %s11, %s7232
      $region76: #{tpu_custom_call.1} parent=71 // pred_fallthru
        _
    $region72: #{tpu_custom_call.1} parent=5 // pred_fallthru
      _
  $region6: #{tpu_custom_call.1} parent=0 // loop_footer
    %s21 = sadd.s32 1, %s17
  $region7: #{tpu_custom_call.1} parent=0 // loop_footer_branch
    %16 = sbr.rel target = $region3
  $region8: #{tpu_custom_call.1} parent=0 // loop_exit
    _

</llo_original>
